<compile_context>
chip_gen: v6e
topology: v6e:2x2x1
jax: 0.10.0
libtpu: 0.0.40
codegen_flags: <defaults>
</compile_context>

<pallas_src>
import jax
import jax.numpy as jnp
from jax.experimental import pallas as pl
from jax.experimental.pallas import tpu as pltpu


# ----------------------------------------------------------------------------
# Pallas kernel: fused gather (drop_idx permutation) + scale + rot1 + rot2 +
# translation + jitter on the xyz channels, plus gathered copy of the features.
# ----------------------------------------------------------------------------
def _augment_kernel(drop_ref, pts_ref, coef_ref, jit_ref, out_ref):
    # drop_ref : SMEM (S,) int32     permutation of range(S) (scalar prefetch)
    # pts_ref  : VMEM (C, bt, S, Pt) channels-major, npoint tile on the lane axis
    # coef_ref : VMEM (9, 1, Pt)     fused scale*rot2*rot1 coefficients (row-major 3x3)
    # jit_ref  : VMEM (3, S, 1, Pt)  jitter + translation, output-sample order
    # out_ref  : VMEM (C, bt, S, Pt)
    C = out_ref.shape[0]
    S = out_ref.shape[2]
    cf = coef_ref[...]                      # (9, 1, Pt); cf[k] -> (1, Pt) broadcast slab
    dt = out_ref.dtype

    for j in range(S):                      # static unroll over kept samples (S ~ 24)
        s = drop_ref[j]                     # original sample index (dynamic sublane offset)
        x = pts_ref[0, :, s, :]             # (bt, Pt)
        y = pts_ref[1, :, s, :]
        z = pts_ref[2, :, s, :]
        out_ref[0, :, j, :] = (x * cf[0] + y * cf[1] + z * cf[2] + jit_ref[0, j]).astype(dt)
        out_ref[1, :, j, :] = (x * cf[3] + y * cf[4] + z * cf[5] + jit_ref[1, j]).astype(dt)
        out_ref[2, :, j, :] = (x * cf[6] + y * cf[7] + z * cf[8] + jit_ref[2, j]).astype(dt)
        # Feature channels ride through, gathered to the same output position.
        for c in range(3, C):
            out_ref[c, :, j, :] = pts_ref[c, :, s, :]


_SPLIT_MIN_BYTES = 512 * 1024      # min per-step payload worth a 2-way megacore split


def _vmem_capacity_bytes():
    try:
        return int(pltpu.get_tpu_info().vmem_capacity_bytes)
    except Exception:
        return 64 * 1024 * 1024    # conservative default (v7x per-TC VMEM)


def _augment_pallas(pts, drop_idx, coef, jit):
    """pts: [C, B, S, P] (kept samples only, channels-major, npoint on lanes);
    drop_idx: [S] int32 permutation of range(S); coef: [9,1,P]; jit: [3,S,1,P].
    Returns [C, B, S, P]: xyz transformed+permuted, features permuted."""
    C, B, S, P = pts.shape
    assert C >= 3, "need xyz channels"
    itemsize = pts.dtype.itemsize

    cap = _vmem_capacity_bytes()
    budget = cap // 4                       # double-buffered blocks target <= cap/4

    def step_bytes(bt_, pt_):
        io = 2 * C * bt_ * S * pt_          # pts block + out block
        par = (9 + 3 * S) * pt_             # coef + jit blocks (also double-buffered)
        return (io + par) * itemsize

    # --- npoint tiling: only when even a single batch row blows the budget.
    pt = P
    if 2 * step_bytes(1, P) > budget and P % 128 == 0:
        pt = 128
        for m in range(P, 127, -128):
            if P % m == 0 and 2 * step_bytes(1, m) <= budget:
                pt = m
                break
    # TODO(synk): P not a multiple of 128 and too large for the VMEM budget is not
    # tiled here (PointNet npoint is 128-aligned in practice).

    # --- batch tiling: largest bt whose double-buffered blocks fit (cdiv grid,
    # no "bt divides B" requirement — Pallas pads the last block).
    bt = 1
    for cand in range(B, 0, -1):
        if 2 * step_bytes(cand, pt) <= budget:
            bt = cand
            break

    nb = -(-B // bt)
    npt = -(-P // pt)
    # Megacore size gate: only force >=2 grid steps when each step still moves
    # enough bytes to amortize the ~0.35us per-step overhead (wins on v7x's two
    # TensorCores, near-free on single-TC v5e/v6e at that size).
    if nb == 1 and npt == 1 and B >= 2 and step_bytes(bt, pt) >= 2 * _SPLIT_MIN_BYTES:
        bt = -(-B // 2)
        nb = -(-B // bt)

    grid = (nb, npt)
    pts_spec = pl.BlockSpec((C, bt, S, pt), lambda i, p, d: (0, i, 0, p))
    coef_spec = pl.BlockSpec((9, 1, pt), lambda i, p, d: (0, 0, p))
    jit_spec = pl.BlockSpec((3, S, 1, pt), lambda i, p, d: (0, 0, 0, p))
    out_spec = pl.BlockSpec((C, bt, S, pt), lambda i, p, d: (0, i, 0, p))

    return pl.pallas_call(
        _augment_kernel,
        out_shape=jax.ShapeDtypeStruct((C, B, S, P), pts.dtype),
        grid_spec=pltpu.PrefetchScalarGridSpec(
            num_scalar_prefetch=1,
            grid=grid,
            in_specs=[pts_spec, coef_spec, jit_spec],
            out_specs=out_spec,
        ),
        compiler_params=pltpu.CompilerParams(
            dimension_semantics=("parallel", "parallel"),
            vmem_limit_bytes=cap // 2),
    )(drop_idx, pts, coef, jit)


@jax.jit
def _augment_forward(new_points, perm_key, coef, jit_eff):
    """new_points: [B, npoint, nsample_orig, C] -> [B, npoint, S_kept, C]."""
    S = jit_eff.shape[1]
    drop_idx = jax.random.permutation(perm_key, S).astype(jnp.int32)
    # Channels-major, npoint-on-lanes layout for the kernel; the [:S] slice fuses
    # into the transpose so only the kept 3/4 of samples are relaid/DMA'd.
    pts_t = jnp.transpose(new_points[:, :, :S, :], (3, 0, 2, 1))    # [C, B, S, P]
    out_t = _augment_pallas(pts_t, drop_idx, coef, jit_eff)
    # TODO(synk): lane-sparse (C on lanes) relayout back to the torch layout; keep
    # the channels-major [C,B,S,P] output (or fuse this transpose into the next
    # kernel) when the consumer can take it — it is the remaining full XLA pass.
    return jnp.transpose(out_t, (1, 3, 2, 0))                       # [B, P, S, C]


# ----------------------------------------------------------------------------
# Augmentor module (JAX)
# ----------------------------------------------------------------------------
class Augmentor:
    def __init__(self, npoint, nsample, key):
        self.npoint = npoint
        self.nsample = nsample * 3 // 4          # kept samples
        k = jax.random.split(key, 7)
        u = jax.random.uniform
        self.theta = u(k[0], (npoint, 1), jnp.float32, -0.1, 0.1)
        self.alpha = u(k[1], (npoint, 1), jnp.float32, -0.1, 0.1)
        self.beta = u(k[2], (npoint, 1), jnp.float32, -0.1, 0.1)
        self.gamma = u(k[3], (npoint, 1), jnp.float32, -0.1, 0.1)
        self.scale_factor = u(k[4], (npoint, 1), jnp.float32, 0.95, 1.05)
        self.translation_factor = u(k[5], (npoint, 1), jnp.float32, -0.05, 0.05)
        self.jitter_factor = u(k[6], (npoint, self.nsample, 3), jnp.float32, -0.01, 0.01)

        # ---- batch-invariant precompute (hoisted out of the kernel) ----
        # NOTE: sqrt(x**2) == |x| — kept to match the reference module semantics.
        al = jnp.sqrt(self.alpha ** 2)
        be = jnp.sqrt(self.beta ** 2)
        ga = jnp.sqrt(self.gamma ** 2)
        th = jnp.sqrt(self.theta ** 2)
        ca, sa = jnp.cos(al), jnp.sin(al)
        cb, sb = jnp.cos(be), jnp.sin(be)
        cg, sg = jnp.cos(ga), jnp.sin(ga)
        aa, cc = jnp.cos(th), jnp.sin(th)

        a = ca * cb
        b = ca * sb * sg - sa * cg
        c = ca * sb * cg + sa * sg
        d = sa * cb
        e = sa * sb * sg + ca * cg
        f = sa * sb * cg - ca * sg
        g = -sb
        h = cb * sg
        i = cb * cg

        s = self.scale_factor            # (npoint, 1) — fold scale into the rotation
        rows = [s * (a * aa + g * cc), s * (b * aa + h * cc), s * (c * aa + i * cc),
                s * d,                 s * e,                 s * f,
                s * (g * aa - a * cc), s * (h * aa - b * cc), s * (i * aa - c * cc)]
        # (9, 1, npoint): fused scale * rot2 * rot1 coefficients, npoint on lanes,
        # each coefficient a single broadcast slab at its use site.
        self.coef = jnp.stack([r[:, 0] for r in rows], axis=0)[:, None, :]
        # (3, S, 1, npoint): jitter + translation (translation folded in).
        self.jit_eff = jnp.transpose(
            self.jitter_factor + self.translation_factor[:, :, None], (2, 1, 0))[:, :, None, :]

    def __call__(self, new_points, perm_key):
        # new_points: [B, npoint, nsample_orig, C] with C >= 3 (xyz + features)
        return _augment_forward(new_points, perm_key, self.coef, self.jit_eff)

    # pure-JAX reference (mirrors the PyTorch module step by step)
    def reference(self, new_points, perm_key):
        drop_idx = jax.random.permutation(perm_key, self.nsample)
        pts = jnp.take(new_points, drop_idx, axis=2)
        x = pts[..., 0] * self.scale_factor
        y = pts[..., 1] * self.scale_factor
        z = pts[..., 2] * self.scale_factor
        al = jnp.sqrt(self.alpha ** 2)
        be = jnp.sqrt(self.beta ** 2)
        ga = jnp.sqrt(self.gamma ** 2)
        a = jnp.cos(al) * jnp.cos(be)
        b = jnp.cos(al) * jnp.sin(be) * jnp.sin(ga) - jnp.sin(al) * jnp.cos(ga)
        c = jnp.cos(al) * jnp.sin(be) * jnp.cos(ga) + jnp.sin(al) * jnp.sin(ga)
        d = jnp.sin(al) * jnp.cos(be)
        e = jnp.sin(al) * jnp.sin(be) * jnp.sin(ga) + jnp.cos(al) * jnp.cos(ga)
        f = jnp.sin(al) * jnp.sin(be) * jnp.cos(ga) - jnp.cos(al) * jnp.sin(ga)
        g = -jnp.sin(be)
        h = jnp.cos(be) * jnp.sin(ga)
        i = jnp.cos(be) * jnp.cos(ga)
        xr = x * a + y * b + z * c
        yr = x * d + y * e + z * f
        zr = x * g + y * h + z * i
        th = jnp.sqrt(self.theta ** 2)
        aa = jnp.cos(th)
        cc = jnp.sin(th)
        xrr = xr * aa + zr * cc
        yrr = yr
        zrr = -xr * cc + zr * aa
        xo = xrr + self.translation_factor + self.jitter_factor[..., 0]
        yo = yrr + self.translation_factor + self.jitter_factor[..., 1]
        zo = zrr + self.translation_factor + self.jitter_factor[..., 2]
        new_xyz = jnp.stack([xo, yo, zo], axis=3)
        return jnp.concatenate([new_xyz, pts[..., 3:]], axis=3)


if __name__ == "__main__":
    key = jax.random.PRNGKey(0)
    k_param, k_in, k_perm = jax.random.split(key, 3)

    B, npoint, nsample, C = 4, 128, 32, 6          # kept samples = 24
    aug = Augmentor(npoint, nsample, k_param)

    new_points = jax.random.normal(k_in, (B, npoint, nsample, C), dtype=jnp.float32)

    out = jax.block_until_ready(aug(new_points, k_perm))
    ref = jax.block_until_ready(aug.reference(new_points, k_perm))

    assert out.shape == (B, npoint, aug.nsample, C), out.shape
    err = float(jnp.max(jnp.abs(out - ref)))
    assert jnp.allclose(out, ref, atol=1e-5, rtol=1e-5), err

    print("KERNEL_OK")
</pallas_src>

<mosaic_0001>
module attributes {stable_mosaic.version = 11 : i64} {
  func.func @_augment_kernel(%arg0: i32, %arg1: i32, %arg2: memref<24xi32, #tpu.memory_space<smem>>, %arg3: memref<6x4x24x128xf32, #tpu.memory_space<vmem>>, %arg4: memref<9x1x128xf32, #tpu.memory_space<vmem>>, %arg5: memref<3x24x1x128xf32, #tpu.memory_space<vmem>>, %arg6: memref<6x4x24x128xf32, #tpu.memory_space<vmem>>) attributes {dimension_semantics = [#tpu.dimension_semantics<parallel>, #tpu.dimension_semantics<parallel>], iteration_bounds = array<i64: 1, 1>, scalar_prefetch = 1 : i64, scratch_operands = 0 : i64, tpu.core_type = #tpu.core_type<tc>, window_params = [{transform_indices = @transform_0, window_bounds = array<i64: 6, 4, 24, 128>}, {transform_indices = @transform_1, window_bounds = array<i64: 9, 1, 128>}, {transform_indices = @transform_2, window_bounds = array<i64: 3, 24, 1, 128>}, {transform_indices = @transform_3, window_bounds = array<i64: 6, 4, 24, 128>}]} {
    %c0 = arith.constant 0 : index
    %c0_0 = arith.constant 0 : index
    %c0_1 = arith.constant 0 : index
    %0 = vector.load %arg4[%c0, %c0_0, %c0_1] : memref<9x1x128xf32, #tpu.memory_space<vmem>>, vector<9x1x128xf32>
    %c0_2 = arith.constant 0 : index
    %1 = memref.load %arg2[%c0_2] : memref<24xi32, #tpu.memory_space<smem>>
    %c0_3 = arith.constant 0 : index
    %c0_4 = arith.constant 0 : index
    %2 = arith.index_cast %1 : i32 to index
    %c0_5 = arith.constant 0 : index
    %3 = vector.load %arg3[%c0_3, %c0_4, %2, %c0_5] : memref<6x4x24x128xf32, #tpu.memory_space<vmem>>, vector<1x4x1x128xf32>
    %4 = vector.shape_cast %3 : vector<1x4x1x128xf32> to vector<4x128xf32>
    %c1 = arith.constant 1 : index
    %c0_6 = arith.constant 0 : index
    %5 = arith.index_cast %1 : i32 to index
    %c0_7 = arith.constant 0 : index
    %6 = vector.load %arg3[%c1, %c0_6, %5, %c0_7] : memref<6x4x24x128xf32, #tpu.memory_space<vmem>>, vector<1x4x1x128xf32>
    %7 = vector.shape_cast %6 : vector<1x4x1x128xf32> to vector<4x128xf32>
    %c2 = arith.constant 2 : index
    %c0_8 = arith.constant 0 : index
    %8 = arith.index_cast %1 : i32 to index
    %c0_9 = arith.constant 0 : index
    %9 = vector.load %arg3[%c2, %c0_8, %8, %c0_9] : memref<6x4x24x128xf32, #tpu.memory_space<vmem>>, vector<1x4x1x128xf32>
    %10 = vector.shape_cast %9 : vector<1x4x1x128xf32> to vector<4x128xf32>
    %11 = vector.extract_strided_slice %0 {offsets = [0, 0, 0], sizes = [1, 1, 128], strides = [1, 1, 1]} : vector<9x1x128xf32> to vector<1x1x128xf32>
    %12 = vector.shape_cast %11 : vector<1x1x128xf32> to vector<1x128xf32>
    %13 = vector.broadcast %12 : vector<1x128xf32> to vector<4x128xf32>
    %14 = arith.mulf %4, %13 : vector<4x128xf32>
    %15 = vector.extract_strided_slice %0 {offsets = [1, 0, 0], sizes = [1, 1, 128], strides = [1, 1, 1]} : vector<9x1x128xf32> to vector<1x1x128xf32>
    %16 = vector.shape_cast %15 : vector<1x1x128xf32> to vector<1x128xf32>
    %17 = vector.broadcast %16 : vector<1x128xf32> to vector<4x128xf32>
    %18 = arith.mulf %7, %17 : vector<4x128xf32>
    %19 = arith.addf %14, %18 : vector<4x128xf32>
    %20 = vector.extract_strided_slice %0 {offsets = [2, 0, 0], sizes = [1, 1, 128], strides = [1, 1, 1]} : vector<9x1x128xf32> to vector<1x1x128xf32>
    %21 = vector.shape_cast %20 : vector<1x1x128xf32> to vector<1x128xf32>
    %22 = vector.broadcast %21 : vector<1x128xf32> to vector<4x128xf32>
    %23 = arith.mulf %10, %22 : vector<4x128xf32>
    %24 = arith.addf %19, %23 : vector<4x128xf32>
    %c0_10 = arith.constant 0 : index
    %c0_11 = arith.constant 0 : index
    %c0_12 = arith.constant 0 : index
    %c0_13 = arith.constant 0 : index
    %25 = vector.load %arg5[%c0_10, %c0_11, %c0_12, %c0_13] : memref<3x24x1x128xf32, #tpu.memory_space<vmem>>, vector<1x1x1x128xf32>
    %26 = vector.shape_cast %25 : vector<1x1x1x128xf32> to vector<1x128xf32>
    %27 = vector.broadcast %26 : vector<1x128xf32> to vector<4x128xf32>
    %28 = arith.addf %24, %27 : vector<4x128xf32>
    %c0_14 = arith.constant 0 : index
    %c0_15 = arith.constant 0 : index
    %c0_16 = arith.constant 0 : index
    %c0_17 = arith.constant 0 : index
    %29 = vector.load %arg6[%c0_14, %c0_15, %c0_16, %c0_17] : memref<6x4x24x128xf32, #tpu.memory_space<vmem>>, vector<1x4x1x128xf32>
    %30 = vector.shape_cast %29 : vector<1x4x1x128xf32> to vector<4x128xf32>
    %31 = vector.shape_cast %28 : vector<4x128xf32> to vector<1x4x1x128xf32>
    tpu.vector_store %arg6[%c0_14, %c0_15, %c0_16, %c0_17], %31 {strides = array<i32>} : memref<6x4x24x128xf32, #tpu.memory_space<vmem>>, vector<1x4x1x128xf32>,
    %32 = vector.extract_strided_slice %0 {offsets = [3, 0, 0], sizes = [1, 1, 128], strides = [1, 1, 1]} : vector<9x1x128xf32> to vector<1x1x128xf32>
    %33 = vector.shape_cast %32 : vector<1x1x128xf32> to vector<1x128xf32>
    %34 = vector.broadcast %33 : vector<1x128xf32> to vector<4x128xf32>
    %35 = arith.mulf %4, %34 : vector<4x128xf32>
    %36 = vector.extract_strided_slice %0 {offsets = [4, 0, 0], sizes = [1, 1, 128], strides = [1, 1, 1]} : vector<9x1x128xf32> to vector<1x1x128xf32>
    %37 = vector.shape_cast %36 : vector<1x1x128xf32> to vector<1x128xf32>
    %38 = vector.broadcast %37 : vector<1x128xf32> to vector<4x128xf32>
    %39 = arith.mulf %7, %38 : vector<4x128xf32>
    %40 = arith.addf %35, %39 : vector<4x128xf32>
    %41 = vector.extract_strided_slice %0 {offsets = [5, 0, 0], sizes = [1, 1, 128], strides = [1, 1, 1]} : vector<9x1x128xf32> to vector<1x1x128xf32>
    %42 = vector.shape_cast %41 : vector<1x1x128xf32> to vector<1x128xf32>
    %43 = vector.broadcast %42 : vector<1x128xf32> to vector<4x128xf32>
    %44 = arith.mulf %10, %43 : vector<4x128xf32>
    %45 = arith.addf %40, %44 : vector<4x128xf32>
    %c1_18 = arith.constant 1 : index
    %c0_19 = arith.constant 0 : index
    %c0_20 = arith.constant 0 : index
    %c0_21 = arith.constant 0 : index
    %46 = vector.load %arg5[%c1_18, %c0_19, %c0_20, %c0_21] : memref<3x24x1x128xf32, #tpu.memory_space<vmem>>, vector<1x1x1x128xf32>
    %47 = vector.shape_cast %46 : vector<1x1x1x128xf32> to vector<1x128xf32>
    %48 = vector.broadcast %47 : vector<1x128xf32> to vector<4x128xf32>
    %49 = arith.addf %45, %48 : vector<4x128xf32>
    %c1_22 = arith.constant 1 : index
    %c0_23 = arith.constant 0 : index
    %c0_24 = arith.constant 0 : index
    %c0_25 = arith.constant 0 : index
    %50 = vector.load %arg6[%c1_22, %c0_23, %c0_24, %c0_25] : memref<6x4x24x128xf32, #tpu.memory_space<vmem>>, vector<1x4x1x128xf32>
    %51 = vector.shape_cast %50 : vector<1x4x1x128xf32> to vector<4x128xf32>
    %52 = vector.shape_cast %49 : vector<4x128xf32> to vector<1x4x1x128xf32>
    tpu.vector_store %arg6[%c1_22, %c0_23, %c0_24, %c0_25], %52 {strides = array<i32>} : memref<6x4x24x128xf32, #tpu.memory_space<vmem>>, vector<1x4x1x128xf32>,
    %53 = vector.extract_strided_slice %0 {offsets = [6, 0, 0], sizes = [1, 1, 128], strides = [1, 1, 1]} : vector<9x1x128xf32> to vector<1x1x128xf32>
    %54 = vector.shape_cast %53 : vector<1x1x128xf32> to vector<1x128xf32>
    %55 = vector.broadcast %54 : vector<1x128xf32> to vector<4x128xf32>
    %56 = arith.mulf %4, %55 : vector<4x128xf32>
    %57 = vector.extract_strided_slice %0 {offsets = [7, 0, 0], sizes = [1, 1, 128], strides = [1, 1, 1]} : vector<9x1x128xf32> to vector<1x1x128xf32>
    %58 = vector.shape_cast %57 : vector<1x1x128xf32> to vector<1x128xf32>
    %59 = vector.broadcast %58 : vector<1x128xf32> to vector<4x128xf32>
    %60 = arith.mulf %7, %59 : vector<4x128xf32>
    %61 = arith.addf %56, %60 : vector<4x128xf32>
    %62 = vector.extract_strided_slice %0 {offsets = [8, 0, 0], sizes = [1, 1, 128], strides = [1, 1, 1]} : vector<9x1x128xf32> to vector<1x1x128xf32>
    %63 = vector.shape_cast %62 : vector<1x1x128xf32> to vector<1x128xf32>
    %64 = vector.broadcast %63 : vector<1x128xf32> to vector<4x128xf32>
    %65 = arith.mulf %10, %64 : vector<4x128xf32>
    %66 = arith.addf %61, %65 : vector<4x128xf32>
    %c2_26 = arith.constant 2 : index
    %c0_27 = arith.constant 0 : index
    %c0_28 = arith.constant 0 : index
    %c0_29 = arith.constant 0 : index
    %67 = vector.load %arg5[%c2_26, %c0_27, %c0_28, %c0_29] : memref<3x24x1x128xf32, #tpu.memory_space<vmem>>, vector<1x1x1x128xf32>
    %68 = vector.shape_cast %67 : vector<1x1x1x128xf32> to vector<1x128xf32>
    %69 = vector.broadcast %68 : vector<1x128xf32> to vector<4x128xf32>
    %70 = arith.addf %66, %69 : vector<4x128xf32>
    %c2_30 = arith.constant 2 : index
    %c0_31 = arith.constant 0 : index
    %c0_32 = arith.constant 0 : index
    %c0_33 = arith.constant 0 : index
    %71 = vector.load %arg6[%c2_30, %c0_31, %c0_32, %c0_33] : memref<6x4x24x128xf32, #tpu.memory_space<vmem>>, vector<1x4x1x128xf32>
    %72 = vector.shape_cast %71 : vector<1x4x1x128xf32> to vector<4x128xf32>
    %73 = vector.shape_cast %70 : vector<4x128xf32> to vector<1x4x1x128xf32>
    tpu.vector_store %arg6[%c2_30, %c0_31, %c0_32, %c0_33], %73 {strides = array<i32>} : memref<6x4x24x128xf32, #tpu.memory_space<vmem>>, vector<1x4x1x128xf32>,
    %c3 = arith.constant 3 : index
    %c0_34 = arith.constant 0 : index
    %74 = arith.index_cast %1 : i32 to index
    %c0_35 = arith.constant 0 : index
    %75 = vector.load %arg3[%c3, %c0_34, %74, %c0_35] : memref<6x4x24x128xf32, #tpu.memory_space<vmem>>, vector<1x4x1x128xf32>
    %76 = vector.shape_cast %75 : vector<1x4x1x128xf32> to vector<4x128xf32>
    %c3_36 = arith.constant 3 : index
    %c0_37 = arith.constant 0 : index
    %c0_38 = arith.constant 0 : index
    %c0_39 = arith.constant 0 : index
    %77 = vector.load %arg6[%c3_36, %c0_37, %c0_38, %c0_39] : memref<6x4x24x128xf32, #tpu.memory_space<vmem>>, vector<1x4x1x128xf32>
    %78 = vector.shape_cast %77 : vector<1x4x1x128xf32> to vector<4x128xf32>
    %79 = vector.shape_cast %76 : vector<4x128xf32> to vector<1x4x1x128xf32>
    tpu.vector_store %arg6[%c3_36, %c0_37, %c0_38, %c0_39], %79 {strides = array<i32>} : memref<6x4x24x128xf32, #tpu.memory_space<vmem>>, vector<1x4x1x128xf32>,
    %c4 = arith.constant 4 : index
    %c0_40 = arith.constant 0 : index
    %80 = arith.index_cast %1 : i32 to index
    %c0_41 = arith.constant 0 : index
    %81 = vector.load %arg3[%c4, %c0_40, %80, %c0_41] : memref<6x4x24x128xf32, #tpu.memory_space<vmem>>, vector<1x4x1x128xf32>
    %82 = vector.shape_cast %81 : vector<1x4x1x128xf32> to vector<4x128xf32>
    %c4_42 = arith.constant 4 : index
    %c0_43 = arith.constant 0 : index
    %c0_44 = arith.constant 0 : index
    %c0_45 = arith.constant 0 : index
    %83 = vector.load %arg6[%c4_42, %c0_43, %c0_44, %c0_45] : memref<6x4x24x128xf32, #tpu.memory_space<vmem>>, vector<1x4x1x128xf32>
    %84 = vector.shape_cast %83 : vector<1x4x1x128xf32> to vector<4x128xf32>
    %85 = vector.shape_cast %82 : vector<4x128xf32> to vector<1x4x1x128xf32>
    tpu.vector_store %arg6[%c4_42, %c0_43, %c0_44, %c0_45], %85 {strides = array<i32>} : memref<6x4x24x128xf32, #tpu.memory_space<vmem>>, vector<1x4x1x128xf32>,
    %c5 = arith.constant 5 : index
    %c0_46 = arith.constant 0 : index
    %86 = arith.index_cast %1 : i32 to index
    %c0_47 = arith.constant 0 : index
    %87 = vector.load %arg3[%c5, %c0_46, %86, %c0_47] : memref<6x4x24x128xf32, #tpu.memory_space<vmem>>, vector<1x4x1x128xf32>
    %88 = vector.shape_cast %87 : vector<1x4x1x128xf32> to vector<4x128xf32>
    %c5_48 = arith.constant 5 : index
    %c0_49 = arith.constant 0 : index
    %c0_50 = arith.constant 0 : index
    %c0_51 = arith.constant 0 : index
    %89 = vector.load %arg6[%c5_48, %c0_49, %c0_50, %c0_51] : memref<6x4x24x128xf32, #tpu.memory_space<vmem>>, vector<1x4x1x128xf32>
    %90 = vector.shape_cast %89 : vector<1x4x1x128xf32> to vector<4x128xf32>
    %91 = vector.shape_cast %88 : vector<4x128xf32> to vector<1x4x1x128xf32>
    tpu.vector_store %arg6[%c5_48, %c0_49, %c0_50, %c0_51], %91 {strides = array<i32>} : memref<6x4x24x128xf32, #tpu.memory_space<vmem>>, vector<1x4x1x128xf32>,
    %c1_52 = arith.constant 1 : index
    %92 = memref.load %arg2[%c1_52] : memref<24xi32, #tpu.memory_space<smem>>
    %c0_53 = arith.constant 0 : index
    %c0_54 = arith.constant 0 : index
    %93 = arith.index_cast %92 : i32 to index
    %c0_55 = arith.constant 0 : index
    %94 = vector.load %arg3[%c0_53, %c0_54, %93, %c0_55] : memref<6x4x24x128xf32, #tpu.memory_space<vmem>>, vector<1x4x1x128xf32>
    %95 = vector.shape_cast %94 : vector<1x4x1x128xf32> to vector<4x128xf32>
    %c1_56 = arith.constant 1 : index
    %c0_57 = arith.constant 0 : index
    %96 = arith.index_cast %92 : i32 to index
    %c0_58 = arith.constant 0 : index
    %97 = vector.load %arg3[%c1_56, %c0_57, %96, %c0_58] : memref<6x4x24x128xf32, #tpu.memory_space<vmem>>, vector<1x4x1x128xf32>
    %98 = vector.shape_cast %97 : vector<1x4x1x128xf32> to vector<4x128xf32>
    %c2_59 = arith.constant 2 : index
    %c0_60 = arith.constant 0 : index
    %99 = arith.index_cast %92 : i32 to index
    %c0_61 = arith.constant 0 : index
    %100 = vector.load %arg3[%c2_59, %c0_60, %99, %c0_61] : memref<6x4x24x128xf32, #tpu.memory_space<vmem>>, vector<1x4x1x128xf32>
    %101 = vector.shape_cast %100 : vector<1x4x1x128xf32> to vector<4x128xf32>
    %102 = vector.extract_strided_slice %0 {offsets = [0, 0, 0], sizes = [1, 1, 128], strides = [1, 1, 1]} : vector<9x1x128xf32> to vector<1x1x128xf32>
    %103 = vector.shape_cast %102 : vector<1x1x128xf32> to vector<1x128xf32>
    %104 = vector.broadcast %103 : vector<1x128xf32> to vector<4x128xf32>
    %105 = arith.mulf %95, %104 : vector<4x128xf32>
    %106 = vector.extract_strided_slice %0 {offsets = [1, 0, 0], sizes = [1, 1, 128], strides = [1, 1, 1]} : vector<9x1x128xf32> to vector<1x1x128xf32>
    %107 = vector.shape_cast %106 : vector<1x1x128xf32> to vector<1x128xf32>
    %108 = vector.broadcast %107 : vector<1x128xf32> to vector<4x128xf32>
    %109 = arith.mulf %98, %108 : vector<4x128xf32>
    %110 = arith.addf %105, %109 : vector<4x128xf32>
    %111 = vector.extract_strided_slice %0 {offsets = [2, 0, 0], sizes = [1, 1, 128], strides = [1, 1, 1]} : vector<9x1x128xf32> to vector<1x1x128xf32>
    %112 = vector.shape_cast %111 : vector<1x1x128xf32> to vector<1x128xf32>
    %113 = vector.broadcast %112 : vector<1x128xf32> to vector<4x128xf32>
    %114 = arith.mulf %101, %113 : vector<4x128xf32>
    %115 = arith.addf %110, %114 : vector<4x128xf32>
    %c0_62 = arith.constant 0 : index
    %c1_63 = arith.constant 1 : index
    %c0_64 = arith.constant 0 : index
    %c0_65 = arith.constant 0 : index
    %116 = vector.load %arg5[%c0_62, %c1_63, %c0_64, %c0_65] : memref<3x24x1x128xf32, #tpu.memory_space<vmem>>, vector<1x1x1x128xf32>
    %117 = vector.shape_cast %116 : vector<1x1x1x128xf32> to vector<1x128xf32>
    %118 = vector.broadcast %117 : vector<1x128xf32> to vector<4x128xf32>
    %119 = arith.addf %115, %118 : vector<4x128xf32>
    %c0_66 = arith.constant 0 : index
    %c0_67 = arith.constant 0 : index
    %c1_68 = arith.constant 1 : index
    %c0_69 = arith.constant 0 : index
    %120 = vector.load %arg6[%c0_66, %c0_67, %c1_68, %c0_69] : memref<6x4x24x128xf32, #tpu.memory_space<vmem>>, vector<1x4x1x128xf32>
    %121 = vector.shape_cast %120 : vector<1x4x1x128xf32> to vector<4x128xf32>
    %122 = vector.shape_cast %119 : vector<4x128xf32> to vector<1x4x1x128xf32>
    tpu.vector_store %arg6[%c0_66, %c0_67, %c1_68, %c0_69], %122 {strides = array<i32>} : memref<6x4x24x128xf32, #tpu.memory_space<vmem>>, vector<1x4x1x128xf32>,
    %123 = vector.extract_strided_slice %0 {offsets = [3, 0, 0], sizes = [1, 1, 128], strides = [1, 1, 1]} : vector<9x1x128xf32> to vector<1x1x128xf32>
    %124 = vector.shape_cast %123 : vector<1x1x128xf32> to vector<1x128xf32>
    %125 = vector.broadcast %124 : vector<1x128xf32> to vector<4x128xf32>
    %126 = arith.mulf %95, %125 : vector<4x128xf32>
    %127 = vector.extract_strided_slice %0 {offsets = [4, 0, 0], sizes = [1, 1, 128], strides = [1, 1, 1]} : vector<9x1x128xf32> to vector<1x1x128xf32>
    %128 = vector.shape_cast %127 : vector<1x1x128xf32> to vector<1x128xf32>
    %129 = vector.broadcast %128 : vector<1x128xf32> to vector<4x128xf32>
    %130 = arith.mulf %98, %129 : vector<4x128xf32>
    %131 = arith.addf %126, %130 : vector<4x128xf32>
    %132 = vector.extract_strided_slice %0 {offsets = [5, 0, 0], sizes = [1, 1, 128], strides = [1, 1, 1]} : vector<9x1x128xf32> to vector<1x1x128xf32>
    %133 = vector.shape_cast %132 : vector<1x1x128xf32> to vector<1x128xf32>
    %134 = vector.broadcast %133 : vector<1x128xf32> to vector<4x128xf32>
    %135 = arith.mulf %101, %134 : vector<4x128xf32>
    %136 = arith.addf %131, %135 : vector<4x128xf32>
    %c1_70 = arith.constant 1 : index
    %c1_71 = arith.constant 1 : index
    %c0_72 = arith.constant 0 : index
    %c0_73 = arith.constant 0 : index
    %137 = vector.load %arg5[%c1_70, %c1_71, %c0_72, %c0_73] : memref<3x24x1x128xf32, #tpu.memory_space<vmem>>, vector<1x1x1x128xf32>
    %138 = vector.shape_cast %137 : vector<1x1x1x128xf32> to vector<1x128xf32>
    %139 = vector.broadcast %138 : vector<1x128xf32> to vector<4x128xf32>
    %140 = arith.addf %136, %139 : vector<4x128xf32>
    %c1_74 = arith.constant 1 : index
    %c0_75 = arith.constant 0 : index
    %c1_76 = arith.constant 1 : index
    %c0_77 = arith.constant 0 : index
    %141 = vector.load %arg6[%c1_74, %c0_75, %c1_76, %c0_77] : memref<6x4x24x128xf32, #tpu.memory_space<vmem>>, vector<1x4x1x128xf32>
    %142 = vector.shape_cast %141 : vector<1x4x1x128xf32> to vector<4x128xf32>
    %143 = vector.shape_cast %140 : vector<4x128xf32> to vector<1x4x1x128xf32>
    tpu.vector_store %arg6[%c1_74, %c0_75, %c1_76, %c0_77], %143 {strides = array<i32>} : memref<6x4x24x128xf32, #tpu.memory_space<vmem>>, vector<1x4x1x128xf32>,
    %144 = vector.extract_strided_slice %0 {offsets = [6, 0, 0], sizes = [1, 1, 128], strides = [1, 1, 1]} : vector<9x1x128xf32> to vector<1x1x128xf32>
    %145 = vector.shape_cast %144 : vector<1x1x128xf32> to vector<1x128xf32>
    %146 = vector.broadcast %145 : vector<1x128xf32> to vector<4x128xf32>
    %147 = arith.mulf %95, %146 : vector<4x128xf32>
    %148 = vector.extract_strided_slice %0 {offsets = [7, 0, 0], sizes = [1, 1, 128], strides = [1, 1, 1]} : vector<9x1x128xf32> to vector<1x1x128xf32>
    %149 = vector.shape_cast %148 : vector<1x1x128xf32> to vector<1x128xf32>
    %150 = vector.broadcast %149 : vector<1x128xf32> to vector<4x128xf32>
    %151 = arith.mulf %98, %150 : vector<4x128xf32>
    %152 = arith.addf %147, %151 : vector<4x128xf32>
    %153 = vector.extract_strided_slice %0 {offsets = [8, 0, 0], sizes = [1, 1, 128], strides = [1, 1, 1]} : vector<9x1x128xf32> to vector<1x1x128xf32>
    %154 = vector.shape_cast %153 : vector<1x1x128xf32> to vector<1x128xf32>
    %155 = vector.broadcast %154 : vector<1x128xf32> to vector<4x128xf32>
    %156 = arith.mulf %101, %155 : vector<4x128xf32>
    %157 = arith.addf %152, %156 : vector<4x128xf32>
    %c2_78 = arith.constant 2 : index
    %c1_79 = arith.constant 1 : index
    %c0_80 = arith.constant 0 : index
    %c0_81 = arith.constant 0 : index
    %158 = vector.load %arg5[%c2_78, %c1_79, %c0_80, %c0_81] : memref<3x24x1x128xf32, #tpu.memory_space<vmem>>, vector<1x1x1x128xf32>
    %159 = vector.shape_cast %158 : vector<1x1x1x128xf32> to vector<1x128xf32>
    %160 = vector.broadcast %159 : vector<1x128xf32> to vector<4x128xf32>
    %161 = arith.addf %157, %160 : vector<4x128xf32>
    %c2_82 = arith.constant 2 : index
    %c0_83 = arith.constant 0 : index
    %c1_84 = arith.constant 1 : index
    %c0_85 = arith.constant 0 : index
    %162 = vector.load %arg6[%c2_82, %c0_83, %c1_84, %c0_85] : memref<6x4x24x128xf32, #tpu.memory_space<vmem>>, vector<1x4x1x128xf32>
    %163 = vector.shape_cast %162 : vector<1x4x1x128xf32> to vector<4x128xf32>
    %164 = vector.shape_cast %161 : vector<4x128xf32> to vector<1x4x1x128xf32>
    tpu.vector_store %arg6[%c2_82, %c0_83, %c1_84, %c0_85], %164 {strides = array<i32>} : memref<6x4x24x128xf32, #tpu.memory_space<vmem>>, vector<1x4x1x128xf32>,
    %c3_86 = arith.constant 3 : index
    %c0_87 = arith.constant 0 : index
    %165 = arith.index_cast %92 : i32 to index
    %c0_88 = arith.constant 0 : index
    %166 = vector.load %arg3[%c3_86, %c0_87, %165, %c0_88] : memref<6x4x24x128xf32, #tpu.memory_space<vmem>>, vector<1x4x1x128xf32>
    %167 = vector.shape_cast %166 : vector<1x4x1x128xf32> to vector<4x128xf32>
    %c3_89 = arith.constant 3 : index
    %c0_90 = arith.constant 0 : index
    %c1_91 = arith.constant 1 : index
    %c0_92 = arith.constant 0 : index
    %168 = vector.load %arg6[%c3_89, %c0_90, %c1_91, %c0_92] : memref<6x4x24x128xf32, #tpu.memory_space<vmem>>, vector<1x4x1x128xf32>
    %169 = vector.shape_cast %168 : vector<1x4x1x128xf32> to vector<4x128xf32>
    %170 = vector.shape_cast %167 : vector<4x128xf32> to vector<1x4x1x128xf32>
    tpu.vector_store %arg6[%c3_89, %c0_90, %c1_91, %c0_92], %170 {strides = array<i32>} : memref<6x4x24x128xf32, #tpu.memory_space<vmem>>, vector<1x4x1x128xf32>,
    %c4_93 = arith.constant 4 : index
    %c0_94 = arith.constant 0 : index
    %171 = arith.index_cast %92 : i32 to index
    %c0_95 = arith.constant 0 : index
    %172 = vector.load %arg3[%c4_93, %c0_94, %171, %c0_95] : memref<6x4x24x128xf32, #tpu.memory_space<vmem>>, vector<1x4x1x128xf32>
    %173 = vector.shape_cast %172 : vector<1x4x1x128xf32> to vector<4x128xf32>
    %c4_96 = arith.constant 4 : index
    %c0_97 = arith.constant 0 : index
    %c1_98 = arith.constant 1 : index
    %c0_99 = arith.constant 0 : index
    %174 = vector.load %arg6[%c4_96, %c0_97, %c1_98, %c0_99] : memref<6x4x24x128xf32, #tpu.memory_space<vmem>>, vector<1x4x1x128xf32>
    %175 = vector.shape_cast %174 : vector<1x4x1x128xf32> to vector<4x128xf32>
    %176 = vector.shape_cast %173 : vector<4x128xf32> to vector<1x4x1x128xf32>
    tpu.vector_store %arg6[%c4_96, %c0_97, %c1_98, %c0_99], %176 {strides = array<i32>} : memref<6x4x24x128xf32, #tpu.memory_space<vmem>>, vector<1x4x1x128xf32>,
    %c5_100 = arith.constant 5 : index
    %c0_101 = arith.constant 0 : index
    %177 = arith.index_cast %92 : i32 to index
    %c0_102 = arith.constant 0 : index
    %178 = vector.load %arg3[%c5_100, %c0_101, %177, %c0_102] : memref<6x4x24x128xf32, #tpu.memory_space<vmem>>, vector<1x4x1x128xf32>
    %179 = vector.shape_cast %178 : vector<1x4x1x128xf32> to vector<4x128xf32>
    %c5_103 = arith.constant 5 : index
    %c0_104 = arith.constant 0 : index
    %c1_105 = arith.constant 1 : index
    %c0_106 = arith.constant 0 : index
    %180 = vector.load %arg6[%c5_103, %c0_104, %c1_105, %c0_106] : memref<6x4x24x128xf32, #tpu.memory_space<vmem>>, vector<1x4x1x128xf32>
    %181 = vector.shape_cast %180 : vector<1x4x1x128xf32> to vector<4x128xf32>
    %182 = vector.shape_cast %179 : vector<4x128xf32> to vector<1x4x1x128xf32>
    tpu.vector_store %arg6[%c5_103, %c0_104, %c1_105, %c0_106], %182 {strides = array<i32>} : memref<6x4x24x128xf32, #tpu.memory_space<vmem>>, vector<1x4x1x128xf32>,
    %c2_107 = arith.constant 2 : index
    %183 = memref.load %arg2[%c2_107] : memref<24xi32, #tpu.memory_space<smem>>
    %c0_108 = arith.constant 0 : index
    %c0_109 = arith.constant 0 : index
    %184 = arith.index_cast %183 : i32 to index
    %c0_110 = arith.constant 0 : index
    %185 = vector.load %arg3[%c0_108, %c0_109, %184, %c0_110] : memref<6x4x24x128xf32, #tpu.memory_space<vmem>>, vector<1x4x1x128xf32>
    %186 = vector.shape_cast %185 : vector<1x4x1x128xf32> to vector<4x128xf32>
    %c1_111 = arith.constant 1 : index
    %c0_112 = arith.constant 0 : index
    %187 = arith.index_cast %183 : i32 to index
    %c0_113 = arith.constant 0 : index
    %188 = vector.load %arg3[%c1_111, %c0_112, %187, %c0_113] : memref<6x4x24x128xf32, #tpu.memory_space<vmem>>, vector<1x4x1x128xf32>
    %189 = vector.shape_cast %188 : vector<1x4x1x128xf32> to vector<4x128xf32>
    %c2_114 = arith.constant 2 : index
    %c0_115 = arith.constant 0 : index
    %190 = arith.index_cast %183 : i32 to index
    %c0_116 = arith.constant 0 : index
    %191 = vector.load %arg3[%c2_114, %c0_115, %190, %c0_116] : memref<6x4x24x128xf32, #tpu.memory_space<vmem>>, vector<1x4x1x128xf32>
    %192 = vector.shape_cast %191 : vector<1x4x1x128xf32> to vector<4x128xf32>
    %193 = vector.extract_strided_slice %0 {offsets = [0, 0, 0], sizes = [1, 1, 128], strides = [1, 1, 1]} : vector<9x1x128xf32> to vector<1x1x128xf32>
    %194 = vector.shape_cast %193 : vector<1x1x128xf32> to vector<1x128xf32>
    %195 = vector.broadcast %194 : vector<1x128xf32> to vector<4x128xf32>
    %196 = arith.mulf %186, %195 : vector<4x128xf32>
    %197 = vector.extract_strided_slice %0 {offsets = [1, 0, 0], sizes = [1, 1, 128], strides = [1, 1, 1]} : vector<9x1x128xf32> to vector<1x1x128xf32>
    %198 = vector.shape_cast %197 : vector<1x1x128xf32> to vector<1x128xf32>
    %199 = vector.broadcast %198 : vector<1x128xf32> to vector<4x128xf32>
    %200 = arith.mulf %189, %199 : vector<4x128xf32>
    %201 = arith.addf %196, %200 : vector<4x128xf32>
    %202 = vector.extract_strided_slice %0 {offsets = [2, 0, 0], sizes = [1, 1, 128], strides = [1, 1, 1]} : vector<9x1x128xf32> to vector<1x1x128xf32>
    %203 = vector.shape_cast %202 : vector<1x1x128xf32> to vector<1x128xf32>
    %204 = vector.broadcast %203 : vector<1x128xf32> to vector<4x128xf32>
    %205 = arith.mulf %192, %204 : vector<4x128xf32>
    %206 = arith.addf %201, %205 : vector<4x128xf32>
    %c0_117 = arith.constant 0 : index
    %c2_118 = arith.constant 2 : index
    %c0_119 = arith.constant 0 : index
    %c0_120 = arith.constant 0 : index
    %207 = vector.load %arg5[%c0_117, %c2_118, %c0_119, %c0_120] : memref<3x24x1x128xf32, #tpu.memory_space<vmem>>, vector<1x1x1x128xf32>
    %208 = vector.shape_cast %207 : vector<1x1x1x128xf32> to vector<1x128xf32>
    %209 = vector.broadcast %208 : vector<1x128xf32> to vector<4x128xf32>
    %210 = arith.addf %206, %209 : vector<4x128xf32>
    %c0_121 = arith.constant 0 : index
    %c0_122 = arith.constant 0 : index
    %c2_123 = arith.constant 2 : index
    %c0_124 = arith.constant 0 : index
    %211 = vector.load %arg6[%c0_121, %c0_122, %c2_123, %c0_124] : memref<6x4x24x128xf32, #tpu.memory_space<vmem>>, vector<1x4x1x128xf32>
    %212 = vector.shape_cast %211 : vector<1x4x1x128xf32> to vector<4x128xf32>
    %213 = vector.shape_cast %210 : vector<4x128xf32> to vector<1x4x1x128xf32>
    tpu.vector_store %arg6[%c0_121, %c0_122, %c2_123, %c0_124], %213 {strides = array<i32>} : memref<6x4x24x128xf32, #tpu.memory_space<vmem>>, vector<1x4x1x128xf32>,
    %214 = vector.extract_strided_slice %0 {offsets = [3, 0, 0], sizes = [1, 1, 128], strides = [1, 1, 1]} : vector<9x1x128xf32> to vector<1x1x128xf32>
    %215 = vector.shape_cast %214 : vector<1x1x128xf32> to vector<1x128xf32>
    %216 = vector.broadcast %215 : vector<1x128xf32> to vector<4x128xf32>
    %217 = arith.mulf %186, %216 : vector<4x128xf32>
    %218 = vector.extract_strided_slice %0 {offsets = [4, 0, 0], sizes = [1, 1, 128], strides = [1, 1, 1]} : vector<9x1x128xf32> to vector<1x1x128xf32>
    %219 = vector.shape_cast %218 : vector<1x1x128xf32> to vector<1x128xf32>
    %220 = vector.broadcast %219 : vector<1x128xf32> to vector<4x128xf32>
    %221 = arith.mulf %189, %220 : vector<4x128xf32>
    %222 = arith.addf %217, %221 : vector<4x128xf32>
    %223 = vector.extract_strided_slice %0 {offsets = [5, 0, 0], sizes = [1, 1, 128], strides = [1, 1, 1]} : vector<9x1x128xf32> to vector<1x1x128xf32>
    %224 = vector.shape_cast %223 : vector<1x1x128xf32> to vector<1x128xf32>
    %225 = vector.broadcast %224 : vector<1x128xf32> to vector<4x128xf32>
    %226 = arith.mulf %192, %225 : vector<4x128xf32>
    %227 = arith.addf %222, %226 : vector<4x128xf32>
    %c1_125 = arith.constant 1 : index
    %c2_126 = arith.constant 2 : index
    %c0_127 = arith.constant 0 : index
    %c0_128 = arith.constant 0 : index
    %228 = vector.load %arg5[%c1_125, %c2_126, %c0_127, %c0_128] : memref<3x24x1x128xf32, #tpu.memory_space<vmem>>, vector<1x1x1x128xf32>
    %229 = vector.shape_cast %228 : vector<1x1x1x128xf32> to vector<1x128xf32>
    %230 = vector.broadcast %229 : vector<1x128xf32> to vector<4x128xf32>
    %231 = arith.addf %227, %230 : vector<4x128xf32>
    %c1_129 = arith.constant 1 : index
    %c0_130 = arith.constant 0 : index
    %c2_131 = arith.constant 2 : index
    %c0_132 = arith.constant 0 : index
    %232 = vector.load %arg6[%c1_129, %c0_130, %c2_131, %c0_132] : memref<6x4x24x128xf32, #tpu.memory_space<vmem>>, vector<1x4x1x128xf32>
    %233 = vector.shape_cast %232 : vector<1x4x1x128xf32> to vector<4x128xf32>
    %234 = vector.shape_cast %231 : vector<4x128xf32> to vector<1x4x1x128xf32>
    tpu.vector_store %arg6[%c1_129, %c0_130, %c2_131, %c0_132], %234 {strides = array<i32>} : memref<6x4x24x128xf32, #tpu.memory_space<vmem>>, vector<1x4x1x128xf32>,
    %235 = vector.extract_strided_slice %0 {offsets = [6, 0, 0], sizes = [1, 1, 128], strides = [1, 1, 1]} : vector<9x1x128xf32> to vector<1x1x128xf32>
    %236 = vector.shape_cast %235 : vector<1x1x128xf32> to vector<1x128xf32>
    %237 = vector.broadcast %236 : vector<1x128xf32> to vector<4x128xf32>
    %238 = arith.mulf %186, %237 : vector<4x128xf32>
    %239 = vector.extract_strided_slice %0 {offsets = [7, 0, 0], sizes = [1, 1, 128], strides = [1, 1, 1]} : vector<9x1x128xf32> to vector<1x1x128xf32>
    %240 = vector.shape_cast %239 : vector<1x1x128xf32> to vector<1x128xf32>
    %241 = vector.broadcast %240 : vector<1x128xf32> to vector<4x128xf32>
    %242 = arith.mulf %189, %241 : vector<4x128xf32>
    %243 = arith.addf %238, %242 : vector<4x128xf32>
    %244 = vector.extract_strided_slice %0 {offsets = [8, 0, 0], sizes = [1, 1, 128], strides = [1, 1, 1]} : vector<9x1x128xf32> to vector<1x1x128xf32>
    %245 = vector.shape_cast %244 : vector<1x1x128xf32> to vector<1x128xf32>
    %246 = vector.broadcast %245 : vector<1x128xf32> to vector<4x128xf32>
    %247 = arith.mulf %192, %246 : vector<4x128xf32>
    %248 = arith.addf %243, %247 : vector<4x128xf32>
    %c2_133 = arith.constant 2 : index
    %c2_134 = arith.constant 2 : index
    %c0_135 = arith.constant 0 : index
    %c0_136 = arith.constant 0 : index
    %249 = vector.load %arg5[%c2_133, %c2_134, %c0_135, %c0_136] : memref<3x24x1x128xf32, #tpu.memory_space<vmem>>, vector<1x1x1x128xf32>
    %250 = vector.shape_cast %249 : vector<1x1x1x128xf32> to vector<1x128xf32>
    %251 = vector.broadcast %250 : vector<1x128xf32> to vector<4x128xf32>
    %252 = arith.addf %248, %251 : vector<4x128xf32>
    %c2_137 = arith.constant 2 : index
    %c0_138 = arith.constant 0 : index
    %c2_139 = arith.constant 2 : index
    %c0_140 = arith.constant 0 : index
    %253 = vector.load %arg6[%c2_137, %c0_138, %c2_139, %c0_140] : memref<6x4x24x128xf32, #tpu.memory_space<vmem>>, vector<1x4x1x128xf32>
    %254 = vector.shape_cast %253 : vector<1x4x1x128xf32> to vector<4x128xf32>
    %255 = vector.shape_cast %252 : vector<4x128xf32> to vector<1x4x1x128xf32>
    tpu.vector_store %arg6[%c2_137, %c0_138, %c2_139, %c0_140], %255 {strides = array<i32>} : memref<6x4x24x128xf32, #tpu.memory_space<vmem>>, vector<1x4x1x128xf32>,
    %c3_141 = arith.constant 3 : index
    %c0_142 = arith.constant 0 : index
    %256 = arith.index_cast %183 : i32 to index
    %c0_143 = arith.constant 0 : index
    %257 = vector.load %arg3[%c3_141, %c0_142, %256, %c0_143] : memref<6x4x24x128xf32, #tpu.memory_space<vmem>>, vector<1x4x1x128xf32>
    %258 = vector.shape_cast %257 : vector<1x4x1x128xf32> to vector<4x128xf32>
    %c3_144 = arith.constant 3 : index
    %c0_145 = arith.constant 0 : index
    %c2_146 = arith.constant 2 : index
    %c0_147 = arith.constant 0 : index
    %259 = vector.load %arg6[%c3_144, %c0_145, %c2_146, %c0_147] : memref<6x4x24x128xf32, #tpu.memory_space<vmem>>, vector<1x4x1x128xf32>
    %260 = vector.shape_cast %259 : vector<1x4x1x128xf32> to vector<4x128xf32>
    %261 = vector.shape_cast %258 : vector<4x128xf32> to vector<1x4x1x128xf32>
    tpu.vector_store %arg6[%c3_144, %c0_145, %c2_146, %c0_147], %261 {strides = array<i32>} : memref<6x4x24x128xf32, #tpu.memory_space<vmem>>, vector<1x4x1x128xf32>,
    %c4_148 = arith.constant 4 : index
    %c0_149 = arith.constant 0 : index
    %262 = arith.index_cast %183 : i32 to index
    %c0_150 = arith.constant 0 : index
    %263 = vector.load %arg3[%c4_148, %c0_149, %262, %c0_150] : memref<6x4x24x128xf32, #tpu.memory_space<vmem>>, vector<1x4x1x128xf32>
    %264 = vector.shape_cast %263 : vector<1x4x1x128xf32> to vector<4x128xf32>
    %c4_151 = arith.constant 4 : index
    %c0_152 = arith.constant 0 : index
    %c2_153 = arith.constant 2 : index
    %c0_154 = arith.constant 0 : index
    %265 = vector.load %arg6[%c4_151, %c0_152, %c2_153, %c0_154] : memref<6x4x24x128xf32, #tpu.memory_space<vmem>>, vector<1x4x1x128xf32>
    %266 = vector.shape_cast %265 : vector<1x4x1x128xf32> to vector<4x128xf32>
    %267 = vector.shape_cast %264 : vector<4x128xf32> to vector<1x4x1x128xf32>
    tpu.vector_store %arg6[%c4_151, %c0_152, %c2_153, %c0_154], %267 {strides = array<i32>} : memref<6x4x24x128xf32, #tpu.memory_space<vmem>>, vector<1x4x1x128xf32>,
    %c5_155 = arith.constant 5 : index
    %c0_156 = arith.constant 0 : index
    %268 = arith.index_cast %183 : i32 to index
    %c0_157 = arith.constant 0 : index
    %269 = vector.load %arg3[%c5_155, %c0_156, %268, %c0_157] : memref<6x4x24x128xf32, #tpu.memory_space<vmem>>, vector<1x4x1x128xf32>
    %270 = vector.shape_cast %269 : vector<1x4x1x128xf32> to vector<4x128xf32>
    %c5_158 = arith.constant 5 : index
    %c0_159 = arith.constant 0 : index
    %c2_160 = arith.constant 2 : index
    %c0_161 = arith.constant 0 : index
    %271 = vector.load %arg6[%c5_158, %c0_159, %c2_160, %c0_161] : memref<6x4x24x128xf32, #tpu.memory_space<vmem>>, vector<1x4x1x128xf32>
    %272 = vector.shape_cast %271 : vector<1x4x1x128xf32> to vector<4x128xf32>
    %273 = vector.shape_cast %270 : vector<4x128xf32> to vector<1x4x1x128xf32>
    tpu.vector_store %arg6[%c5_158, %c0_159, %c2_160, %c0_161], %273 {strides = array<i32>} : memref<6x4x24x128xf32, #tpu.memory_space<vmem>>, vector<1x4x1x128xf32>,
    %c3_162 = arith.constant 3 : index
    %274 = memref.load %arg2[%c3_162] : memref<24xi32, #tpu.memory_space<smem>>
    %c0_163 = arith.constant 0 : index
    %c0_164 = arith.constant 0 : index
    %275 = arith.index_cast %274 : i32 to index
    %c0_165 = arith.constant 0 : index
    %276 = vector.load %arg3[%c0_163, %c0_164, %275, %c0_165] : memref<6x4x24x128xf32, #tpu.memory_space<vmem>>, vector<1x4x1x128xf32>
    %277 = vector.shape_cast %276 : vector<1x4x1x128xf32> to vector<4x128xf32>
    %c1_166 = arith.constant 1 : index
    %c0_167 = arith.constant 0 : index
    %278 = arith.index_cast %274 : i32 to index
    %c0_168 = arith.constant 0 : index
    %279 = vector.load %arg3[%c1_166, %c0_167, %278, %c0_168] : memref<6x4x24x128xf32, #tpu.memory_space<vmem>>, vector<1x4x1x128xf32>
    %280 = vector.shape_cast %279 : vector<1x4x1x128xf32> to vector<4x128xf32>
    %c2_169 = arith.constant 2 : index
    %c0_170 = arith.constant 0 : index
    %281 = arith.index_cast %274 : i32 to index
    %c0_171 = arith.constant 0 : index
    %282 = vector.load %arg3[%c2_169, %c0_170, %281, %c0_171] : memref<6x4x24x128xf32, #tpu.memory_space<vmem>>, vector<1x4x1x128xf32>
    %283 = vector.shape_cast %282 : vector<1x4x1x128xf32> to vector<4x128xf32>
    %284 = vector.extract_strided_slice %0 {offsets = [0, 0, 0], sizes = [1, 1, 128], strides = [1, 1, 1]} : vector<9x1x128xf32> to vector<1x1x128xf32>
    %285 = vector.shape_cast %284 : vector<1x1x128xf32> to vector<1x128xf32>
    %286 = vector.broadcast %285 : vector<1x128xf32> to vector<4x128xf32>
    %287 = arith.mulf %277, %286 : vector<4x128xf32>
    %288 = vector.extract_strided_slice %0 {offsets = [1, 0, 0], sizes = [1, 1, 128], strides = [1, 1, 1]} : vector<9x1x128xf32> to vector<1x1x128xf32>
    %289 = vector.shape_cast %288 : vector<1x1x128xf32> to vector<1x128xf32>
    %290 = vector.broadcast %289 : vector<1x128xf32> to vector<4x128xf32>
    %291 = arith.mulf %280, %290 : vector<4x128xf32>
    %292 = arith.addf %287, %291 : vector<4x128xf32>
    %293 = vector.extract_strided_slice %0 {offsets = [2, 0, 0], sizes = [1, 1, 128], strides = [1, 1, 1]} : vector<9x1x128xf32> to vector<1x1x128xf32>
    %294 = vector.shape_cast %293 : vector<1x1x128xf32> to vector<1x128xf32>
    %295 = vector.broadcast %294 : vector<1x128xf32> to vector<4x128xf32>
    %296 = arith.mulf %283, %295 : vector<4x128xf32>
    %297 = arith.addf %292, %296 : vector<4x128xf32>
    %c0_172 = arith.constant 0 : index
    %c3_173 = arith.constant 3 : index
    %c0_174 = arith.constant 0 : index
    %c0_175 = arith.constant 0 : index
    %298 = vector.load %arg5[%c0_172, %c3_173, %c0_174, %c0_175] : memref<3x24x1x128xf32, #tpu.memory_space<vmem>>, vector<1x1x1x128xf32>
    %299 = vector.shape_cast %298 : vector<1x1x1x128xf32> to vector<1x128xf32>
    %300 = vector.broadcast %299 : vector<1x128xf32> to vector<4x128xf32>
    %301 = arith.addf %297, %300 : vector<4x128xf32>
    %c0_176 = arith.constant 0 : index
    %c0_177 = arith.constant 0 : index
    %c3_178 = arith.constant 3 : index
    %c0_179 = arith.constant 0 : index
    %302 = vector.load %arg6[%c0_176, %c0_177, %c3_178, %c0_179] : memref<6x4x24x128xf32, #tpu.memory_space<vmem>>, vector<1x4x1x128xf32>
    %303 = vector.shape_cast %302 : vector<1x4x1x128xf32> to vector<4x128xf32>
    %304 = vector.shape_cast %301 : vector<4x128xf32> to vector<1x4x1x128xf32>
    tpu.vector_store %arg6[%c0_176, %c0_177, %c3_178, %c0_179], %304 {strides = array<i32>} : memref<6x4x24x128xf32, #tpu.memory_space<vmem>>, vector<1x4x1x128xf32>,
    %305 = vector.extract_strided_slice %0 {offsets = [3, 0, 0], sizes = [1, 1, 128], strides = [1, 1, 1]} : vector<9x1x128xf32> to vector<1x1x128xf32>
    %306 = vector.shape_cast %305 : vector<1x1x128xf32> to vector<1x128xf32>
    %307 = vector.broadcast %306 : vector<1x128xf32> to vector<4x128xf32>
    %308 = arith.mulf %277, %307 : vector<4x128xf32>
    %309 = vector.extract_strided_slice %0 {offsets = [4, 0, 0], sizes = [1, 1, 128], strides = [1, 1, 1]} : vector<9x1x128xf32> to vector<1x1x128xf32>
    %310 = vector.shape_cast %309 : vector<1x1x128xf32> to vector<1x128xf32>
    %311 = vector.broadcast %310 : vector<1x128xf32> to vector<4x128xf32>
    %312 = arith.mulf %280, %311 : vector<4x128xf32>
    %313 = arith.addf %308, %312 : vector<4x128xf32>
    %314 = vector.extract_strided_slice %0 {offsets = [5, 0, 0], sizes = [1, 1, 128], strides = [1, 1, 1]} : vector<9x1x128xf32> to vector<1x1x128xf32>
    %315 = vector.shape_cast %314 : vector<1x1x128xf32> to vector<1x128xf32>
    %316 = vector.broadcast %315 : vector<1x128xf32> to vector<4x128xf32>
    %317 = arith.mulf %283, %316 : vector<4x128xf32>
    %318 = arith.addf %313, %317 : vector<4x128xf32>
    %c1_180 = arith.constant 1 : index
    %c3_181 = arith.constant 3 : index
    %c0_182 = arith.constant 0 : index
    %c0_183 = arith.constant 0 : index
    %319 = vector.load %arg5[%c1_180, %c3_181, %c0_182, %c0_183] : memref<3x24x1x128xf32, #tpu.memory_space<vmem>>, vector<1x1x1x128xf32>
    %320 = vector.shape_cast %319 : vector<1x1x1x128xf32> to vector<1x128xf32>
    %321 = vector.broadcast %320 : vector<1x128xf32> to vector<4x128xf32>
    %322 = arith.addf %318, %321 : vector<4x128xf32>
    %c1_184 = arith.constant 1 : index
    %c0_185 = arith.constant 0 : index
    %c3_186 = arith.constant 3 : index
    %c0_187 = arith.constant 0 : index
    %323 = vector.load %arg6[%c1_184, %c0_185, %c3_186, %c0_187] : memref<6x4x24x128xf32, #tpu.memory_space<vmem>>, vector<1x4x1x128xf32>
    %324 = vector.shape_cast %323 : vector<1x4x1x128xf32> to vector<4x128xf32>
    %325 = vector.shape_cast %322 : vector<4x128xf32> to vector<1x4x1x128xf32>
    tpu.vector_store %arg6[%c1_184, %c0_185, %c3_186, %c0_187], %325 {strides = array<i32>} : memref<6x4x24x128xf32, #tpu.memory_space<vmem>>, vector<1x4x1x128xf32>,
    %326 = vector.extract_strided_slice %0 {offsets = [6, 0, 0], sizes = [1, 1, 128], strides = [1, 1, 1]} : vector<9x1x128xf32> to vector<1x1x128xf32>
    %327 = vector.shape_cast %326 : vector<1x1x128xf32> to vector<1x128xf32>
    %328 = vector.broadcast %327 : vector<1x128xf32> to vector<4x128xf32>
    %329 = arith.mulf %277, %328 : vector<4x128xf32>
    %330 = vector.extract_strided_slice %0 {offsets = [7, 0, 0], sizes = [1, 1, 128], strides = [1, 1, 1]} : vector<9x1x128xf32> to vector<1x1x128xf32>
    %331 = vector.shape_cast %330 : vector<1x1x128xf32> to vector<1x128xf32>
    %332 = vector.broadcast %331 : vector<1x128xf32> to vector<4x128xf32>
    %333 = arith.mulf %280, %332 : vector<4x128xf32>
    %334 = arith.addf %329, %333 : vector<4x128xf32>
    %335 = vector.extract_strided_slice %0 {offsets = [8, 0, 0], sizes = [1, 1, 128], strides = [1, 1, 1]} : vector<9x1x128xf32> to vector<1x1x128xf32>
    %336 = vector.shape_cast %335 : vector<1x1x128xf32> to vector<1x128xf32>
    %337 = vector.broadcast %336 : vector<1x128xf32> to vector<4x128xf32>
    %338 = arith.mulf %283, %337 : vector<4x128xf32>
    %339 = arith.addf %334, %338 : vector<4x128xf32>
    %c2_188 = arith.constant 2 : index
    %c3_189 = arith.constant 3 : index
    %c0_190 = arith.constant 0 : index
    %c0_191 = arith.constant 0 : index
    %340 = vector.load %arg5[%c2_188, %c3_189, %c0_190, %c0_191] : memref<3x24x1x128xf32, #tpu.memory_space<vmem>>, vector<1x1x1x128xf32>
    %341 = vector.shape_cast %340 : vector<1x1x1x128xf32> to vector<1x128xf32>
    %342 = vector.broadcast %341 : vector<1x128xf32> to vector<4x128xf32>
    %343 = arith.addf %339, %342 : vector<4x128xf32>
    %c2_192 = arith.constant 2 : index
    %c0_193 = arith.constant 0 : index
    %c3_194 = arith.constant 3 : index
    %c0_195 = arith.constant 0 : index
    %344 = vector.load %arg6[%c2_192, %c0_193, %c3_194, %c0_195] : memref<6x4x24x128xf32, #tpu.memory_space<vmem>>, vector<1x4x1x128xf32>
    %345 = vector.shape_cast %344 : vector<1x4x1x128xf32> to vector<4x128xf32>
    %346 = vector.shape_cast %343 : vector<4x128xf32> to vector<1x4x1x128xf32>
    tpu.vector_store %arg6[%c2_192, %c0_193, %c3_194, %c0_195], %346 {strides = array<i32>} : memref<6x4x24x128xf32, #tpu.memory_space<vmem>>, vector<1x4x1x128xf32>,
    %c3_196 = arith.constant 3 : index
    %c0_197 = arith.constant 0 : index
    %347 = arith.index_cast %274 : i32 to index
    %c0_198 = arith.constant 0 : index
    %348 = vector.load %arg3[%c3_196, %c0_197, %347, %c0_198] : memref<6x4x24x128xf32, #tpu.memory_space<vmem>>, vector<1x4x1x128xf32>
    %349 = vector.shape_cast %348 : vector<1x4x1x128xf32> to vector<4x128xf32>
    %c3_199 = arith.constant 3 : index
    %c0_200 = arith.constant 0 : index
    %c3_201 = arith.constant 3 : index
    %c0_202 = arith.constant 0 : index
    %350 = vector.load %arg6[%c3_199, %c0_200, %c3_201, %c0_202] : memref<6x4x24x128xf32, #tpu.memory_space<vmem>>, vector<1x4x1x128xf32>
    %351 = vector.shape_cast %350 : vector<1x4x1x128xf32> to vector<4x128xf32>
    %352 = vector.shape_cast %349 : vector<4x128xf32> to vector<1x4x1x128xf32>
    tpu.vector_store %arg6[%c3_199, %c0_200, %c3_201, %c0_202], %352 {strides = array<i32>} : memref<6x4x24x128xf32, #tpu.memory_space<vmem>>, vector<1x4x1x128xf32>,
    %c4_203 = arith.constant 4 : index
    %c0_204 = arith.constant 0 : index
    %353 = arith.index_cast %274 : i32 to index
    %c0_205 = arith.constant 0 : index
    %354 = vector.load %arg3[%c4_203, %c0_204, %353, %c0_205] : memref<6x4x24x128xf32, #tpu.memory_space<vmem>>, vector<1x4x1x128xf32>
    %355 = vector.shape_cast %354 : vector<1x4x1x128xf32> to vector<4x128xf32>
    %c4_206 = arith.constant 4 : index
    %c0_207 = arith.constant 0 : index
    %c3_208 = arith.constant 3 : index
    %c0_209 = arith.constant 0 : index
    %356 = vector.load %arg6[%c4_206, %c0_207, %c3_208, %c0_209] : memref<6x4x24x128xf32, #tpu.memory_space<vmem>>, vector<1x4x1x128xf32>
    %357 = vector.shape_cast %356 : vector<1x4x1x128xf32> to vector<4x128xf32>
    %358 = vector.shape_cast %355 : vector<4x128xf32> to vector<1x4x1x128xf32>
    tpu.vector_store %arg6[%c4_206, %c0_207, %c3_208, %c0_209], %358 {strides = array<i32>} : memref<6x4x24x128xf32, #tpu.memory_space<vmem>>, vector<1x4x1x128xf32>,
    %c5_210 = arith.constant 5 : index
    %c0_211 = arith.constant 0 : index
    %359 = arith.index_cast %274 : i32 to index
    %c0_212 = arith.constant 0 : index
    %360 = vector.load %arg3[%c5_210, %c0_211, %359, %c0_212] : memref<6x4x24x128xf32, #tpu.memory_space<vmem>>, vector<1x4x1x128xf32>
    %361 = vector.shape_cast %360 : vector<1x4x1x128xf32> to vector<4x128xf32>
    %c5_213 = arith.constant 5 : index
    %c0_214 = arith.constant 0 : index
    %c3_215 = arith.constant 3 : index
    %c0_216 = arith.constant 0 : index
    %362 = vector.load %arg6[%c5_213, %c0_214, %c3_215, %c0_216] : memref<6x4x24x128xf32, #tpu.memory_space<vmem>>, vector<1x4x1x128xf32>
    %363 = vector.shape_cast %362 : vector<1x4x1x128xf32> to vector<4x128xf32>
    %364 = vector.shape_cast %361 : vector<4x128xf32> to vector<1x4x1x128xf32>
    tpu.vector_store %arg6[%c5_213, %c0_214, %c3_215, %c0_216], %364 {strides = array<i32>} : memref<6x4x24x128xf32, #tpu.memory_space<vmem>>, vector<1x4x1x128xf32>,
    %c4_217 = arith.constant 4 : index
    %365 = memref.load %arg2[%c4_217] : memref<24xi32, #tpu.memory_space<smem>>
    %c0_218 = arith.constant 0 : index
    %c0_219 = arith.constant 0 : index
    %366 = arith.index_cast %365 : i32 to index
    %c0_220 = arith.constant 0 : index
    %367 = vector.load %arg3[%c0_218, %c0_219, %366, %c0_220] : memref<6x4x24x128xf32, #tpu.memory_space<vmem>>, vector<1x4x1x128xf32>
    %368 = vector.shape_cast %367 : vector<1x4x1x128xf32> to vector<4x128xf32>
    %c1_221 = arith.constant 1 : index
    %c0_222 = arith.constant 0 : index
    %369 = arith.index_cast %365 : i32 to index
    %c0_223 = arith.constant 0 : index
    %370 = vector.load %arg3[%c1_221, %c0_222, %369, %c0_223] : memref<6x4x24x128xf32, #tpu.memory_space<vmem>>, vector<1x4x1x128xf32>
    %371 = vector.shape_cast %370 : vector<1x4x1x128xf32> to vector<4x128xf32>
    %c2_224 = arith.constant 2 : index
    %c0_225 = arith.constant 0 : index
    %372 = arith.index_cast %365 : i32 to index
    %c0_226 = arith.constant 0 : index
    %373 = vector.load %arg3[%c2_224, %c0_225, %372, %c0_226] : memref<6x4x24x128xf32, #tpu.memory_space<vmem>>, vector<1x4x1x128xf32>
    %374 = vector.shape_cast %373 : vector<1x4x1x128xf32> to vector<4x128xf32>
    %375 = vector.extract_strided_slice %0 {offsets = [0, 0, 0], sizes = [1, 1, 128], strides = [1, 1, 1]} : vector<9x1x128xf32> to vector<1x1x128xf32>
    %376 = vector.shape_cast %375 : vector<1x1x128xf32> to vector<1x128xf32>
    %377 = vector.broadcast %376 : vector<1x128xf32> to vector<4x128xf32>
    %378 = arith.mulf %368, %377 : vector<4x128xf32>
    %379 = vector.extract_strided_slice %0 {offsets = [1, 0, 0], sizes = [1, 1, 128], strides = [1, 1, 1]} : vector<9x1x128xf32> to vector<1x1x128xf32>
    %380 = vector.shape_cast %379 : vector<1x1x128xf32> to vector<1x128xf32>
    %381 = vector.broadcast %380 : vector<1x128xf32> to vector<4x128xf32>
    %382 = arith.mulf %371, %381 : vector<4x128xf32>
    %383 = arith.addf %378, %382 : vector<4x128xf32>
    %384 = vector.extract_strided_slice %0 {offsets = [2, 0, 0], sizes = [1, 1, 128], strides = [1, 1, 1]} : vector<9x1x128xf32> to vector<1x1x128xf32>
    %385 = vector.shape_cast %384 : vector<1x1x128xf32> to vector<1x128xf32>
    %386 = vector.broadcast %385 : vector<1x128xf32> to vector<4x128xf32>
    %387 = arith.mulf %374, %386 : vector<4x128xf32>
    %388 = arith.addf %383, %387 : vector<4x128xf32>
    %c0_227 = arith.constant 0 : index
    %c4_228 = arith.constant 4 : index
    %c0_229 = arith.constant 0 : index
    %c0_230 = arith.constant 0 : index
    %389 = vector.load %arg5[%c0_227, %c4_228, %c0_229, %c0_230] : memref<3x24x1x128xf32, #tpu.memory_space<vmem>>, vector<1x1x1x128xf32>
    %390 = vector.shape_cast %389 : vector<1x1x1x128xf32> to vector<1x128xf32>
    %391 = vector.broadcast %390 : vector<1x128xf32> to vector<4x128xf32>
    %392 = arith.addf %388, %391 : vector<4x128xf32>
    %c0_231 = arith.constant 0 : index
    %c0_232 = arith.constant 0 : index
    %c4_233 = arith.constant 4 : index
    %c0_234 = arith.constant 0 : index
    %393 = vector.load %arg6[%c0_231, %c0_232, %c4_233, %c0_234] : memref<6x4x24x128xf32, #tpu.memory_space<vmem>>, vector<1x4x1x128xf32>
    %394 = vector.shape_cast %393 : vector<1x4x1x128xf32> to vector<4x128xf32>
    %395 = vector.shape_cast %392 : vector<4x128xf32> to vector<1x4x1x128xf32>
    tpu.vector_store %arg6[%c0_231, %c0_232, %c4_233, %c0_234], %395 {strides = array<i32>} : memref<6x4x24x128xf32, #tpu.memory_space<vmem>>, vector<1x4x1x128xf32>,
    %396 = vector.extract_strided_slice %0 {offsets = [3, 0, 0], sizes = [1, 1, 128], strides = [1, 1, 1]} : vector<9x1x128xf32> to vector<1x1x128xf32>
    %397 = vector.shape_cast %396 : vector<1x1x128xf32> to vector<1x128xf32>
    %398 = vector.broadcast %397 : vector<1x128xf32> to vector<4x128xf32>
    %399 = arith.mulf %368, %398 : vector<4x128xf32>
    %400 = vector.extract_strided_slice %0 {offsets = [4, 0, 0], sizes = [1, 1, 128], strides = [1, 1, 1]} : vector<9x1x128xf32> to vector<1x1x128xf32>
    %401 = vector.shape_cast %400 : vector<1x1x128xf32> to vector<1x128xf32>
    %402 = vector.broadcast %401 : vector<1x128xf32> to vector<4x128xf32>
    %403 = arith.mulf %371, %402 : vector<4x128xf32>
    %404 = arith.addf %399, %403 : vector<4x128xf32>
    %405 = vector.extract_strided_slice %0 {offsets = [5, 0, 0], sizes = [1, 1, 128], strides = [1, 1, 1]} : vector<9x1x128xf32> to vector<1x1x128xf32>
    %406 = vector.shape_cast %405 : vector<1x1x128xf32> to vector<1x128xf32>
    %407 = vector.broadcast %406 : vector<1x128xf32> to vector<4x128xf32>
    %408 = arith.mulf %374, %407 : vector<4x128xf32>
    %409 = arith.addf %404, %408 : vector<4x128xf32>
    %c1_235 = arith.constant 1 : index
    %c4_236 = arith.constant 4 : index
    %c0_237 = arith.constant 0 : index
    %c0_238 = arith.constant 0 : index
    %410 = vector.load %arg5[%c1_235, %c4_236, %c0_237, %c0_238] : memref<3x24x1x128xf32, #tpu.memory_space<vmem>>, vector<1x1x1x128xf32>
    %411 = vector.shape_cast %410 : vector<1x1x1x128xf32> to vector<1x128xf32>
    %412 = vector.broadcast %411 : vector<1x128xf32> to vector<4x128xf32>
    %413 = arith.addf %409, %412 : vector<4x128xf32>
    %c1_239 = arith.constant 1 : index
    %c0_240 = arith.constant 0 : index
    %c4_241 = arith.constant 4 : index
    %c0_242 = arith.constant 0 : index
    %414 = vector.load %arg6[%c1_239, %c0_240, %c4_241, %c0_242] : memref<6x4x24x128xf32, #tpu.memory_space<vmem>>, vector<1x4x1x128xf32>
    %415 = vector.shape_cast %414 : vector<1x4x1x128xf32> to vector<4x128xf32>
    %416 = vector.shape_cast %413 : vector<4x128xf32> to vector<1x4x1x128xf32>
    tpu.vector_store %arg6[%c1_239, %c0_240, %c4_241, %c0_242], %416 {strides = array<i32>} : memref<6x4x24x128xf32, #tpu.memory_space<vmem>>, vector<1x4x1x128xf32>,
    %417 = vector.extract_strided_slice %0 {offsets = [6, 0, 0], sizes = [1, 1, 128], strides = [1, 1, 1]} : vector<9x1x128xf32> to vector<1x1x128xf32>
    %418 = vector.shape_cast %417 : vector<1x1x128xf32> to vector<1x128xf32>
    %419 = vector.broadcast %418 : vector<1x128xf32> to vector<4x128xf32>
    %420 = arith.mulf %368, %419 : vector<4x128xf32>
    %421 = vector.extract_strided_slice %0 {offsets = [7, 0, 0], sizes = [1, 1, 128], strides = [1, 1, 1]} : vector<9x1x128xf32> to vector<1x1x128xf32>
    %422 = vector.shape_cast %421 : vector<1x1x128xf32> to vector<1x128xf32>
    %423 = vector.broadcast %422 : vector<1x128xf32> to vector<4x128xf32>
    %424 = arith.mulf %371, %423 : vector<4x128xf32>
    %425 = arith.addf %420, %424 : vector<4x128xf32>
    %426 = vector.extract_strided_slice %0 {offsets = [8, 0, 0], sizes = [1, 1, 128], strides = [1, 1, 1]} : vector<9x1x128xf32> to vector<1x1x128xf32>
    %427 = vector.shape_cast %426 : vector<1x1x128xf32> to vector<1x128xf32>
    %428 = vector.broadcast %427 : vector<1x128xf32> to vector<4x128xf32>
    %429 = arith.mulf %374, %428 : vector<4x128xf32>
    %430 = arith.addf %425, %429 : vector<4x128xf32>
    %c2_243 = arith.constant 2 : index
    %c4_244 = arith.constant 4 : index
    %c0_245 = arith.constant 0 : index
    %c0_246 = arith.constant 0 : index
    %431 = vector.load %arg5[%c2_243, %c4_244, %c0_245, %c0_246] : memref<3x24x1x128xf32, #tpu.memory_space<vmem>>, vector<1x1x1x128xf32>
    %432 = vector.shape_cast %431 : vector<1x1x1x128xf32> to vector<1x128xf32>
    %433 = vector.broadcast %432 : vector<1x128xf32> to vector<4x128xf32>
    %434 = arith.addf %430, %433 : vector<4x128xf32>
    %c2_247 = arith.constant 2 : index
    %c0_248 = arith.constant 0 : index
    %c4_249 = arith.constant 4 : index
    %c0_250 = arith.constant 0 : index
    %435 = vector.load %arg6[%c2_247, %c0_248, %c4_249, %c0_250] : memref<6x4x24x128xf32, #tpu.memory_space<vmem>>, vector<1x4x1x128xf32>
    %436 = vector.shape_cast %435 : vector<1x4x1x128xf32> to vector<4x128xf32>
    %437 = vector.shape_cast %434 : vector<4x128xf32> to vector<1x4x1x128xf32>
    tpu.vector_store %arg6[%c2_247, %c0_248, %c4_249, %c0_250], %437 {strides = array<i32>} : memref<6x4x24x128xf32, #tpu.memory_space<vmem>>, vector<1x4x1x128xf32>,
    %c3_251 = arith.constant 3 : index
    %c0_252 = arith.constant 0 : index
    %438 = arith.index_cast %365 : i32 to index
    %c0_253 = arith.constant 0 : index
    %439 = vector.load %arg3[%c3_251, %c0_252, %438, %c0_253] : memref<6x4x24x128xf32, #tpu.memory_space<vmem>>, vector<1x4x1x128xf32>
    %440 = vector.shape_cast %439 : vector<1x4x1x128xf32> to vector<4x128xf32>
    %c3_254 = arith.constant 3 : index
    %c0_255 = arith.constant 0 : index
    %c4_256 = arith.constant 4 : index
    %c0_257 = arith.constant 0 : index
    %441 = vector.load %arg6[%c3_254, %c0_255, %c4_256, %c0_257] : memref<6x4x24x128xf32, #tpu.memory_space<vmem>>, vector<1x4x1x128xf32>
    %442 = vector.shape_cast %441 : vector<1x4x1x128xf32> to vector<4x128xf32>
    %443 = vector.shape_cast %440 : vector<4x128xf32> to vector<1x4x1x128xf32>
    tpu.vector_store %arg6[%c3_254, %c0_255, %c4_256, %c0_257], %443 {strides = array<i32>} : memref<6x4x24x128xf32, #tpu.memory_space<vmem>>, vector<1x4x1x128xf32>,
    %c4_258 = arith.constant 4 : index
    %c0_259 = arith.constant 0 : index
    %444 = arith.index_cast %365 : i32 to index
    %c0_260 = arith.constant 0 : index
    %445 = vector.load %arg3[%c4_258, %c0_259, %444, %c0_260] : memref<6x4x24x128xf32, #tpu.memory_space<vmem>>, vector<1x4x1x128xf32>
    %446 = vector.shape_cast %445 : vector<1x4x1x128xf32> to vector<4x128xf32>
    %c4_261 = arith.constant 4 : index
    %c0_262 = arith.constant 0 : index
    %c4_263 = arith.constant 4 : index
    %c0_264 = arith.constant 0 : index
    %447 = vector.load %arg6[%c4_261, %c0_262, %c4_263, %c0_264] : memref<6x4x24x128xf32, #tpu.memory_space<vmem>>, vector<1x4x1x128xf32>
    %448 = vector.shape_cast %447 : vector<1x4x1x128xf32> to vector<4x128xf32>
    %449 = vector.shape_cast %446 : vector<4x128xf32> to vector<1x4x1x128xf32>
    tpu.vector_store %arg6[%c4_261, %c0_262, %c4_263, %c0_264], %449 {strides = array<i32>} : memref<6x4x24x128xf32, #tpu.memory_space<vmem>>, vector<1x4x1x128xf32>,
    %c5_265 = arith.constant 5 : index
    %c0_266 = arith.constant 0 : index
    %450 = arith.index_cast %365 : i32 to index
    %c0_267 = arith.constant 0 : index
    %451 = vector.load %arg3[%c5_265, %c0_266, %450, %c0_267] : memref<6x4x24x128xf32, #tpu.memory_space<vmem>>, vector<1x4x1x128xf32>
    %452 = vector.shape_cast %451 : vector<1x4x1x128xf32> to vector<4x128xf32>
    %c5_268 = arith.constant 5 : index
    %c0_269 = arith.constant 0 : index
    %c4_270 = arith.constant 4 : index
    %c0_271 = arith.constant 0 : index
    %453 = vector.load %arg6[%c5_268, %c0_269, %c4_270, %c0_271] : memref<6x4x24x128xf32, #tpu.memory_space<vmem>>, vector<1x4x1x128xf32>
    %454 = vector.shape_cast %453 : vector<1x4x1x128xf32> to vector<4x128xf32>
    %455 = vector.shape_cast %452 : vector<4x128xf32> to vector<1x4x1x128xf32>
    tpu.vector_store %arg6[%c5_268, %c0_269, %c4_270, %c0_271], %455 {strides = array<i32>} : memref<6x4x24x128xf32, #tpu.memory_space<vmem>>, vector<1x4x1x128xf32>,
    %c5_272 = arith.constant 5 : index
    %456 = memref.load %arg2[%c5_272] : memref<24xi32, #tpu.memory_space<smem>>
    %c0_273 = arith.constant 0 : index
    %c0_274 = arith.constant 0 : index
    %457 = arith.index_cast %456 : i32 to index
    %c0_275 = arith.constant 0 : index
    %458 = vector.load %arg3[%c0_273, %c0_274, %457, %c0_275] : memref<6x4x24x128xf32, #tpu.memory_space<vmem>>, vector<1x4x1x128xf32>
    %459 = vector.shape_cast %458 : vector<1x4x1x128xf32> to vector<4x128xf32>
    %c1_276 = arith.constant 1 : index
    %c0_277 = arith.constant 0 : index
    %460 = arith.index_cast %456 : i32 to index
    %c0_278 = arith.constant 0 : index
    %461 = vector.load %arg3[%c1_276, %c0_277, %460, %c0_278] : memref<6x4x24x128xf32, #tpu.memory_space<vmem>>, vector<1x4x1x128xf32>
    %462 = vector.shape_cast %461 : vector<1x4x1x128xf32> to vector<4x128xf32>
    %c2_279 = arith.constant 2 : index
    %c0_280 = arith.constant 0 : index
    %463 = arith.index_cast %456 : i32 to index
    %c0_281 = arith.constant 0 : index
    %464 = vector.load %arg3[%c2_279, %c0_280, %463, %c0_281] : memref<6x4x24x128xf32, #tpu.memory_space<vmem>>, vector<1x4x1x128xf32>
    %465 = vector.shape_cast %464 : vector<1x4x1x128xf32> to vector<4x128xf32>
    %466 = vector.extract_strided_slice %0 {offsets = [0, 0, 0], sizes = [1, 1, 128], strides = [1, 1, 1]} : vector<9x1x128xf32> to vector<1x1x128xf32>
    %467 = vector.shape_cast %466 : vector<1x1x128xf32> to vector<1x128xf32>
    %468 = vector.broadcast %467 : vector<1x128xf32> to vector<4x128xf32>
    %469 = arith.mulf %459, %468 : vector<4x128xf32>
    %470 = vector.extract_strided_slice %0 {offsets = [1, 0, 0], sizes = [1, 1, 128], strides = [1, 1, 1]} : vector<9x1x128xf32> to vector<1x1x128xf32>
    %471 = vector.shape_cast %470 : vector<1x1x128xf32> to vector<1x128xf32>
    %472 = vector.broadcast %471 : vector<1x128xf32> to vector<4x128xf32>
    %473 = arith.mulf %462, %472 : vector<4x128xf32>
    %474 = arith.addf %469, %473 : vector<4x128xf32>
    %475 = vector.extract_strided_slice %0 {offsets = [2, 0, 0], sizes = [1, 1, 128], strides = [1, 1, 1]} : vector<9x1x128xf32> to vector<1x1x128xf32>
    %476 = vector.shape_cast %475 : vector<1x1x128xf32> to vector<1x128xf32>
    %477 = vector.broadcast %476 : vector<1x128xf32> to vector<4x128xf32>
    %478 = arith.mulf %465, %477 : vector<4x128xf32>
    %479 = arith.addf %474, %478 : vector<4x128xf32>
    %c0_282 = arith.constant 0 : index
    %c5_283 = arith.constant 5 : index
    %c0_284 = arith.constant 0 : index
    %c0_285 = arith.constant 0 : index
    %480 = vector.load %arg5[%c0_282, %c5_283, %c0_284, %c0_285] : memref<3x24x1x128xf32, #tpu.memory_space<vmem>>, vector<1x1x1x128xf32>
    %481 = vector.shape_cast %480 : vector<1x1x1x128xf32> to vector<1x128xf32>
    %482 = vector.broadcast %481 : vector<1x128xf32> to vector<4x128xf32>
    %483 = arith.addf %479, %482 : vector<4x128xf32>
    %c0_286 = arith.constant 0 : index
    %c0_287 = arith.constant 0 : index
    %c5_288 = arith.constant 5 : index
    %c0_289 = arith.constant 0 : index
    %484 = vector.load %arg6[%c0_286, %c0_287, %c5_288, %c0_289] : memref<6x4x24x128xf32, #tpu.memory_space<vmem>>, vector<1x4x1x128xf32>
    %485 = vector.shape_cast %484 : vector<1x4x1x128xf32> to vector<4x128xf32>
    %486 = vector.shape_cast %483 : vector<4x128xf32> to vector<1x4x1x128xf32>
    tpu.vector_store %arg6[%c0_286, %c0_287, %c5_288, %c0_289], %486 {strides = array<i32>} : memref<6x4x24x128xf32, #tpu.memory_space<vmem>>, vector<1x4x1x128xf32>,
    %487 = vector.extract_strided_slice %0 {offsets = [3, 0, 0], sizes = [1, 1, 128], strides = [1, 1, 1]} : vector<9x1x128xf32> to vector<1x1x128xf32>
    %488 = vector.shape_cast %487 : vector<1x1x128xf32> to vector<1x128xf32>
    %489 = vector.broadcast %488 : vector<1x128xf32> to vector<4x128xf32>
    %490 = arith.mulf %459, %489 : vector<4x128xf32>
    %491 = vector.extract_strided_slice %0 {offsets = [4, 0, 0], sizes = [1, 1, 128], strides = [1, 1, 1]} : vector<9x1x128xf32> to vector<1x1x128xf32>
    %492 = vector.shape_cast %491 : vector<1x1x128xf32> to vector<1x128xf32>
    %493 = vector.broadcast %492 : vector<1x128xf32> to vector<4x128xf32>
    %494 = arith.mulf %462, %493 : vector<4x128xf32>
    %495 = arith.addf %490, %494 : vector<4x128xf32>
    %496 = vector.extract_strided_slice %0 {offsets = [5, 0, 0], sizes = [1, 1, 128], strides = [1, 1, 1]} : vector<9x1x128xf32> to vector<1x1x128xf32>
    %497 = vector.shape_cast %496 : vector<1x1x128xf32> to vector<1x128xf32>
    %498 = vector.broadcast %497 : vector<1x128xf32> to vector<4x128xf32>
    %499 = arith.mulf %465, %498 : vector<4x128xf32>
    %500 = arith.addf %495, %499 : vector<4x128xf32>
    %c1_290 = arith.constant 1 : index
    %c5_291 = arith.constant 5 : index
    %c0_292 = arith.constant 0 : index
    %c0_293 = arith.constant 0 : index
    %501 = vector.load %arg5[%c1_290, %c5_291, %c0_292, %c0_293] : memref<3x24x1x128xf32, #tpu.memory_space<vmem>>, vector<1x1x1x128xf32>
    %502 = vector.shape_cast %501 : vector<1x1x1x128xf32> to vector<1x128xf32>
    %503 = vector.broadcast %502 : vector<1x128xf32> to vector<4x128xf32>
    %504 = arith.addf %500, %503 : vector<4x128xf32>
    %c1_294 = arith.constant 1 : index
    %c0_295 = arith.constant 0 : index
    %c5_296 = arith.constant 5 : index
    %c0_297 = arith.constant 0 : index
    %505 = vector.load %arg6[%c1_294, %c0_295, %c5_296, %c0_297] : memref<6x4x24x128xf32, #tpu.memory_space<vmem>>, vector<1x4x1x128xf32>
    %506 = vector.shape_cast %505 : vector<1x4x1x128xf32> to vector<4x128xf32>
    %507 = vector.shape_cast %504 : vector<4x128xf32> to vector<1x4x1x128xf32>
    tpu.vector_store %arg6[%c1_294, %c0_295, %c5_296, %c0_297], %507 {strides = array<i32>} : memref<6x4x24x128xf32, #tpu.memory_space<vmem>>, vector<1x4x1x128xf32>,
    %508 = vector.extract_strided_slice %0 {offsets = [6, 0, 0], sizes = [1, 1, 128], strides = [1, 1, 1]} : vector<9x1x128xf32> to vector<1x1x128xf32>
    %509 = vector.shape_cast %508 : vector<1x1x128xf32> to vector<1x128xf32>
    %510 = vector.broadcast %509 : vector<1x128xf32> to vector<4x128xf32>
    %511 = arith.mulf %459, %510 : vector<4x128xf32>
    %512 = vector.extract_strided_slice %0 {offsets = [7, 0, 0], sizes = [1, 1, 128], strides = [1, 1, 1]} : vector<9x1x128xf32> to vector<1x1x128xf32>
    %513 = vector.shape_cast %512 : vector<1x1x128xf32> to vector<1x128xf32>
    %514 = vector.broadcast %513 : vector<1x128xf32> to vector<4x128xf32>
    %515 = arith.mulf %462, %514 : vector<4x128xf32>
    %516 = arith.addf %511, %515 : vector<4x128xf32>
    %517 = vector.extract_strided_slice %0 {offsets = [8, 0, 0], sizes = [1, 1, 128], strides = [1, 1, 1]} : vector<9x1x128xf32> to vector<1x1x128xf32>
    %518 = vector.shape_cast %517 : vector<1x1x128xf32> to vector<1x128xf32>
    %519 = vector.broadcast %518 : vector<1x128xf32> to vector<4x128xf32>
    %520 = arith.mulf %465, %519 : vector<4x128xf32>
    %521 = arith.addf %516, %520 : vector<4x128xf32>
    %c2_298 = arith.constant 2 : index
    %c5_299 = arith.constant 5 : index
    %c0_300 = arith.constant 0 : index
    %c0_301 = arith.constant 0 : index
    %522 = vector.load %arg5[%c2_298, %c5_299, %c0_300, %c0_301] : memref<3x24x1x128xf32, #tpu.memory_space<vmem>>, vector<1x1x1x128xf32>
    %523 = vector.shape_cast %522 : vector<1x1x1x128xf32> to vector<1x128xf32>
    %524 = vector.broadcast %523 : vector<1x128xf32> to vector<4x128xf32>
    %525 = arith.addf %521, %524 : vector<4x128xf32>
    %c2_302 = arith.constant 2 : index
    %c0_303 = arith.constant 0 : index
    %c5_304 = arith.constant 5 : index
    %c0_305 = arith.constant 0 : index
    %526 = vector.load %arg6[%c2_302, %c0_303, %c5_304, %c0_305] : memref<6x4x24x128xf32, #tpu.memory_space<vmem>>, vector<1x4x1x128xf32>
    %527 = vector.shape_cast %526 : vector<1x4x1x128xf32> to vector<4x128xf32>
    %528 = vector.shape_cast %525 : vector<4x128xf32> to vector<1x4x1x128xf32>
    tpu.vector_store %arg6[%c2_302, %c0_303, %c5_304, %c0_305], %528 {strides = array<i32>} : memref<6x4x24x128xf32, #tpu.memory_space<vmem>>, vector<1x4x1x128xf32>,
    %c3_306 = arith.constant 3 : index
    %c0_307 = arith.constant 0 : index
    %529 = arith.index_cast %456 : i32 to index
    %c0_308 = arith.constant 0 : index
    %530 = vector.load %arg3[%c3_306, %c0_307, %529, %c0_308] : memref<6x4x24x128xf32, #tpu.memory_space<vmem>>, vector<1x4x1x128xf32>
    %531 = vector.shape_cast %530 : vector<1x4x1x128xf32> to vector<4x128xf32>
    %c3_309 = arith.constant 3 : index
    %c0_310 = arith.constant 0 : index
    %c5_311 = arith.constant 5 : index
    %c0_312 = arith.constant 0 : index
    %532 = vector.load %arg6[%c3_309, %c0_310, %c5_311, %c0_312] : memref<6x4x24x128xf32, #tpu.memory_space<vmem>>, vector<1x4x1x128xf32>
    %533 = vector.shape_cast %532 : vector<1x4x1x128xf32> to vector<4x128xf32>
    %534 = vector.shape_cast %531 : vector<4x128xf32> to vector<1x4x1x128xf32>
    tpu.vector_store %arg6[%c3_309, %c0_310, %c5_311, %c0_312], %534 {strides = array<i32>} : memref<6x4x24x128xf32, #tpu.memory_space<vmem>>, vector<1x4x1x128xf32>,
    %c4_313 = arith.constant 4 : index
    %c0_314 = arith.constant 0 : index
    %535 = arith.index_cast %456 : i32 to index
    %c0_315 = arith.constant 0 : index
    %536 = vector.load %arg3[%c4_313, %c0_314, %535, %c0_315] : memref<6x4x24x128xf32, #tpu.memory_space<vmem>>, vector<1x4x1x128xf32>
    %537 = vector.shape_cast %536 : vector<1x4x1x128xf32> to vector<4x128xf32>
    %c4_316 = arith.constant 4 : index
    %c0_317 = arith.constant 0 : index
    %c5_318 = arith.constant 5 : index
    %c0_319 = arith.constant 0 : index
    %538 = vector.load %arg6[%c4_316, %c0_317, %c5_318, %c0_319] : memref<6x4x24x128xf32, #tpu.memory_space<vmem>>, vector<1x4x1x128xf32>
    %539 = vector.shape_cast %538 : vector<1x4x1x128xf32> to vector<4x128xf32>
    %540 = vector.shape_cast %537 : vector<4x128xf32> to vector<1x4x1x128xf32>
    tpu.vector_store %arg6[%c4_316, %c0_317, %c5_318, %c0_319], %540 {strides = array<i32>} : memref<6x4x24x128xf32, #tpu.memory_space<vmem>>, vector<1x4x1x128xf32>,
    %c5_320 = arith.constant 5 : index
    %c0_321 = arith.constant 0 : index
    %541 = arith.index_cast %456 : i32 to index
    %c0_322 = arith.constant 0 : index
    %542 = vector.load %arg3[%c5_320, %c0_321, %541, %c0_322] : memref<6x4x24x128xf32, #tpu.memory_space<vmem>>, vector<1x4x1x128xf32>
    %543 = vector.shape_cast %542 : vector<1x4x1x128xf32> to vector<4x128xf32>
    %c5_323 = arith.constant 5 : index
    %c0_324 = arith.constant 0 : index
    %c5_325 = arith.constant 5 : index
    %c0_326 = arith.constant 0 : index
    %544 = vector.load %arg6[%c5_323, %c0_324, %c5_325, %c0_326] : memref<6x4x24x128xf32, #tpu.memory_space<vmem>>, vector<1x4x1x128xf32>
    %545 = vector.shape_cast %544 : vector<1x4x1x128xf32> to vector<4x128xf32>
    %546 = vector.shape_cast %543 : vector<4x128xf32> to vector<1x4x1x128xf32>
    tpu.vector_store %arg6[%c5_323, %c0_324, %c5_325, %c0_326], %546 {strides = array<i32>} : memref<6x4x24x128xf32, #tpu.memory_space<vmem>>, vector<1x4x1x128xf32>,
    %c6 = arith.constant 6 : index
    %547 = memref.load %arg2[%c6] : memref<24xi32, #tpu.memory_space<smem>>
    %c0_327 = arith.constant 0 : index
    %c0_328 = arith.constant 0 : index
    %548 = arith.index_cast %547 : i32 to index
    %c0_329 = arith.constant 0 : index
    %549 = vector.load %arg3[%c0_327, %c0_328, %548, %c0_329] : memref<6x4x24x128xf32, #tpu.memory_space<vmem>>, vector<1x4x1x128xf32>
    %550 = vector.shape_cast %549 : vector<1x4x1x128xf32> to vector<4x128xf32>
    %c1_330 = arith.constant 1 : index
    %c0_331 = arith.constant 0 : index
    %551 = arith.index_cast %547 : i32 to index
    %c0_332 = arith.constant 0 : index
    %552 = vector.load %arg3[%c1_330, %c0_331, %551, %c0_332] : memref<6x4x24x128xf32, #tpu.memory_space<vmem>>, vector<1x4x1x128xf32>
    %553 = vector.shape_cast %552 : vector<1x4x1x128xf32> to vector<4x128xf32>
    %c2_333 = arith.constant 2 : index
    %c0_334 = arith.constant 0 : index
    %554 = arith.index_cast %547 : i32 to index
    %c0_335 = arith.constant 0 : index
    %555 = vector.load %arg3[%c2_333, %c0_334, %554, %c0_335] : memref<6x4x24x128xf32, #tpu.memory_space<vmem>>, vector<1x4x1x128xf32>
    %556 = vector.shape_cast %555 : vector<1x4x1x128xf32> to vector<4x128xf32>
    %557 = vector.extract_strided_slice %0 {offsets = [0, 0, 0], sizes = [1, 1, 128], strides = [1, 1, 1]} : vector<9x1x128xf32> to vector<1x1x128xf32>
    %558 = vector.shape_cast %557 : vector<1x1x128xf32> to vector<1x128xf32>
    %559 = vector.broadcast %558 : vector<1x128xf32> to vector<4x128xf32>
    %560 = arith.mulf %550, %559 : vector<4x128xf32>
    %561 = vector.extract_strided_slice %0 {offsets = [1, 0, 0], sizes = [1, 1, 128], strides = [1, 1, 1]} : vector<9x1x128xf32> to vector<1x1x128xf32>
    %562 = vector.shape_cast %561 : vector<1x1x128xf32> to vector<1x128xf32>
    %563 = vector.broadcast %562 : vector<1x128xf32> to vector<4x128xf32>
    %564 = arith.mulf %553, %563 : vector<4x128xf32>
    %565 = arith.addf %560, %564 : vector<4x128xf32>
    %566 = vector.extract_strided_slice %0 {offsets = [2, 0, 0], sizes = [1, 1, 128], strides = [1, 1, 1]} : vector<9x1x128xf32> to vector<1x1x128xf32>
    %567 = vector.shape_cast %566 : vector<1x1x128xf32> to vector<1x128xf32>
    %568 = vector.broadcast %567 : vector<1x128xf32> to vector<4x128xf32>
    %569 = arith.mulf %556, %568 : vector<4x128xf32>
    %570 = arith.addf %565, %569 : vector<4x128xf32>
    %c0_336 = arith.constant 0 : index
    %c6_337 = arith.constant 6 : index
    %c0_338 = arith.constant 0 : index
    %c0_339 = arith.constant 0 : index
    %571 = vector.load %arg5[%c0_336, %c6_337, %c0_338, %c0_339] : memref<3x24x1x128xf32, #tpu.memory_space<vmem>>, vector<1x1x1x128xf32>
    %572 = vector.shape_cast %571 : vector<1x1x1x128xf32> to vector<1x128xf32>
    %573 = vector.broadcast %572 : vector<1x128xf32> to vector<4x128xf32>
    %574 = arith.addf %570, %573 : vector<4x128xf32>
    %c0_340 = arith.constant 0 : index
    %c0_341 = arith.constant 0 : index
    %c6_342 = arith.constant 6 : index
    %c0_343 = arith.constant 0 : index
    %575 = vector.load %arg6[%c0_340, %c0_341, %c6_342, %c0_343] : memref<6x4x24x128xf32, #tpu.memory_space<vmem>>, vector<1x4x1x128xf32>
    %576 = vector.shape_cast %575 : vector<1x4x1x128xf32> to vector<4x128xf32>
    %577 = vector.shape_cast %574 : vector<4x128xf32> to vector<1x4x1x128xf32>
    tpu.vector_store %arg6[%c0_340, %c0_341, %c6_342, %c0_343], %577 {strides = array<i32>} : memref<6x4x24x128xf32, #tpu.memory_space<vmem>>, vector<1x4x1x128xf32>,
    %578 = vector.extract_strided_slice %0 {offsets = [3, 0, 0], sizes = [1, 1, 128], strides = [1, 1, 1]} : vector<9x1x128xf32> to vector<1x1x128xf32>
    %579 = vector.shape_cast %578 : vector<1x1x128xf32> to vector<1x128xf32>
    %580 = vector.broadcast %579 : vector<1x128xf32> to vector<4x128xf32>
    %581 = arith.mulf %550, %580 : vector<4x128xf32>
    %582 = vector.extract_strided_slice %0 {offsets = [4, 0, 0], sizes = [1, 1, 128], strides = [1, 1, 1]} : vector<9x1x128xf32> to vector<1x1x128xf32>
    %583 = vector.shape_cast %582 : vector<1x1x128xf32> to vector<1x128xf32>
    %584 = vector.broadcast %583 : vector<1x128xf32> to vector<4x128xf32>
    %585 = arith.mulf %553, %584 : vector<4x128xf32>
    %586 = arith.addf %581, %585 : vector<4x128xf32>
    %587 = vector.extract_strided_slice %0 {offsets = [5, 0, 0], sizes = [1, 1, 128], strides = [1, 1, 1]} : vector<9x1x128xf32> to vector<1x1x128xf32>
    %588 = vector.shape_cast %587 : vector<1x1x128xf32> to vector<1x128xf32>
    %589 = vector.broadcast %588 : vector<1x128xf32> to vector<4x128xf32>
    %590 = arith.mulf %556, %589 : vector<4x128xf32>
    %591 = arith.addf %586, %590 : vector<4x128xf32>
    %c1_344 = arith.constant 1 : index
    %c6_345 = arith.constant 6 : index
    %c0_346 = arith.constant 0 : index
    %c0_347 = arith.constant 0 : index
    %592 = vector.load %arg5[%c1_344, %c6_345, %c0_346, %c0_347] : memref<3x24x1x128xf32, #tpu.memory_space<vmem>>, vector<1x1x1x128xf32>
    %593 = vector.shape_cast %592 : vector<1x1x1x128xf32> to vector<1x128xf32>
    %594 = vector.broadcast %593 : vector<1x128xf32> to vector<4x128xf32>
    %595 = arith.addf %591, %594 : vector<4x128xf32>
    %c1_348 = arith.constant 1 : index
    %c0_349 = arith.constant 0 : index
    %c6_350 = arith.constant 6 : index
    %c0_351 = arith.constant 0 : index
    %596 = vector.load %arg6[%c1_348, %c0_349, %c6_350, %c0_351] : memref<6x4x24x128xf32, #tpu.memory_space<vmem>>, vector<1x4x1x128xf32>
    %597 = vector.shape_cast %596 : vector<1x4x1x128xf32> to vector<4x128xf32>
    %598 = vector.shape_cast %595 : vector<4x128xf32> to vector<1x4x1x128xf32>
    tpu.vector_store %arg6[%c1_348, %c0_349, %c6_350, %c0_351], %598 {strides = array<i32>} : memref<6x4x24x128xf32, #tpu.memory_space<vmem>>, vector<1x4x1x128xf32>,
    %599 = vector.extract_strided_slice %0 {offsets = [6, 0, 0], sizes = [1, 1, 128], strides = [1, 1, 1]} : vector<9x1x128xf32> to vector<1x1x128xf32>
    %600 = vector.shape_cast %599 : vector<1x1x128xf32> to vector<1x128xf32>
    %601 = vector.broadcast %600 : vector<1x128xf32> to vector<4x128xf32>
    %602 = arith.mulf %550, %601 : vector<4x128xf32>
    %603 = vector.extract_strided_slice %0 {offsets = [7, 0, 0], sizes = [1, 1, 128], strides = [1, 1, 1]} : vector<9x1x128xf32> to vector<1x1x128xf32>
    %604 = vector.shape_cast %603 : vector<1x1x128xf32> to vector<1x128xf32>
    %605 = vector.broadcast %604 : vector<1x128xf32> to vector<4x128xf32>
    %606 = arith.mulf %553, %605 : vector<4x128xf32>
    %607 = arith.addf %602, %606 : vector<4x128xf32>
    %608 = vector.extract_strided_slice %0 {offsets = [8, 0, 0], sizes = [1, 1, 128], strides = [1, 1, 1]} : vector<9x1x128xf32> to vector<1x1x128xf32>
    %609 = vector.shape_cast %608 : vector<1x1x128xf32> to vector<1x128xf32>
    %610 = vector.broadcast %609 : vector<1x128xf32> to vector<4x128xf32>
    %611 = arith.mulf %556, %610 : vector<4x128xf32>
    %612 = arith.addf %607, %611 : vector<4x128xf32>
    %c2_352 = arith.constant 2 : index
    %c6_353 = arith.constant 6 : index
    %c0_354 = arith.constant 0 : index
    %c0_355 = arith.constant 0 : index
    %613 = vector.load %arg5[%c2_352, %c6_353, %c0_354, %c0_355] : memref<3x24x1x128xf32, #tpu.memory_space<vmem>>, vector<1x1x1x128xf32>
    %614 = vector.shape_cast %613 : vector<1x1x1x128xf32> to vector<1x128xf32>
    %615 = vector.broadcast %614 : vector<1x128xf32> to vector<4x128xf32>
    %616 = arith.addf %612, %615 : vector<4x128xf32>
    %c2_356 = arith.constant 2 : index
    %c0_357 = arith.constant 0 : index
    %c6_358 = arith.constant 6 : index
    %c0_359 = arith.constant 0 : index
    %617 = vector.load %arg6[%c2_356, %c0_357, %c6_358, %c0_359] : memref<6x4x24x128xf32, #tpu.memory_space<vmem>>, vector<1x4x1x128xf32>
    %618 = vector.shape_cast %617 : vector<1x4x1x128xf32> to vector<4x128xf32>
    %619 = vector.shape_cast %616 : vector<4x128xf32> to vector<1x4x1x128xf32>
    tpu.vector_store %arg6[%c2_356, %c0_357, %c6_358, %c0_359], %619 {strides = array<i32>} : memref<6x4x24x128xf32, #tpu.memory_space<vmem>>, vector<1x4x1x128xf32>,
    %c3_360 = arith.constant 3 : index
    %c0_361 = arith.constant 0 : index
    %620 = arith.index_cast %547 : i32 to index
    %c0_362 = arith.constant 0 : index
    %621 = vector.load %arg3[%c3_360, %c0_361, %620, %c0_362] : memref<6x4x24x128xf32, #tpu.memory_space<vmem>>, vector<1x4x1x128xf32>
    %622 = vector.shape_cast %621 : vector<1x4x1x128xf32> to vector<4x128xf32>
    %c3_363 = arith.constant 3 : index
    %c0_364 = arith.constant 0 : index
    %c6_365 = arith.constant 6 : index
    %c0_366 = arith.constant 0 : index
    %623 = vector.load %arg6[%c3_363, %c0_364, %c6_365, %c0_366] : memref<6x4x24x128xf32, #tpu.memory_space<vmem>>, vector<1x4x1x128xf32>
    %624 = vector.shape_cast %623 : vector<1x4x1x128xf32> to vector<4x128xf32>
    %625 = vector.shape_cast %622 : vector<4x128xf32> to vector<1x4x1x128xf32>
    tpu.vector_store %arg6[%c3_363, %c0_364, %c6_365, %c0_366], %625 {strides = array<i32>} : memref<6x4x24x128xf32, #tpu.memory_space<vmem>>, vector<1x4x1x128xf32>,
    %c4_367 = arith.constant 4 : index
    %c0_368 = arith.constant 0 : index
    %626 = arith.index_cast %547 : i32 to index
    %c0_369 = arith.constant 0 : index
    %627 = vector.load %arg3[%c4_367, %c0_368, %626, %c0_369] : memref<6x4x24x128xf32, #tpu.memory_space<vmem>>, vector<1x4x1x128xf32>
    %628 = vector.shape_cast %627 : vector<1x4x1x128xf32> to vector<4x128xf32>
    %c4_370 = arith.constant 4 : index
    %c0_371 = arith.constant 0 : index
    %c6_372 = arith.constant 6 : index
    %c0_373 = arith.constant 0 : index
    %629 = vector.load %arg6[%c4_370, %c0_371, %c6_372, %c0_373] : memref<6x4x24x128xf32, #tpu.memory_space<vmem>>, vector<1x4x1x128xf32>
    %630 = vector.shape_cast %629 : vector<1x4x1x128xf32> to vector<4x128xf32>
    %631 = vector.shape_cast %628 : vector<4x128xf32> to vector<1x4x1x128xf32>
    tpu.vector_store %arg6[%c4_370, %c0_371, %c6_372, %c0_373], %631 {strides = array<i32>} : memref<6x4x24x128xf32, #tpu.memory_space<vmem>>, vector<1x4x1x128xf32>,
    %c5_374 = arith.constant 5 : index
    %c0_375 = arith.constant 0 : index
    %632 = arith.index_cast %547 : i32 to index
    %c0_376 = arith.constant 0 : index
    %633 = vector.load %arg3[%c5_374, %c0_375, %632, %c0_376] : memref<6x4x24x128xf32, #tpu.memory_space<vmem>>, vector<1x4x1x128xf32>
    %634 = vector.shape_cast %633 : vector<1x4x1x128xf32> to vector<4x128xf32>
    %c5_377 = arith.constant 5 : index
    %c0_378 = arith.constant 0 : index
    %c6_379 = arith.constant 6 : index
    %c0_380 = arith.constant 0 : index
    %635 = vector.load %arg6[%c5_377, %c0_378, %c6_379, %c0_380] : memref<6x4x24x128xf32, #tpu.memory_space<vmem>>, vector<1x4x1x128xf32>
    %636 = vector.shape_cast %635 : vector<1x4x1x128xf32> to vector<4x128xf32>
    %637 = vector.shape_cast %634 : vector<4x128xf32> to vector<1x4x1x128xf32>
    tpu.vector_store %arg6[%c5_377, %c0_378, %c6_379, %c0_380], %637 {strides = array<i32>} : memref<6x4x24x128xf32, #tpu.memory_space<vmem>>, vector<1x4x1x128xf32>,
    %c7 = arith.constant 7 : index
    %638 = memref.load %arg2[%c7] : memref<24xi32, #tpu.memory_space<smem>>
    %c0_381 = arith.constant 0 : index
    %c0_382 = arith.constant 0 : index
    %639 = arith.index_cast %638 : i32 to index
    %c0_383 = arith.constant 0 : index
    %640 = vector.load %arg3[%c0_381, %c0_382, %639, %c0_383] : memref<6x4x24x128xf32, #tpu.memory_space<vmem>>, vector<1x4x1x128xf32>
    %641 = vector.shape_cast %640 : vector<1x4x1x128xf32> to vector<4x128xf32>
    %c1_384 = arith.constant 1 : index
    %c0_385 = arith.constant 0 : index
    %642 = arith.index_cast %638 : i32 to index
    %c0_386 = arith.constant 0 : index
    %643 = vector.load %arg3[%c1_384, %c0_385, %642, %c0_386] : memref<6x4x24x128xf32, #tpu.memory_space<vmem>>, vector<1x4x1x128xf32>
    %644 = vector.shape_cast %643 : vector<1x4x1x128xf32> to vector<4x128xf32>
    %c2_387 = arith.constant 2 : index
    %c0_388 = arith.constant 0 : index
    %645 = arith.index_cast %638 : i32 to index
    %c0_389 = arith.constant 0 : index
    %646 = vector.load %arg3[%c2_387, %c0_388, %645, %c0_389] : memref<6x4x24x128xf32, #tpu.memory_space<vmem>>, vector<1x4x1x128xf32>
    %647 = vector.shape_cast %646 : vector<1x4x1x128xf32> to vector<4x128xf32>
    %648 = vector.extract_strided_slice %0 {offsets = [0, 0, 0], sizes = [1, 1, 128], strides = [1, 1, 1]} : vector<9x1x128xf32> to vector<1x1x128xf32>
    %649 = vector.shape_cast %648 : vector<1x1x128xf32> to vector<1x128xf32>
    %650 = vector.broadcast %649 : vector<1x128xf32> to vector<4x128xf32>
    %651 = arith.mulf %641, %650 : vector<4x128xf32>
    %652 = vector.extract_strided_slice %0 {offsets = [1, 0, 0], sizes = [1, 1, 128], strides = [1, 1, 1]} : vector<9x1x128xf32> to vector<1x1x128xf32>
    %653 = vector.shape_cast %652 : vector<1x1x128xf32> to vector<1x128xf32>
    %654 = vector.broadcast %653 : vector<1x128xf32> to vector<4x128xf32>
    %655 = arith.mulf %644, %654 : vector<4x128xf32>
    %656 = arith.addf %651, %655 : vector<4x128xf32>
    %657 = vector.extract_strided_slice %0 {offsets = [2, 0, 0], sizes = [1, 1, 128], strides = [1, 1, 1]} : vector<9x1x128xf32> to vector<1x1x128xf32>
    %658 = vector.shape_cast %657 : vector<1x1x128xf32> to vector<1x128xf32>
    %659 = vector.broadcast %658 : vector<1x128xf32> to vector<4x128xf32>
    %660 = arith.mulf %647, %659 : vector<4x128xf32>
    %661 = arith.addf %656, %660 : vector<4x128xf32>
    %c0_390 = arith.constant 0 : index
    %c7_391 = arith.constant 7 : index
    %c0_392 = arith.constant 0 : index
    %c0_393 = arith.constant 0 : index
    %662 = vector.load %arg5[%c0_390, %c7_391, %c0_392, %c0_393] : memref<3x24x1x128xf32, #tpu.memory_space<vmem>>, vector<1x1x1x128xf32>
    %663 = vector.shape_cast %662 : vector<1x1x1x128xf32> to vector<1x128xf32>
    %664 = vector.broadcast %663 : vector<1x128xf32> to vector<4x128xf32>
    %665 = arith.addf %661, %664 : vector<4x128xf32>
    %c0_394 = arith.constant 0 : index
    %c0_395 = arith.constant 0 : index
    %c7_396 = arith.constant 7 : index
    %c0_397 = arith.constant 0 : index
    %666 = vector.load %arg6[%c0_394, %c0_395, %c7_396, %c0_397] : memref<6x4x24x128xf32, #tpu.memory_space<vmem>>, vector<1x4x1x128xf32>
    %667 = vector.shape_cast %666 : vector<1x4x1x128xf32> to vector<4x128xf32>
    %668 = vector.shape_cast %665 : vector<4x128xf32> to vector<1x4x1x128xf32>
    tpu.vector_store %arg6[%c0_394, %c0_395, %c7_396, %c0_397], %668 {strides = array<i32>} : memref<6x4x24x128xf32, #tpu.memory_space<vmem>>, vector<1x4x1x128xf32>,
    %669 = vector.extract_strided_slice %0 {offsets = [3, 0, 0], sizes = [1, 1, 128], strides = [1, 1, 1]} : vector<9x1x128xf32> to vector<1x1x128xf32>
    %670 = vector.shape_cast %669 : vector<1x1x128xf32> to vector<1x128xf32>
    %671 = vector.broadcast %670 : vector<1x128xf32> to vector<4x128xf32>
    %672 = arith.mulf %641, %671 : vector<4x128xf32>
    %673 = vector.extract_strided_slice %0 {offsets = [4, 0, 0], sizes = [1, 1, 128], strides = [1, 1, 1]} : vector<9x1x128xf32> to vector<1x1x128xf32>
    %674 = vector.shape_cast %673 : vector<1x1x128xf32> to vector<1x128xf32>
    %675 = vector.broadcast %674 : vector<1x128xf32> to vector<4x128xf32>
    %676 = arith.mulf %644, %675 : vector<4x128xf32>
    %677 = arith.addf %672, %676 : vector<4x128xf32>
    %678 = vector.extract_strided_slice %0 {offsets = [5, 0, 0], sizes = [1, 1, 128], strides = [1, 1, 1]} : vector<9x1x128xf32> to vector<1x1x128xf32>
    %679 = vector.shape_cast %678 : vector<1x1x128xf32> to vector<1x128xf32>
    %680 = vector.broadcast %679 : vector<1x128xf32> to vector<4x128xf32>
    %681 = arith.mulf %647, %680 : vector<4x128xf32>
    %682 = arith.addf %677, %681 : vector<4x128xf32>
    %c1_398 = arith.constant 1 : index
    %c7_399 = arith.constant 7 : index
    %c0_400 = arith.constant 0 : index
    %c0_401 = arith.constant 0 : index
    %683 = vector.load %arg5[%c1_398, %c7_399, %c0_400, %c0_401] : memref<3x24x1x128xf32, #tpu.memory_space<vmem>>, vector<1x1x1x128xf32>
    %684 = vector.shape_cast %683 : vector<1x1x1x128xf32> to vector<1x128xf32>
    %685 = vector.broadcast %684 : vector<1x128xf32> to vector<4x128xf32>
    %686 = arith.addf %682, %685 : vector<4x128xf32>
    %c1_402 = arith.constant 1 : index
    %c0_403 = arith.constant 0 : index
    %c7_404 = arith.constant 7 : index
    %c0_405 = arith.constant 0 : index
    %687 = vector.load %arg6[%c1_402, %c0_403, %c7_404, %c0_405] : memref<6x4x24x128xf32, #tpu.memory_space<vmem>>, vector<1x4x1x128xf32>
    %688 = vector.shape_cast %687 : vector<1x4x1x128xf32> to vector<4x128xf32>
    %689 = vector.shape_cast %686 : vector<4x128xf32> to vector<1x4x1x128xf32>
    tpu.vector_store %arg6[%c1_402, %c0_403, %c7_404, %c0_405], %689 {strides = array<i32>} : memref<6x4x24x128xf32, #tpu.memory_space<vmem>>, vector<1x4x1x128xf32>,
    %690 = vector.extract_strided_slice %0 {offsets = [6, 0, 0], sizes = [1, 1, 128], strides = [1, 1, 1]} : vector<9x1x128xf32> to vector<1x1x128xf32>
    %691 = vector.shape_cast %690 : vector<1x1x128xf32> to vector<1x128xf32>
    %692 = vector.broadcast %691 : vector<1x128xf32> to vector<4x128xf32>
    %693 = arith.mulf %641, %692 : vector<4x128xf32>
    %694 = vector.extract_strided_slice %0 {offsets = [7, 0, 0], sizes = [1, 1, 128], strides = [1, 1, 1]} : vector<9x1x128xf32> to vector<1x1x128xf32>
    %695 = vector.shape_cast %694 : vector<1x1x128xf32> to vector<1x128xf32>
    %696 = vector.broadcast %695 : vector<1x128xf32> to vector<4x128xf32>
    %697 = arith.mulf %644, %696 : vector<4x128xf32>
    %698 = arith.addf %693, %697 : vector<4x128xf32>
    %699 = vector.extract_strided_slice %0 {offsets = [8, 0, 0], sizes = [1, 1, 128], strides = [1, 1, 1]} : vector<9x1x128xf32> to vector<1x1x128xf32>
    %700 = vector.shape_cast %699 : vector<1x1x128xf32> to vector<1x128xf32>
    %701 = vector.broadcast %700 : vector<1x128xf32> to vector<4x128xf32>
    %702 = arith.mulf %647, %701 : vector<4x128xf32>
    %703 = arith.addf %698, %702 : vector<4x128xf32>
    %c2_406 = arith.constant 2 : index
    %c7_407 = arith.constant 7 : index
    %c0_408 = arith.constant 0 : index
    %c0_409 = arith.constant 0 : index
    %704 = vector.load %arg5[%c2_406, %c7_407, %c0_408, %c0_409] : memref<3x24x1x128xf32, #tpu.memory_space<vmem>>, vector<1x1x1x128xf32>
    %705 = vector.shape_cast %704 : vector<1x1x1x128xf32> to vector<1x128xf32>
    %706 = vector.broadcast %705 : vector<1x128xf32> to vector<4x128xf32>
    %707 = arith.addf %703, %706 : vector<4x128xf32>
    %c2_410 = arith.constant 2 : index
    %c0_411 = arith.constant 0 : index
    %c7_412 = arith.constant 7 : index
    %c0_413 = arith.constant 0 : index
    %708 = vector.load %arg6[%c2_410, %c0_411, %c7_412, %c0_413] : memref<6x4x24x128xf32, #tpu.memory_space<vmem>>, vector<1x4x1x128xf32>
    %709 = vector.shape_cast %708 : vector<1x4x1x128xf32> to vector<4x128xf32>
    %710 = vector.shape_cast %707 : vector<4x128xf32> to vector<1x4x1x128xf32>
    tpu.vector_store %arg6[%c2_410, %c0_411, %c7_412, %c0_413], %710 {strides = array<i32>} : memref<6x4x24x128xf32, #tpu.memory_space<vmem>>, vector<1x4x1x128xf32>,
    %c3_414 = arith.constant 3 : index
    %c0_415 = arith.constant 0 : index
    %711 = arith.index_cast %638 : i32 to index
    %c0_416 = arith.constant 0 : index
    %712 = vector.load %arg3[%c3_414, %c0_415, %711, %c0_416] : memref<6x4x24x128xf32, #tpu.memory_space<vmem>>, vector<1x4x1x128xf32>
    %713 = vector.shape_cast %712 : vector<1x4x1x128xf32> to vector<4x128xf32>
    %c3_417 = arith.constant 3 : index
    %c0_418 = arith.constant 0 : index
    %c7_419 = arith.constant 7 : index
    %c0_420 = arith.constant 0 : index
    %714 = vector.load %arg6[%c3_417, %c0_418, %c7_419, %c0_420] : memref<6x4x24x128xf32, #tpu.memory_space<vmem>>, vector<1x4x1x128xf32>
    %715 = vector.shape_cast %714 : vector<1x4x1x128xf32> to vector<4x128xf32>
    %716 = vector.shape_cast %713 : vector<4x128xf32> to vector<1x4x1x128xf32>
    tpu.vector_store %arg6[%c3_417, %c0_418, %c7_419, %c0_420], %716 {strides = array<i32>} : memref<6x4x24x128xf32, #tpu.memory_space<vmem>>, vector<1x4x1x128xf32>,
    %c4_421 = arith.constant 4 : index
    %c0_422 = arith.constant 0 : index
    %717 = arith.index_cast %638 : i32 to index
    %c0_423 = arith.constant 0 : index
    %718 = vector.load %arg3[%c4_421, %c0_422, %717, %c0_423] : memref<6x4x24x128xf32, #tpu.memory_space<vmem>>, vector<1x4x1x128xf32>
    %719 = vector.shape_cast %718 : vector<1x4x1x128xf32> to vector<4x128xf32>
    %c4_424 = arith.constant 4 : index
    %c0_425 = arith.constant 0 : index
    %c7_426 = arith.constant 7 : index
    %c0_427 = arith.constant 0 : index
    %720 = vector.load %arg6[%c4_424, %c0_425, %c7_426, %c0_427] : memref<6x4x24x128xf32, #tpu.memory_space<vmem>>, vector<1x4x1x128xf32>
    %721 = vector.shape_cast %720 : vector<1x4x1x128xf32> to vector<4x128xf32>
    %722 = vector.shape_cast %719 : vector<4x128xf32> to vector<1x4x1x128xf32>
    tpu.vector_store %arg6[%c4_424, %c0_425, %c7_426, %c0_427], %722 {strides = array<i32>} : memref<6x4x24x128xf32, #tpu.memory_space<vmem>>, vector<1x4x1x128xf32>,
    %c5_428 = arith.constant 5 : index
    %c0_429 = arith.constant 0 : index
    %723 = arith.index_cast %638 : i32 to index
    %c0_430 = arith.constant 0 : index
    %724 = vector.load %arg3[%c5_428, %c0_429, %723, %c0_430] : memref<6x4x24x128xf32, #tpu.memory_space<vmem>>, vector<1x4x1x128xf32>
    %725 = vector.shape_cast %724 : vector<1x4x1x128xf32> to vector<4x128xf32>
    %c5_431 = arith.constant 5 : index
    %c0_432 = arith.constant 0 : index
    %c7_433 = arith.constant 7 : index
    %c0_434 = arith.constant 0 : index
    %726 = vector.load %arg6[%c5_431, %c0_432, %c7_433, %c0_434] : memref<6x4x24x128xf32, #tpu.memory_space<vmem>>, vector<1x4x1x128xf32>
    %727 = vector.shape_cast %726 : vector<1x4x1x128xf32> to vector<4x128xf32>
    %728 = vector.shape_cast %725 : vector<4x128xf32> to vector<1x4x1x128xf32>
    tpu.vector_store %arg6[%c5_431, %c0_432, %c7_433, %c0_434], %728 {strides = array<i32>} : memref<6x4x24x128xf32, #tpu.memory_space<vmem>>, vector<1x4x1x128xf32>,
    %c8 = arith.constant 8 : index
    %729 = memref.load %arg2[%c8] : memref<24xi32, #tpu.memory_space<smem>>
    %c0_435 = arith.constant 0 : index
    %c0_436 = arith.constant 0 : index
    %730 = arith.index_cast %729 : i32 to index
    %c0_437 = arith.constant 0 : index
    %731 = vector.load %arg3[%c0_435, %c0_436, %730, %c0_437] : memref<6x4x24x128xf32, #tpu.memory_space<vmem>>, vector<1x4x1x128xf32>
    %732 = vector.shape_cast %731 : vector<1x4x1x128xf32> to vector<4x128xf32>
    %c1_438 = arith.constant 1 : index
    %c0_439 = arith.constant 0 : index
    %733 = arith.index_cast %729 : i32 to index
    %c0_440 = arith.constant 0 : index
    %734 = vector.load %arg3[%c1_438, %c0_439, %733, %c0_440] : memref<6x4x24x128xf32, #tpu.memory_space<vmem>>, vector<1x4x1x128xf32>
    %735 = vector.shape_cast %734 : vector<1x4x1x128xf32> to vector<4x128xf32>
    %c2_441 = arith.constant 2 : index
    %c0_442 = arith.constant 0 : index
    %736 = arith.index_cast %729 : i32 to index
    %c0_443 = arith.constant 0 : index
    %737 = vector.load %arg3[%c2_441, %c0_442, %736, %c0_443] : memref<6x4x24x128xf32, #tpu.memory_space<vmem>>, vector<1x4x1x128xf32>
    %738 = vector.shape_cast %737 : vector<1x4x1x128xf32> to vector<4x128xf32>
    %739 = vector.extract_strided_slice %0 {offsets = [0, 0, 0], sizes = [1, 1, 128], strides = [1, 1, 1]} : vector<9x1x128xf32> to vector<1x1x128xf32>
    %740 = vector.shape_cast %739 : vector<1x1x128xf32> to vector<1x128xf32>
    %741 = vector.broadcast %740 : vector<1x128xf32> to vector<4x128xf32>
    %742 = arith.mulf %732, %741 : vector<4x128xf32>
    %743 = vector.extract_strided_slice %0 {offsets = [1, 0, 0], sizes = [1, 1, 128], strides = [1, 1, 1]} : vector<9x1x128xf32> to vector<1x1x128xf32>
    %744 = vector.shape_cast %743 : vector<1x1x128xf32> to vector<1x128xf32>
    %745 = vector.broadcast %744 : vector<1x128xf32> to vector<4x128xf32>
    %746 = arith.mulf %735, %745 : vector<4x128xf32>
    %747 = arith.addf %742, %746 : vector<4x128xf32>
    %748 = vector.extract_strided_slice %0 {offsets = [2, 0, 0], sizes = [1, 1, 128], strides = [1, 1, 1]} : vector<9x1x128xf32> to vector<1x1x128xf32>
    %749 = vector.shape_cast %748 : vector<1x1x128xf32> to vector<1x128xf32>
    %750 = vector.broadcast %749 : vector<1x128xf32> to vector<4x128xf32>
    %751 = arith.mulf %738, %750 : vector<4x128xf32>
    %752 = arith.addf %747, %751 : vector<4x128xf32>
    %c0_444 = arith.constant 0 : index
    %c8_445 = arith.constant 8 : index
    %c0_446 = arith.constant 0 : index
    %c0_447 = arith.constant 0 : index
    %753 = vector.load %arg5[%c0_444, %c8_445, %c0_446, %c0_447] : memref<3x24x1x128xf32, #tpu.memory_space<vmem>>, vector<1x1x1x128xf32>
    %754 = vector.shape_cast %753 : vector<1x1x1x128xf32> to vector<1x128xf32>
    %755 = vector.broadcast %754 : vector<1x128xf32> to vector<4x128xf32>
    %756 = arith.addf %752, %755 : vector<4x128xf32>
    %c0_448 = arith.constant 0 : index
    %c0_449 = arith.constant 0 : index
    %c8_450 = arith.constant 8 : index
    %c0_451 = arith.constant 0 : index
    %757 = vector.load %arg6[%c0_448, %c0_449, %c8_450, %c0_451] : memref<6x4x24x128xf32, #tpu.memory_space<vmem>>, vector<1x4x1x128xf32>
    %758 = vector.shape_cast %757 : vector<1x4x1x128xf32> to vector<4x128xf32>
    %759 = vector.shape_cast %756 : vector<4x128xf32> to vector<1x4x1x128xf32>
    tpu.vector_store %arg6[%c0_448, %c0_449, %c8_450, %c0_451], %759 {strides = array<i32>} : memref<6x4x24x128xf32, #tpu.memory_space<vmem>>, vector<1x4x1x128xf32>,
    %760 = vector.extract_strided_slice %0 {offsets = [3, 0, 0], sizes = [1, 1, 128], strides = [1, 1, 1]} : vector<9x1x128xf32> to vector<1x1x128xf32>
    %761 = vector.shape_cast %760 : vector<1x1x128xf32> to vector<1x128xf32>
    %762 = vector.broadcast %761 : vector<1x128xf32> to vector<4x128xf32>
    %763 = arith.mulf %732, %762 : vector<4x128xf32>
    %764 = vector.extract_strided_slice %0 {offsets = [4, 0, 0], sizes = [1, 1, 128], strides = [1, 1, 1]} : vector<9x1x128xf32> to vector<1x1x128xf32>
    %765 = vector.shape_cast %764 : vector<1x1x128xf32> to vector<1x128xf32>
    %766 = vector.broadcast %765 : vector<1x128xf32> to vector<4x128xf32>
    %767 = arith.mulf %735, %766 : vector<4x128xf32>
    %768 = arith.addf %763, %767 : vector<4x128xf32>
    %769 = vector.extract_strided_slice %0 {offsets = [5, 0, 0], sizes = [1, 1, 128], strides = [1, 1, 1]} : vector<9x1x128xf32> to vector<1x1x128xf32>
    %770 = vector.shape_cast %769 : vector<1x1x128xf32> to vector<1x128xf32>
    %771 = vector.broadcast %770 : vector<1x128xf32> to vector<4x128xf32>
    %772 = arith.mulf %738, %771 : vector<4x128xf32>
    %773 = arith.addf %768, %772 : vector<4x128xf32>
    %c1_452 = arith.constant 1 : index
    %c8_453 = arith.constant 8 : index
    %c0_454 = arith.constant 0 : index
    %c0_455 = arith.constant 0 : index
    %774 = vector.load %arg5[%c1_452, %c8_453, %c0_454, %c0_455] : memref<3x24x1x128xf32, #tpu.memory_space<vmem>>, vector<1x1x1x128xf32>
    %775 = vector.shape_cast %774 : vector<1x1x1x128xf32> to vector<1x128xf32>
    %776 = vector.broadcast %775 : vector<1x128xf32> to vector<4x128xf32>
    %777 = arith.addf %773, %776 : vector<4x128xf32>
    %c1_456 = arith.constant 1 : index
    %c0_457 = arith.constant 0 : index
    %c8_458 = arith.constant 8 : index
    %c0_459 = arith.constant 0 : index
    %778 = vector.load %arg6[%c1_456, %c0_457, %c8_458, %c0_459] : memref<6x4x24x128xf32, #tpu.memory_space<vmem>>, vector<1x4x1x128xf32>
    %779 = vector.shape_cast %778 : vector<1x4x1x128xf32> to vector<4x128xf32>
    %780 = vector.shape_cast %777 : vector<4x128xf32> to vector<1x4x1x128xf32>
    tpu.vector_store %arg6[%c1_456, %c0_457, %c8_458, %c0_459], %780 {strides = array<i32>} : memref<6x4x24x128xf32, #tpu.memory_space<vmem>>, vector<1x4x1x128xf32>,
    %781 = vector.extract_strided_slice %0 {offsets = [6, 0, 0], sizes = [1, 1, 128], strides = [1, 1, 1]} : vector<9x1x128xf32> to vector<1x1x128xf32>
    %782 = vector.shape_cast %781 : vector<1x1x128xf32> to vector<1x128xf32>
    %783 = vector.broadcast %782 : vector<1x128xf32> to vector<4x128xf32>
    %784 = arith.mulf %732, %783 : vector<4x128xf32>
    %785 = vector.extract_strided_slice %0 {offsets = [7, 0, 0], sizes = [1, 1, 128], strides = [1, 1, 1]} : vector<9x1x128xf32> to vector<1x1x128xf32>
    %786 = vector.shape_cast %785 : vector<1x1x128xf32> to vector<1x128xf32>
    %787 = vector.broadcast %786 : vector<1x128xf32> to vector<4x128xf32>
    %788 = arith.mulf %735, %787 : vector<4x128xf32>
    %789 = arith.addf %784, %788 : vector<4x128xf32>
    %790 = vector.extract_strided_slice %0 {offsets = [8, 0, 0], sizes = [1, 1, 128], strides = [1, 1, 1]} : vector<9x1x128xf32> to vector<1x1x128xf32>
    %791 = vector.shape_cast %790 : vector<1x1x128xf32> to vector<1x128xf32>
    %792 = vector.broadcast %791 : vector<1x128xf32> to vector<4x128xf32>
    %793 = arith.mulf %738, %792 : vector<4x128xf32>
    %794 = arith.addf %789, %793 : vector<4x128xf32>
    %c2_460 = arith.constant 2 : index
    %c8_461 = arith.constant 8 : index
    %c0_462 = arith.constant 0 : index
    %c0_463 = arith.constant 0 : index
    %795 = vector.load %arg5[%c2_460, %c8_461, %c0_462, %c0_463] : memref<3x24x1x128xf32, #tpu.memory_space<vmem>>, vector<1x1x1x128xf32>
    %796 = vector.shape_cast %795 : vector<1x1x1x128xf32> to vector<1x128xf32>
    %797 = vector.broadcast %796 : vector<1x128xf32> to vector<4x128xf32>
    %798 = arith.addf %794, %797 : vector<4x128xf32>
    %c2_464 = arith.constant 2 : index
    %c0_465 = arith.constant 0 : index
    %c8_466 = arith.constant 8 : index
    %c0_467 = arith.constant 0 : index
    %799 = vector.load %arg6[%c2_464, %c0_465, %c8_466, %c0_467] : memref<6x4x24x128xf32, #tpu.memory_space<vmem>>, vector<1x4x1x128xf32>
    %800 = vector.shape_cast %799 : vector<1x4x1x128xf32> to vector<4x128xf32>
    %801 = vector.shape_cast %798 : vector<4x128xf32> to vector<1x4x1x128xf32>
    tpu.vector_store %arg6[%c2_464, %c0_465, %c8_466, %c0_467], %801 {strides = array<i32>} : memref<6x4x24x128xf32, #tpu.memory_space<vmem>>, vector<1x4x1x128xf32>,
    %c3_468 = arith.constant 3 : index
    %c0_469 = arith.constant 0 : index
    %802 = arith.index_cast %729 : i32 to index
    %c0_470 = arith.constant 0 : index
    %803 = vector.load %arg3[%c3_468, %c0_469, %802, %c0_470] : memref<6x4x24x128xf32, #tpu.memory_space<vmem>>, vector<1x4x1x128xf32>
    %804 = vector.shape_cast %803 : vector<1x4x1x128xf32> to vector<4x128xf32>
    %c3_471 = arith.constant 3 : index
    %c0_472 = arith.constant 0 : index
    %c8_473 = arith.constant 8 : index
    %c0_474 = arith.constant 0 : index
    %805 = vector.load %arg6[%c3_471, %c0_472, %c8_473, %c0_474] : memref<6x4x24x128xf32, #tpu.memory_space<vmem>>, vector<1x4x1x128xf32>
    %806 = vector.shape_cast %805 : vector<1x4x1x128xf32> to vector<4x128xf32>
    %807 = vector.shape_cast %804 : vector<4x128xf32> to vector<1x4x1x128xf32>
    tpu.vector_store %arg6[%c3_471, %c0_472, %c8_473, %c0_474], %807 {strides = array<i32>} : memref<6x4x24x128xf32, #tpu.memory_space<vmem>>, vector<1x4x1x128xf32>,
    %c4_475 = arith.constant 4 : index
    %c0_476 = arith.constant 0 : index
    %808 = arith.index_cast %729 : i32 to index
    %c0_477 = arith.constant 0 : index
    %809 = vector.load %arg3[%c4_475, %c0_476, %808, %c0_477] : memref<6x4x24x128xf32, #tpu.memory_space<vmem>>, vector<1x4x1x128xf32>
    %810 = vector.shape_cast %809 : vector<1x4x1x128xf32> to vector<4x128xf32>
    %c4_478 = arith.constant 4 : index
    %c0_479 = arith.constant 0 : index
    %c8_480 = arith.constant 8 : index
    %c0_481 = arith.constant 0 : index
    %811 = vector.load %arg6[%c4_478, %c0_479, %c8_480, %c0_481] : memref<6x4x24x128xf32, #tpu.memory_space<vmem>>, vector<1x4x1x128xf32>
    %812 = vector.shape_cast %811 : vector<1x4x1x128xf32> to vector<4x128xf32>
    %813 = vector.shape_cast %810 : vector<4x128xf32> to vector<1x4x1x128xf32>
    tpu.vector_store %arg6[%c4_478, %c0_479, %c8_480, %c0_481], %813 {strides = array<i32>} : memref<6x4x24x128xf32, #tpu.memory_space<vmem>>, vector<1x4x1x128xf32>,
    %c5_482 = arith.constant 5 : index
    %c0_483 = arith.constant 0 : index
    %814 = arith.index_cast %729 : i32 to index
    %c0_484 = arith.constant 0 : index
    %815 = vector.load %arg3[%c5_482, %c0_483, %814, %c0_484] : memref<6x4x24x128xf32, #tpu.memory_space<vmem>>, vector<1x4x1x128xf32>
    %816 = vector.shape_cast %815 : vector<1x4x1x128xf32> to vector<4x128xf32>
    %c5_485 = arith.constant 5 : index
    %c0_486 = arith.constant 0 : index
    %c8_487 = arith.constant 8 : index
    %c0_488 = arith.constant 0 : index
    %817 = vector.load %arg6[%c5_485, %c0_486, %c8_487, %c0_488] : memref<6x4x24x128xf32, #tpu.memory_space<vmem>>, vector<1x4x1x128xf32>
    %818 = vector.shape_cast %817 : vector<1x4x1x128xf32> to vector<4x128xf32>
    %819 = vector.shape_cast %816 : vector<4x128xf32> to vector<1x4x1x128xf32>
    tpu.vector_store %arg6[%c5_485, %c0_486, %c8_487, %c0_488], %819 {strides = array<i32>} : memref<6x4x24x128xf32, #tpu.memory_space<vmem>>, vector<1x4x1x128xf32>,
    %c9 = arith.constant 9 : index
    %820 = memref.load %arg2[%c9] : memref<24xi32, #tpu.memory_space<smem>>
    %c0_489 = arith.constant 0 : index
    %c0_490 = arith.constant 0 : index
    %821 = arith.index_cast %820 : i32 to index
    %c0_491 = arith.constant 0 : index
    %822 = vector.load %arg3[%c0_489, %c0_490, %821, %c0_491] : memref<6x4x24x128xf32, #tpu.memory_space<vmem>>, vector<1x4x1x128xf32>
    %823 = vector.shape_cast %822 : vector<1x4x1x128xf32> to vector<4x128xf32>
    %c1_492 = arith.constant 1 : index
    %c0_493 = arith.constant 0 : index
    %824 = arith.index_cast %820 : i32 to index
    %c0_494 = arith.constant 0 : index
    %825 = vector.load %arg3[%c1_492, %c0_493, %824, %c0_494] : memref<6x4x24x128xf32, #tpu.memory_space<vmem>>, vector<1x4x1x128xf32>
    %826 = vector.shape_cast %825 : vector<1x4x1x128xf32> to vector<4x128xf32>
    %c2_495 = arith.constant 2 : index
    %c0_496 = arith.constant 0 : index
    %827 = arith.index_cast %820 : i32 to index
    %c0_497 = arith.constant 0 : index
    %828 = vector.load %arg3[%c2_495, %c0_496, %827, %c0_497] : memref<6x4x24x128xf32, #tpu.memory_space<vmem>>, vector<1x4x1x128xf32>
    %829 = vector.shape_cast %828 : vector<1x4x1x128xf32> to vector<4x128xf32>
    %830 = vector.extract_strided_slice %0 {offsets = [0, 0, 0], sizes = [1, 1, 128], strides = [1, 1, 1]} : vector<9x1x128xf32> to vector<1x1x128xf32>
    %831 = vector.shape_cast %830 : vector<1x1x128xf32> to vector<1x128xf32>
    %832 = vector.broadcast %831 : vector<1x128xf32> to vector<4x128xf32>
    %833 = arith.mulf %823, %832 : vector<4x128xf32>
    %834 = vector.extract_strided_slice %0 {offsets = [1, 0, 0], sizes = [1, 1, 128], strides = [1, 1, 1]} : vector<9x1x128xf32> to vector<1x1x128xf32>
    %835 = vector.shape_cast %834 : vector<1x1x128xf32> to vector<1x128xf32>
    %836 = vector.broadcast %835 : vector<1x128xf32> to vector<4x128xf32>
    %837 = arith.mulf %826, %836 : vector<4x128xf32>
    %838 = arith.addf %833, %837 : vector<4x128xf32>
    %839 = vector.extract_strided_slice %0 {offsets = [2, 0, 0], sizes = [1, 1, 128], strides = [1, 1, 1]} : vector<9x1x128xf32> to vector<1x1x128xf32>
    %840 = vector.shape_cast %839 : vector<1x1x128xf32> to vector<1x128xf32>
    %841 = vector.broadcast %840 : vector<1x128xf32> to vector<4x128xf32>
    %842 = arith.mulf %829, %841 : vector<4x128xf32>
    %843 = arith.addf %838, %842 : vector<4x128xf32>
    %c0_498 = arith.constant 0 : index
    %c9_499 = arith.constant 9 : index
    %c0_500 = arith.constant 0 : index
    %c0_501 = arith.constant 0 : index
    %844 = vector.load %arg5[%c0_498, %c9_499, %c0_500, %c0_501] : memref<3x24x1x128xf32, #tpu.memory_space<vmem>>, vector<1x1x1x128xf32>
    %845 = vector.shape_cast %844 : vector<1x1x1x128xf32> to vector<1x128xf32>
    %846 = vector.broadcast %845 : vector<1x128xf32> to vector<4x128xf32>
    %847 = arith.addf %843, %846 : vector<4x128xf32>
    %c0_502 = arith.constant 0 : index
    %c0_503 = arith.constant 0 : index
    %c9_504 = arith.constant 9 : index
    %c0_505 = arith.constant 0 : index
    %848 = vector.load %arg6[%c0_502, %c0_503, %c9_504, %c0_505] : memref<6x4x24x128xf32, #tpu.memory_space<vmem>>, vector<1x4x1x128xf32>
    %849 = vector.shape_cast %848 : vector<1x4x1x128xf32> to vector<4x128xf32>
    %850 = vector.shape_cast %847 : vector<4x128xf32> to vector<1x4x1x128xf32>
    tpu.vector_store %arg6[%c0_502, %c0_503, %c9_504, %c0_505], %850 {strides = array<i32>} : memref<6x4x24x128xf32, #tpu.memory_space<vmem>>, vector<1x4x1x128xf32>,
    %851 = vector.extract_strided_slice %0 {offsets = [3, 0, 0], sizes = [1, 1, 128], strides = [1, 1, 1]} : vector<9x1x128xf32> to vector<1x1x128xf32>
    %852 = vector.shape_cast %851 : vector<1x1x128xf32> to vector<1x128xf32>
    %853 = vector.broadcast %852 : vector<1x128xf32> to vector<4x128xf32>
    %854 = arith.mulf %823, %853 : vector<4x128xf32>
    %855 = vector.extract_strided_slice %0 {offsets = [4, 0, 0], sizes = [1, 1, 128], strides = [1, 1, 1]} : vector<9x1x128xf32> to vector<1x1x128xf32>
    %856 = vector.shape_cast %855 : vector<1x1x128xf32> to vector<1x128xf32>
    %857 = vector.broadcast %856 : vector<1x128xf32> to vector<4x128xf32>
    %858 = arith.mulf %826, %857 : vector<4x128xf32>
    %859 = arith.addf %854, %858 : vector<4x128xf32>
    %860 = vector.extract_strided_slice %0 {offsets = [5, 0, 0], sizes = [1, 1, 128], strides = [1, 1, 1]} : vector<9x1x128xf32> to vector<1x1x128xf32>
    %861 = vector.shape_cast %860 : vector<1x1x128xf32> to vector<1x128xf32>
    %862 = vector.broadcast %861 : vector<1x128xf32> to vector<4x128xf32>
    %863 = arith.mulf %829, %862 : vector<4x128xf32>
    %864 = arith.addf %859, %863 : vector<4x128xf32>
    %c1_506 = arith.constant 1 : index
    %c9_507 = arith.constant 9 : index
    %c0_508 = arith.constant 0 : index
    %c0_509 = arith.constant 0 : index
    %865 = vector.load %arg5[%c1_506, %c9_507, %c0_508, %c0_509] : memref<3x24x1x128xf32, #tpu.memory_space<vmem>>, vector<1x1x1x128xf32>
    %866 = vector.shape_cast %865 : vector<1x1x1x128xf32> to vector<1x128xf32>
    %867 = vector.broadcast %866 : vector<1x128xf32> to vector<4x128xf32>
    %868 = arith.addf %864, %867 : vector<4x128xf32>
    %c1_510 = arith.constant 1 : index
    %c0_511 = arith.constant 0 : index
    %c9_512 = arith.constant 9 : index
    %c0_513 = arith.constant 0 : index
    %869 = vector.load %arg6[%c1_510, %c0_511, %c9_512, %c0_513] : memref<6x4x24x128xf32, #tpu.memory_space<vmem>>, vector<1x4x1x128xf32>
    %870 = vector.shape_cast %869 : vector<1x4x1x128xf32> to vector<4x128xf32>
    %871 = vector.shape_cast %868 : vector<4x128xf32> to vector<1x4x1x128xf32>
    tpu.vector_store %arg6[%c1_510, %c0_511, %c9_512, %c0_513], %871 {strides = array<i32>} : memref<6x4x24x128xf32, #tpu.memory_space<vmem>>, vector<1x4x1x128xf32>,
    %872 = vector.extract_strided_slice %0 {offsets = [6, 0, 0], sizes = [1, 1, 128], strides = [1, 1, 1]} : vector<9x1x128xf32> to vector<1x1x128xf32>
    %873 = vector.shape_cast %872 : vector<1x1x128xf32> to vector<1x128xf32>
    %874 = vector.broadcast %873 : vector<1x128xf32> to vector<4x128xf32>
    %875 = arith.mulf %823, %874 : vector<4x128xf32>
    %876 = vector.extract_strided_slice %0 {offsets = [7, 0, 0], sizes = [1, 1, 128], strides = [1, 1, 1]} : vector<9x1x128xf32> to vector<1x1x128xf32>
    %877 = vector.shape_cast %876 : vector<1x1x128xf32> to vector<1x128xf32>
    %878 = vector.broadcast %877 : vector<1x128xf32> to vector<4x128xf32>
    %879 = arith.mulf %826, %878 : vector<4x128xf32>
    %880 = arith.addf %875, %879 : vector<4x128xf32>
    %881 = vector.extract_strided_slice %0 {offsets = [8, 0, 0], sizes = [1, 1, 128], strides = [1, 1, 1]} : vector<9x1x128xf32> to vector<1x1x128xf32>
    %882 = vector.shape_cast %881 : vector<1x1x128xf32> to vector<1x128xf32>
    %883 = vector.broadcast %882 : vector<1x128xf32> to vector<4x128xf32>
    %884 = arith.mulf %829, %883 : vector<4x128xf32>
    %885 = arith.addf %880, %884 : vector<4x128xf32>
    %c2_514 = arith.constant 2 : index
    %c9_515 = arith.constant 9 : index
    %c0_516 = arith.constant 0 : index
    %c0_517 = arith.constant 0 : index
    %886 = vector.load %arg5[%c2_514, %c9_515, %c0_516, %c0_517] : memref<3x24x1x128xf32, #tpu.memory_space<vmem>>, vector<1x1x1x128xf32>
    %887 = vector.shape_cast %886 : vector<1x1x1x128xf32> to vector<1x128xf32>
    %888 = vector.broadcast %887 : vector<1x128xf32> to vector<4x128xf32>
    %889 = arith.addf %885, %888 : vector<4x128xf32>
    %c2_518 = arith.constant 2 : index
    %c0_519 = arith.constant 0 : index
    %c9_520 = arith.constant 9 : index
    %c0_521 = arith.constant 0 : index
    %890 = vector.load %arg6[%c2_518, %c0_519, %c9_520, %c0_521] : memref<6x4x24x128xf32, #tpu.memory_space<vmem>>, vector<1x4x1x128xf32>
    %891 = vector.shape_cast %890 : vector<1x4x1x128xf32> to vector<4x128xf32>
    %892 = vector.shape_cast %889 : vector<4x128xf32> to vector<1x4x1x128xf32>
    tpu.vector_store %arg6[%c2_518, %c0_519, %c9_520, %c0_521], %892 {strides = array<i32>} : memref<6x4x24x128xf32, #tpu.memory_space<vmem>>, vector<1x4x1x128xf32>,
    %c3_522 = arith.constant 3 : index
    %c0_523 = arith.constant 0 : index
    %893 = arith.index_cast %820 : i32 to index
    %c0_524 = arith.constant 0 : index
    %894 = vector.load %arg3[%c3_522, %c0_523, %893, %c0_524] : memref<6x4x24x128xf32, #tpu.memory_space<vmem>>, vector<1x4x1x128xf32>
    %895 = vector.shape_cast %894 : vector<1x4x1x128xf32> to vector<4x128xf32>
    %c3_525 = arith.constant 3 : index
    %c0_526 = arith.constant 0 : index
    %c9_527 = arith.constant 9 : index
    %c0_528 = arith.constant 0 : index
    %896 = vector.load %arg6[%c3_525, %c0_526, %c9_527, %c0_528] : memref<6x4x24x128xf32, #tpu.memory_space<vmem>>, vector<1x4x1x128xf32>
    %897 = vector.shape_cast %896 : vector<1x4x1x128xf32> to vector<4x128xf32>
    %898 = vector.shape_cast %895 : vector<4x128xf32> to vector<1x4x1x128xf32>
    tpu.vector_store %arg6[%c3_525, %c0_526, %c9_527, %c0_528], %898 {strides = array<i32>} : memref<6x4x24x128xf32, #tpu.memory_space<vmem>>, vector<1x4x1x128xf32>,
    %c4_529 = arith.constant 4 : index
    %c0_530 = arith.constant 0 : index
    %899 = arith.index_cast %820 : i32 to index
    %c0_531 = arith.constant 0 : index
    %900 = vector.load %arg3[%c4_529, %c0_530, %899, %c0_531] : memref<6x4x24x128xf32, #tpu.memory_space<vmem>>, vector<1x4x1x128xf32>
    %901 = vector.shape_cast %900 : vector<1x4x1x128xf32> to vector<4x128xf32>
    %c4_532 = arith.constant 4 : index
    %c0_533 = arith.constant 0 : index
    %c9_534 = arith.constant 9 : index
    %c0_535 = arith.constant 0 : index
    %902 = vector.load %arg6[%c4_532, %c0_533, %c9_534, %c0_535] : memref<6x4x24x128xf32, #tpu.memory_space<vmem>>, vector<1x4x1x128xf32>
    %903 = vector.shape_cast %902 : vector<1x4x1x128xf32> to vector<4x128xf32>
    %904 = vector.shape_cast %901 : vector<4x128xf32> to vector<1x4x1x128xf32>
    tpu.vector_store %arg6[%c4_532, %c0_533, %c9_534, %c0_535], %904 {strides = array<i32>} : memref<6x4x24x128xf32, #tpu.memory_space<vmem>>, vector<1x4x1x128xf32>,
    %c5_536 = arith.constant 5 : index
    %c0_537 = arith.constant 0 : index
    %905 = arith.index_cast %820 : i32 to index
    %c0_538 = arith.constant 0 : index
    %906 = vector.load %arg3[%c5_536, %c0_537, %905, %c0_538] : memref<6x4x24x128xf32, #tpu.memory_space<vmem>>, vector<1x4x1x128xf32>
    %907 = vector.shape_cast %906 : vector<1x4x1x128xf32> to vector<4x128xf32>
    %c5_539 = arith.constant 5 : index
    %c0_540 = arith.constant 0 : index
    %c9_541 = arith.constant 9 : index
    %c0_542 = arith.constant 0 : index
    %908 = vector.load %arg6[%c5_539, %c0_540, %c9_541, %c0_542] : memref<6x4x24x128xf32, #tpu.memory_space<vmem>>, vector<1x4x1x128xf32>
    %909 = vector.shape_cast %908 : vector<1x4x1x128xf32> to vector<4x128xf32>
    %910 = vector.shape_cast %907 : vector<4x128xf32> to vector<1x4x1x128xf32>
    tpu.vector_store %arg6[%c5_539, %c0_540, %c9_541, %c0_542], %910 {strides = array<i32>} : memref<6x4x24x128xf32, #tpu.memory_space<vmem>>, vector<1x4x1x128xf32>,
    %c10 = arith.constant 10 : index
    %911 = memref.load %arg2[%c10] : memref<24xi32, #tpu.memory_space<smem>>
    %c0_543 = arith.constant 0 : index
    %c0_544 = arith.constant 0 : index
    %912 = arith.index_cast %911 : i32 to index
    %c0_545 = arith.constant 0 : index
    %913 = vector.load %arg3[%c0_543, %c0_544, %912, %c0_545] : memref<6x4x24x128xf32, #tpu.memory_space<vmem>>, vector<1x4x1x128xf32>
    %914 = vector.shape_cast %913 : vector<1x4x1x128xf32> to vector<4x128xf32>
    %c1_546 = arith.constant 1 : index
    %c0_547 = arith.constant 0 : index
    %915 = arith.index_cast %911 : i32 to index
    %c0_548 = arith.constant 0 : index
    %916 = vector.load %arg3[%c1_546, %c0_547, %915, %c0_548] : memref<6x4x24x128xf32, #tpu.memory_space<vmem>>, vector<1x4x1x128xf32>
    %917 = vector.shape_cast %916 : vector<1x4x1x128xf32> to vector<4x128xf32>
    %c2_549 = arith.constant 2 : index
    %c0_550 = arith.constant 0 : index
    %918 = arith.index_cast %911 : i32 to index
    %c0_551 = arith.constant 0 : index
    %919 = vector.load %arg3[%c2_549, %c0_550, %918, %c0_551] : memref<6x4x24x128xf32, #tpu.memory_space<vmem>>, vector<1x4x1x128xf32>
    %920 = vector.shape_cast %919 : vector<1x4x1x128xf32> to vector<4x128xf32>
    %921 = vector.extract_strided_slice %0 {offsets = [0, 0, 0], sizes = [1, 1, 128], strides = [1, 1, 1]} : vector<9x1x128xf32> to vector<1x1x128xf32>
    %922 = vector.shape_cast %921 : vector<1x1x128xf32> to vector<1x128xf32>
    %923 = vector.broadcast %922 : vector<1x128xf32> to vector<4x128xf32>
    %924 = arith.mulf %914, %923 : vector<4x128xf32>
    %925 = vector.extract_strided_slice %0 {offsets = [1, 0, 0], sizes = [1, 1, 128], strides = [1, 1, 1]} : vector<9x1x128xf32> to vector<1x1x128xf32>
    %926 = vector.shape_cast %925 : vector<1x1x128xf32> to vector<1x128xf32>
    %927 = vector.broadcast %926 : vector<1x128xf32> to vector<4x128xf32>
    %928 = arith.mulf %917, %927 : vector<4x128xf32>
    %929 = arith.addf %924, %928 : vector<4x128xf32>
    %930 = vector.extract_strided_slice %0 {offsets = [2, 0, 0], sizes = [1, 1, 128], strides = [1, 1, 1]} : vector<9x1x128xf32> to vector<1x1x128xf32>
    %931 = vector.shape_cast %930 : vector<1x1x128xf32> to vector<1x128xf32>
    %932 = vector.broadcast %931 : vector<1x128xf32> to vector<4x128xf32>
    %933 = arith.mulf %920, %932 : vector<4x128xf32>
    %934 = arith.addf %929, %933 : vector<4x128xf32>
    %c0_552 = arith.constant 0 : index
    %c10_553 = arith.constant 10 : index
    %c0_554 = arith.constant 0 : index
    %c0_555 = arith.constant 0 : index
    %935 = vector.load %arg5[%c0_552, %c10_553, %c0_554, %c0_555] : memref<3x24x1x128xf32, #tpu.memory_space<vmem>>, vector<1x1x1x128xf32>
    %936 = vector.shape_cast %935 : vector<1x1x1x128xf32> to vector<1x128xf32>
    %937 = vector.broadcast %936 : vector<1x128xf32> to vector<4x128xf32>
    %938 = arith.addf %934, %937 : vector<4x128xf32>
    %c0_556 = arith.constant 0 : index
    %c0_557 = arith.constant 0 : index
    %c10_558 = arith.constant 10 : index
    %c0_559 = arith.constant 0 : index
    %939 = vector.load %arg6[%c0_556, %c0_557, %c10_558, %c0_559] : memref<6x4x24x128xf32, #tpu.memory_space<vmem>>, vector<1x4x1x128xf32>
    %940 = vector.shape_cast %939 : vector<1x4x1x128xf32> to vector<4x128xf32>
    %941 = vector.shape_cast %938 : vector<4x128xf32> to vector<1x4x1x128xf32>
    tpu.vector_store %arg6[%c0_556, %c0_557, %c10_558, %c0_559], %941 {strides = array<i32>} : memref<6x4x24x128xf32, #tpu.memory_space<vmem>>, vector<1x4x1x128xf32>,
    %942 = vector.extract_strided_slice %0 {offsets = [3, 0, 0], sizes = [1, 1, 128], strides = [1, 1, 1]} : vector<9x1x128xf32> to vector<1x1x128xf32>
    %943 = vector.shape_cast %942 : vector<1x1x128xf32> to vector<1x128xf32>
    %944 = vector.broadcast %943 : vector<1x128xf32> to vector<4x128xf32>
    %945 = arith.mulf %914, %944 : vector<4x128xf32>
    %946 = vector.extract_strided_slice %0 {offsets = [4, 0, 0], sizes = [1, 1, 128], strides = [1, 1, 1]} : vector<9x1x128xf32> to vector<1x1x128xf32>
    %947 = vector.shape_cast %946 : vector<1x1x128xf32> to vector<1x128xf32>
    %948 = vector.broadcast %947 : vector<1x128xf32> to vector<4x128xf32>
    %949 = arith.mulf %917, %948 : vector<4x128xf32>
    %950 = arith.addf %945, %949 : vector<4x128xf32>
    %951 = vector.extract_strided_slice %0 {offsets = [5, 0, 0], sizes = [1, 1, 128], strides = [1, 1, 1]} : vector<9x1x128xf32> to vector<1x1x128xf32>
    %952 = vector.shape_cast %951 : vector<1x1x128xf32> to vector<1x128xf32>
    %953 = vector.broadcast %952 : vector<1x128xf32> to vector<4x128xf32>
    %954 = arith.mulf %920, %953 : vector<4x128xf32>
    %955 = arith.addf %950, %954 : vector<4x128xf32>
    %c1_560 = arith.constant 1 : index
    %c10_561 = arith.constant 10 : index
    %c0_562 = arith.constant 0 : index
    %c0_563 = arith.constant 0 : index
    %956 = vector.load %arg5[%c1_560, %c10_561, %c0_562, %c0_563] : memref<3x24x1x128xf32, #tpu.memory_space<vmem>>, vector<1x1x1x128xf32>
    %957 = vector.shape_cast %956 : vector<1x1x1x128xf32> to vector<1x128xf32>
    %958 = vector.broadcast %957 : vector<1x128xf32> to vector<4x128xf32>
    %959 = arith.addf %955, %958 : vector<4x128xf32>
    %c1_564 = arith.constant 1 : index
    %c0_565 = arith.constant 0 : index
    %c10_566 = arith.constant 10 : index
    %c0_567 = arith.constant 0 : index
    %960 = vector.load %arg6[%c1_564, %c0_565, %c10_566, %c0_567] : memref<6x4x24x128xf32, #tpu.memory_space<vmem>>, vector<1x4x1x128xf32>
    %961 = vector.shape_cast %960 : vector<1x4x1x128xf32> to vector<4x128xf32>
    %962 = vector.shape_cast %959 : vector<4x128xf32> to vector<1x4x1x128xf32>
    tpu.vector_store %arg6[%c1_564, %c0_565, %c10_566, %c0_567], %962 {strides = array<i32>} : memref<6x4x24x128xf32, #tpu.memory_space<vmem>>, vector<1x4x1x128xf32>,
    %963 = vector.extract_strided_slice %0 {offsets = [6, 0, 0], sizes = [1, 1, 128], strides = [1, 1, 1]} : vector<9x1x128xf32> to vector<1x1x128xf32>
    %964 = vector.shape_cast %963 : vector<1x1x128xf32> to vector<1x128xf32>
    %965 = vector.broadcast %964 : vector<1x128xf32> to vector<4x128xf32>
    %966 = arith.mulf %914, %965 : vector<4x128xf32>
    %967 = vector.extract_strided_slice %0 {offsets = [7, 0, 0], sizes = [1, 1, 128], strides = [1, 1, 1]} : vector<9x1x128xf32> to vector<1x1x128xf32>
    %968 = vector.shape_cast %967 : vector<1x1x128xf32> to vector<1x128xf32>
    %969 = vector.broadcast %968 : vector<1x128xf32> to vector<4x128xf32>
    %970 = arith.mulf %917, %969 : vector<4x128xf32>
    %971 = arith.addf %966, %970 : vector<4x128xf32>
    %972 = vector.extract_strided_slice %0 {offsets = [8, 0, 0], sizes = [1, 1, 128], strides = [1, 1, 1]} : vector<9x1x128xf32> to vector<1x1x128xf32>
    %973 = vector.shape_cast %972 : vector<1x1x128xf32> to vector<1x128xf32>
    %974 = vector.broadcast %973 : vector<1x128xf32> to vector<4x128xf32>
    %975 = arith.mulf %920, %974 : vector<4x128xf32>
    %976 = arith.addf %971, %975 : vector<4x128xf32>
    %c2_568 = arith.constant 2 : index
    %c10_569 = arith.constant 10 : index
    %c0_570 = arith.constant 0 : index
    %c0_571 = arith.constant 0 : index
    %977 = vector.load %arg5[%c2_568, %c10_569, %c0_570, %c0_571] : memref<3x24x1x128xf32, #tpu.memory_space<vmem>>, vector<1x1x1x128xf32>
    %978 = vector.shape_cast %977 : vector<1x1x1x128xf32> to vector<1x128xf32>
    %979 = vector.broadcast %978 : vector<1x128xf32> to vector<4x128xf32>
    %980 = arith.addf %976, %979 : vector<4x128xf32>
    %c2_572 = arith.constant 2 : index
    %c0_573 = arith.constant 0 : index
    %c10_574 = arith.constant 10 : index
    %c0_575 = arith.constant 0 : index
    %981 = vector.load %arg6[%c2_572, %c0_573, %c10_574, %c0_575] : memref<6x4x24x128xf32, #tpu.memory_space<vmem>>, vector<1x4x1x128xf32>
    %982 = vector.shape_cast %981 : vector<1x4x1x128xf32> to vector<4x128xf32>
    %983 = vector.shape_cast %980 : vector<4x128xf32> to vector<1x4x1x128xf32>
    tpu.vector_store %arg6[%c2_572, %c0_573, %c10_574, %c0_575], %983 {strides = array<i32>} : memref<6x4x24x128xf32, #tpu.memory_space<vmem>>, vector<1x4x1x128xf32>,
    %c3_576 = arith.constant 3 : index
    %c0_577 = arith.constant 0 : index
    %984 = arith.index_cast %911 : i32 to index
    %c0_578 = arith.constant 0 : index
    %985 = vector.load %arg3[%c3_576, %c0_577, %984, %c0_578] : memref<6x4x24x128xf32, #tpu.memory_space<vmem>>, vector<1x4x1x128xf32>
    %986 = vector.shape_cast %985 : vector<1x4x1x128xf32> to vector<4x128xf32>
    %c3_579 = arith.constant 3 : index
    %c0_580 = arith.constant 0 : index
    %c10_581 = arith.constant 10 : index
    %c0_582 = arith.constant 0 : index
    %987 = vector.load %arg6[%c3_579, %c0_580, %c10_581, %c0_582] : memref<6x4x24x128xf32, #tpu.memory_space<vmem>>, vector<1x4x1x128xf32>
    %988 = vector.shape_cast %987 : vector<1x4x1x128xf32> to vector<4x128xf32>
    %989 = vector.shape_cast %986 : vector<4x128xf32> to vector<1x4x1x128xf32>
    tpu.vector_store %arg6[%c3_579, %c0_580, %c10_581, %c0_582], %989 {strides = array<i32>} : memref<6x4x24x128xf32, #tpu.memory_space<vmem>>, vector<1x4x1x128xf32>,
    %c4_583 = arith.constant 4 : index
    %c0_584 = arith.constant 0 : index
    %990 = arith.index_cast %911 : i32 to index
    %c0_585 = arith.constant 0 : index
    %991 = vector.load %arg3[%c4_583, %c0_584, %990, %c0_585] : memref<6x4x24x128xf32, #tpu.memory_space<vmem>>, vector<1x4x1x128xf32>
    %992 = vector.shape_cast %991 : vector<1x4x1x128xf32> to vector<4x128xf32>
    %c4_586 = arith.constant 4 : index
    %c0_587 = arith.constant 0 : index
    %c10_588 = arith.constant 10 : index
    %c0_589 = arith.constant 0 : index
    %993 = vector.load %arg6[%c4_586, %c0_587, %c10_588, %c0_589] : memref<6x4x24x128xf32, #tpu.memory_space<vmem>>, vector<1x4x1x128xf32>
    %994 = vector.shape_cast %993 : vector<1x4x1x128xf32> to vector<4x128xf32>
    %995 = vector.shape_cast %992 : vector<4x128xf32> to vector<1x4x1x128xf32>
    tpu.vector_store %arg6[%c4_586, %c0_587, %c10_588, %c0_589], %995 {strides = array<i32>} : memref<6x4x24x128xf32, #tpu.memory_space<vmem>>, vector<1x4x1x128xf32>,
    %c5_590 = arith.constant 5 : index
    %c0_591 = arith.constant 0 : index
    %996 = arith.index_cast %911 : i32 to index
    %c0_592 = arith.constant 0 : index
    %997 = vector.load %arg3[%c5_590, %c0_591, %996, %c0_592] : memref<6x4x24x128xf32, #tpu.memory_space<vmem>>, vector<1x4x1x128xf32>
    %998 = vector.shape_cast %997 : vector<1x4x1x128xf32> to vector<4x128xf32>
    %c5_593 = arith.constant 5 : index
    %c0_594 = arith.constant 0 : index
    %c10_595 = arith.constant 10 : index
    %c0_596 = arith.constant 0 : index
    %999 = vector.load %arg6[%c5_593, %c0_594, %c10_595, %c0_596] : memref<6x4x24x128xf32, #tpu.memory_space<vmem>>, vector<1x4x1x128xf32>
    %1000 = vector.shape_cast %999 : vector<1x4x1x128xf32> to vector<4x128xf32>
    %1001 = vector.shape_cast %998 : vector<4x128xf32> to vector<1x4x1x128xf32>
    tpu.vector_store %arg6[%c5_593, %c0_594, %c10_595, %c0_596], %1001 {strides = array<i32>} : memref<6x4x24x128xf32, #tpu.memory_space<vmem>>, vector<1x4x1x128xf32>,
    %c11 = arith.constant 11 : index
    %1002 = memref.load %arg2[%c11] : memref<24xi32, #tpu.memory_space<smem>>
    %c0_597 = arith.constant 0 : index
    %c0_598 = arith.constant 0 : index
    %1003 = arith.index_cast %1002 : i32 to index
    %c0_599 = arith.constant 0 : index
    %1004 = vector.load %arg3[%c0_597, %c0_598, %1003, %c0_599] : memref<6x4x24x128xf32, #tpu.memory_space<vmem>>, vector<1x4x1x128xf32>
    %1005 = vector.shape_cast %1004 : vector<1x4x1x128xf32> to vector<4x128xf32>
    %c1_600 = arith.constant 1 : index
    %c0_601 = arith.constant 0 : index
    %1006 = arith.index_cast %1002 : i32 to index
    %c0_602 = arith.constant 0 : index
    %1007 = vector.load %arg3[%c1_600, %c0_601, %1006, %c0_602] : memref<6x4x24x128xf32, #tpu.memory_space<vmem>>, vector<1x4x1x128xf32>
    %1008 = vector.shape_cast %1007 : vector<1x4x1x128xf32> to vector<4x128xf32>
    %c2_603 = arith.constant 2 : index
    %c0_604 = arith.constant 0 : index
    %1009 = arith.index_cast %1002 : i32 to index
    %c0_605 = arith.constant 0 : index
    %1010 = vector.load %arg3[%c2_603, %c0_604, %1009, %c0_605] : memref<6x4x24x128xf32, #tpu.memory_space<vmem>>, vector<1x4x1x128xf32>
    %1011 = vector.shape_cast %1010 : vector<1x4x1x128xf32> to vector<4x128xf32>
    %1012 = vector.extract_strided_slice %0 {offsets = [0, 0, 0], sizes = [1, 1, 128], strides = [1, 1, 1]} : vector<9x1x128xf32> to vector<1x1x128xf32>
    %1013 = vector.shape_cast %1012 : vector<1x1x128xf32> to vector<1x128xf32>
    %1014 = vector.broadcast %1013 : vector<1x128xf32> to vector<4x128xf32>
    %1015 = arith.mulf %1005, %1014 : vector<4x128xf32>
    %1016 = vector.extract_strided_slice %0 {offsets = [1, 0, 0], sizes = [1, 1, 128], strides = [1, 1, 1]} : vector<9x1x128xf32> to vector<1x1x128xf32>
    %1017 = vector.shape_cast %1016 : vector<1x1x128xf32> to vector<1x128xf32>
    %1018 = vector.broadcast %1017 : vector<1x128xf32> to vector<4x128xf32>
    %1019 = arith.mulf %1008, %1018 : vector<4x128xf32>
    %1020 = arith.addf %1015, %1019 : vector<4x128xf32>
    %1021 = vector.extract_strided_slice %0 {offsets = [2, 0, 0], sizes = [1, 1, 128], strides = [1, 1, 1]} : vector<9x1x128xf32> to vector<1x1x128xf32>
    %1022 = vector.shape_cast %1021 : vector<1x1x128xf32> to vector<1x128xf32>
    %1023 = vector.broadcast %1022 : vector<1x128xf32> to vector<4x128xf32>
    %1024 = arith.mulf %1011, %1023 : vector<4x128xf32>
    %1025 = arith.addf %1020, %1024 : vector<4x128xf32>
    %c0_606 = arith.constant 0 : index
    %c11_607 = arith.constant 11 : index
    %c0_608 = arith.constant 0 : index
    %c0_609 = arith.constant 0 : index
    %1026 = vector.load %arg5[%c0_606, %c11_607, %c0_608, %c0_609] : memref<3x24x1x128xf32, #tpu.memory_space<vmem>>, vector<1x1x1x128xf32>
    %1027 = vector.shape_cast %1026 : vector<1x1x1x128xf32> to vector<1x128xf32>
    %1028 = vector.broadcast %1027 : vector<1x128xf32> to vector<4x128xf32>
    %1029 = arith.addf %1025, %1028 : vector<4x128xf32>
    %c0_610 = arith.constant 0 : index
    %c0_611 = arith.constant 0 : index
    %c11_612 = arith.constant 11 : index
    %c0_613 = arith.constant 0 : index
    %1030 = vector.load %arg6[%c0_610, %c0_611, %c11_612, %c0_613] : memref<6x4x24x128xf32, #tpu.memory_space<vmem>>, vector<1x4x1x128xf32>
    %1031 = vector.shape_cast %1030 : vector<1x4x1x128xf32> to vector<4x128xf32>
    %1032 = vector.shape_cast %1029 : vector<4x128xf32> to vector<1x4x1x128xf32>
    tpu.vector_store %arg6[%c0_610, %c0_611, %c11_612, %c0_613], %1032 {strides = array<i32>} : memref<6x4x24x128xf32, #tpu.memory_space<vmem>>, vector<1x4x1x128xf32>,
    %1033 = vector.extract_strided_slice %0 {offsets = [3, 0, 0], sizes = [1, 1, 128], strides = [1, 1, 1]} : vector<9x1x128xf32> to vector<1x1x128xf32>
    %1034 = vector.shape_cast %1033 : vector<1x1x128xf32> to vector<1x128xf32>
    %1035 = vector.broadcast %1034 : vector<1x128xf32> to vector<4x128xf32>
    %1036 = arith.mulf %1005, %1035 : vector<4x128xf32>
    %1037 = vector.extract_strided_slice %0 {offsets = [4, 0, 0], sizes = [1, 1, 128], strides = [1, 1, 1]} : vector<9x1x128xf32> to vector<1x1x128xf32>
    %1038 = vector.shape_cast %1037 : vector<1x1x128xf32> to vector<1x128xf32>
    %1039 = vector.broadcast %1038 : vector<1x128xf32> to vector<4x128xf32>
    %1040 = arith.mulf %1008, %1039 : vector<4x128xf32>
    %1041 = arith.addf %1036, %1040 : vector<4x128xf32>
    %1042 = vector.extract_strided_slice %0 {offsets = [5, 0, 0], sizes = [1, 1, 128], strides = [1, 1, 1]} : vector<9x1x128xf32> to vector<1x1x128xf32>
    %1043 = vector.shape_cast %1042 : vector<1x1x128xf32> to vector<1x128xf32>
    %1044 = vector.broadcast %1043 : vector<1x128xf32> to vector<4x128xf32>
    %1045 = arith.mulf %1011, %1044 : vector<4x128xf32>
    %1046 = arith.addf %1041, %1045 : vector<4x128xf32>
    %c1_614 = arith.constant 1 : index
    %c11_615 = arith.constant 11 : index
    %c0_616 = arith.constant 0 : index
    %c0_617 = arith.constant 0 : index
    %1047 = vector.load %arg5[%c1_614, %c11_615, %c0_616, %c0_617] : memref<3x24x1x128xf32, #tpu.memory_space<vmem>>, vector<1x1x1x128xf32>
    %1048 = vector.shape_cast %1047 : vector<1x1x1x128xf32> to vector<1x128xf32>
    %1049 = vector.broadcast %1048 : vector<1x128xf32> to vector<4x128xf32>
    %1050 = arith.addf %1046, %1049 : vector<4x128xf32>
    %c1_618 = arith.constant 1 : index
    %c0_619 = arith.constant 0 : index
    %c11_620 = arith.constant 11 : index
    %c0_621 = arith.constant 0 : index
    %1051 = vector.load %arg6[%c1_618, %c0_619, %c11_620, %c0_621] : memref<6x4x24x128xf32, #tpu.memory_space<vmem>>, vector<1x4x1x128xf32>
    %1052 = vector.shape_cast %1051 : vector<1x4x1x128xf32> to vector<4x128xf32>
    %1053 = vector.shape_cast %1050 : vector<4x128xf32> to vector<1x4x1x128xf32>
    tpu.vector_store %arg6[%c1_618, %c0_619, %c11_620, %c0_621], %1053 {strides = array<i32>} : memref<6x4x24x128xf32, #tpu.memory_space<vmem>>, vector<1x4x1x128xf32>,
    %1054 = vector.extract_strided_slice %0 {offsets = [6, 0, 0], sizes = [1, 1, 128], strides = [1, 1, 1]} : vector<9x1x128xf32> to vector<1x1x128xf32>
    %1055 = vector.shape_cast %1054 : vector<1x1x128xf32> to vector<1x128xf32>
    %1056 = vector.broadcast %1055 : vector<1x128xf32> to vector<4x128xf32>
    %1057 = arith.mulf %1005, %1056 : vector<4x128xf32>
    %1058 = vector.extract_strided_slice %0 {offsets = [7, 0, 0], sizes = [1, 1, 128], strides = [1, 1, 1]} : vector<9x1x128xf32> to vector<1x1x128xf32>
    %1059 = vector.shape_cast %1058 : vector<1x1x128xf32> to vector<1x128xf32>
    %1060 = vector.broadcast %1059 : vector<1x128xf32> to vector<4x128xf32>
    %1061 = arith.mulf %1008, %1060 : vector<4x128xf32>
    %1062 = arith.addf %1057, %1061 : vector<4x128xf32>
    %1063 = vector.extract_strided_slice %0 {offsets = [8, 0, 0], sizes = [1, 1, 128], strides = [1, 1, 1]} : vector<9x1x128xf32> to vector<1x1x128xf32>
    %1064 = vector.shape_cast %1063 : vector<1x1x128xf32> to vector<1x128xf32>
    %1065 = vector.broadcast %1064 : vector<1x128xf32> to vector<4x128xf32>
    %1066 = arith.mulf %1011, %1065 : vector<4x128xf32>
    %1067 = arith.addf %1062, %1066 : vector<4x128xf32>
    %c2_622 = arith.constant 2 : index
    %c11_623 = arith.constant 11 : index
    %c0_624 = arith.constant 0 : index
    %c0_625 = arith.constant 0 : index
    %1068 = vector.load %arg5[%c2_622, %c11_623, %c0_624, %c0_625] : memref<3x24x1x128xf32, #tpu.memory_space<vmem>>, vector<1x1x1x128xf32>
    %1069 = vector.shape_cast %1068 : vector<1x1x1x128xf32> to vector<1x128xf32>
    %1070 = vector.broadcast %1069 : vector<1x128xf32> to vector<4x128xf32>
    %1071 = arith.addf %1067, %1070 : vector<4x128xf32>
    %c2_626 = arith.constant 2 : index
    %c0_627 = arith.constant 0 : index
    %c11_628 = arith.constant 11 : index
    %c0_629 = arith.constant 0 : index
    %1072 = vector.load %arg6[%c2_626, %c0_627, %c11_628, %c0_629] : memref<6x4x24x128xf32, #tpu.memory_space<vmem>>, vector<1x4x1x128xf32>
    %1073 = vector.shape_cast %1072 : vector<1x4x1x128xf32> to vector<4x128xf32>
    %1074 = vector.shape_cast %1071 : vector<4x128xf32> to vector<1x4x1x128xf32>
    tpu.vector_store %arg6[%c2_626, %c0_627, %c11_628, %c0_629], %1074 {strides = array<i32>} : memref<6x4x24x128xf32, #tpu.memory_space<vmem>>, vector<1x4x1x128xf32>,
    %c3_630 = arith.constant 3 : index
    %c0_631 = arith.constant 0 : index
    %1075 = arith.index_cast %1002 : i32 to index
    %c0_632 = arith.constant 0 : index
    %1076 = vector.load %arg3[%c3_630, %c0_631, %1075, %c0_632] : memref<6x4x24x128xf32, #tpu.memory_space<vmem>>, vector<1x4x1x128xf32>
    %1077 = vector.shape_cast %1076 : vector<1x4x1x128xf32> to vector<4x128xf32>
    %c3_633 = arith.constant 3 : index
    %c0_634 = arith.constant 0 : index
    %c11_635 = arith.constant 11 : index
    %c0_636 = arith.constant 0 : index
    %1078 = vector.load %arg6[%c3_633, %c0_634, %c11_635, %c0_636] : memref<6x4x24x128xf32, #tpu.memory_space<vmem>>, vector<1x4x1x128xf32>
    %1079 = vector.shape_cast %1078 : vector<1x4x1x128xf32> to vector<4x128xf32>
    %1080 = vector.shape_cast %1077 : vector<4x128xf32> to vector<1x4x1x128xf32>
    tpu.vector_store %arg6[%c3_633, %c0_634, %c11_635, %c0_636], %1080 {strides = array<i32>} : memref<6x4x24x128xf32, #tpu.memory_space<vmem>>, vector<1x4x1x128xf32>,
    %c4_637 = arith.constant 4 : index
    %c0_638 = arith.constant 0 : index
    %1081 = arith.index_cast %1002 : i32 to index
    %c0_639 = arith.constant 0 : index
    %1082 = vector.load %arg3[%c4_637, %c0_638, %1081, %c0_639] : memref<6x4x24x128xf32, #tpu.memory_space<vmem>>, vector<1x4x1x128xf32>
    %1083 = vector.shape_cast %1082 : vector<1x4x1x128xf32> to vector<4x128xf32>
    %c4_640 = arith.constant 4 : index
    %c0_641 = arith.constant 0 : index
    %c11_642 = arith.constant 11 : index
    %c0_643 = arith.constant 0 : index
    %1084 = vector.load %arg6[%c4_640, %c0_641, %c11_642, %c0_643] : memref<6x4x24x128xf32, #tpu.memory_space<vmem>>, vector<1x4x1x128xf32>
    %1085 = vector.shape_cast %1084 : vector<1x4x1x128xf32> to vector<4x128xf32>
    %1086 = vector.shape_cast %1083 : vector<4x128xf32> to vector<1x4x1x128xf32>
    tpu.vector_store %arg6[%c4_640, %c0_641, %c11_642, %c0_643], %1086 {strides = array<i32>} : memref<6x4x24x128xf32, #tpu.memory_space<vmem>>, vector<1x4x1x128xf32>,
    %c5_644 = arith.constant 5 : index
    %c0_645 = arith.constant 0 : index
    %1087 = arith.index_cast %1002 : i32 to index
    %c0_646 = arith.constant 0 : index
    %1088 = vector.load %arg3[%c5_644, %c0_645, %1087, %c0_646] : memref<6x4x24x128xf32, #tpu.memory_space<vmem>>, vector<1x4x1x128xf32>
    %1089 = vector.shape_cast %1088 : vector<1x4x1x128xf32> to vector<4x128xf32>
    %c5_647 = arith.constant 5 : index
    %c0_648 = arith.constant 0 : index
    %c11_649 = arith.constant 11 : index
    %c0_650 = arith.constant 0 : index
    %1090 = vector.load %arg6[%c5_647, %c0_648, %c11_649, %c0_650] : memref<6x4x24x128xf32, #tpu.memory_space<vmem>>, vector<1x4x1x128xf32>
    %1091 = vector.shape_cast %1090 : vector<1x4x1x128xf32> to vector<4x128xf32>
    %1092 = vector.shape_cast %1089 : vector<4x128xf32> to vector<1x4x1x128xf32>
    tpu.vector_store %arg6[%c5_647, %c0_648, %c11_649, %c0_650], %1092 {strides = array<i32>} : memref<6x4x24x128xf32, #tpu.memory_space<vmem>>, vector<1x4x1x128xf32>,
    %c12 = arith.constant 12 : index
    %1093 = memref.load %arg2[%c12] : memref<24xi32, #tpu.memory_space<smem>>
    %c0_651 = arith.constant 0 : index
    %c0_652 = arith.constant 0 : index
    %1094 = arith.index_cast %1093 : i32 to index
    %c0_653 = arith.constant 0 : index
    %1095 = vector.load %arg3[%c0_651, %c0_652, %1094, %c0_653] : memref<6x4x24x128xf32, #tpu.memory_space<vmem>>, vector<1x4x1x128xf32>
    %1096 = vector.shape_cast %1095 : vector<1x4x1x128xf32> to vector<4x128xf32>
    %c1_654 = arith.constant 1 : index
    %c0_655 = arith.constant 0 : index
    %1097 = arith.index_cast %1093 : i32 to index
    %c0_656 = arith.constant 0 : index
    %1098 = vector.load %arg3[%c1_654, %c0_655, %1097, %c0_656] : memref<6x4x24x128xf32, #tpu.memory_space<vmem>>, vector<1x4x1x128xf32>
    %1099 = vector.shape_cast %1098 : vector<1x4x1x128xf32> to vector<4x128xf32>
    %c2_657 = arith.constant 2 : index
    %c0_658 = arith.constant 0 : index
    %1100 = arith.index_cast %1093 : i32 to index
    %c0_659 = arith.constant 0 : index
    %1101 = vector.load %arg3[%c2_657, %c0_658, %1100, %c0_659] : memref<6x4x24x128xf32, #tpu.memory_space<vmem>>, vector<1x4x1x128xf32>
    %1102 = vector.shape_cast %1101 : vector<1x4x1x128xf32> to vector<4x128xf32>
    %1103 = vector.extract_strided_slice %0 {offsets = [0, 0, 0], sizes = [1, 1, 128], strides = [1, 1, 1]} : vector<9x1x128xf32> to vector<1x1x128xf32>
    %1104 = vector.shape_cast %1103 : vector<1x1x128xf32> to vector<1x128xf32>
    %1105 = vector.broadcast %1104 : vector<1x128xf32> to vector<4x128xf32>
    %1106 = arith.mulf %1096, %1105 : vector<4x128xf32>
    %1107 = vector.extract_strided_slice %0 {offsets = [1, 0, 0], sizes = [1, 1, 128], strides = [1, 1, 1]} : vector<9x1x128xf32> to vector<1x1x128xf32>
    %1108 = vector.shape_cast %1107 : vector<1x1x128xf32> to vector<1x128xf32>
    %1109 = vector.broadcast %1108 : vector<1x128xf32> to vector<4x128xf32>
    %1110 = arith.mulf %1099, %1109 : vector<4x128xf32>
    %1111 = arith.addf %1106, %1110 : vector<4x128xf32>
    %1112 = vector.extract_strided_slice %0 {offsets = [2, 0, 0], sizes = [1, 1, 128], strides = [1, 1, 1]} : vector<9x1x128xf32> to vector<1x1x128xf32>
    %1113 = vector.shape_cast %1112 : vector<1x1x128xf32> to vector<1x128xf32>
    %1114 = vector.broadcast %1113 : vector<1x128xf32> to vector<4x128xf32>
    %1115 = arith.mulf %1102, %1114 : vector<4x128xf32>
    %1116 = arith.addf %1111, %1115 : vector<4x128xf32>
    %c0_660 = arith.constant 0 : index
    %c12_661 = arith.constant 12 : index
    %c0_662 = arith.constant 0 : index
    %c0_663 = arith.constant 0 : index
    %1117 = vector.load %arg5[%c0_660, %c12_661, %c0_662, %c0_663] : memref<3x24x1x128xf32, #tpu.memory_space<vmem>>, vector<1x1x1x128xf32>
    %1118 = vector.shape_cast %1117 : vector<1x1x1x128xf32> to vector<1x128xf32>
    %1119 = vector.broadcast %1118 : vector<1x128xf32> to vector<4x128xf32>
    %1120 = arith.addf %1116, %1119 : vector<4x128xf32>
    %c0_664 = arith.constant 0 : index
    %c0_665 = arith.constant 0 : index
    %c12_666 = arith.constant 12 : index
    %c0_667 = arith.constant 0 : index
    %1121 = vector.load %arg6[%c0_664, %c0_665, %c12_666, %c0_667] : memref<6x4x24x128xf32, #tpu.memory_space<vmem>>, vector<1x4x1x128xf32>
    %1122 = vector.shape_cast %1121 : vector<1x4x1x128xf32> to vector<4x128xf32>
    %1123 = vector.shape_cast %1120 : vector<4x128xf32> to vector<1x4x1x128xf32>
    tpu.vector_store %arg6[%c0_664, %c0_665, %c12_666, %c0_667], %1123 {strides = array<i32>} : memref<6x4x24x128xf32, #tpu.memory_space<vmem>>, vector<1x4x1x128xf32>,
    %1124 = vector.extract_strided_slice %0 {offsets = [3, 0, 0], sizes = [1, 1, 128], strides = [1, 1, 1]} : vector<9x1x128xf32> to vector<1x1x128xf32>
    %1125 = vector.shape_cast %1124 : vector<1x1x128xf32> to vector<1x128xf32>
    %1126 = vector.broadcast %1125 : vector<1x128xf32> to vector<4x128xf32>
    %1127 = arith.mulf %1096, %1126 : vector<4x128xf32>
    %1128 = vector.extract_strided_slice %0 {offsets = [4, 0, 0], sizes = [1, 1, 128], strides = [1, 1, 1]} : vector<9x1x128xf32> to vector<1x1x128xf32>
    %1129 = vector.shape_cast %1128 : vector<1x1x128xf32> to vector<1x128xf32>
    %1130 = vector.broadcast %1129 : vector<1x128xf32> to vector<4x128xf32>
    %1131 = arith.mulf %1099, %1130 : vector<4x128xf32>
    %1132 = arith.addf %1127, %1131 : vector<4x128xf32>
    %1133 = vector.extract_strided_slice %0 {offsets = [5, 0, 0], sizes = [1, 1, 128], strides = [1, 1, 1]} : vector<9x1x128xf32> to vector<1x1x128xf32>
    %1134 = vector.shape_cast %1133 : vector<1x1x128xf32> to vector<1x128xf32>
    %1135 = vector.broadcast %1134 : vector<1x128xf32> to vector<4x128xf32>
    %1136 = arith.mulf %1102, %1135 : vector<4x128xf32>
    %1137 = arith.addf %1132, %1136 : vector<4x128xf32>
    %c1_668 = arith.constant 1 : index
    %c12_669 = arith.constant 12 : index
    %c0_670 = arith.constant 0 : index
    %c0_671 = arith.constant 0 : index
    %1138 = vector.load %arg5[%c1_668, %c12_669, %c0_670, %c0_671] : memref<3x24x1x128xf32, #tpu.memory_space<vmem>>, vector<1x1x1x128xf32>
    %1139 = vector.shape_cast %1138 : vector<1x1x1x128xf32> to vector<1x128xf32>
    %1140 = vector.broadcast %1139 : vector<1x128xf32> to vector<4x128xf32>
    %1141 = arith.addf %1137, %1140 : vector<4x128xf32>
    %c1_672 = arith.constant 1 : index
    %c0_673 = arith.constant 0 : index
    %c12_674 = arith.constant 12 : index
    %c0_675 = arith.constant 0 : index
    %1142 = vector.load %arg6[%c1_672, %c0_673, %c12_674, %c0_675] : memref<6x4x24x128xf32, #tpu.memory_space<vmem>>, vector<1x4x1x128xf32>
    %1143 = vector.shape_cast %1142 : vector<1x4x1x128xf32> to vector<4x128xf32>
    %1144 = vector.shape_cast %1141 : vector<4x128xf32> to vector<1x4x1x128xf32>
    tpu.vector_store %arg6[%c1_672, %c0_673, %c12_674, %c0_675], %1144 {strides = array<i32>} : memref<6x4x24x128xf32, #tpu.memory_space<vmem>>, vector<1x4x1x128xf32>,
    %1145 = vector.extract_strided_slice %0 {offsets = [6, 0, 0], sizes = [1, 1, 128], strides = [1, 1, 1]} : vector<9x1x128xf32> to vector<1x1x128xf32>
    %1146 = vector.shape_cast %1145 : vector<1x1x128xf32> to vector<1x128xf32>
    %1147 = vector.broadcast %1146 : vector<1x128xf32> to vector<4x128xf32>
    %1148 = arith.mulf %1096, %1147 : vector<4x128xf32>
    %1149 = vector.extract_strided_slice %0 {offsets = [7, 0, 0], sizes = [1, 1, 128], strides = [1, 1, 1]} : vector<9x1x128xf32> to vector<1x1x128xf32>
    %1150 = vector.shape_cast %1149 : vector<1x1x128xf32> to vector<1x128xf32>
    %1151 = vector.broadcast %1150 : vector<1x128xf32> to vector<4x128xf32>
    %1152 = arith.mulf %1099, %1151 : vector<4x128xf32>
    %1153 = arith.addf %1148, %1152 : vector<4x128xf32>
    %1154 = vector.extract_strided_slice %0 {offsets = [8, 0, 0], sizes = [1, 1, 128], strides = [1, 1, 1]} : vector<9x1x128xf32> to vector<1x1x128xf32>
    %1155 = vector.shape_cast %1154 : vector<1x1x128xf32> to vector<1x128xf32>
    %1156 = vector.broadcast %1155 : vector<1x128xf32> to vector<4x128xf32>
    %1157 = arith.mulf %1102, %1156 : vector<4x128xf32>
    %1158 = arith.addf %1153, %1157 : vector<4x128xf32>
    %c2_676 = arith.constant 2 : index
    %c12_677 = arith.constant 12 : index
    %c0_678 = arith.constant 0 : index
    %c0_679 = arith.constant 0 : index
    %1159 = vector.load %arg5[%c2_676, %c12_677, %c0_678, %c0_679] : memref<3x24x1x128xf32, #tpu.memory_space<vmem>>, vector<1x1x1x128xf32>
    %1160 = vector.shape_cast %1159 : vector<1x1x1x128xf32> to vector<1x128xf32>
    %1161 = vector.broadcast %1160 : vector<1x128xf32> to vector<4x128xf32>
    %1162 = arith.addf %1158, %1161 : vector<4x128xf32>
    %c2_680 = arith.constant 2 : index
    %c0_681 = arith.constant 0 : index
    %c12_682 = arith.constant 12 : index
    %c0_683 = arith.constant 0 : index
    %1163 = vector.load %arg6[%c2_680, %c0_681, %c12_682, %c0_683] : memref<6x4x24x128xf32, #tpu.memory_space<vmem>>, vector<1x4x1x128xf32>
    %1164 = vector.shape_cast %1163 : vector<1x4x1x128xf32> to vector<4x128xf32>
    %1165 = vector.shape_cast %1162 : vector<4x128xf32> to vector<1x4x1x128xf32>
    tpu.vector_store %arg6[%c2_680, %c0_681, %c12_682, %c0_683], %1165 {strides = array<i32>} : memref<6x4x24x128xf32, #tpu.memory_space<vmem>>, vector<1x4x1x128xf32>,
    %c3_684 = arith.constant 3 : index
    %c0_685 = arith.constant 0 : index
    %1166 = arith.index_cast %1093 : i32 to index
    %c0_686 = arith.constant 0 : index
    %1167 = vector.load %arg3[%c3_684, %c0_685, %1166, %c0_686] : memref<6x4x24x128xf32, #tpu.memory_space<vmem>>, vector<1x4x1x128xf32>
    %1168 = vector.shape_cast %1167 : vector<1x4x1x128xf32> to vector<4x128xf32>
    %c3_687 = arith.constant 3 : index
    %c0_688 = arith.constant 0 : index
    %c12_689 = arith.constant 12 : index
    %c0_690 = arith.constant 0 : index
    %1169 = vector.load %arg6[%c3_687, %c0_688, %c12_689, %c0_690] : memref<6x4x24x128xf32, #tpu.memory_space<vmem>>, vector<1x4x1x128xf32>
    %1170 = vector.shape_cast %1169 : vector<1x4x1x128xf32> to vector<4x128xf32>
    %1171 = vector.shape_cast %1168 : vector<4x128xf32> to vector<1x4x1x128xf32>
    tpu.vector_store %arg6[%c3_687, %c0_688, %c12_689, %c0_690], %1171 {strides = array<i32>} : memref<6x4x24x128xf32, #tpu.memory_space<vmem>>, vector<1x4x1x128xf32>,
    %c4_691 = arith.constant 4 : index
    %c0_692 = arith.constant 0 : index
    %1172 = arith.index_cast %1093 : i32 to index
    %c0_693 = arith.constant 0 : index
    %1173 = vector.load %arg3[%c4_691, %c0_692, %1172, %c0_693] : memref<6x4x24x128xf32, #tpu.memory_space<vmem>>, vector<1x4x1x128xf32>
    %1174 = vector.shape_cast %1173 : vector<1x4x1x128xf32> to vector<4x128xf32>
    %c4_694 = arith.constant 4 : index
    %c0_695 = arith.constant 0 : index
    %c12_696 = arith.constant 12 : index
    %c0_697 = arith.constant 0 : index
    %1175 = vector.load %arg6[%c4_694, %c0_695, %c12_696, %c0_697] : memref<6x4x24x128xf32, #tpu.memory_space<vmem>>, vector<1x4x1x128xf32>
    %1176 = vector.shape_cast %1175 : vector<1x4x1x128xf32> to vector<4x128xf32>
    %1177 = vector.shape_cast %1174 : vector<4x128xf32> to vector<1x4x1x128xf32>
    tpu.vector_store %arg6[%c4_694, %c0_695, %c12_696, %c0_697], %1177 {strides = array<i32>} : memref<6x4x24x128xf32, #tpu.memory_space<vmem>>, vector<1x4x1x128xf32>,
    %c5_698 = arith.constant 5 : index
    %c0_699 = arith.constant 0 : index
    %1178 = arith.index_cast %1093 : i32 to index
    %c0_700 = arith.constant 0 : index
    %1179 = vector.load %arg3[%c5_698, %c0_699, %1178, %c0_700] : memref<6x4x24x128xf32, #tpu.memory_space<vmem>>, vector<1x4x1x128xf32>
    %1180 = vector.shape_cast %1179 : vector<1x4x1x128xf32> to vector<4x128xf32>
    %c5_701 = arith.constant 5 : index
    %c0_702 = arith.constant 0 : index
    %c12_703 = arith.constant 12 : index
    %c0_704 = arith.constant 0 : index
    %1181 = vector.load %arg6[%c5_701, %c0_702, %c12_703, %c0_704] : memref<6x4x24x128xf32, #tpu.memory_space<vmem>>, vector<1x4x1x128xf32>
    %1182 = vector.shape_cast %1181 : vector<1x4x1x128xf32> to vector<4x128xf32>
    %1183 = vector.shape_cast %1180 : vector<4x128xf32> to vector<1x4x1x128xf32>
    tpu.vector_store %arg6[%c5_701, %c0_702, %c12_703, %c0_704], %1183 {strides = array<i32>} : memref<6x4x24x128xf32, #tpu.memory_space<vmem>>, vector<1x4x1x128xf32>,
    %c13 = arith.constant 13 : index
    %1184 = memref.load %arg2[%c13] : memref<24xi32, #tpu.memory_space<smem>>
    %c0_705 = arith.constant 0 : index
    %c0_706 = arith.constant 0 : index
    %1185 = arith.index_cast %1184 : i32 to index
    %c0_707 = arith.constant 0 : index
    %1186 = vector.load %arg3[%c0_705, %c0_706, %1185, %c0_707] : memref<6x4x24x128xf32, #tpu.memory_space<vmem>>, vector<1x4x1x128xf32>
    %1187 = vector.shape_cast %1186 : vector<1x4x1x128xf32> to vector<4x128xf32>
    %c1_708 = arith.constant 1 : index
    %c0_709 = arith.constant 0 : index
    %1188 = arith.index_cast %1184 : i32 to index
    %c0_710 = arith.constant 0 : index
    %1189 = vector.load %arg3[%c1_708, %c0_709, %1188, %c0_710] : memref<6x4x24x128xf32, #tpu.memory_space<vmem>>, vector<1x4x1x128xf32>
    %1190 = vector.shape_cast %1189 : vector<1x4x1x128xf32> to vector<4x128xf32>
    %c2_711 = arith.constant 2 : index
    %c0_712 = arith.constant 0 : index
    %1191 = arith.index_cast %1184 : i32 to index
    %c0_713 = arith.constant 0 : index
    %1192 = vector.load %arg3[%c2_711, %c0_712, %1191, %c0_713] : memref<6x4x24x128xf32, #tpu.memory_space<vmem>>, vector<1x4x1x128xf32>
    %1193 = vector.shape_cast %1192 : vector<1x4x1x128xf32> to vector<4x128xf32>
    %1194 = vector.extract_strided_slice %0 {offsets = [0, 0, 0], sizes = [1, 1, 128], strides = [1, 1, 1]} : vector<9x1x128xf32> to vector<1x1x128xf32>
    %1195 = vector.shape_cast %1194 : vector<1x1x128xf32> to vector<1x128xf32>
    %1196 = vector.broadcast %1195 : vector<1x128xf32> to vector<4x128xf32>
    %1197 = arith.mulf %1187, %1196 : vector<4x128xf32>
    %1198 = vector.extract_strided_slice %0 {offsets = [1, 0, 0], sizes = [1, 1, 128], strides = [1, 1, 1]} : vector<9x1x128xf32> to vector<1x1x128xf32>
    %1199 = vector.shape_cast %1198 : vector<1x1x128xf32> to vector<1x128xf32>
    %1200 = vector.broadcast %1199 : vector<1x128xf32> to vector<4x128xf32>
    %1201 = arith.mulf %1190, %1200 : vector<4x128xf32>
    %1202 = arith.addf %1197, %1201 : vector<4x128xf32>
    %1203 = vector.extract_strided_slice %0 {offsets = [2, 0, 0], sizes = [1, 1, 128], strides = [1, 1, 1]} : vector<9x1x128xf32> to vector<1x1x128xf32>
    %1204 = vector.shape_cast %1203 : vector<1x1x128xf32> to vector<1x128xf32>
    %1205 = vector.broadcast %1204 : vector<1x128xf32> to vector<4x128xf32>
    %1206 = arith.mulf %1193, %1205 : vector<4x128xf32>
    %1207 = arith.addf %1202, %1206 : vector<4x128xf32>
    %c0_714 = arith.constant 0 : index
    %c13_715 = arith.constant 13 : index
    %c0_716 = arith.constant 0 : index
    %c0_717 = arith.constant 0 : index
    %1208 = vector.load %arg5[%c0_714, %c13_715, %c0_716, %c0_717] : memref<3x24x1x128xf32, #tpu.memory_space<vmem>>, vector<1x1x1x128xf32>
    %1209 = vector.shape_cast %1208 : vector<1x1x1x128xf32> to vector<1x128xf32>
    %1210 = vector.broadcast %1209 : vector<1x128xf32> to vector<4x128xf32>
    %1211 = arith.addf %1207, %1210 : vector<4x128xf32>
    %c0_718 = arith.constant 0 : index
    %c0_719 = arith.constant 0 : index
    %c13_720 = arith.constant 13 : index
    %c0_721 = arith.constant 0 : index
    %1212 = vector.load %arg6[%c0_718, %c0_719, %c13_720, %c0_721] : memref<6x4x24x128xf32, #tpu.memory_space<vmem>>, vector<1x4x1x128xf32>
    %1213 = vector.shape_cast %1212 : vector<1x4x1x128xf32> to vector<4x128xf32>
    %1214 = vector.shape_cast %1211 : vector<4x128xf32> to vector<1x4x1x128xf32>
    tpu.vector_store %arg6[%c0_718, %c0_719, %c13_720, %c0_721], %1214 {strides = array<i32>} : memref<6x4x24x128xf32, #tpu.memory_space<vmem>>, vector<1x4x1x128xf32>,
    %1215 = vector.extract_strided_slice %0 {offsets = [3, 0, 0], sizes = [1, 1, 128], strides = [1, 1, 1]} : vector<9x1x128xf32> to vector<1x1x128xf32>
    %1216 = vector.shape_cast %1215 : vector<1x1x128xf32> to vector<1x128xf32>
    %1217 = vector.broadcast %1216 : vector<1x128xf32> to vector<4x128xf32>
    %1218 = arith.mulf %1187, %1217 : vector<4x128xf32>
    %1219 = vector.extract_strided_slice %0 {offsets = [4, 0, 0], sizes = [1, 1, 128], strides = [1, 1, 1]} : vector<9x1x128xf32> to vector<1x1x128xf32>
    %1220 = vector.shape_cast %1219 : vector<1x1x128xf32> to vector<1x128xf32>
    %1221 = vector.broadcast %1220 : vector<1x128xf32> to vector<4x128xf32>
    %1222 = arith.mulf %1190, %1221 : vector<4x128xf32>
    %1223 = arith.addf %1218, %1222 : vector<4x128xf32>
    %1224 = vector.extract_strided_slice %0 {offsets = [5, 0, 0], sizes = [1, 1, 128], strides = [1, 1, 1]} : vector<9x1x128xf32> to vector<1x1x128xf32>
    %1225 = vector.shape_cast %1224 : vector<1x1x128xf32> to vector<1x128xf32>
    %1226 = vector.broadcast %1225 : vector<1x128xf32> to vector<4x128xf32>
    %1227 = arith.mulf %1193, %1226 : vector<4x128xf32>
    %1228 = arith.addf %1223, %1227 : vector<4x128xf32>
    %c1_722 = arith.constant 1 : index
    %c13_723 = arith.constant 13 : index
    %c0_724 = arith.constant 0 : index
    %c0_725 = arith.constant 0 : index
    %1229 = vector.load %arg5[%c1_722, %c13_723, %c0_724, %c0_725] : memref<3x24x1x128xf32, #tpu.memory_space<vmem>>, vector<1x1x1x128xf32>
    %1230 = vector.shape_cast %1229 : vector<1x1x1x128xf32> to vector<1x128xf32>
    %1231 = vector.broadcast %1230 : vector<1x128xf32> to vector<4x128xf32>
    %1232 = arith.addf %1228, %1231 : vector<4x128xf32>
    %c1_726 = arith.constant 1 : index
    %c0_727 = arith.constant 0 : index
    %c13_728 = arith.constant 13 : index
    %c0_729 = arith.constant 0 : index
    %1233 = vector.load %arg6[%c1_726, %c0_727, %c13_728, %c0_729] : memref<6x4x24x128xf32, #tpu.memory_space<vmem>>, vector<1x4x1x128xf32>
    %1234 = vector.shape_cast %1233 : vector<1x4x1x128xf32> to vector<4x128xf32>
    %1235 = vector.shape_cast %1232 : vector<4x128xf32> to vector<1x4x1x128xf32>
    tpu.vector_store %arg6[%c1_726, %c0_727, %c13_728, %c0_729], %1235 {strides = array<i32>} : memref<6x4x24x128xf32, #tpu.memory_space<vmem>>, vector<1x4x1x128xf32>,
    %1236 = vector.extract_strided_slice %0 {offsets = [6, 0, 0], sizes = [1, 1, 128], strides = [1, 1, 1]} : vector<9x1x128xf32> to vector<1x1x128xf32>
    %1237 = vector.shape_cast %1236 : vector<1x1x128xf32> to vector<1x128xf32>
    %1238 = vector.broadcast %1237 : vector<1x128xf32> to vector<4x128xf32>
    %1239 = arith.mulf %1187, %1238 : vector<4x128xf32>
    %1240 = vector.extract_strided_slice %0 {offsets = [7, 0, 0], sizes = [1, 1, 128], strides = [1, 1, 1]} : vector<9x1x128xf32> to vector<1x1x128xf32>
    %1241 = vector.shape_cast %1240 : vector<1x1x128xf32> to vector<1x128xf32>
    %1242 = vector.broadcast %1241 : vector<1x128xf32> to vector<4x128xf32>
    %1243 = arith.mulf %1190, %1242 : vector<4x128xf32>
    %1244 = arith.addf %1239, %1243 : vector<4x128xf32>
    %1245 = vector.extract_strided_slice %0 {offsets = [8, 0, 0], sizes = [1, 1, 128], strides = [1, 1, 1]} : vector<9x1x128xf32> to vector<1x1x128xf32>
    %1246 = vector.shape_cast %1245 : vector<1x1x128xf32> to vector<1x128xf32>
    %1247 = vector.broadcast %1246 : vector<1x128xf32> to vector<4x128xf32>
    %1248 = arith.mulf %1193, %1247 : vector<4x128xf32>
    %1249 = arith.addf %1244, %1248 : vector<4x128xf32>
    %c2_730 = arith.constant 2 : index
    %c13_731 = arith.constant 13 : index
    %c0_732 = arith.constant 0 : index
    %c0_733 = arith.constant 0 : index
    %1250 = vector.load %arg5[%c2_730, %c13_731, %c0_732, %c0_733] : memref<3x24x1x128xf32, #tpu.memory_space<vmem>>, vector<1x1x1x128xf32>
    %1251 = vector.shape_cast %1250 : vector<1x1x1x128xf32> to vector<1x128xf32>
    %1252 = vector.broadcast %1251 : vector<1x128xf32> to vector<4x128xf32>
    %1253 = arith.addf %1249, %1252 : vector<4x128xf32>
    %c2_734 = arith.constant 2 : index
    %c0_735 = arith.constant 0 : index
    %c13_736 = arith.constant 13 : index
    %c0_737 = arith.constant 0 : index
    %1254 = vector.load %arg6[%c2_734, %c0_735, %c13_736, %c0_737] : memref<6x4x24x128xf32, #tpu.memory_space<vmem>>, vector<1x4x1x128xf32>
    %1255 = vector.shape_cast %1254 : vector<1x4x1x128xf32> to vector<4x128xf32>
    %1256 = vector.shape_cast %1253 : vector<4x128xf32> to vector<1x4x1x128xf32>
    tpu.vector_store %arg6[%c2_734, %c0_735, %c13_736, %c0_737], %1256 {strides = array<i32>} : memref<6x4x24x128xf32, #tpu.memory_space<vmem>>, vector<1x4x1x128xf32>,
    %c3_738 = arith.constant 3 : index
    %c0_739 = arith.constant 0 : index
    %1257 = arith.index_cast %1184 : i32 to index
    %c0_740 = arith.constant 0 : index
    %1258 = vector.load %arg3[%c3_738, %c0_739, %1257, %c0_740] : memref<6x4x24x128xf32, #tpu.memory_space<vmem>>, vector<1x4x1x128xf32>
    %1259 = vector.shape_cast %1258 : vector<1x4x1x128xf32> to vector<4x128xf32>
    %c3_741 = arith.constant 3 : index
    %c0_742 = arith.constant 0 : index
    %c13_743 = arith.constant 13 : index
    %c0_744 = arith.constant 0 : index
    %1260 = vector.load %arg6[%c3_741, %c0_742, %c13_743, %c0_744] : memref<6x4x24x128xf32, #tpu.memory_space<vmem>>, vector<1x4x1x128xf32>
    %1261 = vector.shape_cast %1260 : vector<1x4x1x128xf32> to vector<4x128xf32>
    %1262 = vector.shape_cast %1259 : vector<4x128xf32> to vector<1x4x1x128xf32>
    tpu.vector_store %arg6[%c3_741, %c0_742, %c13_743, %c0_744], %1262 {strides = array<i32>} : memref<6x4x24x128xf32, #tpu.memory_space<vmem>>, vector<1x4x1x128xf32>,
    %c4_745 = arith.constant 4 : index
    %c0_746 = arith.constant 0 : index
    %1263 = arith.index_cast %1184 : i32 to index
    %c0_747 = arith.constant 0 : index
    %1264 = vector.load %arg3[%c4_745, %c0_746, %1263, %c0_747] : memref<6x4x24x128xf32, #tpu.memory_space<vmem>>, vector<1x4x1x128xf32>
    %1265 = vector.shape_cast %1264 : vector<1x4x1x128xf32> to vector<4x128xf32>
    %c4_748 = arith.constant 4 : index
    %c0_749 = arith.constant 0 : index
    %c13_750 = arith.constant 13 : index
    %c0_751 = arith.constant 0 : index
    %1266 = vector.load %arg6[%c4_748, %c0_749, %c13_750, %c0_751] : memref<6x4x24x128xf32, #tpu.memory_space<vmem>>, vector<1x4x1x128xf32>
    %1267 = vector.shape_cast %1266 : vector<1x4x1x128xf32> to vector<4x128xf32>
    %1268 = vector.shape_cast %1265 : vector<4x128xf32> to vector<1x4x1x128xf32>
    tpu.vector_store %arg6[%c4_748, %c0_749, %c13_750, %c0_751], %1268 {strides = array<i32>} : memref<6x4x24x128xf32, #tpu.memory_space<vmem>>, vector<1x4x1x128xf32>,
    %c5_752 = arith.constant 5 : index
    %c0_753 = arith.constant 0 : index
    %1269 = arith.index_cast %1184 : i32 to index
    %c0_754 = arith.constant 0 : index
    %1270 = vector.load %arg3[%c5_752, %c0_753, %1269, %c0_754] : memref<6x4x24x128xf32, #tpu.memory_space<vmem>>, vector<1x4x1x128xf32>
    %1271 = vector.shape_cast %1270 : vector<1x4x1x128xf32> to vector<4x128xf32>
    %c5_755 = arith.constant 5 : index
    %c0_756 = arith.constant 0 : index
    %c13_757 = arith.constant 13 : index
    %c0_758 = arith.constant 0 : index
    %1272 = vector.load %arg6[%c5_755, %c0_756, %c13_757, %c0_758] : memref<6x4x24x128xf32, #tpu.memory_space<vmem>>, vector<1x4x1x128xf32>
    %1273 = vector.shape_cast %1272 : vector<1x4x1x128xf32> to vector<4x128xf32>
    %1274 = vector.shape_cast %1271 : vector<4x128xf32> to vector<1x4x1x128xf32>
    tpu.vector_store %arg6[%c5_755, %c0_756, %c13_757, %c0_758], %1274 {strides = array<i32>} : memref<6x4x24x128xf32, #tpu.memory_space<vmem>>, vector<1x4x1x128xf32>,
    %c14 = arith.constant 14 : index
    %1275 = memref.load %arg2[%c14] : memref<24xi32, #tpu.memory_space<smem>>
    %c0_759 = arith.constant 0 : index
    %c0_760 = arith.constant 0 : index
    %1276 = arith.index_cast %1275 : i32 to index
    %c0_761 = arith.constant 0 : index
    %1277 = vector.load %arg3[%c0_759, %c0_760, %1276, %c0_761] : memref<6x4x24x128xf32, #tpu.memory_space<vmem>>, vector<1x4x1x128xf32>
    %1278 = vector.shape_cast %1277 : vector<1x4x1x128xf32> to vector<4x128xf32>
    %c1_762 = arith.constant 1 : index
    %c0_763 = arith.constant 0 : index
    %1279 = arith.index_cast %1275 : i32 to index
    %c0_764 = arith.constant 0 : index
    %1280 = vector.load %arg3[%c1_762, %c0_763, %1279, %c0_764] : memref<6x4x24x128xf32, #tpu.memory_space<vmem>>, vector<1x4x1x128xf32>
    %1281 = vector.shape_cast %1280 : vector<1x4x1x128xf32> to vector<4x128xf32>
    %c2_765 = arith.constant 2 : index
    %c0_766 = arith.constant 0 : index
    %1282 = arith.index_cast %1275 : i32 to index
    %c0_767 = arith.constant 0 : index
    %1283 = vector.load %arg3[%c2_765, %c0_766, %1282, %c0_767] : memref<6x4x24x128xf32, #tpu.memory_space<vmem>>, vector<1x4x1x128xf32>
    %1284 = vector.shape_cast %1283 : vector<1x4x1x128xf32> to vector<4x128xf32>
    %1285 = vector.extract_strided_slice %0 {offsets = [0, 0, 0], sizes = [1, 1, 128], strides = [1, 1, 1]} : vector<9x1x128xf32> to vector<1x1x128xf32>
    %1286 = vector.shape_cast %1285 : vector<1x1x128xf32> to vector<1x128xf32>
    %1287 = vector.broadcast %1286 : vector<1x128xf32> to vector<4x128xf32>
    %1288 = arith.mulf %1278, %1287 : vector<4x128xf32>
    %1289 = vector.extract_strided_slice %0 {offsets = [1, 0, 0], sizes = [1, 1, 128], strides = [1, 1, 1]} : vector<9x1x128xf32> to vector<1x1x128xf32>
    %1290 = vector.shape_cast %1289 : vector<1x1x128xf32> to vector<1x128xf32>
    %1291 = vector.broadcast %1290 : vector<1x128xf32> to vector<4x128xf32>
    %1292 = arith.mulf %1281, %1291 : vector<4x128xf32>
    %1293 = arith.addf %1288, %1292 : vector<4x128xf32>
    %1294 = vector.extract_strided_slice %0 {offsets = [2, 0, 0], sizes = [1, 1, 128], strides = [1, 1, 1]} : vector<9x1x128xf32> to vector<1x1x128xf32>
    %1295 = vector.shape_cast %1294 : vector<1x1x128xf32> to vector<1x128xf32>
    %1296 = vector.broadcast %1295 : vector<1x128xf32> to vector<4x128xf32>
    %1297 = arith.mulf %1284, %1296 : vector<4x128xf32>
    %1298 = arith.addf %1293, %1297 : vector<4x128xf32>
    %c0_768 = arith.constant 0 : index
    %c14_769 = arith.constant 14 : index
    %c0_770 = arith.constant 0 : index
    %c0_771 = arith.constant 0 : index
    %1299 = vector.load %arg5[%c0_768, %c14_769, %c0_770, %c0_771] : memref<3x24x1x128xf32, #tpu.memory_space<vmem>>, vector<1x1x1x128xf32>
    %1300 = vector.shape_cast %1299 : vector<1x1x1x128xf32> to vector<1x128xf32>
    %1301 = vector.broadcast %1300 : vector<1x128xf32> to vector<4x128xf32>
    %1302 = arith.addf %1298, %1301 : vector<4x128xf32>
    %c0_772 = arith.constant 0 : index
    %c0_773 = arith.constant 0 : index
    %c14_774 = arith.constant 14 : index
    %c0_775 = arith.constant 0 : index
    %1303 = vector.load %arg6[%c0_772, %c0_773, %c14_774, %c0_775] : memref<6x4x24x128xf32, #tpu.memory_space<vmem>>, vector<1x4x1x128xf32>
    %1304 = vector.shape_cast %1303 : vector<1x4x1x128xf32> to vector<4x128xf32>
    %1305 = vector.shape_cast %1302 : vector<4x128xf32> to vector<1x4x1x128xf32>
    tpu.vector_store %arg6[%c0_772, %c0_773, %c14_774, %c0_775], %1305 {strides = array<i32>} : memref<6x4x24x128xf32, #tpu.memory_space<vmem>>, vector<1x4x1x128xf32>,
    %1306 = vector.extract_strided_slice %0 {offsets = [3, 0, 0], sizes = [1, 1, 128], strides = [1, 1, 1]} : vector<9x1x128xf32> to vector<1x1x128xf32>
    %1307 = vector.shape_cast %1306 : vector<1x1x128xf32> to vector<1x128xf32>
    %1308 = vector.broadcast %1307 : vector<1x128xf32> to vector<4x128xf32>
    %1309 = arith.mulf %1278, %1308 : vector<4x128xf32>
    %1310 = vector.extract_strided_slice %0 {offsets = [4, 0, 0], sizes = [1, 1, 128], strides = [1, 1, 1]} : vector<9x1x128xf32> to vector<1x1x128xf32>
    %1311 = vector.shape_cast %1310 : vector<1x1x128xf32> to vector<1x128xf32>
    %1312 = vector.broadcast %1311 : vector<1x128xf32> to vector<4x128xf32>
    %1313 = arith.mulf %1281, %1312 : vector<4x128xf32>
    %1314 = arith.addf %1309, %1313 : vector<4x128xf32>
    %1315 = vector.extract_strided_slice %0 {offsets = [5, 0, 0], sizes = [1, 1, 128], strides = [1, 1, 1]} : vector<9x1x128xf32> to vector<1x1x128xf32>
    %1316 = vector.shape_cast %1315 : vector<1x1x128xf32> to vector<1x128xf32>
    %1317 = vector.broadcast %1316 : vector<1x128xf32> to vector<4x128xf32>
    %1318 = arith.mulf %1284, %1317 : vector<4x128xf32>
    %1319 = arith.addf %1314, %1318 : vector<4x128xf32>
    %c1_776 = arith.constant 1 : index
    %c14_777 = arith.constant 14 : index
    %c0_778 = arith.constant 0 : index
    %c0_779 = arith.constant 0 : index
    %1320 = vector.load %arg5[%c1_776, %c14_777, %c0_778, %c0_779] : memref<3x24x1x128xf32, #tpu.memory_space<vmem>>, vector<1x1x1x128xf32>
    %1321 = vector.shape_cast %1320 : vector<1x1x1x128xf32> to vector<1x128xf32>
    %1322 = vector.broadcast %1321 : vector<1x128xf32> to vector<4x128xf32>
    %1323 = arith.addf %1319, %1322 : vector<4x128xf32>
    %c1_780 = arith.constant 1 : index
    %c0_781 = arith.constant 0 : index
    %c14_782 = arith.constant 14 : index
    %c0_783 = arith.constant 0 : index
    %1324 = vector.load %arg6[%c1_780, %c0_781, %c14_782, %c0_783] : memref<6x4x24x128xf32, #tpu.memory_space<vmem>>, vector<1x4x1x128xf32>
    %1325 = vector.shape_cast %1324 : vector<1x4x1x128xf32> to vector<4x128xf32>
    %1326 = vector.shape_cast %1323 : vector<4x128xf32> to vector<1x4x1x128xf32>
    tpu.vector_store %arg6[%c1_780, %c0_781, %c14_782, %c0_783], %1326 {strides = array<i32>} : memref<6x4x24x128xf32, #tpu.memory_space<vmem>>, vector<1x4x1x128xf32>,
    %1327 = vector.extract_strided_slice %0 {offsets = [6, 0, 0], sizes = [1, 1, 128], strides = [1, 1, 1]} : vector<9x1x128xf32> to vector<1x1x128xf32>
    %1328 = vector.shape_cast %1327 : vector<1x1x128xf32> to vector<1x128xf32>
    %1329 = vector.broadcast %1328 : vector<1x128xf32> to vector<4x128xf32>
    %1330 = arith.mulf %1278, %1329 : vector<4x128xf32>
    %1331 = vector.extract_strided_slice %0 {offsets = [7, 0, 0], sizes = [1, 1, 128], strides = [1, 1, 1]} : vector<9x1x128xf32> to vector<1x1x128xf32>
    %1332 = vector.shape_cast %1331 : vector<1x1x128xf32> to vector<1x128xf32>
    %1333 = vector.broadcast %1332 : vector<1x128xf32> to vector<4x128xf32>
    %1334 = arith.mulf %1281, %1333 : vector<4x128xf32>
    %1335 = arith.addf %1330, %1334 : vector<4x128xf32>
    %1336 = vector.extract_strided_slice %0 {offsets = [8, 0, 0], sizes = [1, 1, 128], strides = [1, 1, 1]} : vector<9x1x128xf32> to vector<1x1x128xf32>
    %1337 = vector.shape_cast %1336 : vector<1x1x128xf32> to vector<1x128xf32>
    %1338 = vector.broadcast %1337 : vector<1x128xf32> to vector<4x128xf32>
    %1339 = arith.mulf %1284, %1338 : vector<4x128xf32>
    %1340 = arith.addf %1335, %1339 : vector<4x128xf32>
    %c2_784 = arith.constant 2 : index
    %c14_785 = arith.constant 14 : index
    %c0_786 = arith.constant 0 : index
    %c0_787 = arith.constant 0 : index
    %1341 = vector.load %arg5[%c2_784, %c14_785, %c0_786, %c0_787] : memref<3x24x1x128xf32, #tpu.memory_space<vmem>>, vector<1x1x1x128xf32>
    %1342 = vector.shape_cast %1341 : vector<1x1x1x128xf32> to vector<1x128xf32>
    %1343 = vector.broadcast %1342 : vector<1x128xf32> to vector<4x128xf32>
    %1344 = arith.addf %1340, %1343 : vector<4x128xf32>
    %c2_788 = arith.constant 2 : index
    %c0_789 = arith.constant 0 : index
    %c14_790 = arith.constant 14 : index
    %c0_791 = arith.constant 0 : index
    %1345 = vector.load %arg6[%c2_788, %c0_789, %c14_790, %c0_791] : memref<6x4x24x128xf32, #tpu.memory_space<vmem>>, vector<1x4x1x128xf32>
    %1346 = vector.shape_cast %1345 : vector<1x4x1x128xf32> to vector<4x128xf32>
    %1347 = vector.shape_cast %1344 : vector<4x128xf32> to vector<1x4x1x128xf32>
    tpu.vector_store %arg6[%c2_788, %c0_789, %c14_790, %c0_791], %1347 {strides = array<i32>} : memref<6x4x24x128xf32, #tpu.memory_space<vmem>>, vector<1x4x1x128xf32>,
    %c3_792 = arith.constant 3 : index
    %c0_793 = arith.constant 0 : index
    %1348 = arith.index_cast %1275 : i32 to index
    %c0_794 = arith.constant 0 : index
    %1349 = vector.load %arg3[%c3_792, %c0_793, %1348, %c0_794] : memref<6x4x24x128xf32, #tpu.memory_space<vmem>>, vector<1x4x1x128xf32>
    %1350 = vector.shape_cast %1349 : vector<1x4x1x128xf32> to vector<4x128xf32>
    %c3_795 = arith.constant 3 : index
    %c0_796 = arith.constant 0 : index
    %c14_797 = arith.constant 14 : index
    %c0_798 = arith.constant 0 : index
    %1351 = vector.load %arg6[%c3_795, %c0_796, %c14_797, %c0_798] : memref<6x4x24x128xf32, #tpu.memory_space<vmem>>, vector<1x4x1x128xf32>
    %1352 = vector.shape_cast %1351 : vector<1x4x1x128xf32> to vector<4x128xf32>
    %1353 = vector.shape_cast %1350 : vector<4x128xf32> to vector<1x4x1x128xf32>
    tpu.vector_store %arg6[%c3_795, %c0_796, %c14_797, %c0_798], %1353 {strides = array<i32>} : memref<6x4x24x128xf32, #tpu.memory_space<vmem>>, vector<1x4x1x128xf32>,
    %c4_799 = arith.constant 4 : index
    %c0_800 = arith.constant 0 : index
    %1354 = arith.index_cast %1275 : i32 to index
    %c0_801 = arith.constant 0 : index
    %1355 = vector.load %arg3[%c4_799, %c0_800, %1354, %c0_801] : memref<6x4x24x128xf32, #tpu.memory_space<vmem>>, vector<1x4x1x128xf32>
    %1356 = vector.shape_cast %1355 : vector<1x4x1x128xf32> to vector<4x128xf32>
    %c4_802 = arith.constant 4 : index
    %c0_803 = arith.constant 0 : index
    %c14_804 = arith.constant 14 : index
    %c0_805 = arith.constant 0 : index
    %1357 = vector.load %arg6[%c4_802, %c0_803, %c14_804, %c0_805] : memref<6x4x24x128xf32, #tpu.memory_space<vmem>>, vector<1x4x1x128xf32>
    %1358 = vector.shape_cast %1357 : vector<1x4x1x128xf32> to vector<4x128xf32>
    %1359 = vector.shape_cast %1356 : vector<4x128xf32> to vector<1x4x1x128xf32>
    tpu.vector_store %arg6[%c4_802, %c0_803, %c14_804, %c0_805], %1359 {strides = array<i32>} : memref<6x4x24x128xf32, #tpu.memory_space<vmem>>, vector<1x4x1x128xf32>,
    %c5_806 = arith.constant 5 : index
    %c0_807 = arith.constant 0 : index
    %1360 = arith.index_cast %1275 : i32 to index
    %c0_808 = arith.constant 0 : index
    %1361 = vector.load %arg3[%c5_806, %c0_807, %1360, %c0_808] : memref<6x4x24x128xf32, #tpu.memory_space<vmem>>, vector<1x4x1x128xf32>
    %1362 = vector.shape_cast %1361 : vector<1x4x1x128xf32> to vector<4x128xf32>
    %c5_809 = arith.constant 5 : index
    %c0_810 = arith.constant 0 : index
    %c14_811 = arith.constant 14 : index
    %c0_812 = arith.constant 0 : index
    %1363 = vector.load %arg6[%c5_809, %c0_810, %c14_811, %c0_812] : memref<6x4x24x128xf32, #tpu.memory_space<vmem>>, vector<1x4x1x128xf32>
    %1364 = vector.shape_cast %1363 : vector<1x4x1x128xf32> to vector<4x128xf32>
    %1365 = vector.shape_cast %1362 : vector<4x128xf32> to vector<1x4x1x128xf32>
    tpu.vector_store %arg6[%c5_809, %c0_810, %c14_811, %c0_812], %1365 {strides = array<i32>} : memref<6x4x24x128xf32, #tpu.memory_space<vmem>>, vector<1x4x1x128xf32>,
    %c15 = arith.constant 15 : index
    %1366 = memref.load %arg2[%c15] : memref<24xi32, #tpu.memory_space<smem>>
    %c0_813 = arith.constant 0 : index
    %c0_814 = arith.constant 0 : index
    %1367 = arith.index_cast %1366 : i32 to index
    %c0_815 = arith.constant 0 : index
    %1368 = vector.load %arg3[%c0_813, %c0_814, %1367, %c0_815] : memref<6x4x24x128xf32, #tpu.memory_space<vmem>>, vector<1x4x1x128xf32>
    %1369 = vector.shape_cast %1368 : vector<1x4x1x128xf32> to vector<4x128xf32>
    %c1_816 = arith.constant 1 : index
    %c0_817 = arith.constant 0 : index
    %1370 = arith.index_cast %1366 : i32 to index
    %c0_818 = arith.constant 0 : index
    %1371 = vector.load %arg3[%c1_816, %c0_817, %1370, %c0_818] : memref<6x4x24x128xf32, #tpu.memory_space<vmem>>, vector<1x4x1x128xf32>
    %1372 = vector.shape_cast %1371 : vector<1x4x1x128xf32> to vector<4x128xf32>
    %c2_819 = arith.constant 2 : index
    %c0_820 = arith.constant 0 : index
    %1373 = arith.index_cast %1366 : i32 to index
    %c0_821 = arith.constant 0 : index
    %1374 = vector.load %arg3[%c2_819, %c0_820, %1373, %c0_821] : memref<6x4x24x128xf32, #tpu.memory_space<vmem>>, vector<1x4x1x128xf32>
    %1375 = vector.shape_cast %1374 : vector<1x4x1x128xf32> to vector<4x128xf32>
    %1376 = vector.extract_strided_slice %0 {offsets = [0, 0, 0], sizes = [1, 1, 128], strides = [1, 1, 1]} : vector<9x1x128xf32> to vector<1x1x128xf32>
    %1377 = vector.shape_cast %1376 : vector<1x1x128xf32> to vector<1x128xf32>
    %1378 = vector.broadcast %1377 : vector<1x128xf32> to vector<4x128xf32>
    %1379 = arith.mulf %1369, %1378 : vector<4x128xf32>
    %1380 = vector.extract_strided_slice %0 {offsets = [1, 0, 0], sizes = [1, 1, 128], strides = [1, 1, 1]} : vector<9x1x128xf32> to vector<1x1x128xf32>
    %1381 = vector.shape_cast %1380 : vector<1x1x128xf32> to vector<1x128xf32>
    %1382 = vector.broadcast %1381 : vector<1x128xf32> to vector<4x128xf32>
    %1383 = arith.mulf %1372, %1382 : vector<4x128xf32>
    %1384 = arith.addf %1379, %1383 : vector<4x128xf32>
    %1385 = vector.extract_strided_slice %0 {offsets = [2, 0, 0], sizes = [1, 1, 128], strides = [1, 1, 1]} : vector<9x1x128xf32> to vector<1x1x128xf32>
    %1386 = vector.shape_cast %1385 : vector<1x1x128xf32> to vector<1x128xf32>
    %1387 = vector.broadcast %1386 : vector<1x128xf32> to vector<4x128xf32>
    %1388 = arith.mulf %1375, %1387 : vector<4x128xf32>
    %1389 = arith.addf %1384, %1388 : vector<4x128xf32>
    %c0_822 = arith.constant 0 : index
    %c15_823 = arith.constant 15 : index
    %c0_824 = arith.constant 0 : index
    %c0_825 = arith.constant 0 : index
    %1390 = vector.load %arg5[%c0_822, %c15_823, %c0_824, %c0_825] : memref<3x24x1x128xf32, #tpu.memory_space<vmem>>, vector<1x1x1x128xf32>
    %1391 = vector.shape_cast %1390 : vector<1x1x1x128xf32> to vector<1x128xf32>
    %1392 = vector.broadcast %1391 : vector<1x128xf32> to vector<4x128xf32>
    %1393 = arith.addf %1389, %1392 : vector<4x128xf32>
    %c0_826 = arith.constant 0 : index
    %c0_827 = arith.constant 0 : index
    %c15_828 = arith.constant 15 : index
    %c0_829 = arith.constant 0 : index
    %1394 = vector.load %arg6[%c0_826, %c0_827, %c15_828, %c0_829] : memref<6x4x24x128xf32, #tpu.memory_space<vmem>>, vector<1x4x1x128xf32>
    %1395 = vector.shape_cast %1394 : vector<1x4x1x128xf32> to vector<4x128xf32>
    %1396 = vector.shape_cast %1393 : vector<4x128xf32> to vector<1x4x1x128xf32>
    tpu.vector_store %arg6[%c0_826, %c0_827, %c15_828, %c0_829], %1396 {strides = array<i32>} : memref<6x4x24x128xf32, #tpu.memory_space<vmem>>, vector<1x4x1x128xf32>,
    %1397 = vector.extract_strided_slice %0 {offsets = [3, 0, 0], sizes = [1, 1, 128], strides = [1, 1, 1]} : vector<9x1x128xf32> to vector<1x1x128xf32>
    %1398 = vector.shape_cast %1397 : vector<1x1x128xf32> to vector<1x128xf32>
    %1399 = vector.broadcast %1398 : vector<1x128xf32> to vector<4x128xf32>
    %1400 = arith.mulf %1369, %1399 : vector<4x128xf32>
    %1401 = vector.extract_strided_slice %0 {offsets = [4, 0, 0], sizes = [1, 1, 128], strides = [1, 1, 1]} : vector<9x1x128xf32> to vector<1x1x128xf32>
    %1402 = vector.shape_cast %1401 : vector<1x1x128xf32> to vector<1x128xf32>
    %1403 = vector.broadcast %1402 : vector<1x128xf32> to vector<4x128xf32>
    %1404 = arith.mulf %1372, %1403 : vector<4x128xf32>
    %1405 = arith.addf %1400, %1404 : vector<4x128xf32>
    %1406 = vector.extract_strided_slice %0 {offsets = [5, 0, 0], sizes = [1, 1, 128], strides = [1, 1, 1]} : vector<9x1x128xf32> to vector<1x1x128xf32>
    %1407 = vector.shape_cast %1406 : vector<1x1x128xf32> to vector<1x128xf32>
    %1408 = vector.broadcast %1407 : vector<1x128xf32> to vector<4x128xf32>
    %1409 = arith.mulf %1375, %1408 : vector<4x128xf32>
    %1410 = arith.addf %1405, %1409 : vector<4x128xf32>
    %c1_830 = arith.constant 1 : index
    %c15_831 = arith.constant 15 : index
    %c0_832 = arith.constant 0 : index
    %c0_833 = arith.constant 0 : index
    %1411 = vector.load %arg5[%c1_830, %c15_831, %c0_832, %c0_833] : memref<3x24x1x128xf32, #tpu.memory_space<vmem>>, vector<1x1x1x128xf32>
    %1412 = vector.shape_cast %1411 : vector<1x1x1x128xf32> to vector<1x128xf32>
    %1413 = vector.broadcast %1412 : vector<1x128xf32> to vector<4x128xf32>
    %1414 = arith.addf %1410, %1413 : vector<4x128xf32>
    %c1_834 = arith.constant 1 : index
    %c0_835 = arith.constant 0 : index
    %c15_836 = arith.constant 15 : index
    %c0_837 = arith.constant 0 : index
    %1415 = vector.load %arg6[%c1_834, %c0_835, %c15_836, %c0_837] : memref<6x4x24x128xf32, #tpu.memory_space<vmem>>, vector<1x4x1x128xf32>
    %1416 = vector.shape_cast %1415 : vector<1x4x1x128xf32> to vector<4x128xf32>
    %1417 = vector.shape_cast %1414 : vector<4x128xf32> to vector<1x4x1x128xf32>
    tpu.vector_store %arg6[%c1_834, %c0_835, %c15_836, %c0_837], %1417 {strides = array<i32>} : memref<6x4x24x128xf32, #tpu.memory_space<vmem>>, vector<1x4x1x128xf32>,
    %1418 = vector.extract_strided_slice %0 {offsets = [6, 0, 0], sizes = [1, 1, 128], strides = [1, 1, 1]} : vector<9x1x128xf32> to vector<1x1x128xf32>
    %1419 = vector.shape_cast %1418 : vector<1x1x128xf32> to vector<1x128xf32>
    %1420 = vector.broadcast %1419 : vector<1x128xf32> to vector<4x128xf32>
    %1421 = arith.mulf %1369, %1420 : vector<4x128xf32>
    %1422 = vector.extract_strided_slice %0 {offsets = [7, 0, 0], sizes = [1, 1, 128], strides = [1, 1, 1]} : vector<9x1x128xf32> to vector<1x1x128xf32>
    %1423 = vector.shape_cast %1422 : vector<1x1x128xf32> to vector<1x128xf32>
    %1424 = vector.broadcast %1423 : vector<1x128xf32> to vector<4x128xf32>
    %1425 = arith.mulf %1372, %1424 : vector<4x128xf32>
    %1426 = arith.addf %1421, %1425 : vector<4x128xf32>
    %1427 = vector.extract_strided_slice %0 {offsets = [8, 0, 0], sizes = [1, 1, 128], strides = [1, 1, 1]} : vector<9x1x128xf32> to vector<1x1x128xf32>
    %1428 = vector.shape_cast %1427 : vector<1x1x128xf32> to vector<1x128xf32>
    %1429 = vector.broadcast %1428 : vector<1x128xf32> to vector<4x128xf32>
    %1430 = arith.mulf %1375, %1429 : vector<4x128xf32>
    %1431 = arith.addf %1426, %1430 : vector<4x128xf32>
    %c2_838 = arith.constant 2 : index
    %c15_839 = arith.constant 15 : index
    %c0_840 = arith.constant 0 : index
    %c0_841 = arith.constant 0 : index
    %1432 = vector.load %arg5[%c2_838, %c15_839, %c0_840, %c0_841] : memref<3x24x1x128xf32, #tpu.memory_space<vmem>>, vector<1x1x1x128xf32>
    %1433 = vector.shape_cast %1432 : vector<1x1x1x128xf32> to vector<1x128xf32>
    %1434 = vector.broadcast %1433 : vector<1x128xf32> to vector<4x128xf32>
    %1435 = arith.addf %1431, %1434 : vector<4x128xf32>
    %c2_842 = arith.constant 2 : index
    %c0_843 = arith.constant 0 : index
    %c15_844 = arith.constant 15 : index
    %c0_845 = arith.constant 0 : index
    %1436 = vector.load %arg6[%c2_842, %c0_843, %c15_844, %c0_845] : memref<6x4x24x128xf32, #tpu.memory_space<vmem>>, vector<1x4x1x128xf32>
    %1437 = vector.shape_cast %1436 : vector<1x4x1x128xf32> to vector<4x128xf32>
    %1438 = vector.shape_cast %1435 : vector<4x128xf32> to vector<1x4x1x128xf32>
    tpu.vector_store %arg6[%c2_842, %c0_843, %c15_844, %c0_845], %1438 {strides = array<i32>} : memref<6x4x24x128xf32, #tpu.memory_space<vmem>>, vector<1x4x1x128xf32>,
    %c3_846 = arith.constant 3 : index
    %c0_847 = arith.constant 0 : index
    %1439 = arith.index_cast %1366 : i32 to index
    %c0_848 = arith.constant 0 : index
    %1440 = vector.load %arg3[%c3_846, %c0_847, %1439, %c0_848] : memref<6x4x24x128xf32, #tpu.memory_space<vmem>>, vector<1x4x1x128xf32>
    %1441 = vector.shape_cast %1440 : vector<1x4x1x128xf32> to vector<4x128xf32>
    %c3_849 = arith.constant 3 : index
    %c0_850 = arith.constant 0 : index
    %c15_851 = arith.constant 15 : index
    %c0_852 = arith.constant 0 : index
    %1442 = vector.load %arg6[%c3_849, %c0_850, %c15_851, %c0_852] : memref<6x4x24x128xf32, #tpu.memory_space<vmem>>, vector<1x4x1x128xf32>
    %1443 = vector.shape_cast %1442 : vector<1x4x1x128xf32> to vector<4x128xf32>
    %1444 = vector.shape_cast %1441 : vector<4x128xf32> to vector<1x4x1x128xf32>
    tpu.vector_store %arg6[%c3_849, %c0_850, %c15_851, %c0_852], %1444 {strides = array<i32>} : memref<6x4x24x128xf32, #tpu.memory_space<vmem>>, vector<1x4x1x128xf32>,
    %c4_853 = arith.constant 4 : index
    %c0_854 = arith.constant 0 : index
    %1445 = arith.index_cast %1366 : i32 to index
    %c0_855 = arith.constant 0 : index
    %1446 = vector.load %arg3[%c4_853, %c0_854, %1445, %c0_855] : memref<6x4x24x128xf32, #tpu.memory_space<vmem>>, vector<1x4x1x128xf32>
    %1447 = vector.shape_cast %1446 : vector<1x4x1x128xf32> to vector<4x128xf32>
    %c4_856 = arith.constant 4 : index
    %c0_857 = arith.constant 0 : index
    %c15_858 = arith.constant 15 : index
    %c0_859 = arith.constant 0 : index
    %1448 = vector.load %arg6[%c4_856, %c0_857, %c15_858, %c0_859] : memref<6x4x24x128xf32, #tpu.memory_space<vmem>>, vector<1x4x1x128xf32>
    %1449 = vector.shape_cast %1448 : vector<1x4x1x128xf32> to vector<4x128xf32>
    %1450 = vector.shape_cast %1447 : vector<4x128xf32> to vector<1x4x1x128xf32>
    tpu.vector_store %arg6[%c4_856, %c0_857, %c15_858, %c0_859], %1450 {strides = array<i32>} : memref<6x4x24x128xf32, #tpu.memory_space<vmem>>, vector<1x4x1x128xf32>,
    %c5_860 = arith.constant 5 : index
    %c0_861 = arith.constant 0 : index
    %1451 = arith.index_cast %1366 : i32 to index
    %c0_862 = arith.constant 0 : index
    %1452 = vector.load %arg3[%c5_860, %c0_861, %1451, %c0_862] : memref<6x4x24x128xf32, #tpu.memory_space<vmem>>, vector<1x4x1x128xf32>
    %1453 = vector.shape_cast %1452 : vector<1x4x1x128xf32> to vector<4x128xf32>
    %c5_863 = arith.constant 5 : index
    %c0_864 = arith.constant 0 : index
    %c15_865 = arith.constant 15 : index
    %c0_866 = arith.constant 0 : index
    %1454 = vector.load %arg6[%c5_863, %c0_864, %c15_865, %c0_866] : memref<6x4x24x128xf32, #tpu.memory_space<vmem>>, vector<1x4x1x128xf32>
    %1455 = vector.shape_cast %1454 : vector<1x4x1x128xf32> to vector<4x128xf32>
    %1456 = vector.shape_cast %1453 : vector<4x128xf32> to vector<1x4x1x128xf32>
    tpu.vector_store %arg6[%c5_863, %c0_864, %c15_865, %c0_866], %1456 {strides = array<i32>} : memref<6x4x24x128xf32, #tpu.memory_space<vmem>>, vector<1x4x1x128xf32>,
    %c16 = arith.constant 16 : index
    %1457 = memref.load %arg2[%c16] : memref<24xi32, #tpu.memory_space<smem>>
    %c0_867 = arith.constant 0 : index
    %c0_868 = arith.constant 0 : index
    %1458 = arith.index_cast %1457 : i32 to index
    %c0_869 = arith.constant 0 : index
    %1459 = vector.load %arg3[%c0_867, %c0_868, %1458, %c0_869] : memref<6x4x24x128xf32, #tpu.memory_space<vmem>>, vector<1x4x1x128xf32>
    %1460 = vector.shape_cast %1459 : vector<1x4x1x128xf32> to vector<4x128xf32>
    %c1_870 = arith.constant 1 : index
    %c0_871 = arith.constant 0 : index
    %1461 = arith.index_cast %1457 : i32 to index
    %c0_872 = arith.constant 0 : index
    %1462 = vector.load %arg3[%c1_870, %c0_871, %1461, %c0_872] : memref<6x4x24x128xf32, #tpu.memory_space<vmem>>, vector<1x4x1x128xf32>
    %1463 = vector.shape_cast %1462 : vector<1x4x1x128xf32> to vector<4x128xf32>
    %c2_873 = arith.constant 2 : index
    %c0_874 = arith.constant 0 : index
    %1464 = arith.index_cast %1457 : i32 to index
    %c0_875 = arith.constant 0 : index
    %1465 = vector.load %arg3[%c2_873, %c0_874, %1464, %c0_875] : memref<6x4x24x128xf32, #tpu.memory_space<vmem>>, vector<1x4x1x128xf32>
    %1466 = vector.shape_cast %1465 : vector<1x4x1x128xf32> to vector<4x128xf32>
    %1467 = vector.extract_strided_slice %0 {offsets = [0, 0, 0], sizes = [1, 1, 128], strides = [1, 1, 1]} : vector<9x1x128xf32> to vector<1x1x128xf32>
    %1468 = vector.shape_cast %1467 : vector<1x1x128xf32> to vector<1x128xf32>
    %1469 = vector.broadcast %1468 : vector<1x128xf32> to vector<4x128xf32>
    %1470 = arith.mulf %1460, %1469 : vector<4x128xf32>
    %1471 = vector.extract_strided_slice %0 {offsets = [1, 0, 0], sizes = [1, 1, 128], strides = [1, 1, 1]} : vector<9x1x128xf32> to vector<1x1x128xf32>
    %1472 = vector.shape_cast %1471 : vector<1x1x128xf32> to vector<1x128xf32>
    %1473 = vector.broadcast %1472 : vector<1x128xf32> to vector<4x128xf32>
    %1474 = arith.mulf %1463, %1473 : vector<4x128xf32>
    %1475 = arith.addf %1470, %1474 : vector<4x128xf32>
    %1476 = vector.extract_strided_slice %0 {offsets = [2, 0, 0], sizes = [1, 1, 128], strides = [1, 1, 1]} : vector<9x1x128xf32> to vector<1x1x128xf32>
    %1477 = vector.shape_cast %1476 : vector<1x1x128xf32> to vector<1x128xf32>
    %1478 = vector.broadcast %1477 : vector<1x128xf32> to vector<4x128xf32>
    %1479 = arith.mulf %1466, %1478 : vector<4x128xf32>
    %1480 = arith.addf %1475, %1479 : vector<4x128xf32>
    %c0_876 = arith.constant 0 : index
    %c16_877 = arith.constant 16 : index
    %c0_878 = arith.constant 0 : index
    %c0_879 = arith.constant 0 : index
    %1481 = vector.load %arg5[%c0_876, %c16_877, %c0_878, %c0_879] : memref<3x24x1x128xf32, #tpu.memory_space<vmem>>, vector<1x1x1x128xf32>
    %1482 = vector.shape_cast %1481 : vector<1x1x1x128xf32> to vector<1x128xf32>
    %1483 = vector.broadcast %1482 : vector<1x128xf32> to vector<4x128xf32>
    %1484 = arith.addf %1480, %1483 : vector<4x128xf32>
    %c0_880 = arith.constant 0 : index
    %c0_881 = arith.constant 0 : index
    %c16_882 = arith.constant 16 : index
    %c0_883 = arith.constant 0 : index
    %1485 = vector.load %arg6[%c0_880, %c0_881, %c16_882, %c0_883] : memref<6x4x24x128xf32, #tpu.memory_space<vmem>>, vector<1x4x1x128xf32>
    %1486 = vector.shape_cast %1485 : vector<1x4x1x128xf32> to vector<4x128xf32>
    %1487 = vector.shape_cast %1484 : vector<4x128xf32> to vector<1x4x1x128xf32>
    tpu.vector_store %arg6[%c0_880, %c0_881, %c16_882, %c0_883], %1487 {strides = array<i32>} : memref<6x4x24x128xf32, #tpu.memory_space<vmem>>, vector<1x4x1x128xf32>,
    %1488 = vector.extract_strided_slice %0 {offsets = [3, 0, 0], sizes = [1, 1, 128], strides = [1, 1, 1]} : vector<9x1x128xf32> to vector<1x1x128xf32>
    %1489 = vector.shape_cast %1488 : vector<1x1x128xf32> to vector<1x128xf32>
    %1490 = vector.broadcast %1489 : vector<1x128xf32> to vector<4x128xf32>
    %1491 = arith.mulf %1460, %1490 : vector<4x128xf32>
    %1492 = vector.extract_strided_slice %0 {offsets = [4, 0, 0], sizes = [1, 1, 128], strides = [1, 1, 1]} : vector<9x1x128xf32> to vector<1x1x128xf32>
    %1493 = vector.shape_cast %1492 : vector<1x1x128xf32> to vector<1x128xf32>
    %1494 = vector.broadcast %1493 : vector<1x128xf32> to vector<4x128xf32>
    %1495 = arith.mulf %1463, %1494 : vector<4x128xf32>
    %1496 = arith.addf %1491, %1495 : vector<4x128xf32>
    %1497 = vector.extract_strided_slice %0 {offsets = [5, 0, 0], sizes = [1, 1, 128], strides = [1, 1, 1]} : vector<9x1x128xf32> to vector<1x1x128xf32>
    %1498 = vector.shape_cast %1497 : vector<1x1x128xf32> to vector<1x128xf32>
    %1499 = vector.broadcast %1498 : vector<1x128xf32> to vector<4x128xf32>
    %1500 = arith.mulf %1466, %1499 : vector<4x128xf32>
    %1501 = arith.addf %1496, %1500 : vector<4x128xf32>
    %c1_884 = arith.constant 1 : index
    %c16_885 = arith.constant 16 : index
    %c0_886 = arith.constant 0 : index
    %c0_887 = arith.constant 0 : index
    %1502 = vector.load %arg5[%c1_884, %c16_885, %c0_886, %c0_887] : memref<3x24x1x128xf32, #tpu.memory_space<vmem>>, vector<1x1x1x128xf32>
    %1503 = vector.shape_cast %1502 : vector<1x1x1x128xf32> to vector<1x128xf32>
    %1504 = vector.broadcast %1503 : vector<1x128xf32> to vector<4x128xf32>
    %1505 = arith.addf %1501, %1504 : vector<4x128xf32>
    %c1_888 = arith.constant 1 : index
    %c0_889 = arith.constant 0 : index
    %c16_890 = arith.constant 16 : index
    %c0_891 = arith.constant 0 : index
    %1506 = vector.load %arg6[%c1_888, %c0_889, %c16_890, %c0_891] : memref<6x4x24x128xf32, #tpu.memory_space<vmem>>, vector<1x4x1x128xf32>
    %1507 = vector.shape_cast %1506 : vector<1x4x1x128xf32> to vector<4x128xf32>
    %1508 = vector.shape_cast %1505 : vector<4x128xf32> to vector<1x4x1x128xf32>
    tpu.vector_store %arg6[%c1_888, %c0_889, %c16_890, %c0_891], %1508 {strides = array<i32>} : memref<6x4x24x128xf32, #tpu.memory_space<vmem>>, vector<1x4x1x128xf32>,
    %1509 = vector.extract_strided_slice %0 {offsets = [6, 0, 0], sizes = [1, 1, 128], strides = [1, 1, 1]} : vector<9x1x128xf32> to vector<1x1x128xf32>
    %1510 = vector.shape_cast %1509 : vector<1x1x128xf32> to vector<1x128xf32>
    %1511 = vector.broadcast %1510 : vector<1x128xf32> to vector<4x128xf32>
    %1512 = arith.mulf %1460, %1511 : vector<4x128xf32>
    %1513 = vector.extract_strided_slice %0 {offsets = [7, 0, 0], sizes = [1, 1, 128], strides = [1, 1, 1]} : vector<9x1x128xf32> to vector<1x1x128xf32>
    %1514 = vector.shape_cast %1513 : vector<1x1x128xf32> to vector<1x128xf32>
    %1515 = vector.broadcast %1514 : vector<1x128xf32> to vector<4x128xf32>
    %1516 = arith.mulf %1463, %1515 : vector<4x128xf32>
    %1517 = arith.addf %1512, %1516 : vector<4x128xf32>
    %1518 = vector.extract_strided_slice %0 {offsets = [8, 0, 0], sizes = [1, 1, 128], strides = [1, 1, 1]} : vector<9x1x128xf32> to vector<1x1x128xf32>
    %1519 = vector.shape_cast %1518 : vector<1x1x128xf32> to vector<1x128xf32>
    %1520 = vector.broadcast %1519 : vector<1x128xf32> to vector<4x128xf32>
    %1521 = arith.mulf %1466, %1520 : vector<4x128xf32>
    %1522 = arith.addf %1517, %1521 : vector<4x128xf32>
    %c2_892 = arith.constant 2 : index
    %c16_893 = arith.constant 16 : index
    %c0_894 = arith.constant 0 : index
    %c0_895 = arith.constant 0 : index
    %1523 = vector.load %arg5[%c2_892, %c16_893, %c0_894, %c0_895] : memref<3x24x1x128xf32, #tpu.memory_space<vmem>>, vector<1x1x1x128xf32>
    %1524 = vector.shape_cast %1523 : vector<1x1x1x128xf32> to vector<1x128xf32>
    %1525 = vector.broadcast %1524 : vector<1x128xf32> to vector<4x128xf32>
    %1526 = arith.addf %1522, %1525 : vector<4x128xf32>
    %c2_896 = arith.constant 2 : index
    %c0_897 = arith.constant 0 : index
    %c16_898 = arith.constant 16 : index
    %c0_899 = arith.constant 0 : index
    %1527 = vector.load %arg6[%c2_896, %c0_897, %c16_898, %c0_899] : memref<6x4x24x128xf32, #tpu.memory_space<vmem>>, vector<1x4x1x128xf32>
    %1528 = vector.shape_cast %1527 : vector<1x4x1x128xf32> to vector<4x128xf32>
    %1529 = vector.shape_cast %1526 : vector<4x128xf32> to vector<1x4x1x128xf32>
    tpu.vector_store %arg6[%c2_896, %c0_897, %c16_898, %c0_899], %1529 {strides = array<i32>} : memref<6x4x24x128xf32, #tpu.memory_space<vmem>>, vector<1x4x1x128xf32>,
    %c3_900 = arith.constant 3 : index
    %c0_901 = arith.constant 0 : index
    %1530 = arith.index_cast %1457 : i32 to index
    %c0_902 = arith.constant 0 : index
    %1531 = vector.load %arg3[%c3_900, %c0_901, %1530, %c0_902] : memref<6x4x24x128xf32, #tpu.memory_space<vmem>>, vector<1x4x1x128xf32>
    %1532 = vector.shape_cast %1531 : vector<1x4x1x128xf32> to vector<4x128xf32>
    %c3_903 = arith.constant 3 : index
    %c0_904 = arith.constant 0 : index
    %c16_905 = arith.constant 16 : index
    %c0_906 = arith.constant 0 : index
    %1533 = vector.load %arg6[%c3_903, %c0_904, %c16_905, %c0_906] : memref<6x4x24x128xf32, #tpu.memory_space<vmem>>, vector<1x4x1x128xf32>
    %1534 = vector.shape_cast %1533 : vector<1x4x1x128xf32> to vector<4x128xf32>
    %1535 = vector.shape_cast %1532 : vector<4x128xf32> to vector<1x4x1x128xf32>
    tpu.vector_store %arg6[%c3_903, %c0_904, %c16_905, %c0_906], %1535 {strides = array<i32>} : memref<6x4x24x128xf32, #tpu.memory_space<vmem>>, vector<1x4x1x128xf32>,
    %c4_907 = arith.constant 4 : index
    %c0_908 = arith.constant 0 : index
    %1536 = arith.index_cast %1457 : i32 to index
    %c0_909 = arith.constant 0 : index
    %1537 = vector.load %arg3[%c4_907, %c0_908, %1536, %c0_909] : memref<6x4x24x128xf32, #tpu.memory_space<vmem>>, vector<1x4x1x128xf32>
    %1538 = vector.shape_cast %1537 : vector<1x4x1x128xf32> to vector<4x128xf32>
    %c4_910 = arith.constant 4 : index
    %c0_911 = arith.constant 0 : index
    %c16_912 = arith.constant 16 : index
    %c0_913 = arith.constant 0 : index
    %1539 = vector.load %arg6[%c4_910, %c0_911, %c16_912, %c0_913] : memref<6x4x24x128xf32, #tpu.memory_space<vmem>>, vector<1x4x1x128xf32>
    %1540 = vector.shape_cast %1539 : vector<1x4x1x128xf32> to vector<4x128xf32>
    %1541 = vector.shape_cast %1538 : vector<4x128xf32> to vector<1x4x1x128xf32>
    tpu.vector_store %arg6[%c4_910, %c0_911, %c16_912, %c0_913], %1541 {strides = array<i32>} : memref<6x4x24x128xf32, #tpu.memory_space<vmem>>, vector<1x4x1x128xf32>,
    %c5_914 = arith.constant 5 : index
    %c0_915 = arith.constant 0 : index
    %1542 = arith.index_cast %1457 : i32 to index
    %c0_916 = arith.constant 0 : index
    %1543 = vector.load %arg3[%c5_914, %c0_915, %1542, %c0_916] : memref<6x4x24x128xf32, #tpu.memory_space<vmem>>, vector<1x4x1x128xf32>
    %1544 = vector.shape_cast %1543 : vector<1x4x1x128xf32> to vector<4x128xf32>
    %c5_917 = arith.constant 5 : index
    %c0_918 = arith.constant 0 : index
    %c16_919 = arith.constant 16 : index
    %c0_920 = arith.constant 0 : index
    %1545 = vector.load %arg6[%c5_917, %c0_918, %c16_919, %c0_920] : memref<6x4x24x128xf32, #tpu.memory_space<vmem>>, vector<1x4x1x128xf32>
    %1546 = vector.shape_cast %1545 : vector<1x4x1x128xf32> to vector<4x128xf32>
    %1547 = vector.shape_cast %1544 : vector<4x128xf32> to vector<1x4x1x128xf32>
    tpu.vector_store %arg6[%c5_917, %c0_918, %c16_919, %c0_920], %1547 {strides = array<i32>} : memref<6x4x24x128xf32, #tpu.memory_space<vmem>>, vector<1x4x1x128xf32>,
    %c17 = arith.constant 17 : index
    %1548 = memref.load %arg2[%c17] : memref<24xi32, #tpu.memory_space<smem>>
    %c0_921 = arith.constant 0 : index
    %c0_922 = arith.constant 0 : index
    %1549 = arith.index_cast %1548 : i32 to index
    %c0_923 = arith.constant 0 : index
    %1550 = vector.load %arg3[%c0_921, %c0_922, %1549, %c0_923] : memref<6x4x24x128xf32, #tpu.memory_space<vmem>>, vector<1x4x1x128xf32>
    %1551 = vector.shape_cast %1550 : vector<1x4x1x128xf32> to vector<4x128xf32>
    %c1_924 = arith.constant 1 : index
    %c0_925 = arith.constant 0 : index
    %1552 = arith.index_cast %1548 : i32 to index
    %c0_926 = arith.constant 0 : index
    %1553 = vector.load %arg3[%c1_924, %c0_925, %1552, %c0_926] : memref<6x4x24x128xf32, #tpu.memory_space<vmem>>, vector<1x4x1x128xf32>
    %1554 = vector.shape_cast %1553 : vector<1x4x1x128xf32> to vector<4x128xf32>
    %c2_927 = arith.constant 2 : index
    %c0_928 = arith.constant 0 : index
    %1555 = arith.index_cast %1548 : i32 to index
    %c0_929 = arith.constant 0 : index
    %1556 = vector.load %arg3[%c2_927, %c0_928, %1555, %c0_929] : memref<6x4x24x128xf32, #tpu.memory_space<vmem>>, vector<1x4x1x128xf32>
    %1557 = vector.shape_cast %1556 : vector<1x4x1x128xf32> to vector<4x128xf32>
    %1558 = vector.extract_strided_slice %0 {offsets = [0, 0, 0], sizes = [1, 1, 128], strides = [1, 1, 1]} : vector<9x1x128xf32> to vector<1x1x128xf32>
    %1559 = vector.shape_cast %1558 : vector<1x1x128xf32> to vector<1x128xf32>
    %1560 = vector.broadcast %1559 : vector<1x128xf32> to vector<4x128xf32>
    %1561 = arith.mulf %1551, %1560 : vector<4x128xf32>
    %1562 = vector.extract_strided_slice %0 {offsets = [1, 0, 0], sizes = [1, 1, 128], strides = [1, 1, 1]} : vector<9x1x128xf32> to vector<1x1x128xf32>
    %1563 = vector.shape_cast %1562 : vector<1x1x128xf32> to vector<1x128xf32>
    %1564 = vector.broadcast %1563 : vector<1x128xf32> to vector<4x128xf32>
    %1565 = arith.mulf %1554, %1564 : vector<4x128xf32>
    %1566 = arith.addf %1561, %1565 : vector<4x128xf32>
    %1567 = vector.extract_strided_slice %0 {offsets = [2, 0, 0], sizes = [1, 1, 128], strides = [1, 1, 1]} : vector<9x1x128xf32> to vector<1x1x128xf32>
    %1568 = vector.shape_cast %1567 : vector<1x1x128xf32> to vector<1x128xf32>
    %1569 = vector.broadcast %1568 : vector<1x128xf32> to vector<4x128xf32>
    %1570 = arith.mulf %1557, %1569 : vector<4x128xf32>
    %1571 = arith.addf %1566, %1570 : vector<4x128xf32>
    %c0_930 = arith.constant 0 : index
    %c17_931 = arith.constant 17 : index
    %c0_932 = arith.constant 0 : index
    %c0_933 = arith.constant 0 : index
    %1572 = vector.load %arg5[%c0_930, %c17_931, %c0_932, %c0_933] : memref<3x24x1x128xf32, #tpu.memory_space<vmem>>, vector<1x1x1x128xf32>
    %1573 = vector.shape_cast %1572 : vector<1x1x1x128xf32> to vector<1x128xf32>
    %1574 = vector.broadcast %1573 : vector<1x128xf32> to vector<4x128xf32>
    %1575 = arith.addf %1571, %1574 : vector<4x128xf32>
    %c0_934 = arith.constant 0 : index
    %c0_935 = arith.constant 0 : index
    %c17_936 = arith.constant 17 : index
    %c0_937 = arith.constant 0 : index
    %1576 = vector.load %arg6[%c0_934, %c0_935, %c17_936, %c0_937] : memref<6x4x24x128xf32, #tpu.memory_space<vmem>>, vector<1x4x1x128xf32>
    %1577 = vector.shape_cast %1576 : vector<1x4x1x128xf32> to vector<4x128xf32>
    %1578 = vector.shape_cast %1575 : vector<4x128xf32> to vector<1x4x1x128xf32>
    tpu.vector_store %arg6[%c0_934, %c0_935, %c17_936, %c0_937], %1578 {strides = array<i32>} : memref<6x4x24x128xf32, #tpu.memory_space<vmem>>, vector<1x4x1x128xf32>,
    %1579 = vector.extract_strided_slice %0 {offsets = [3, 0, 0], sizes = [1, 1, 128], strides = [1, 1, 1]} : vector<9x1x128xf32> to vector<1x1x128xf32>
    %1580 = vector.shape_cast %1579 : vector<1x1x128xf32> to vector<1x128xf32>
    %1581 = vector.broadcast %1580 : vector<1x128xf32> to vector<4x128xf32>
    %1582 = arith.mulf %1551, %1581 : vector<4x128xf32>
    %1583 = vector.extract_strided_slice %0 {offsets = [4, 0, 0], sizes = [1, 1, 128], strides = [1, 1, 1]} : vector<9x1x128xf32> to vector<1x1x128xf32>
    %1584 = vector.shape_cast %1583 : vector<1x1x128xf32> to vector<1x128xf32>
    %1585 = vector.broadcast %1584 : vector<1x128xf32> to vector<4x128xf32>
    %1586 = arith.mulf %1554, %1585 : vector<4x128xf32>
    %1587 = arith.addf %1582, %1586 : vector<4x128xf32>
    %1588 = vector.extract_strided_slice %0 {offsets = [5, 0, 0], sizes = [1, 1, 128], strides = [1, 1, 1]} : vector<9x1x128xf32> to vector<1x1x128xf32>
    %1589 = vector.shape_cast %1588 : vector<1x1x128xf32> to vector<1x128xf32>
    %1590 = vector.broadcast %1589 : vector<1x128xf32> to vector<4x128xf32>
    %1591 = arith.mulf %1557, %1590 : vector<4x128xf32>
    %1592 = arith.addf %1587, %1591 : vector<4x128xf32>
    %c1_938 = arith.constant 1 : index
    %c17_939 = arith.constant 17 : index
    %c0_940 = arith.constant 0 : index
    %c0_941 = arith.constant 0 : index
    %1593 = vector.load %arg5[%c1_938, %c17_939, %c0_940, %c0_941] : memref<3x24x1x128xf32, #tpu.memory_space<vmem>>, vector<1x1x1x128xf32>
    %1594 = vector.shape_cast %1593 : vector<1x1x1x128xf32> to vector<1x128xf32>
    %1595 = vector.broadcast %1594 : vector<1x128xf32> to vector<4x128xf32>
    %1596 = arith.addf %1592, %1595 : vector<4x128xf32>
    %c1_942 = arith.constant 1 : index
    %c0_943 = arith.constant 0 : index
    %c17_944 = arith.constant 17 : index
    %c0_945 = arith.constant 0 : index
    %1597 = vector.load %arg6[%c1_942, %c0_943, %c17_944, %c0_945] : memref<6x4x24x128xf32, #tpu.memory_space<vmem>>, vector<1x4x1x128xf32>
    %1598 = vector.shape_cast %1597 : vector<1x4x1x128xf32> to vector<4x128xf32>
    %1599 = vector.shape_cast %1596 : vector<4x128xf32> to vector<1x4x1x128xf32>
    tpu.vector_store %arg6[%c1_942, %c0_943, %c17_944, %c0_945], %1599 {strides = array<i32>} : memref<6x4x24x128xf32, #tpu.memory_space<vmem>>, vector<1x4x1x128xf32>,
    %1600 = vector.extract_strided_slice %0 {offsets = [6, 0, 0], sizes = [1, 1, 128], strides = [1, 1, 1]} : vector<9x1x128xf32> to vector<1x1x128xf32>
    %1601 = vector.shape_cast %1600 : vector<1x1x128xf32> to vector<1x128xf32>
    %1602 = vector.broadcast %1601 : vector<1x128xf32> to vector<4x128xf32>
    %1603 = arith.mulf %1551, %1602 : vector<4x128xf32>
    %1604 = vector.extract_strided_slice %0 {offsets = [7, 0, 0], sizes = [1, 1, 128], strides = [1, 1, 1]} : vector<9x1x128xf32> to vector<1x1x128xf32>
    %1605 = vector.shape_cast %1604 : vector<1x1x128xf32> to vector<1x128xf32>
    %1606 = vector.broadcast %1605 : vector<1x128xf32> to vector<4x128xf32>
    %1607 = arith.mulf %1554, %1606 : vector<4x128xf32>
    %1608 = arith.addf %1603, %1607 : vector<4x128xf32>
    %1609 = vector.extract_strided_slice %0 {offsets = [8, 0, 0], sizes = [1, 1, 128], strides = [1, 1, 1]} : vector<9x1x128xf32> to vector<1x1x128xf32>
    %1610 = vector.shape_cast %1609 : vector<1x1x128xf32> to vector<1x128xf32>
    %1611 = vector.broadcast %1610 : vector<1x128xf32> to vector<4x128xf32>
    %1612 = arith.mulf %1557, %1611 : vector<4x128xf32>
    %1613 = arith.addf %1608, %1612 : vector<4x128xf32>
    %c2_946 = arith.constant 2 : index
    %c17_947 = arith.constant 17 : index
    %c0_948 = arith.constant 0 : index
    %c0_949 = arith.constant 0 : index
    %1614 = vector.load %arg5[%c2_946, %c17_947, %c0_948, %c0_949] : memref<3x24x1x128xf32, #tpu.memory_space<vmem>>, vector<1x1x1x128xf32>
    %1615 = vector.shape_cast %1614 : vector<1x1x1x128xf32> to vector<1x128xf32>
    %1616 = vector.broadcast %1615 : vector<1x128xf32> to vector<4x128xf32>
    %1617 = arith.addf %1613, %1616 : vector<4x128xf32>
    %c2_950 = arith.constant 2 : index
    %c0_951 = arith.constant 0 : index
    %c17_952 = arith.constant 17 : index
    %c0_953 = arith.constant 0 : index
    %1618 = vector.load %arg6[%c2_950, %c0_951, %c17_952, %c0_953] : memref<6x4x24x128xf32, #tpu.memory_space<vmem>>, vector<1x4x1x128xf32>
    %1619 = vector.shape_cast %1618 : vector<1x4x1x128xf32> to vector<4x128xf32>
    %1620 = vector.shape_cast %1617 : vector<4x128xf32> to vector<1x4x1x128xf32>
    tpu.vector_store %arg6[%c2_950, %c0_951, %c17_952, %c0_953], %1620 {strides = array<i32>} : memref<6x4x24x128xf32, #tpu.memory_space<vmem>>, vector<1x4x1x128xf32>,
    %c3_954 = arith.constant 3 : index
    %c0_955 = arith.constant 0 : index
    %1621 = arith.index_cast %1548 : i32 to index
    %c0_956 = arith.constant 0 : index
    %1622 = vector.load %arg3[%c3_954, %c0_955, %1621, %c0_956] : memref<6x4x24x128xf32, #tpu.memory_space<vmem>>, vector<1x4x1x128xf32>
    %1623 = vector.shape_cast %1622 : vector<1x4x1x128xf32> to vector<4x128xf32>
    %c3_957 = arith.constant 3 : index
    %c0_958 = arith.constant 0 : index
    %c17_959 = arith.constant 17 : index
    %c0_960 = arith.constant 0 : index
    %1624 = vector.load %arg6[%c3_957, %c0_958, %c17_959, %c0_960] : memref<6x4x24x128xf32, #tpu.memory_space<vmem>>, vector<1x4x1x128xf32>
    %1625 = vector.shape_cast %1624 : vector<1x4x1x128xf32> to vector<4x128xf32>
    %1626 = vector.shape_cast %1623 : vector<4x128xf32> to vector<1x4x1x128xf32>
    tpu.vector_store %arg6[%c3_957, %c0_958, %c17_959, %c0_960], %1626 {strides = array<i32>} : memref<6x4x24x128xf32, #tpu.memory_space<vmem>>, vector<1x4x1x128xf32>,
    %c4_961 = arith.constant 4 : index
    %c0_962 = arith.constant 0 : index
    %1627 = arith.index_cast %1548 : i32 to index
    %c0_963 = arith.constant 0 : index
    %1628 = vector.load %arg3[%c4_961, %c0_962, %1627, %c0_963] : memref<6x4x24x128xf32, #tpu.memory_space<vmem>>, vector<1x4x1x128xf32>
    %1629 = vector.shape_cast %1628 : vector<1x4x1x128xf32> to vector<4x128xf32>
    %c4_964 = arith.constant 4 : index
    %c0_965 = arith.constant 0 : index
    %c17_966 = arith.constant 17 : index
    %c0_967 = arith.constant 0 : index
    %1630 = vector.load %arg6[%c4_964, %c0_965, %c17_966, %c0_967] : memref<6x4x24x128xf32, #tpu.memory_space<vmem>>, vector<1x4x1x128xf32>
    %1631 = vector.shape_cast %1630 : vector<1x4x1x128xf32> to vector<4x128xf32>
    %1632 = vector.shape_cast %1629 : vector<4x128xf32> to vector<1x4x1x128xf32>
    tpu.vector_store %arg6[%c4_964, %c0_965, %c17_966, %c0_967], %1632 {strides = array<i32>} : memref<6x4x24x128xf32, #tpu.memory_space<vmem>>, vector<1x4x1x128xf32>,
    %c5_968 = arith.constant 5 : index
    %c0_969 = arith.constant 0 : index
    %1633 = arith.index_cast %1548 : i32 to index
    %c0_970 = arith.constant 0 : index
    %1634 = vector.load %arg3[%c5_968, %c0_969, %1633, %c0_970] : memref<6x4x24x128xf32, #tpu.memory_space<vmem>>, vector<1x4x1x128xf32>
    %1635 = vector.shape_cast %1634 : vector<1x4x1x128xf32> to vector<4x128xf32>
    %c5_971 = arith.constant 5 : index
    %c0_972 = arith.constant 0 : index
    %c17_973 = arith.constant 17 : index
    %c0_974 = arith.constant 0 : index
    %1636 = vector.load %arg6[%c5_971, %c0_972, %c17_973, %c0_974] : memref<6x4x24x128xf32, #tpu.memory_space<vmem>>, vector<1x4x1x128xf32>
    %1637 = vector.shape_cast %1636 : vector<1x4x1x128xf32> to vector<4x128xf32>
    %1638 = vector.shape_cast %1635 : vector<4x128xf32> to vector<1x4x1x128xf32>
    tpu.vector_store %arg6[%c5_971, %c0_972, %c17_973, %c0_974], %1638 {strides = array<i32>} : memref<6x4x24x128xf32, #tpu.memory_space<vmem>>, vector<1x4x1x128xf32>,
    %c18 = arith.constant 18 : index
    %1639 = memref.load %arg2[%c18] : memref<24xi32, #tpu.memory_space<smem>>
    %c0_975 = arith.constant 0 : index
    %c0_976 = arith.constant 0 : index
    %1640 = arith.index_cast %1639 : i32 to index
    %c0_977 = arith.constant 0 : index
    %1641 = vector.load %arg3[%c0_975, %c0_976, %1640, %c0_977] : memref<6x4x24x128xf32, #tpu.memory_space<vmem>>, vector<1x4x1x128xf32>
    %1642 = vector.shape_cast %1641 : vector<1x4x1x128xf32> to vector<4x128xf32>
    %c1_978 = arith.constant 1 : index
    %c0_979 = arith.constant 0 : index
    %1643 = arith.index_cast %1639 : i32 to index
    %c0_980 = arith.constant 0 : index
    %1644 = vector.load %arg3[%c1_978, %c0_979, %1643, %c0_980] : memref<6x4x24x128xf32, #tpu.memory_space<vmem>>, vector<1x4x1x128xf32>
    %1645 = vector.shape_cast %1644 : vector<1x4x1x128xf32> to vector<4x128xf32>
    %c2_981 = arith.constant 2 : index
    %c0_982 = arith.constant 0 : index
    %1646 = arith.index_cast %1639 : i32 to index
    %c0_983 = arith.constant 0 : index
    %1647 = vector.load %arg3[%c2_981, %c0_982, %1646, %c0_983] : memref<6x4x24x128xf32, #tpu.memory_space<vmem>>, vector<1x4x1x128xf32>
    %1648 = vector.shape_cast %1647 : vector<1x4x1x128xf32> to vector<4x128xf32>
    %1649 = vector.extract_strided_slice %0 {offsets = [0, 0, 0], sizes = [1, 1, 128], strides = [1, 1, 1]} : vector<9x1x128xf32> to vector<1x1x128xf32>
    %1650 = vector.shape_cast %1649 : vector<1x1x128xf32> to vector<1x128xf32>
    %1651 = vector.broadcast %1650 : vector<1x128xf32> to vector<4x128xf32>
    %1652 = arith.mulf %1642, %1651 : vector<4x128xf32>
    %1653 = vector.extract_strided_slice %0 {offsets = [1, 0, 0], sizes = [1, 1, 128], strides = [1, 1, 1]} : vector<9x1x128xf32> to vector<1x1x128xf32>
    %1654 = vector.shape_cast %1653 : vector<1x1x128xf32> to vector<1x128xf32>
    %1655 = vector.broadcast %1654 : vector<1x128xf32> to vector<4x128xf32>
    %1656 = arith.mulf %1645, %1655 : vector<4x128xf32>
    %1657 = arith.addf %1652, %1656 : vector<4x128xf32>
    %1658 = vector.extract_strided_slice %0 {offsets = [2, 0, 0], sizes = [1, 1, 128], strides = [1, 1, 1]} : vector<9x1x128xf32> to vector<1x1x128xf32>
    %1659 = vector.shape_cast %1658 : vector<1x1x128xf32> to vector<1x128xf32>
    %1660 = vector.broadcast %1659 : vector<1x128xf32> to vector<4x128xf32>
    %1661 = arith.mulf %1648, %1660 : vector<4x128xf32>
    %1662 = arith.addf %1657, %1661 : vector<4x128xf32>
    %c0_984 = arith.constant 0 : index
    %c18_985 = arith.constant 18 : index
    %c0_986 = arith.constant 0 : index
    %c0_987 = arith.constant 0 : index
    %1663 = vector.load %arg5[%c0_984, %c18_985, %c0_986, %c0_987] : memref<3x24x1x128xf32, #tpu.memory_space<vmem>>, vector<1x1x1x128xf32>
    %1664 = vector.shape_cast %1663 : vector<1x1x1x128xf32> to vector<1x128xf32>
    %1665 = vector.broadcast %1664 : vector<1x128xf32> to vector<4x128xf32>
    %1666 = arith.addf %1662, %1665 : vector<4x128xf32>
    %c0_988 = arith.constant 0 : index
    %c0_989 = arith.constant 0 : index
    %c18_990 = arith.constant 18 : index
    %c0_991 = arith.constant 0 : index
    %1667 = vector.load %arg6[%c0_988, %c0_989, %c18_990, %c0_991] : memref<6x4x24x128xf32, #tpu.memory_space<vmem>>, vector<1x4x1x128xf32>
    %1668 = vector.shape_cast %1667 : vector<1x4x1x128xf32> to vector<4x128xf32>
    %1669 = vector.shape_cast %1666 : vector<4x128xf32> to vector<1x4x1x128xf32>
    tpu.vector_store %arg6[%c0_988, %c0_989, %c18_990, %c0_991], %1669 {strides = array<i32>} : memref<6x4x24x128xf32, #tpu.memory_space<vmem>>, vector<1x4x1x128xf32>,
    %1670 = vector.extract_strided_slice %0 {offsets = [3, 0, 0], sizes = [1, 1, 128], strides = [1, 1, 1]} : vector<9x1x128xf32> to vector<1x1x128xf32>
    %1671 = vector.shape_cast %1670 : vector<1x1x128xf32> to vector<1x128xf32>
    %1672 = vector.broadcast %1671 : vector<1x128xf32> to vector<4x128xf32>
    %1673 = arith.mulf %1642, %1672 : vector<4x128xf32>
    %1674 = vector.extract_strided_slice %0 {offsets = [4, 0, 0], sizes = [1, 1, 128], strides = [1, 1, 1]} : vector<9x1x128xf32> to vector<1x1x128xf32>
    %1675 = vector.shape_cast %1674 : vector<1x1x128xf32> to vector<1x128xf32>
    %1676 = vector.broadcast %1675 : vector<1x128xf32> to vector<4x128xf32>
    %1677 = arith.mulf %1645, %1676 : vector<4x128xf32>
    %1678 = arith.addf %1673, %1677 : vector<4x128xf32>
    %1679 = vector.extract_strided_slice %0 {offsets = [5, 0, 0], sizes = [1, 1, 128], strides = [1, 1, 1]} : vector<9x1x128xf32> to vector<1x1x128xf32>
    %1680 = vector.shape_cast %1679 : vector<1x1x128xf32> to vector<1x128xf32>
    %1681 = vector.broadcast %1680 : vector<1x128xf32> to vector<4x128xf32>
    %1682 = arith.mulf %1648, %1681 : vector<4x128xf32>
    %1683 = arith.addf %1678, %1682 : vector<4x128xf32>
    %c1_992 = arith.constant 1 : index
    %c18_993 = arith.constant 18 : index
    %c0_994 = arith.constant 0 : index
    %c0_995 = arith.constant 0 : index
    %1684 = vector.load %arg5[%c1_992, %c18_993, %c0_994, %c0_995] : memref<3x24x1x128xf32, #tpu.memory_space<vmem>>, vector<1x1x1x128xf32>
    %1685 = vector.shape_cast %1684 : vector<1x1x1x128xf32> to vector<1x128xf32>
    %1686 = vector.broadcast %1685 : vector<1x128xf32> to vector<4x128xf32>
    %1687 = arith.addf %1683, %1686 : vector<4x128xf32>
    %c1_996 = arith.constant 1 : index
    %c0_997 = arith.constant 0 : index
    %c18_998 = arith.constant 18 : index
    %c0_999 = arith.constant 0 : index
    %1688 = vector.load %arg6[%c1_996, %c0_997, %c18_998, %c0_999] : memref<6x4x24x128xf32, #tpu.memory_space<vmem>>, vector<1x4x1x128xf32>
    %1689 = vector.shape_cast %1688 : vector<1x4x1x128xf32> to vector<4x128xf32>
    %1690 = vector.shape_cast %1687 : vector<4x128xf32> to vector<1x4x1x128xf32>
    tpu.vector_store %arg6[%c1_996, %c0_997, %c18_998, %c0_999], %1690 {strides = array<i32>} : memref<6x4x24x128xf32, #tpu.memory_space<vmem>>, vector<1x4x1x128xf32>,
    %1691 = vector.extract_strided_slice %0 {offsets = [6, 0, 0], sizes = [1, 1, 128], strides = [1, 1, 1]} : vector<9x1x128xf32> to vector<1x1x128xf32>
    %1692 = vector.shape_cast %1691 : vector<1x1x128xf32> to vector<1x128xf32>
    %1693 = vector.broadcast %1692 : vector<1x128xf32> to vector<4x128xf32>
    %1694 = arith.mulf %1642, %1693 : vector<4x128xf32>
    %1695 = vector.extract_strided_slice %0 {offsets = [7, 0, 0], sizes = [1, 1, 128], strides = [1, 1, 1]} : vector<9x1x128xf32> to vector<1x1x128xf32>
    %1696 = vector.shape_cast %1695 : vector<1x1x128xf32> to vector<1x128xf32>
    %1697 = vector.broadcast %1696 : vector<1x128xf32> to vector<4x128xf32>
    %1698 = arith.mulf %1645, %1697 : vector<4x128xf32>
    %1699 = arith.addf %1694, %1698 : vector<4x128xf32>
    %1700 = vector.extract_strided_slice %0 {offsets = [8, 0, 0], sizes = [1, 1, 128], strides = [1, 1, 1]} : vector<9x1x128xf32> to vector<1x1x128xf32>
    %1701 = vector.shape_cast %1700 : vector<1x1x128xf32> to vector<1x128xf32>
    %1702 = vector.broadcast %1701 : vector<1x128xf32> to vector<4x128xf32>
    %1703 = arith.mulf %1648, %1702 : vector<4x128xf32>
    %1704 = arith.addf %1699, %1703 : vector<4x128xf32>
    %c2_1000 = arith.constant 2 : index
    %c18_1001 = arith.constant 18 : index
    %c0_1002 = arith.constant 0 : index
    %c0_1003 = arith.constant 0 : index
    %1705 = vector.load %arg5[%c2_1000, %c18_1001, %c0_1002, %c0_1003] : memref<3x24x1x128xf32, #tpu.memory_space<vmem>>, vector<1x1x1x128xf32>
    %1706 = vector.shape_cast %1705 : vector<1x1x1x128xf32> to vector<1x128xf32>
    %1707 = vector.broadcast %1706 : vector<1x128xf32> to vector<4x128xf32>
    %1708 = arith.addf %1704, %1707 : vector<4x128xf32>
    %c2_1004 = arith.constant 2 : index
    %c0_1005 = arith.constant 0 : index
    %c18_1006 = arith.constant 18 : index
    %c0_1007 = arith.constant 0 : index
    %1709 = vector.load %arg6[%c2_1004, %c0_1005, %c18_1006, %c0_1007] : memref<6x4x24x128xf32, #tpu.memory_space<vmem>>, vector<1x4x1x128xf32>
    %1710 = vector.shape_cast %1709 : vector<1x4x1x128xf32> to vector<4x128xf32>
    %1711 = vector.shape_cast %1708 : vector<4x128xf32> to vector<1x4x1x128xf32>
    tpu.vector_store %arg6[%c2_1004, %c0_1005, %c18_1006, %c0_1007], %1711 {strides = array<i32>} : memref<6x4x24x128xf32, #tpu.memory_space<vmem>>, vector<1x4x1x128xf32>,
    %c3_1008 = arith.constant 3 : index
    %c0_1009 = arith.constant 0 : index
    %1712 = arith.index_cast %1639 : i32 to index
    %c0_1010 = arith.constant 0 : index
    %1713 = vector.load %arg3[%c3_1008, %c0_1009, %1712, %c0_1010] : memref<6x4x24x128xf32, #tpu.memory_space<vmem>>, vector<1x4x1x128xf32>
    %1714 = vector.shape_cast %1713 : vector<1x4x1x128xf32> to vector<4x128xf32>
    %c3_1011 = arith.constant 3 : index
    %c0_1012 = arith.constant 0 : index
    %c18_1013 = arith.constant 18 : index
    %c0_1014 = arith.constant 0 : index
    %1715 = vector.load %arg6[%c3_1011, %c0_1012, %c18_1013, %c0_1014] : memref<6x4x24x128xf32, #tpu.memory_space<vmem>>, vector<1x4x1x128xf32>
    %1716 = vector.shape_cast %1715 : vector<1x4x1x128xf32> to vector<4x128xf32>
    %1717 = vector.shape_cast %1714 : vector<4x128xf32> to vector<1x4x1x128xf32>
    tpu.vector_store %arg6[%c3_1011, %c0_1012, %c18_1013, %c0_1014], %1717 {strides = array<i32>} : memref<6x4x24x128xf32, #tpu.memory_space<vmem>>, vector<1x4x1x128xf32>,
    %c4_1015 = arith.constant 4 : index
    %c0_1016 = arith.constant 0 : index
    %1718 = arith.index_cast %1639 : i32 to index
    %c0_1017 = arith.constant 0 : index
    %1719 = vector.load %arg3[%c4_1015, %c0_1016, %1718, %c0_1017] : memref<6x4x24x128xf32, #tpu.memory_space<vmem>>, vector<1x4x1x128xf32>
    %1720 = vector.shape_cast %1719 : vector<1x4x1x128xf32> to vector<4x128xf32>
    %c4_1018 = arith.constant 4 : index
    %c0_1019 = arith.constant 0 : index
    %c18_1020 = arith.constant 18 : index
    %c0_1021 = arith.constant 0 : index
    %1721 = vector.load %arg6[%c4_1018, %c0_1019, %c18_1020, %c0_1021] : memref<6x4x24x128xf32, #tpu.memory_space<vmem>>, vector<1x4x1x128xf32>
    %1722 = vector.shape_cast %1721 : vector<1x4x1x128xf32> to vector<4x128xf32>
    %1723 = vector.shape_cast %1720 : vector<4x128xf32> to vector<1x4x1x128xf32>
    tpu.vector_store %arg6[%c4_1018, %c0_1019, %c18_1020, %c0_1021], %1723 {strides = array<i32>} : memref<6x4x24x128xf32, #tpu.memory_space<vmem>>, vector<1x4x1x128xf32>,
    %c5_1022 = arith.constant 5 : index
    %c0_1023 = arith.constant 0 : index
    %1724 = arith.index_cast %1639 : i32 to index
    %c0_1024 = arith.constant 0 : index
    %1725 = vector.load %arg3[%c5_1022, %c0_1023, %1724, %c0_1024] : memref<6x4x24x128xf32, #tpu.memory_space<vmem>>, vector<1x4x1x128xf32>
    %1726 = vector.shape_cast %1725 : vector<1x4x1x128xf32> to vector<4x128xf32>
    %c5_1025 = arith.constant 5 : index
    %c0_1026 = arith.constant 0 : index
    %c18_1027 = arith.constant 18 : index
    %c0_1028 = arith.constant 0 : index
    %1727 = vector.load %arg6[%c5_1025, %c0_1026, %c18_1027, %c0_1028] : memref<6x4x24x128xf32, #tpu.memory_space<vmem>>, vector<1x4x1x128xf32>
    %1728 = vector.shape_cast %1727 : vector<1x4x1x128xf32> to vector<4x128xf32>
    %1729 = vector.shape_cast %1726 : vector<4x128xf32> to vector<1x4x1x128xf32>
    tpu.vector_store %arg6[%c5_1025, %c0_1026, %c18_1027, %c0_1028], %1729 {strides = array<i32>} : memref<6x4x24x128xf32, #tpu.memory_space<vmem>>, vector<1x4x1x128xf32>,
    %c19 = arith.constant 19 : index
    %1730 = memref.load %arg2[%c19] : memref<24xi32, #tpu.memory_space<smem>>
    %c0_1029 = arith.constant 0 : index
    %c0_1030 = arith.constant 0 : index
    %1731 = arith.index_cast %1730 : i32 to index
    %c0_1031 = arith.constant 0 : index
    %1732 = vector.load %arg3[%c0_1029, %c0_1030, %1731, %c0_1031] : memref<6x4x24x128xf32, #tpu.memory_space<vmem>>, vector<1x4x1x128xf32>
    %1733 = vector.shape_cast %1732 : vector<1x4x1x128xf32> to vector<4x128xf32>
    %c1_1032 = arith.constant 1 : index
    %c0_1033 = arith.constant 0 : index
    %1734 = arith.index_cast %1730 : i32 to index
    %c0_1034 = arith.constant 0 : index
    %1735 = vector.load %arg3[%c1_1032, %c0_1033, %1734, %c0_1034] : memref<6x4x24x128xf32, #tpu.memory_space<vmem>>, vector<1x4x1x128xf32>
    %1736 = vector.shape_cast %1735 : vector<1x4x1x128xf32> to vector<4x128xf32>
    %c2_1035 = arith.constant 2 : index
    %c0_1036 = arith.constant 0 : index
    %1737 = arith.index_cast %1730 : i32 to index
    %c0_1037 = arith.constant 0 : index
    %1738 = vector.load %arg3[%c2_1035, %c0_1036, %1737, %c0_1037] : memref<6x4x24x128xf32, #tpu.memory_space<vmem>>, vector<1x4x1x128xf32>
    %1739 = vector.shape_cast %1738 : vector<1x4x1x128xf32> to vector<4x128xf32>
    %1740 = vector.extract_strided_slice %0 {offsets = [0, 0, 0], sizes = [1, 1, 128], strides = [1, 1, 1]} : vector<9x1x128xf32> to vector<1x1x128xf32>
    %1741 = vector.shape_cast %1740 : vector<1x1x128xf32> to vector<1x128xf32>
    %1742 = vector.broadcast %1741 : vector<1x128xf32> to vector<4x128xf32>
    %1743 = arith.mulf %1733, %1742 : vector<4x128xf32>
    %1744 = vector.extract_strided_slice %0 {offsets = [1, 0, 0], sizes = [1, 1, 128], strides = [1, 1, 1]} : vector<9x1x128xf32> to vector<1x1x128xf32>
    %1745 = vector.shape_cast %1744 : vector<1x1x128xf32> to vector<1x128xf32>
    %1746 = vector.broadcast %1745 : vector<1x128xf32> to vector<4x128xf32>
    %1747 = arith.mulf %1736, %1746 : vector<4x128xf32>
    %1748 = arith.addf %1743, %1747 : vector<4x128xf32>
    %1749 = vector.extract_strided_slice %0 {offsets = [2, 0, 0], sizes = [1, 1, 128], strides = [1, 1, 1]} : vector<9x1x128xf32> to vector<1x1x128xf32>
    %1750 = vector.shape_cast %1749 : vector<1x1x128xf32> to vector<1x128xf32>
    %1751 = vector.broadcast %1750 : vector<1x128xf32> to vector<4x128xf32>
    %1752 = arith.mulf %1739, %1751 : vector<4x128xf32>
    %1753 = arith.addf %1748, %1752 : vector<4x128xf32>
    %c0_1038 = arith.constant 0 : index
    %c19_1039 = arith.constant 19 : index
    %c0_1040 = arith.constant 0 : index
    %c0_1041 = arith.constant 0 : index
    %1754 = vector.load %arg5[%c0_1038, %c19_1039, %c0_1040, %c0_1041] : memref<3x24x1x128xf32, #tpu.memory_space<vmem>>, vector<1x1x1x128xf32>
    %1755 = vector.shape_cast %1754 : vector<1x1x1x128xf32> to vector<1x128xf32>
    %1756 = vector.broadcast %1755 : vector<1x128xf32> to vector<4x128xf32>
    %1757 = arith.addf %1753, %1756 : vector<4x128xf32>
    %c0_1042 = arith.constant 0 : index
    %c0_1043 = arith.constant 0 : index
    %c19_1044 = arith.constant 19 : index
    %c0_1045 = arith.constant 0 : index
    %1758 = vector.load %arg6[%c0_1042, %c0_1043, %c19_1044, %c0_1045] : memref<6x4x24x128xf32, #tpu.memory_space<vmem>>, vector<1x4x1x128xf32>
    %1759 = vector.shape_cast %1758 : vector<1x4x1x128xf32> to vector<4x128xf32>
    %1760 = vector.shape_cast %1757 : vector<4x128xf32> to vector<1x4x1x128xf32>
    tpu.vector_store %arg6[%c0_1042, %c0_1043, %c19_1044, %c0_1045], %1760 {strides = array<i32>} : memref<6x4x24x128xf32, #tpu.memory_space<vmem>>, vector<1x4x1x128xf32>,
    %1761 = vector.extract_strided_slice %0 {offsets = [3, 0, 0], sizes = [1, 1, 128], strides = [1, 1, 1]} : vector<9x1x128xf32> to vector<1x1x128xf32>
    %1762 = vector.shape_cast %1761 : vector<1x1x128xf32> to vector<1x128xf32>
    %1763 = vector.broadcast %1762 : vector<1x128xf32> to vector<4x128xf32>
    %1764 = arith.mulf %1733, %1763 : vector<4x128xf32>
    %1765 = vector.extract_strided_slice %0 {offsets = [4, 0, 0], sizes = [1, 1, 128], strides = [1, 1, 1]} : vector<9x1x128xf32> to vector<1x1x128xf32>
    %1766 = vector.shape_cast %1765 : vector<1x1x128xf32> to vector<1x128xf32>
    %1767 = vector.broadcast %1766 : vector<1x128xf32> to vector<4x128xf32>
    %1768 = arith.mulf %1736, %1767 : vector<4x128xf32>
    %1769 = arith.addf %1764, %1768 : vector<4x128xf32>
    %1770 = vector.extract_strided_slice %0 {offsets = [5, 0, 0], sizes = [1, 1, 128], strides = [1, 1, 1]} : vector<9x1x128xf32> to vector<1x1x128xf32>
    %1771 = vector.shape_cast %1770 : vector<1x1x128xf32> to vector<1x128xf32>
    %1772 = vector.broadcast %1771 : vector<1x128xf32> to vector<4x128xf32>
    %1773 = arith.mulf %1739, %1772 : vector<4x128xf32>
    %1774 = arith.addf %1769, %1773 : vector<4x128xf32>
    %c1_1046 = arith.constant 1 : index
    %c19_1047 = arith.constant 19 : index
    %c0_1048 = arith.constant 0 : index
    %c0_1049 = arith.constant 0 : index
    %1775 = vector.load %arg5[%c1_1046, %c19_1047, %c0_1048, %c0_1049] : memref<3x24x1x128xf32, #tpu.memory_space<vmem>>, vector<1x1x1x128xf32>
    %1776 = vector.shape_cast %1775 : vector<1x1x1x128xf32> to vector<1x128xf32>
    %1777 = vector.broadcast %1776 : vector<1x128xf32> to vector<4x128xf32>
    %1778 = arith.addf %1774, %1777 : vector<4x128xf32>
    %c1_1050 = arith.constant 1 : index
    %c0_1051 = arith.constant 0 : index
    %c19_1052 = arith.constant 19 : index
    %c0_1053 = arith.constant 0 : index
    %1779 = vector.load %arg6[%c1_1050, %c0_1051, %c19_1052, %c0_1053] : memref<6x4x24x128xf32, #tpu.memory_space<vmem>>, vector<1x4x1x128xf32>
    %1780 = vector.shape_cast %1779 : vector<1x4x1x128xf32> to vector<4x128xf32>
    %1781 = vector.shape_cast %1778 : vector<4x128xf32> to vector<1x4x1x128xf32>
    tpu.vector_store %arg6[%c1_1050, %c0_1051, %c19_1052, %c0_1053], %1781 {strides = array<i32>} : memref<6x4x24x128xf32, #tpu.memory_space<vmem>>, vector<1x4x1x128xf32>,
    %1782 = vector.extract_strided_slice %0 {offsets = [6, 0, 0], sizes = [1, 1, 128], strides = [1, 1, 1]} : vector<9x1x128xf32> to vector<1x1x128xf32>
    %1783 = vector.shape_cast %1782 : vector<1x1x128xf32> to vector<1x128xf32>
    %1784 = vector.broadcast %1783 : vector<1x128xf32> to vector<4x128xf32>
    %1785 = arith.mulf %1733, %1784 : vector<4x128xf32>
    %1786 = vector.extract_strided_slice %0 {offsets = [7, 0, 0], sizes = [1, 1, 128], strides = [1, 1, 1]} : vector<9x1x128xf32> to vector<1x1x128xf32>
    %1787 = vector.shape_cast %1786 : vector<1x1x128xf32> to vector<1x128xf32>
    %1788 = vector.broadcast %1787 : vector<1x128xf32> to vector<4x128xf32>
    %1789 = arith.mulf %1736, %1788 : vector<4x128xf32>
    %1790 = arith.addf %1785, %1789 : vector<4x128xf32>
    %1791 = vector.extract_strided_slice %0 {offsets = [8, 0, 0], sizes = [1, 1, 128], strides = [1, 1, 1]} : vector<9x1x128xf32> to vector<1x1x128xf32>
    %1792 = vector.shape_cast %1791 : vector<1x1x128xf32> to vector<1x128xf32>
    %1793 = vector.broadcast %1792 : vector<1x128xf32> to vector<4x128xf32>
    %1794 = arith.mulf %1739, %1793 : vector<4x128xf32>
    %1795 = arith.addf %1790, %1794 : vector<4x128xf32>
    %c2_1054 = arith.constant 2 : index
    %c19_1055 = arith.constant 19 : index
    %c0_1056 = arith.constant 0 : index
    %c0_1057 = arith.constant 0 : index
    %1796 = vector.load %arg5[%c2_1054, %c19_1055, %c0_1056, %c0_1057] : memref<3x24x1x128xf32, #tpu.memory_space<vmem>>, vector<1x1x1x128xf32>
    %1797 = vector.shape_cast %1796 : vector<1x1x1x128xf32> to vector<1x128xf32>
    %1798 = vector.broadcast %1797 : vector<1x128xf32> to vector<4x128xf32>
    %1799 = arith.addf %1795, %1798 : vector<4x128xf32>
    %c2_1058 = arith.constant 2 : index
    %c0_1059 = arith.constant 0 : index
    %c19_1060 = arith.constant 19 : index
    %c0_1061 = arith.constant 0 : index
    %1800 = vector.load %arg6[%c2_1058, %c0_1059, %c19_1060, %c0_1061] : memref<6x4x24x128xf32, #tpu.memory_space<vmem>>, vector<1x4x1x128xf32>
    %1801 = vector.shape_cast %1800 : vector<1x4x1x128xf32> to vector<4x128xf32>
    %1802 = vector.shape_cast %1799 : vector<4x128xf32> to vector<1x4x1x128xf32>
    tpu.vector_store %arg6[%c2_1058, %c0_1059, %c19_1060, %c0_1061], %1802 {strides = array<i32>} : memref<6x4x24x128xf32, #tpu.memory_space<vmem>>, vector<1x4x1x128xf32>,
    %c3_1062 = arith.constant 3 : index
    %c0_1063 = arith.constant 0 : index
    %1803 = arith.index_cast %1730 : i32 to index
    %c0_1064 = arith.constant 0 : index
    %1804 = vector.load %arg3[%c3_1062, %c0_1063, %1803, %c0_1064] : memref<6x4x24x128xf32, #tpu.memory_space<vmem>>, vector<1x4x1x128xf32>
    %1805 = vector.shape_cast %1804 : vector<1x4x1x128xf32> to vector<4x128xf32>
    %c3_1065 = arith.constant 3 : index
    %c0_1066 = arith.constant 0 : index
    %c19_1067 = arith.constant 19 : index
    %c0_1068 = arith.constant 0 : index
    %1806 = vector.load %arg6[%c3_1065, %c0_1066, %c19_1067, %c0_1068] : memref<6x4x24x128xf32, #tpu.memory_space<vmem>>, vector<1x4x1x128xf32>
    %1807 = vector.shape_cast %1806 : vector<1x4x1x128xf32> to vector<4x128xf32>
    %1808 = vector.shape_cast %1805 : vector<4x128xf32> to vector<1x4x1x128xf32>
    tpu.vector_store %arg6[%c3_1065, %c0_1066, %c19_1067, %c0_1068], %1808 {strides = array<i32>} : memref<6x4x24x128xf32, #tpu.memory_space<vmem>>, vector<1x4x1x128xf32>,
    %c4_1069 = arith.constant 4 : index
    %c0_1070 = arith.constant 0 : index
    %1809 = arith.index_cast %1730 : i32 to index
    %c0_1071 = arith.constant 0 : index
    %1810 = vector.load %arg3[%c4_1069, %c0_1070, %1809, %c0_1071] : memref<6x4x24x128xf32, #tpu.memory_space<vmem>>, vector<1x4x1x128xf32>
    %1811 = vector.shape_cast %1810 : vector<1x4x1x128xf32> to vector<4x128xf32>
    %c4_1072 = arith.constant 4 : index
    %c0_1073 = arith.constant 0 : index
    %c19_1074 = arith.constant 19 : index
    %c0_1075 = arith.constant 0 : index
    %1812 = vector.load %arg6[%c4_1072, %c0_1073, %c19_1074, %c0_1075] : memref<6x4x24x128xf32, #tpu.memory_space<vmem>>, vector<1x4x1x128xf32>
    %1813 = vector.shape_cast %1812 : vector<1x4x1x128xf32> to vector<4x128xf32>
    %1814 = vector.shape_cast %1811 : vector<4x128xf32> to vector<1x4x1x128xf32>
    tpu.vector_store %arg6[%c4_1072, %c0_1073, %c19_1074, %c0_1075], %1814 {strides = array<i32>} : memref<6x4x24x128xf32, #tpu.memory_space<vmem>>, vector<1x4x1x128xf32>,
    %c5_1076 = arith.constant 5 : index
    %c0_1077 = arith.constant 0 : index
    %1815 = arith.index_cast %1730 : i32 to index
    %c0_1078 = arith.constant 0 : index
    %1816 = vector.load %arg3[%c5_1076, %c0_1077, %1815, %c0_1078] : memref<6x4x24x128xf32, #tpu.memory_space<vmem>>, vector<1x4x1x128xf32>
    %1817 = vector.shape_cast %1816 : vector<1x4x1x128xf32> to vector<4x128xf32>
    %c5_1079 = arith.constant 5 : index
    %c0_1080 = arith.constant 0 : index
    %c19_1081 = arith.constant 19 : index
    %c0_1082 = arith.constant 0 : index
    %1818 = vector.load %arg6[%c5_1079, %c0_1080, %c19_1081, %c0_1082] : memref<6x4x24x128xf32, #tpu.memory_space<vmem>>, vector<1x4x1x128xf32>
    %1819 = vector.shape_cast %1818 : vector<1x4x1x128xf32> to vector<4x128xf32>
    %1820 = vector.shape_cast %1817 : vector<4x128xf32> to vector<1x4x1x128xf32>
    tpu.vector_store %arg6[%c5_1079, %c0_1080, %c19_1081, %c0_1082], %1820 {strides = array<i32>} : memref<6x4x24x128xf32, #tpu.memory_space<vmem>>, vector<1x4x1x128xf32>,
    %c20 = arith.constant 20 : index
    %1821 = memref.load %arg2[%c20] : memref<24xi32, #tpu.memory_space<smem>>
    %c0_1083 = arith.constant 0 : index
    %c0_1084 = arith.constant 0 : index
    %1822 = arith.index_cast %1821 : i32 to index
    %c0_1085 = arith.constant 0 : index
    %1823 = vector.load %arg3[%c0_1083, %c0_1084, %1822, %c0_1085] : memref<6x4x24x128xf32, #tpu.memory_space<vmem>>, vector<1x4x1x128xf32>
    %1824 = vector.shape_cast %1823 : vector<1x4x1x128xf32> to vector<4x128xf32>
    %c1_1086 = arith.constant 1 : index
    %c0_1087 = arith.constant 0 : index
    %1825 = arith.index_cast %1821 : i32 to index
    %c0_1088 = arith.constant 0 : index
    %1826 = vector.load %arg3[%c1_1086, %c0_1087, %1825, %c0_1088] : memref<6x4x24x128xf32, #tpu.memory_space<vmem>>, vector<1x4x1x128xf32>
    %1827 = vector.shape_cast %1826 : vector<1x4x1x128xf32> to vector<4x128xf32>
    %c2_1089 = arith.constant 2 : index
    %c0_1090 = arith.constant 0 : index
    %1828 = arith.index_cast %1821 : i32 to index
    %c0_1091 = arith.constant 0 : index
    %1829 = vector.load %arg3[%c2_1089, %c0_1090, %1828, %c0_1091] : memref<6x4x24x128xf32, #tpu.memory_space<vmem>>, vector<1x4x1x128xf32>
    %1830 = vector.shape_cast %1829 : vector<1x4x1x128xf32> to vector<4x128xf32>
    %1831 = vector.extract_strided_slice %0 {offsets = [0, 0, 0], sizes = [1, 1, 128], strides = [1, 1, 1]} : vector<9x1x128xf32> to vector<1x1x128xf32>
    %1832 = vector.shape_cast %1831 : vector<1x1x128xf32> to vector<1x128xf32>
    %1833 = vector.broadcast %1832 : vector<1x128xf32> to vector<4x128xf32>
    %1834 = arith.mulf %1824, %1833 : vector<4x128xf32>
    %1835 = vector.extract_strided_slice %0 {offsets = [1, 0, 0], sizes = [1, 1, 128], strides = [1, 1, 1]} : vector<9x1x128xf32> to vector<1x1x128xf32>
    %1836 = vector.shape_cast %1835 : vector<1x1x128xf32> to vector<1x128xf32>
    %1837 = vector.broadcast %1836 : vector<1x128xf32> to vector<4x128xf32>
    %1838 = arith.mulf %1827, %1837 : vector<4x128xf32>
    %1839 = arith.addf %1834, %1838 : vector<4x128xf32>
    %1840 = vector.extract_strided_slice %0 {offsets = [2, 0, 0], sizes = [1, 1, 128], strides = [1, 1, 1]} : vector<9x1x128xf32> to vector<1x1x128xf32>
    %1841 = vector.shape_cast %1840 : vector<1x1x128xf32> to vector<1x128xf32>
    %1842 = vector.broadcast %1841 : vector<1x128xf32> to vector<4x128xf32>
    %1843 = arith.mulf %1830, %1842 : vector<4x128xf32>
    %1844 = arith.addf %1839, %1843 : vector<4x128xf32>
    %c0_1092 = arith.constant 0 : index
    %c20_1093 = arith.constant 20 : index
    %c0_1094 = arith.constant 0 : index
    %c0_1095 = arith.constant 0 : index
    %1845 = vector.load %arg5[%c0_1092, %c20_1093, %c0_1094, %c0_1095] : memref<3x24x1x128xf32, #tpu.memory_space<vmem>>, vector<1x1x1x128xf32>
    %1846 = vector.shape_cast %1845 : vector<1x1x1x128xf32> to vector<1x128xf32>
    %1847 = vector.broadcast %1846 : vector<1x128xf32> to vector<4x128xf32>
    %1848 = arith.addf %1844, %1847 : vector<4x128xf32>
    %c0_1096 = arith.constant 0 : index
    %c0_1097 = arith.constant 0 : index
    %c20_1098 = arith.constant 20 : index
    %c0_1099 = arith.constant 0 : index
    %1849 = vector.load %arg6[%c0_1096, %c0_1097, %c20_1098, %c0_1099] : memref<6x4x24x128xf32, #tpu.memory_space<vmem>>, vector<1x4x1x128xf32>
    %1850 = vector.shape_cast %1849 : vector<1x4x1x128xf32> to vector<4x128xf32>
    %1851 = vector.shape_cast %1848 : vector<4x128xf32> to vector<1x4x1x128xf32>
    tpu.vector_store %arg6[%c0_1096, %c0_1097, %c20_1098, %c0_1099], %1851 {strides = array<i32>} : memref<6x4x24x128xf32, #tpu.memory_space<vmem>>, vector<1x4x1x128xf32>,
    %1852 = vector.extract_strided_slice %0 {offsets = [3, 0, 0], sizes = [1, 1, 128], strides = [1, 1, 1]} : vector<9x1x128xf32> to vector<1x1x128xf32>
    %1853 = vector.shape_cast %1852 : vector<1x1x128xf32> to vector<1x128xf32>
    %1854 = vector.broadcast %1853 : vector<1x128xf32> to vector<4x128xf32>
    %1855 = arith.mulf %1824, %1854 : vector<4x128xf32>
    %1856 = vector.extract_strided_slice %0 {offsets = [4, 0, 0], sizes = [1, 1, 128], strides = [1, 1, 1]} : vector<9x1x128xf32> to vector<1x1x128xf32>
    %1857 = vector.shape_cast %1856 : vector<1x1x128xf32> to vector<1x128xf32>
    %1858 = vector.broadcast %1857 : vector<1x128xf32> to vector<4x128xf32>
    %1859 = arith.mulf %1827, %1858 : vector<4x128xf32>
    %1860 = arith.addf %1855, %1859 : vector<4x128xf32>
    %1861 = vector.extract_strided_slice %0 {offsets = [5, 0, 0], sizes = [1, 1, 128], strides = [1, 1, 1]} : vector<9x1x128xf32> to vector<1x1x128xf32>
    %1862 = vector.shape_cast %1861 : vector<1x1x128xf32> to vector<1x128xf32>
    %1863 = vector.broadcast %1862 : vector<1x128xf32> to vector<4x128xf32>
    %1864 = arith.mulf %1830, %1863 : vector<4x128xf32>
    %1865 = arith.addf %1860, %1864 : vector<4x128xf32>
    %c1_1100 = arith.constant 1 : index
    %c20_1101 = arith.constant 20 : index
    %c0_1102 = arith.constant 0 : index
    %c0_1103 = arith.constant 0 : index
    %1866 = vector.load %arg5[%c1_1100, %c20_1101, %c0_1102, %c0_1103] : memref<3x24x1x128xf32, #tpu.memory_space<vmem>>, vector<1x1x1x128xf32>
    %1867 = vector.shape_cast %1866 : vector<1x1x1x128xf32> to vector<1x128xf32>
    %1868 = vector.broadcast %1867 : vector<1x128xf32> to vector<4x128xf32>
    %1869 = arith.addf %1865, %1868 : vector<4x128xf32>
    %c1_1104 = arith.constant 1 : index
    %c0_1105 = arith.constant 0 : index
    %c20_1106 = arith.constant 20 : index
    %c0_1107 = arith.constant 0 : index
    %1870 = vector.load %arg6[%c1_1104, %c0_1105, %c20_1106, %c0_1107] : memref<6x4x24x128xf32, #tpu.memory_space<vmem>>, vector<1x4x1x128xf32>
    %1871 = vector.shape_cast %1870 : vector<1x4x1x128xf32> to vector<4x128xf32>
    %1872 = vector.shape_cast %1869 : vector<4x128xf32> to vector<1x4x1x128xf32>
    tpu.vector_store %arg6[%c1_1104, %c0_1105, %c20_1106, %c0_1107], %1872 {strides = array<i32>} : memref<6x4x24x128xf32, #tpu.memory_space<vmem>>, vector<1x4x1x128xf32>,
    %1873 = vector.extract_strided_slice %0 {offsets = [6, 0, 0], sizes = [1, 1, 128], strides = [1, 1, 1]} : vector<9x1x128xf32> to vector<1x1x128xf32>
    %1874 = vector.shape_cast %1873 : vector<1x1x128xf32> to vector<1x128xf32>
    %1875 = vector.broadcast %1874 : vector<1x128xf32> to vector<4x128xf32>
    %1876 = arith.mulf %1824, %1875 : vector<4x128xf32>
    %1877 = vector.extract_strided_slice %0 {offsets = [7, 0, 0], sizes = [1, 1, 128], strides = [1, 1, 1]} : vector<9x1x128xf32> to vector<1x1x128xf32>
    %1878 = vector.shape_cast %1877 : vector<1x1x128xf32> to vector<1x128xf32>
    %1879 = vector.broadcast %1878 : vector<1x128xf32> to vector<4x128xf32>
    %1880 = arith.mulf %1827, %1879 : vector<4x128xf32>
    %1881 = arith.addf %1876, %1880 : vector<4x128xf32>
    %1882 = vector.extract_strided_slice %0 {offsets = [8, 0, 0], sizes = [1, 1, 128], strides = [1, 1, 1]} : vector<9x1x128xf32> to vector<1x1x128xf32>
    %1883 = vector.shape_cast %1882 : vector<1x1x128xf32> to vector<1x128xf32>
    %1884 = vector.broadcast %1883 : vector<1x128xf32> to vector<4x128xf32>
    %1885 = arith.mulf %1830, %1884 : vector<4x128xf32>
    %1886 = arith.addf %1881, %1885 : vector<4x128xf32>
    %c2_1108 = arith.constant 2 : index
    %c20_1109 = arith.constant 20 : index
    %c0_1110 = arith.constant 0 : index
    %c0_1111 = arith.constant 0 : index
    %1887 = vector.load %arg5[%c2_1108, %c20_1109, %c0_1110, %c0_1111] : memref<3x24x1x128xf32, #tpu.memory_space<vmem>>, vector<1x1x1x128xf32>
    %1888 = vector.shape_cast %1887 : vector<1x1x1x128xf32> to vector<1x128xf32>
    %1889 = vector.broadcast %1888 : vector<1x128xf32> to vector<4x128xf32>
    %1890 = arith.addf %1886, %1889 : vector<4x128xf32>
    %c2_1112 = arith.constant 2 : index
    %c0_1113 = arith.constant 0 : index
    %c20_1114 = arith.constant 20 : index
    %c0_1115 = arith.constant 0 : index
    %1891 = vector.load %arg6[%c2_1112, %c0_1113, %c20_1114, %c0_1115] : memref<6x4x24x128xf32, #tpu.memory_space<vmem>>, vector<1x4x1x128xf32>
    %1892 = vector.shape_cast %1891 : vector<1x4x1x128xf32> to vector<4x128xf32>
    %1893 = vector.shape_cast %1890 : vector<4x128xf32> to vector<1x4x1x128xf32>
    tpu.vector_store %arg6[%c2_1112, %c0_1113, %c20_1114, %c0_1115], %1893 {strides = array<i32>} : memref<6x4x24x128xf32, #tpu.memory_space<vmem>>, vector<1x4x1x128xf32>,
    %c3_1116 = arith.constant 3 : index
    %c0_1117 = arith.constant 0 : index
    %1894 = arith.index_cast %1821 : i32 to index
    %c0_1118 = arith.constant 0 : index
    %1895 = vector.load %arg3[%c3_1116, %c0_1117, %1894, %c0_1118] : memref<6x4x24x128xf32, #tpu.memory_space<vmem>>, vector<1x4x1x128xf32>
    %1896 = vector.shape_cast %1895 : vector<1x4x1x128xf32> to vector<4x128xf32>
    %c3_1119 = arith.constant 3 : index
    %c0_1120 = arith.constant 0 : index
    %c20_1121 = arith.constant 20 : index
    %c0_1122 = arith.constant 0 : index
    %1897 = vector.load %arg6[%c3_1119, %c0_1120, %c20_1121, %c0_1122] : memref<6x4x24x128xf32, #tpu.memory_space<vmem>>, vector<1x4x1x128xf32>
    %1898 = vector.shape_cast %1897 : vector<1x4x1x128xf32> to vector<4x128xf32>
    %1899 = vector.shape_cast %1896 : vector<4x128xf32> to vector<1x4x1x128xf32>
    tpu.vector_store %arg6[%c3_1119, %c0_1120, %c20_1121, %c0_1122], %1899 {strides = array<i32>} : memref<6x4x24x128xf32, #tpu.memory_space<vmem>>, vector<1x4x1x128xf32>,
    %c4_1123 = arith.constant 4 : index
    %c0_1124 = arith.constant 0 : index
    %1900 = arith.index_cast %1821 : i32 to index
    %c0_1125 = arith.constant 0 : index
    %1901 = vector.load %arg3[%c4_1123, %c0_1124, %1900, %c0_1125] : memref<6x4x24x128xf32, #tpu.memory_space<vmem>>, vector<1x4x1x128xf32>
    %1902 = vector.shape_cast %1901 : vector<1x4x1x128xf32> to vector<4x128xf32>
    %c4_1126 = arith.constant 4 : index
    %c0_1127 = arith.constant 0 : index
    %c20_1128 = arith.constant 20 : index
    %c0_1129 = arith.constant 0 : index
    %1903 = vector.load %arg6[%c4_1126, %c0_1127, %c20_1128, %c0_1129] : memref<6x4x24x128xf32, #tpu.memory_space<vmem>>, vector<1x4x1x128xf32>
    %1904 = vector.shape_cast %1903 : vector<1x4x1x128xf32> to vector<4x128xf32>
    %1905 = vector.shape_cast %1902 : vector<4x128xf32> to vector<1x4x1x128xf32>
    tpu.vector_store %arg6[%c4_1126, %c0_1127, %c20_1128, %c0_1129], %1905 {strides = array<i32>} : memref<6x4x24x128xf32, #tpu.memory_space<vmem>>, vector<1x4x1x128xf32>,
    %c5_1130 = arith.constant 5 : index
    %c0_1131 = arith.constant 0 : index
    %1906 = arith.index_cast %1821 : i32 to index
    %c0_1132 = arith.constant 0 : index
    %1907 = vector.load %arg3[%c5_1130, %c0_1131, %1906, %c0_1132] : memref<6x4x24x128xf32, #tpu.memory_space<vmem>>, vector<1x4x1x128xf32>
    %1908 = vector.shape_cast %1907 : vector<1x4x1x128xf32> to vector<4x128xf32>
    %c5_1133 = arith.constant 5 : index
    %c0_1134 = arith.constant 0 : index
    %c20_1135 = arith.constant 20 : index
    %c0_1136 = arith.constant 0 : index
    %1909 = vector.load %arg6[%c5_1133, %c0_1134, %c20_1135, %c0_1136] : memref<6x4x24x128xf32, #tpu.memory_space<vmem>>, vector<1x4x1x128xf32>
    %1910 = vector.shape_cast %1909 : vector<1x4x1x128xf32> to vector<4x128xf32>
    %1911 = vector.shape_cast %1908 : vector<4x128xf32> to vector<1x4x1x128xf32>
    tpu.vector_store %arg6[%c5_1133, %c0_1134, %c20_1135, %c0_1136], %1911 {strides = array<i32>} : memref<6x4x24x128xf32, #tpu.memory_space<vmem>>, vector<1x4x1x128xf32>,
    %c21 = arith.constant 21 : index
    %1912 = memref.load %arg2[%c21] : memref<24xi32, #tpu.memory_space<smem>>
    %c0_1137 = arith.constant 0 : index
    %c0_1138 = arith.constant 0 : index
    %1913 = arith.index_cast %1912 : i32 to index
    %c0_1139 = arith.constant 0 : index
    %1914 = vector.load %arg3[%c0_1137, %c0_1138, %1913, %c0_1139] : memref<6x4x24x128xf32, #tpu.memory_space<vmem>>, vector<1x4x1x128xf32>
    %1915 = vector.shape_cast %1914 : vector<1x4x1x128xf32> to vector<4x128xf32>
    %c1_1140 = arith.constant 1 : index
    %c0_1141 = arith.constant 0 : index
    %1916 = arith.index_cast %1912 : i32 to index
    %c0_1142 = arith.constant 0 : index
    %1917 = vector.load %arg3[%c1_1140, %c0_1141, %1916, %c0_1142] : memref<6x4x24x128xf32, #tpu.memory_space<vmem>>, vector<1x4x1x128xf32>
    %1918 = vector.shape_cast %1917 : vector<1x4x1x128xf32> to vector<4x128xf32>
    %c2_1143 = arith.constant 2 : index
    %c0_1144 = arith.constant 0 : index
    %1919 = arith.index_cast %1912 : i32 to index
    %c0_1145 = arith.constant 0 : index
    %1920 = vector.load %arg3[%c2_1143, %c0_1144, %1919, %c0_1145] : memref<6x4x24x128xf32, #tpu.memory_space<vmem>>, vector<1x4x1x128xf32>
    %1921 = vector.shape_cast %1920 : vector<1x4x1x128xf32> to vector<4x128xf32>
    %1922 = vector.extract_strided_slice %0 {offsets = [0, 0, 0], sizes = [1, 1, 128], strides = [1, 1, 1]} : vector<9x1x128xf32> to vector<1x1x128xf32>
    %1923 = vector.shape_cast %1922 : vector<1x1x128xf32> to vector<1x128xf32>
    %1924 = vector.broadcast %1923 : vector<1x128xf32> to vector<4x128xf32>
    %1925 = arith.mulf %1915, %1924 : vector<4x128xf32>
    %1926 = vector.extract_strided_slice %0 {offsets = [1, 0, 0], sizes = [1, 1, 128], strides = [1, 1, 1]} : vector<9x1x128xf32> to vector<1x1x128xf32>
    %1927 = vector.shape_cast %1926 : vector<1x1x128xf32> to vector<1x128xf32>
    %1928 = vector.broadcast %1927 : vector<1x128xf32> to vector<4x128xf32>
    %1929 = arith.mulf %1918, %1928 : vector<4x128xf32>
    %1930 = arith.addf %1925, %1929 : vector<4x128xf32>
    %1931 = vector.extract_strided_slice %0 {offsets = [2, 0, 0], sizes = [1, 1, 128], strides = [1, 1, 1]} : vector<9x1x128xf32> to vector<1x1x128xf32>
    %1932 = vector.shape_cast %1931 : vector<1x1x128xf32> to vector<1x128xf32>
    %1933 = vector.broadcast %1932 : vector<1x128xf32> to vector<4x128xf32>
    %1934 = arith.mulf %1921, %1933 : vector<4x128xf32>
    %1935 = arith.addf %1930, %1934 : vector<4x128xf32>
    %c0_1146 = arith.constant 0 : index
    %c21_1147 = arith.constant 21 : index
    %c0_1148 = arith.constant 0 : index
    %c0_1149 = arith.constant 0 : index
    %1936 = vector.load %arg5[%c0_1146, %c21_1147, %c0_1148, %c0_1149] : memref<3x24x1x128xf32, #tpu.memory_space<vmem>>, vector<1x1x1x128xf32>
    %1937 = vector.shape_cast %1936 : vector<1x1x1x128xf32> to vector<1x128xf32>
    %1938 = vector.broadcast %1937 : vector<1x128xf32> to vector<4x128xf32>
    %1939 = arith.addf %1935, %1938 : vector<4x128xf32>
    %c0_1150 = arith.constant 0 : index
    %c0_1151 = arith.constant 0 : index
    %c21_1152 = arith.constant 21 : index
    %c0_1153 = arith.constant 0 : index
    %1940 = vector.load %arg6[%c0_1150, %c0_1151, %c21_1152, %c0_1153] : memref<6x4x24x128xf32, #tpu.memory_space<vmem>>, vector<1x4x1x128xf32>
    %1941 = vector.shape_cast %1940 : vector<1x4x1x128xf32> to vector<4x128xf32>
    %1942 = vector.shape_cast %1939 : vector<4x128xf32> to vector<1x4x1x128xf32>
    tpu.vector_store %arg6[%c0_1150, %c0_1151, %c21_1152, %c0_1153], %1942 {strides = array<i32>} : memref<6x4x24x128xf32, #tpu.memory_space<vmem>>, vector<1x4x1x128xf32>,
    %1943 = vector.extract_strided_slice %0 {offsets = [3, 0, 0], sizes = [1, 1, 128], strides = [1, 1, 1]} : vector<9x1x128xf32> to vector<1x1x128xf32>
    %1944 = vector.shape_cast %1943 : vector<1x1x128xf32> to vector<1x128xf32>
    %1945 = vector.broadcast %1944 : vector<1x128xf32> to vector<4x128xf32>
    %1946 = arith.mulf %1915, %1945 : vector<4x128xf32>
    %1947 = vector.extract_strided_slice %0 {offsets = [4, 0, 0], sizes = [1, 1, 128], strides = [1, 1, 1]} : vector<9x1x128xf32> to vector<1x1x128xf32>
    %1948 = vector.shape_cast %1947 : vector<1x1x128xf32> to vector<1x128xf32>
    %1949 = vector.broadcast %1948 : vector<1x128xf32> to vector<4x128xf32>
    %1950 = arith.mulf %1918, %1949 : vector<4x128xf32>
    %1951 = arith.addf %1946, %1950 : vector<4x128xf32>
    %1952 = vector.extract_strided_slice %0 {offsets = [5, 0, 0], sizes = [1, 1, 128], strides = [1, 1, 1]} : vector<9x1x128xf32> to vector<1x1x128xf32>
    %1953 = vector.shape_cast %1952 : vector<1x1x128xf32> to vector<1x128xf32>
    %1954 = vector.broadcast %1953 : vector<1x128xf32> to vector<4x128xf32>
    %1955 = arith.mulf %1921, %1954 : vector<4x128xf32>
    %1956 = arith.addf %1951, %1955 : vector<4x128xf32>
    %c1_1154 = arith.constant 1 : index
    %c21_1155 = arith.constant 21 : index
    %c0_1156 = arith.constant 0 : index
    %c0_1157 = arith.constant 0 : index
    %1957 = vector.load %arg5[%c1_1154, %c21_1155, %c0_1156, %c0_1157] : memref<3x24x1x128xf32, #tpu.memory_space<vmem>>, vector<1x1x1x128xf32>
    %1958 = vector.shape_cast %1957 : vector<1x1x1x128xf32> to vector<1x128xf32>
    %1959 = vector.broadcast %1958 : vector<1x128xf32> to vector<4x128xf32>
    %1960 = arith.addf %1956, %1959 : vector<4x128xf32>
    %c1_1158 = arith.constant 1 : index
    %c0_1159 = arith.constant 0 : index
    %c21_1160 = arith.constant 21 : index
    %c0_1161 = arith.constant 0 : index
    %1961 = vector.load %arg6[%c1_1158, %c0_1159, %c21_1160, %c0_1161] : memref<6x4x24x128xf32, #tpu.memory_space<vmem>>, vector<1x4x1x128xf32>
    %1962 = vector.shape_cast %1961 : vector<1x4x1x128xf32> to vector<4x128xf32>
    %1963 = vector.shape_cast %1960 : vector<4x128xf32> to vector<1x4x1x128xf32>
    tpu.vector_store %arg6[%c1_1158, %c0_1159, %c21_1160, %c0_1161], %1963 {strides = array<i32>} : memref<6x4x24x128xf32, #tpu.memory_space<vmem>>, vector<1x4x1x128xf32>,
    %1964 = vector.extract_strided_slice %0 {offsets = [6, 0, 0], sizes = [1, 1, 128], strides = [1, 1, 1]} : vector<9x1x128xf32> to vector<1x1x128xf32>
    %1965 = vector.shape_cast %1964 : vector<1x1x128xf32> to vector<1x128xf32>
    %1966 = vector.broadcast %1965 : vector<1x128xf32> to vector<4x128xf32>
    %1967 = arith.mulf %1915, %1966 : vector<4x128xf32>
    %1968 = vector.extract_strided_slice %0 {offsets = [7, 0, 0], sizes = [1, 1, 128], strides = [1, 1, 1]} : vector<9x1x128xf32> to vector<1x1x128xf32>
    %1969 = vector.shape_cast %1968 : vector<1x1x128xf32> to vector<1x128xf32>
    %1970 = vector.broadcast %1969 : vector<1x128xf32> to vector<4x128xf32>
    %1971 = arith.mulf %1918, %1970 : vector<4x128xf32>
    %1972 = arith.addf %1967, %1971 : vector<4x128xf32>
    %1973 = vector.extract_strided_slice %0 {offsets = [8, 0, 0], sizes = [1, 1, 128], strides = [1, 1, 1]} : vector<9x1x128xf32> to vector<1x1x128xf32>
    %1974 = vector.shape_cast %1973 : vector<1x1x128xf32> to vector<1x128xf32>
    %1975 = vector.broadcast %1974 : vector<1x128xf32> to vector<4x128xf32>
    %1976 = arith.mulf %1921, %1975 : vector<4x128xf32>
    %1977 = arith.addf %1972, %1976 : vector<4x128xf32>
    %c2_1162 = arith.constant 2 : index
    %c21_1163 = arith.constant 21 : index
    %c0_1164 = arith.constant 0 : index
    %c0_1165 = arith.constant 0 : index
    %1978 = vector.load %arg5[%c2_1162, %c21_1163, %c0_1164, %c0_1165] : memref<3x24x1x128xf32, #tpu.memory_space<vmem>>, vector<1x1x1x128xf32>
    %1979 = vector.shape_cast %1978 : vector<1x1x1x128xf32> to vector<1x128xf32>
    %1980 = vector.broadcast %1979 : vector<1x128xf32> to vector<4x128xf32>
    %1981 = arith.addf %1977, %1980 : vector<4x128xf32>
    %c2_1166 = arith.constant 2 : index
    %c0_1167 = arith.constant 0 : index
    %c21_1168 = arith.constant 21 : index
    %c0_1169 = arith.constant 0 : index
    %1982 = vector.load %arg6[%c2_1166, %c0_1167, %c21_1168, %c0_1169] : memref<6x4x24x128xf32, #tpu.memory_space<vmem>>, vector<1x4x1x128xf32>
    %1983 = vector.shape_cast %1982 : vector<1x4x1x128xf32> to vector<4x128xf32>
    %1984 = vector.shape_cast %1981 : vector<4x128xf32> to vector<1x4x1x128xf32>
    tpu.vector_store %arg6[%c2_1166, %c0_1167, %c21_1168, %c0_1169], %1984 {strides = array<i32>} : memref<6x4x24x128xf32, #tpu.memory_space<vmem>>, vector<1x4x1x128xf32>,
    %c3_1170 = arith.constant 3 : index
    %c0_1171 = arith.constant 0 : index
    %1985 = arith.index_cast %1912 : i32 to index
    %c0_1172 = arith.constant 0 : index
    %1986 = vector.load %arg3[%c3_1170, %c0_1171, %1985, %c0_1172] : memref<6x4x24x128xf32, #tpu.memory_space<vmem>>, vector<1x4x1x128xf32>
    %1987 = vector.shape_cast %1986 : vector<1x4x1x128xf32> to vector<4x128xf32>
    %c3_1173 = arith.constant 3 : index
    %c0_1174 = arith.constant 0 : index
    %c21_1175 = arith.constant 21 : index
    %c0_1176 = arith.constant 0 : index
    %1988 = vector.load %arg6[%c3_1173, %c0_1174, %c21_1175, %c0_1176] : memref<6x4x24x128xf32, #tpu.memory_space<vmem>>, vector<1x4x1x128xf32>
    %1989 = vector.shape_cast %1988 : vector<1x4x1x128xf32> to vector<4x128xf32>
    %1990 = vector.shape_cast %1987 : vector<4x128xf32> to vector<1x4x1x128xf32>
    tpu.vector_store %arg6[%c3_1173, %c0_1174, %c21_1175, %c0_1176], %1990 {strides = array<i32>} : memref<6x4x24x128xf32, #tpu.memory_space<vmem>>, vector<1x4x1x128xf32>,
    %c4_1177 = arith.constant 4 : index
    %c0_1178 = arith.constant 0 : index
    %1991 = arith.index_cast %1912 : i32 to index
    %c0_1179 = arith.constant 0 : index
    %1992 = vector.load %arg3[%c4_1177, %c0_1178, %1991, %c0_1179] : memref<6x4x24x128xf32, #tpu.memory_space<vmem>>, vector<1x4x1x128xf32>
    %1993 = vector.shape_cast %1992 : vector<1x4x1x128xf32> to vector<4x128xf32>
    %c4_1180 = arith.constant 4 : index
    %c0_1181 = arith.constant 0 : index
    %c21_1182 = arith.constant 21 : index
    %c0_1183 = arith.constant 0 : index
    %1994 = vector.load %arg6[%c4_1180, %c0_1181, %c21_1182, %c0_1183] : memref<6x4x24x128xf32, #tpu.memory_space<vmem>>, vector<1x4x1x128xf32>
    %1995 = vector.shape_cast %1994 : vector<1x4x1x128xf32> to vector<4x128xf32>
    %1996 = vector.shape_cast %1993 : vector<4x128xf32> to vector<1x4x1x128xf32>
    tpu.vector_store %arg6[%c4_1180, %c0_1181, %c21_1182, %c0_1183], %1996 {strides = array<i32>} : memref<6x4x24x128xf32, #tpu.memory_space<vmem>>, vector<1x4x1x128xf32>,
    %c5_1184 = arith.constant 5 : index
    %c0_1185 = arith.constant 0 : index
    %1997 = arith.index_cast %1912 : i32 to index
    %c0_1186 = arith.constant 0 : index
    %1998 = vector.load %arg3[%c5_1184, %c0_1185, %1997, %c0_1186] : memref<6x4x24x128xf32, #tpu.memory_space<vmem>>, vector<1x4x1x128xf32>
    %1999 = vector.shape_cast %1998 : vector<1x4x1x128xf32> to vector<4x128xf32>
    %c5_1187 = arith.constant 5 : index
    %c0_1188 = arith.constant 0 : index
    %c21_1189 = arith.constant 21 : index
    %c0_1190 = arith.constant 0 : index
    %2000 = vector.load %arg6[%c5_1187, %c0_1188, %c21_1189, %c0_1190] : memref<6x4x24x128xf32, #tpu.memory_space<vmem>>, vector<1x4x1x128xf32>
    %2001 = vector.shape_cast %2000 : vector<1x4x1x128xf32> to vector<4x128xf32>
    %2002 = vector.shape_cast %1999 : vector<4x128xf32> to vector<1x4x1x128xf32>
    tpu.vector_store %arg6[%c5_1187, %c0_1188, %c21_1189, %c0_1190], %2002 {strides = array<i32>} : memref<6x4x24x128xf32, #tpu.memory_space<vmem>>, vector<1x4x1x128xf32>,
    %c22 = arith.constant 22 : index
    %2003 = memref.load %arg2[%c22] : memref<24xi32, #tpu.memory_space<smem>>
    %c0_1191 = arith.constant 0 : index
    %c0_1192 = arith.constant 0 : index
    %2004 = arith.index_cast %2003 : i32 to index
    %c0_1193 = arith.constant 0 : index
    %2005 = vector.load %arg3[%c0_1191, %c0_1192, %2004, %c0_1193] : memref<6x4x24x128xf32, #tpu.memory_space<vmem>>, vector<1x4x1x128xf32>
    %2006 = vector.shape_cast %2005 : vector<1x4x1x128xf32> to vector<4x128xf32>
    %c1_1194 = arith.constant 1 : index
    %c0_1195 = arith.constant 0 : index
    %2007 = arith.index_cast %2003 : i32 to index
    %c0_1196 = arith.constant 0 : index
    %2008 = vector.load %arg3[%c1_1194, %c0_1195, %2007, %c0_1196] : memref<6x4x24x128xf32, #tpu.memory_space<vmem>>, vector<1x4x1x128xf32>
    %2009 = vector.shape_cast %2008 : vector<1x4x1x128xf32> to vector<4x128xf32>
    %c2_1197 = arith.constant 2 : index
    %c0_1198 = arith.constant 0 : index
    %2010 = arith.index_cast %2003 : i32 to index
    %c0_1199 = arith.constant 0 : index
    %2011 = vector.load %arg3[%c2_1197, %c0_1198, %2010, %c0_1199] : memref<6x4x24x128xf32, #tpu.memory_space<vmem>>, vector<1x4x1x128xf32>
    %2012 = vector.shape_cast %2011 : vector<1x4x1x128xf32> to vector<4x128xf32>
    %2013 = vector.extract_strided_slice %0 {offsets = [0, 0, 0], sizes = [1, 1, 128], strides = [1, 1, 1]} : vector<9x1x128xf32> to vector<1x1x128xf32>
    %2014 = vector.shape_cast %2013 : vector<1x1x128xf32> to vector<1x128xf32>
    %2015 = vector.broadcast %2014 : vector<1x128xf32> to vector<4x128xf32>
    %2016 = arith.mulf %2006, %2015 : vector<4x128xf32>
    %2017 = vector.extract_strided_slice %0 {offsets = [1, 0, 0], sizes = [1, 1, 128], strides = [1, 1, 1]} : vector<9x1x128xf32> to vector<1x1x128xf32>
    %2018 = vector.shape_cast %2017 : vector<1x1x128xf32> to vector<1x128xf32>
    %2019 = vector.broadcast %2018 : vector<1x128xf32> to vector<4x128xf32>
    %2020 = arith.mulf %2009, %2019 : vector<4x128xf32>
    %2021 = arith.addf %2016, %2020 : vector<4x128xf32>
    %2022 = vector.extract_strided_slice %0 {offsets = [2, 0, 0], sizes = [1, 1, 128], strides = [1, 1, 1]} : vector<9x1x128xf32> to vector<1x1x128xf32>
    %2023 = vector.shape_cast %2022 : vector<1x1x128xf32> to vector<1x128xf32>
    %2024 = vector.broadcast %2023 : vector<1x128xf32> to vector<4x128xf32>
    %2025 = arith.mulf %2012, %2024 : vector<4x128xf32>
    %2026 = arith.addf %2021, %2025 : vector<4x128xf32>
    %c0_1200 = arith.constant 0 : index
    %c22_1201 = arith.constant 22 : index
    %c0_1202 = arith.constant 0 : index
    %c0_1203 = arith.constant 0 : index
    %2027 = vector.load %arg5[%c0_1200, %c22_1201, %c0_1202, %c0_1203] : memref<3x24x1x128xf32, #tpu.memory_space<vmem>>, vector<1x1x1x128xf32>
    %2028 = vector.shape_cast %2027 : vector<1x1x1x128xf32> to vector<1x128xf32>
    %2029 = vector.broadcast %2028 : vector<1x128xf32> to vector<4x128xf32>
    %2030 = arith.addf %2026, %2029 : vector<4x128xf32>
    %c0_1204 = arith.constant 0 : index
    %c0_1205 = arith.constant 0 : index
    %c22_1206 = arith.constant 22 : index
    %c0_1207 = arith.constant 0 : index
    %2031 = vector.load %arg6[%c0_1204, %c0_1205, %c22_1206, %c0_1207] : memref<6x4x24x128xf32, #tpu.memory_space<vmem>>, vector<1x4x1x128xf32>
    %2032 = vector.shape_cast %2031 : vector<1x4x1x128xf32> to vector<4x128xf32>
    %2033 = vector.shape_cast %2030 : vector<4x128xf32> to vector<1x4x1x128xf32>
    tpu.vector_store %arg6[%c0_1204, %c0_1205, %c22_1206, %c0_1207], %2033 {strides = array<i32>} : memref<6x4x24x128xf32, #tpu.memory_space<vmem>>, vector<1x4x1x128xf32>,
    %2034 = vector.extract_strided_slice %0 {offsets = [3, 0, 0], sizes = [1, 1, 128], strides = [1, 1, 1]} : vector<9x1x128xf32> to vector<1x1x128xf32>
    %2035 = vector.shape_cast %2034 : vector<1x1x128xf32> to vector<1x128xf32>
    %2036 = vector.broadcast %2035 : vector<1x128xf32> to vector<4x128xf32>
    %2037 = arith.mulf %2006, %2036 : vector<4x128xf32>
    %2038 = vector.extract_strided_slice %0 {offsets = [4, 0, 0], sizes = [1, 1, 128], strides = [1, 1, 1]} : vector<9x1x128xf32> to vector<1x1x128xf32>
    %2039 = vector.shape_cast %2038 : vector<1x1x128xf32> to vector<1x128xf32>
    %2040 = vector.broadcast %2039 : vector<1x128xf32> to vector<4x128xf32>
    %2041 = arith.mulf %2009, %2040 : vector<4x128xf32>
    %2042 = arith.addf %2037, %2041 : vector<4x128xf32>
    %2043 = vector.extract_strided_slice %0 {offsets = [5, 0, 0], sizes = [1, 1, 128], strides = [1, 1, 1]} : vector<9x1x128xf32> to vector<1x1x128xf32>
    %2044 = vector.shape_cast %2043 : vector<1x1x128xf32> to vector<1x128xf32>
    %2045 = vector.broadcast %2044 : vector<1x128xf32> to vector<4x128xf32>
    %2046 = arith.mulf %2012, %2045 : vector<4x128xf32>
    %2047 = arith.addf %2042, %2046 : vector<4x128xf32>
    %c1_1208 = arith.constant 1 : index
    %c22_1209 = arith.constant 22 : index
    %c0_1210 = arith.constant 0 : index
    %c0_1211 = arith.constant 0 : index
    %2048 = vector.load %arg5[%c1_1208, %c22_1209, %c0_1210, %c0_1211] : memref<3x24x1x128xf32, #tpu.memory_space<vmem>>, vector<1x1x1x128xf32>
    %2049 = vector.shape_cast %2048 : vector<1x1x1x128xf32> to vector<1x128xf32>
    %2050 = vector.broadcast %2049 : vector<1x128xf32> to vector<4x128xf32>
    %2051 = arith.addf %2047, %2050 : vector<4x128xf32>
    %c1_1212 = arith.constant 1 : index
    %c0_1213 = arith.constant 0 : index
    %c22_1214 = arith.constant 22 : index
    %c0_1215 = arith.constant 0 : index
    %2052 = vector.load %arg6[%c1_1212, %c0_1213, %c22_1214, %c0_1215] : memref<6x4x24x128xf32, #tpu.memory_space<vmem>>, vector<1x4x1x128xf32>
    %2053 = vector.shape_cast %2052 : vector<1x4x1x128xf32> to vector<4x128xf32>
    %2054 = vector.shape_cast %2051 : vector<4x128xf32> to vector<1x4x1x128xf32>
    tpu.vector_store %arg6[%c1_1212, %c0_1213, %c22_1214, %c0_1215], %2054 {strides = array<i32>} : memref<6x4x24x128xf32, #tpu.memory_space<vmem>>, vector<1x4x1x128xf32>,
    %2055 = vector.extract_strided_slice %0 {offsets = [6, 0, 0], sizes = [1, 1, 128], strides = [1, 1, 1]} : vector<9x1x128xf32> to vector<1x1x128xf32>
    %2056 = vector.shape_cast %2055 : vector<1x1x128xf32> to vector<1x128xf32>
    %2057 = vector.broadcast %2056 : vector<1x128xf32> to vector<4x128xf32>
    %2058 = arith.mulf %2006, %2057 : vector<4x128xf32>
    %2059 = vector.extract_strided_slice %0 {offsets = [7, 0, 0], sizes = [1, 1, 128], strides = [1, 1, 1]} : vector<9x1x128xf32> to vector<1x1x128xf32>
    %2060 = vector.shape_cast %2059 : vector<1x1x128xf32> to vector<1x128xf32>
    %2061 = vector.broadcast %2060 : vector<1x128xf32> to vector<4x128xf32>
    %2062 = arith.mulf %2009, %2061 : vector<4x128xf32>
    %2063 = arith.addf %2058, %2062 : vector<4x128xf32>
    %2064 = vector.extract_strided_slice %0 {offsets = [8, 0, 0], sizes = [1, 1, 128], strides = [1, 1, 1]} : vector<9x1x128xf32> to vector<1x1x128xf32>
    %2065 = vector.shape_cast %2064 : vector<1x1x128xf32> to vector<1x128xf32>
    %2066 = vector.broadcast %2065 : vector<1x128xf32> to vector<4x128xf32>
    %2067 = arith.mulf %2012, %2066 : vector<4x128xf32>
    %2068 = arith.addf %2063, %2067 : vector<4x128xf32>
    %c2_1216 = arith.constant 2 : index
    %c22_1217 = arith.constant 22 : index
    %c0_1218 = arith.constant 0 : index
    %c0_1219 = arith.constant 0 : index
    %2069 = vector.load %arg5[%c2_1216, %c22_1217, %c0_1218, %c0_1219] : memref<3x24x1x128xf32, #tpu.memory_space<vmem>>, vector<1x1x1x128xf32>
    %2070 = vector.shape_cast %2069 : vector<1x1x1x128xf32> to vector<1x128xf32>
    %2071 = vector.broadcast %2070 : vector<1x128xf32> to vector<4x128xf32>
    %2072 = arith.addf %2068, %2071 : vector<4x128xf32>
    %c2_1220 = arith.constant 2 : index
    %c0_1221 = arith.constant 0 : index
    %c22_1222 = arith.constant 22 : index
    %c0_1223 = arith.constant 0 : index
    %2073 = vector.load %arg6[%c2_1220, %c0_1221, %c22_1222, %c0_1223] : memref<6x4x24x128xf32, #tpu.memory_space<vmem>>, vector<1x4x1x128xf32>
    %2074 = vector.shape_cast %2073 : vector<1x4x1x128xf32> to vector<4x128xf32>
    %2075 = vector.shape_cast %2072 : vector<4x128xf32> to vector<1x4x1x128xf32>
    tpu.vector_store %arg6[%c2_1220, %c0_1221, %c22_1222, %c0_1223], %2075 {strides = array<i32>} : memref<6x4x24x128xf32, #tpu.memory_space<vmem>>, vector<1x4x1x128xf32>,
    %c3_1224 = arith.constant 3 : index
    %c0_1225 = arith.constant 0 : index
    %2076 = arith.index_cast %2003 : i32 to index
    %c0_1226 = arith.constant 0 : index
    %2077 = vector.load %arg3[%c3_1224, %c0_1225, %2076, %c0_1226] : memref<6x4x24x128xf32, #tpu.memory_space<vmem>>, vector<1x4x1x128xf32>
    %2078 = vector.shape_cast %2077 : vector<1x4x1x128xf32> to vector<4x128xf32>
    %c3_1227 = arith.constant 3 : index
    %c0_1228 = arith.constant 0 : index
    %c22_1229 = arith.constant 22 : index
    %c0_1230 = arith.constant 0 : index
    %2079 = vector.load %arg6[%c3_1227, %c0_1228, %c22_1229, %c0_1230] : memref<6x4x24x128xf32, #tpu.memory_space<vmem>>, vector<1x4x1x128xf32>
    %2080 = vector.shape_cast %2079 : vector<1x4x1x128xf32> to vector<4x128xf32>
    %2081 = vector.shape_cast %2078 : vector<4x128xf32> to vector<1x4x1x128xf32>
    tpu.vector_store %arg6[%c3_1227, %c0_1228, %c22_1229, %c0_1230], %2081 {strides = array<i32>} : memref<6x4x24x128xf32, #tpu.memory_space<vmem>>, vector<1x4x1x128xf32>,
    %c4_1231 = arith.constant 4 : index
    %c0_1232 = arith.constant 0 : index
    %2082 = arith.index_cast %2003 : i32 to index
    %c0_1233 = arith.constant 0 : index
    %2083 = vector.load %arg3[%c4_1231, %c0_1232, %2082, %c0_1233] : memref<6x4x24x128xf32, #tpu.memory_space<vmem>>, vector<1x4x1x128xf32>
    %2084 = vector.shape_cast %2083 : vector<1x4x1x128xf32> to vector<4x128xf32>
    %c4_1234 = arith.constant 4 : index
    %c0_1235 = arith.constant 0 : index
    %c22_1236 = arith.constant 22 : index
    %c0_1237 = arith.constant 0 : index
    %2085 = vector.load %arg6[%c4_1234, %c0_1235, %c22_1236, %c0_1237] : memref<6x4x24x128xf32, #tpu.memory_space<vmem>>, vector<1x4x1x128xf32>
    %2086 = vector.shape_cast %2085 : vector<1x4x1x128xf32> to vector<4x128xf32>
    %2087 = vector.shape_cast %2084 : vector<4x128xf32> to vector<1x4x1x128xf32>
    tpu.vector_store %arg6[%c4_1234, %c0_1235, %c22_1236, %c0_1237], %2087 {strides = array<i32>} : memref<6x4x24x128xf32, #tpu.memory_space<vmem>>, vector<1x4x1x128xf32>,
    %c5_1238 = arith.constant 5 : index
    %c0_1239 = arith.constant 0 : index
    %2088 = arith.index_cast %2003 : i32 to index
    %c0_1240 = arith.constant 0 : index
    %2089 = vector.load %arg3[%c5_1238, %c0_1239, %2088, %c0_1240] : memref<6x4x24x128xf32, #tpu.memory_space<vmem>>, vector<1x4x1x128xf32>
    %2090 = vector.shape_cast %2089 : vector<1x4x1x128xf32> to vector<4x128xf32>
    %c5_1241 = arith.constant 5 : index
    %c0_1242 = arith.constant 0 : index
    %c22_1243 = arith.constant 22 : index
    %c0_1244 = arith.constant 0 : index
    %2091 = vector.load %arg6[%c5_1241, %c0_1242, %c22_1243, %c0_1244] : memref<6x4x24x128xf32, #tpu.memory_space<vmem>>, vector<1x4x1x128xf32>
    %2092 = vector.shape_cast %2091 : vector<1x4x1x128xf32> to vector<4x128xf32>
    %2093 = vector.shape_cast %2090 : vector<4x128xf32> to vector<1x4x1x128xf32>
    tpu.vector_store %arg6[%c5_1241, %c0_1242, %c22_1243, %c0_1244], %2093 {strides = array<i32>} : memref<6x4x24x128xf32, #tpu.memory_space<vmem>>, vector<1x4x1x128xf32>,
    %c23 = arith.constant 23 : index
    %2094 = memref.load %arg2[%c23] : memref<24xi32, #tpu.memory_space<smem>>
    %c0_1245 = arith.constant 0 : index
    %c0_1246 = arith.constant 0 : index
    %2095 = arith.index_cast %2094 : i32 to index
    %c0_1247 = arith.constant 0 : index
    %2096 = vector.load %arg3[%c0_1245, %c0_1246, %2095, %c0_1247] : memref<6x4x24x128xf32, #tpu.memory_space<vmem>>, vector<1x4x1x128xf32>
    %2097 = vector.shape_cast %2096 : vector<1x4x1x128xf32> to vector<4x128xf32>
    %c1_1248 = arith.constant 1 : index
    %c0_1249 = arith.constant 0 : index
    %2098 = arith.index_cast %2094 : i32 to index
    %c0_1250 = arith.constant 0 : index
    %2099 = vector.load %arg3[%c1_1248, %c0_1249, %2098, %c0_1250] : memref<6x4x24x128xf32, #tpu.memory_space<vmem>>, vector<1x4x1x128xf32>
    %2100 = vector.shape_cast %2099 : vector<1x4x1x128xf32> to vector<4x128xf32>
    %c2_1251 = arith.constant 2 : index
    %c0_1252 = arith.constant 0 : index
    %2101 = arith.index_cast %2094 : i32 to index
    %c0_1253 = arith.constant 0 : index
    %2102 = vector.load %arg3[%c2_1251, %c0_1252, %2101, %c0_1253] : memref<6x4x24x128xf32, #tpu.memory_space<vmem>>, vector<1x4x1x128xf32>
    %2103 = vector.shape_cast %2102 : vector<1x4x1x128xf32> to vector<4x128xf32>
    %2104 = vector.extract_strided_slice %0 {offsets = [0, 0, 0], sizes = [1, 1, 128], strides = [1, 1, 1]} : vector<9x1x128xf32> to vector<1x1x128xf32>
    %2105 = vector.shape_cast %2104 : vector<1x1x128xf32> to vector<1x128xf32>
    %2106 = vector.broadcast %2105 : vector<1x128xf32> to vector<4x128xf32>
    %2107 = arith.mulf %2097, %2106 : vector<4x128xf32>
    %2108 = vector.extract_strided_slice %0 {offsets = [1, 0, 0], sizes = [1, 1, 128], strides = [1, 1, 1]} : vector<9x1x128xf32> to vector<1x1x128xf32>
    %2109 = vector.shape_cast %2108 : vector<1x1x128xf32> to vector<1x128xf32>
    %2110 = vector.broadcast %2109 : vector<1x128xf32> to vector<4x128xf32>
    %2111 = arith.mulf %2100, %2110 : vector<4x128xf32>
    %2112 = arith.addf %2107, %2111 : vector<4x128xf32>
    %2113 = vector.extract_strided_slice %0 {offsets = [2, 0, 0], sizes = [1, 1, 128], strides = [1, 1, 1]} : vector<9x1x128xf32> to vector<1x1x128xf32>
    %2114 = vector.shape_cast %2113 : vector<1x1x128xf32> to vector<1x128xf32>
    %2115 = vector.broadcast %2114 : vector<1x128xf32> to vector<4x128xf32>
    %2116 = arith.mulf %2103, %2115 : vector<4x128xf32>
    %2117 = arith.addf %2112, %2116 : vector<4x128xf32>
    %c0_1254 = arith.constant 0 : index
    %c23_1255 = arith.constant 23 : index
    %c0_1256 = arith.constant 0 : index
    %c0_1257 = arith.constant 0 : index
    %2118 = vector.load %arg5[%c0_1254, %c23_1255, %c0_1256, %c0_1257] : memref<3x24x1x128xf32, #tpu.memory_space<vmem>>, vector<1x1x1x128xf32>
    %2119 = vector.shape_cast %2118 : vector<1x1x1x128xf32> to vector<1x128xf32>
    %2120 = vector.broadcast %2119 : vector<1x128xf32> to vector<4x128xf32>
    %2121 = arith.addf %2117, %2120 : vector<4x128xf32>
    %c0_1258 = arith.constant 0 : index
    %c0_1259 = arith.constant 0 : index
    %c23_1260 = arith.constant 23 : index
    %c0_1261 = arith.constant 0 : index
    %2122 = vector.load %arg6[%c0_1258, %c0_1259, %c23_1260, %c0_1261] : memref<6x4x24x128xf32, #tpu.memory_space<vmem>>, vector<1x4x1x128xf32>
    %2123 = vector.shape_cast %2122 : vector<1x4x1x128xf32> to vector<4x128xf32>
    %2124 = vector.shape_cast %2121 : vector<4x128xf32> to vector<1x4x1x128xf32>
    tpu.vector_store %arg6[%c0_1258, %c0_1259, %c23_1260, %c0_1261], %2124 {strides = array<i32>} : memref<6x4x24x128xf32, #tpu.memory_space<vmem>>, vector<1x4x1x128xf32>,
    %2125 = vector.extract_strided_slice %0 {offsets = [3, 0, 0], sizes = [1, 1, 128], strides = [1, 1, 1]} : vector<9x1x128xf32> to vector<1x1x128xf32>
    %2126 = vector.shape_cast %2125 : vector<1x1x128xf32> to vector<1x128xf32>
    %2127 = vector.broadcast %2126 : vector<1x128xf32> to vector<4x128xf32>
    %2128 = arith.mulf %2097, %2127 : vector<4x128xf32>
    %2129 = vector.extract_strided_slice %0 {offsets = [4, 0, 0], sizes = [1, 1, 128], strides = [1, 1, 1]} : vector<9x1x128xf32> to vector<1x1x128xf32>
    %2130 = vector.shape_cast %2129 : vector<1x1x128xf32> to vector<1x128xf32>
    %2131 = vector.broadcast %2130 : vector<1x128xf32> to vector<4x128xf32>
    %2132 = arith.mulf %2100, %2131 : vector<4x128xf32>
    %2133 = arith.addf %2128, %2132 : vector<4x128xf32>
    %2134 = vector.extract_strided_slice %0 {offsets = [5, 0, 0], sizes = [1, 1, 128], strides = [1, 1, 1]} : vector<9x1x128xf32> to vector<1x1x128xf32>
    %2135 = vector.shape_cast %2134 : vector<1x1x128xf32> to vector<1x128xf32>
    %2136 = vector.broadcast %2135 : vector<1x128xf32> to vector<4x128xf32>
    %2137 = arith.mulf %2103, %2136 : vector<4x128xf32>
    %2138 = arith.addf %2133, %2137 : vector<4x128xf32>
    %c1_1262 = arith.constant 1 : index
    %c23_1263 = arith.constant 23 : index
    %c0_1264 = arith.constant 0 : index
    %c0_1265 = arith.constant 0 : index
    %2139 = vector.load %arg5[%c1_1262, %c23_1263, %c0_1264, %c0_1265] : memref<3x24x1x128xf32, #tpu.memory_space<vmem>>, vector<1x1x1x128xf32>
    %2140 = vector.shape_cast %2139 : vector<1x1x1x128xf32> to vector<1x128xf32>
    %2141 = vector.broadcast %2140 : vector<1x128xf32> to vector<4x128xf32>
    %2142 = arith.addf %2138, %2141 : vector<4x128xf32>
    %c1_1266 = arith.constant 1 : index
    %c0_1267 = arith.constant 0 : index
    %c23_1268 = arith.constant 23 : index
    %c0_1269 = arith.constant 0 : index
    %2143 = vector.load %arg6[%c1_1266, %c0_1267, %c23_1268, %c0_1269] : memref<6x4x24x128xf32, #tpu.memory_space<vmem>>, vector<1x4x1x128xf32>
    %2144 = vector.shape_cast %2143 : vector<1x4x1x128xf32> to vector<4x128xf32>
    %2145 = vector.shape_cast %2142 : vector<4x128xf32> to vector<1x4x1x128xf32>
    tpu.vector_store %arg6[%c1_1266, %c0_1267, %c23_1268, %c0_1269], %2145 {strides = array<i32>} : memref<6x4x24x128xf32, #tpu.memory_space<vmem>>, vector<1x4x1x128xf32>,
    %2146 = vector.extract_strided_slice %0 {offsets = [6, 0, 0], sizes = [1, 1, 128], strides = [1, 1, 1]} : vector<9x1x128xf32> to vector<1x1x128xf32>
    %2147 = vector.shape_cast %2146 : vector<1x1x128xf32> to vector<1x128xf32>
    %2148 = vector.broadcast %2147 : vector<1x128xf32> to vector<4x128xf32>
    %2149 = arith.mulf %2097, %2148 : vector<4x128xf32>
    %2150 = vector.extract_strided_slice %0 {offsets = [7, 0, 0], sizes = [1, 1, 128], strides = [1, 1, 1]} : vector<9x1x128xf32> to vector<1x1x128xf32>
    %2151 = vector.shape_cast %2150 : vector<1x1x128xf32> to vector<1x128xf32>
    %2152 = vector.broadcast %2151 : vector<1x128xf32> to vector<4x128xf32>
    %2153 = arith.mulf %2100, %2152 : vector<4x128xf32>
    %2154 = arith.addf %2149, %2153 : vector<4x128xf32>
    %2155 = vector.extract_strided_slice %0 {offsets = [8, 0, 0], sizes = [1, 1, 128], strides = [1, 1, 1]} : vector<9x1x128xf32> to vector<1x1x128xf32>
    %2156 = vector.shape_cast %2155 : vector<1x1x128xf32> to vector<1x128xf32>
    %2157 = vector.broadcast %2156 : vector<1x128xf32> to vector<4x128xf32>
    %2158 = arith.mulf %2103, %2157 : vector<4x128xf32>
    %2159 = arith.addf %2154, %2158 : vector<4x128xf32>
    %c2_1270 = arith.constant 2 : index
    %c23_1271 = arith.constant 23 : index
    %c0_1272 = arith.constant 0 : index
    %c0_1273 = arith.constant 0 : index
    %2160 = vector.load %arg5[%c2_1270, %c23_1271, %c0_1272, %c0_1273] : memref<3x24x1x128xf32, #tpu.memory_space<vmem>>, vector<1x1x1x128xf32>
    %2161 = vector.shape_cast %2160 : vector<1x1x1x128xf32> to vector<1x128xf32>
    %2162 = vector.broadcast %2161 : vector<1x128xf32> to vector<4x128xf32>
    %2163 = arith.addf %2159, %2162 : vector<4x128xf32>
    %c2_1274 = arith.constant 2 : index
    %c0_1275 = arith.constant 0 : index
    %c23_1276 = arith.constant 23 : index
    %c0_1277 = arith.constant 0 : index
    %2164 = vector.load %arg6[%c2_1274, %c0_1275, %c23_1276, %c0_1277] : memref<6x4x24x128xf32, #tpu.memory_space<vmem>>, vector<1x4x1x128xf32>
    %2165 = vector.shape_cast %2164 : vector<1x4x1x128xf32> to vector<4x128xf32>
    %2166 = vector.shape_cast %2163 : vector<4x128xf32> to vector<1x4x1x128xf32>
    tpu.vector_store %arg6[%c2_1274, %c0_1275, %c23_1276, %c0_1277], %2166 {strides = array<i32>} : memref<6x4x24x128xf32, #tpu.memory_space<vmem>>, vector<1x4x1x128xf32>,
    %c3_1278 = arith.constant 3 : index
    %c0_1279 = arith.constant 0 : index
    %2167 = arith.index_cast %2094 : i32 to index
    %c0_1280 = arith.constant 0 : index
    %2168 = vector.load %arg3[%c3_1278, %c0_1279, %2167, %c0_1280] : memref<6x4x24x128xf32, #tpu.memory_space<vmem>>, vector<1x4x1x128xf32>
    %2169 = vector.shape_cast %2168 : vector<1x4x1x128xf32> to vector<4x128xf32>
    %c3_1281 = arith.constant 3 : index
    %c0_1282 = arith.constant 0 : index
    %c23_1283 = arith.constant 23 : index
    %c0_1284 = arith.constant 0 : index
    %2170 = vector.load %arg6[%c3_1281, %c0_1282, %c23_1283, %c0_1284] : memref<6x4x24x128xf32, #tpu.memory_space<vmem>>, vector<1x4x1x128xf32>
    %2171 = vector.shape_cast %2170 : vector<1x4x1x128xf32> to vector<4x128xf32>
    %2172 = vector.shape_cast %2169 : vector<4x128xf32> to vector<1x4x1x128xf32>
    tpu.vector_store %arg6[%c3_1281, %c0_1282, %c23_1283, %c0_1284], %2172 {strides = array<i32>} : memref<6x4x24x128xf32, #tpu.memory_space<vmem>>, vector<1x4x1x128xf32>,
    %c4_1285 = arith.constant 4 : index
    %c0_1286 = arith.constant 0 : index
    %2173 = arith.index_cast %2094 : i32 to index
    %c0_1287 = arith.constant 0 : index
    %2174 = vector.load %arg3[%c4_1285, %c0_1286, %2173, %c0_1287] : memref<6x4x24x128xf32, #tpu.memory_space<vmem>>, vector<1x4x1x128xf32>
    %2175 = vector.shape_cast %2174 : vector<1x4x1x128xf32> to vector<4x128xf32>
    %c4_1288 = arith.constant 4 : index
    %c0_1289 = arith.constant 0 : index
    %c23_1290 = arith.constant 23 : index
    %c0_1291 = arith.constant 0 : index
    %2176 = vector.load %arg6[%c4_1288, %c0_1289, %c23_1290, %c0_1291] : memref<6x4x24x128xf32, #tpu.memory_space<vmem>>, vector<1x4x1x128xf32>
    %2177 = vector.shape_cast %2176 : vector<1x4x1x128xf32> to vector<4x128xf32>
    %2178 = vector.shape_cast %2175 : vector<4x128xf32> to vector<1x4x1x128xf32>
    tpu.vector_store %arg6[%c4_1288, %c0_1289, %c23_1290, %c0_1291], %2178 {strides = array<i32>} : memref<6x4x24x128xf32, #tpu.memory_space<vmem>>, vector<1x4x1x128xf32>,
    %c5_1292 = arith.constant 5 : index
    %c0_1293 = arith.constant 0 : index
    %2179 = arith.index_cast %2094 : i32 to index
    %c0_1294 = arith.constant 0 : index
    %2180 = vector.load %arg3[%c5_1292, %c0_1293, %2179, %c0_1294] : memref<6x4x24x128xf32, #tpu.memory_space<vmem>>, vector<1x4x1x128xf32>
    %2181 = vector.shape_cast %2180 : vector<1x4x1x128xf32> to vector<4x128xf32>
    %c5_1295 = arith.constant 5 : index
    %c0_1296 = arith.constant 0 : index
    %c23_1297 = arith.constant 23 : index
    %c0_1298 = arith.constant 0 : index
    %2182 = vector.load %arg6[%c5_1295, %c0_1296, %c23_1297, %c0_1298] : memref<6x4x24x128xf32, #tpu.memory_space<vmem>>, vector<1x4x1x128xf32>
    %2183 = vector.shape_cast %2182 : vector<1x4x1x128xf32> to vector<4x128xf32>
    %2184 = vector.shape_cast %2181 : vector<4x128xf32> to vector<1x4x1x128xf32>
    tpu.vector_store %arg6[%c5_1295, %c0_1296, %c23_1297, %c0_1298], %2184 {strides = array<i32>} : memref<6x4x24x128xf32, #tpu.memory_space<vmem>>, vector<1x4x1x128xf32>,
    return
  }
  func.func @transform_0(%arg0: i32, %arg1: i32, %arg2: memref<24xi32, #tpu.memory_space<smem>>) -> (i32, i32, i32, i32) {
    %c0_i32 = arith.constant 0 : i32
    %c0_i32_0 = arith.constant 0 : i32
    %c0_i32_1 = arith.constant 0 : i32
    return %c0_i32, %arg0, %c0_i32_0, %arg1 : i32, i32, i32, i32
  }
  func.func @transform_1(%arg0: i32, %arg1: i32, %arg2: memref<24xi32, #tpu.memory_space<smem>>) -> (i32, i32, i32) {
    %c0_i32 = arith.constant 0 : i32
    %c0_i32_0 = arith.constant 0 : i32
    %c0_i32_1 = arith.constant 0 : i32
    return %c0_i32, %c0_i32_0, %arg1 : i32, i32, i32
  }
  func.func @transform_2(%arg0: i32, %arg1: i32, %arg2: memref<24xi32, #tpu.memory_space<smem>>) -> (i32, i32, i32, i32) {
    %c0_i32 = arith.constant 0 : i32
    %c0_i32_0 = arith.constant 0 : i32
    %c0_i32_1 = arith.constant 0 : i32
    %c0_i32_2 = arith.constant 0 : i32
    return %c0_i32, %c0_i32_0, %c0_i32_1, %arg1 : i32, i32, i32, i32
  }
  func.func @transform_3(%arg0: i32, %arg1: i32, %arg2: memref<24xi32, #tpu.memory_space<smem>>) -> (i32, i32, i32, i32) {
    %c0_i32 = arith.constant 0 : i32
    %c0_i32_0 = arith.constant 0 : i32
    %c0_i32_1 = arith.constant 0 : i32
    return %c0_i32, %arg0, %c0_i32_0, %arg1 : i32, i32, i32, i32
  }
}

</mosaic_0001>

<llo_original>
// kernel: _augment_forward.1
$region0: #{_augment_forward.1}
  #allocation0 [shape = 'u32[]', space=smem, size = 0x4, offset = 0x4, fixed_abs, tag = 'smem constant byte address 0x4 - core index']
  #allocation1 [shape = 'u32[144,128]{1,0:T(1,128)}', space=vmem, size = 0x12000, scoped, tag = 'internal scratch']
  #allocation2 [shape = 's32[1]{0}', space=sflag, size = 0x4, scoped, tag = 'scoped memory for _augment_forward.1']
  #allocation3 [shape = 'u8[512]{0}', space=smem, size = 0x200, scoped, tag = 'prefetched SMEM operand 0']
  %s0 = inlined_call_operand.vmem [shape: s32[24], index: 0, kind: input, shape index: {}]
  %s1 = inlined_call_operand.vmem [shape: f32[6,4,24,128], index: 1, kind: input, shape index: {}]
  %s2 = inlined_call_operand.vmem [shape: f32[9,1,128], index: 2, kind: input, shape index: {}]
  %s3 = inlined_call_operand.vmem [shape: f32[3,24,1,128], index: 3, kind: input, shape index: {}]
  %s4 = inlined_call_operand.vmem [shape: f32[6,4,24,128], index: 4, kind: output, shape index: {}]
  %s5 = sld [smem:[#allocation0]]
  $region22: #{_augment_forward.1} parent=0
    _
  %s7 = ssub.s32 1, %s5
  %s8 = scalar_select 0, %s7, %s5
  %s9 = sshll.u32 %s0, 4
  %s10 = int_to_ptr.vmem [resolvable:$true] %s9
  %12 = dma.vmem_to_smem %s10, 16, [#allocation3], [#allocation2]
  %13 = dma.done [#allocation2], 16
  %14 = sfence
  // Predicated region
  $region2: #{_augment_forward.1} parent=0 // pred_check
    _
  $region3: #{_augment_forward.1} parent=0 // pred_check_branch
    %16 = sbr.rel (0) target = $region5
  $region4: #{_augment_forward.1} parent=0 // pred_region
    _
  $region5: #{_augment_forward.1} parent=0 // pred_fallthru
    _
  // Predicated region
  $region6: #{_augment_forward.1} parent=0 // pred_check
    _
  $region7: #{_augment_forward.1} parent=0 // pred_check_branch
    %18 = sbr.rel (0) target = $region9
  $region8: #{_augment_forward.1} parent=0 // pred_region
    _
  $region9: #{_augment_forward.1} parent=0 // pred_fallthru
    _
  // Predicated region
  $region10: #{_augment_forward.1} parent=0 // pred_check
    _
  $region11: #{_augment_forward.1} parent=0 // pred_check_branch
    %20 = sbr.rel (0) target = $region13
  $region12: #{_augment_forward.1} parent=0 // pred_region
    _
  $region13: #{_augment_forward.1} parent=0 // pred_fallthru
    _
  %v21 = vld [vmem:[%s2] sm:$0x1]
  %v22 = vld [vmem:[%s2 + $0x1] sm:$0x1]
  %v23 = vld [vmem:[%s2 + $0x2] sm:$0x1]
  %v24 = vld [vmem:[%s2 + $0x3] sm:$0x1]
  %v25 = vld [vmem:[%s2 + $0x4] sm:$0x1]
  %v26 = vld [vmem:[%s2 + $0x5] sm:$0x1]
  %v27 = vld [vmem:[%s2 + $0x6] sm:$0x1]
  %v28 = vld [vmem:[%s2 + $0x7] sm:$0x1]
  %v29 = vld [vmem:[%s2 + $0x8] sm:$0x1]
  %s30 = sld [smem:[#allocation3]]
  %s31 = scalar_lea.vmem %s1, %s30
  %v32 = vld [vmem:[%s31] sm:$0x1]
  %v33 = vld [vmem:[%s31 + $0x18] sm:$0x1]
  %v34 = vld [vmem:[%s31 + $0x30] sm:$0x1]
  %v35 = vld [vmem:[%s31 + $0x48] sm:$0x1]
  %s36 = sadd.s32 %s30, 96
  %s37 = scalar_lea.vmem %s1, %s36
  %v38 = vld [vmem:[%s37] sm:$0x1]
  %v39 = vld [vmem:[%s37 + $0x18] sm:$0x1]
  %v40 = vld [vmem:[%s37 + $0x30] sm:$0x1]
  %v41 = vld [vmem:[%s37 + $0x48] sm:$0x1]
  %s42 = sadd.s32 %s30, 192
  %s43 = scalar_lea.vmem %s1, %s42
  %v44 = vld [vmem:[%s43] sm:$0x1]
  %v45 = vld [vmem:[%s43 + $0x18] sm:$0x1]
  %v46 = vld [vmem:[%s43 + $0x30] sm:$0x1]
  %v47 = vld [vmem:[%s43 + $0x48] sm:$0x1]
  %v49 = vlaneseq
  %v50 = vshrl.u32 %v49, 7
  %v51 = vsub.s32 0, %v50
  %v52 = vrot.slane %v21, %v51
  %v54 = vmul.f32 %v32, %v52
  %v55 = vmul.f32 %v33, %v52
  %v56 = vmul.f32 %v34, %v52
  %v57 = vmul.f32 %v35, %v52
  %v59 = vlaneseq
  %v60 = vshrl.u32 %v59, 7
  %v61 = vsub.s32 0, %v60
  %v62 = vrot.slane %v22, %v61
  %v64 = vmul.f32 %v38, %v62
  %v65 = vmul.f32 %v39, %v62
  %v66 = vmul.f32 %v40, %v62
  %v67 = vmul.f32 %v41, %v62
  %v68 = vadd.f32 %v54, %v64
  %v69 = vadd.f32 %v55, %v65
  %v70 = vadd.f32 %v56, %v66
  %v71 = vadd.f32 %v57, %v67
  %v73 = vlaneseq
  %v74 = vshrl.u32 %v73, 7
  %v75 = vsub.s32 0, %v74
  %v76 = vrot.slane %v23, %v75
  %v78 = vmul.f32 %v44, %v76
  %v79 = vmul.f32 %v45, %v76
  %v80 = vmul.f32 %v46, %v76
  %v81 = vmul.f32 %v47, %v76
  %v82 = vadd.f32 %v68, %v78
  %v83 = vadd.f32 %v69, %v79
  %v84 = vadd.f32 %v70, %v80
  %v85 = vadd.f32 %v71, %v81
  %v86 = vld [vmem:[%s3] sm:$0x1]
  %v88 = vlaneseq
  %v89 = vshrl.u32 %v88, 7
  %v90 = vsub.s32 0, %v89
  %v91 = vrot.slane %v86, %v90
  %v93 = vadd.f32 %v82, %v91
  %v94 = vadd.f32 %v83, %v91
  %v95 = vadd.f32 %v84, %v91
  %v96 = vadd.f32 %v85, %v91
  %97 = vst [vmem:[%s4] sm:$0x1] %v93
  %98 = vst [vmem:[%s4 + $0x18] sm:$0x1] %v94
  %99 = vst [vmem:[%s4 + $0x30] sm:$0x1] %v95
  %100 = vst [vmem:[%s4 + $0x48] sm:$0x1] %v96
  %v102 = vlaneseq
  %v103 = vshrl.u32 %v102, 7
  %v104 = vsub.s32 0, %v103
  %v105 = vrot.slane %v24, %v104
  %v107 = vmul.f32 %v32, %v105
  %v108 = vmul.f32 %v33, %v105
  %v109 = vmul.f32 %v34, %v105
  %v110 = vmul.f32 %v35, %v105
  %v112 = vlaneseq
  %v113 = vshrl.u32 %v112, 7
  %v114 = vsub.s32 0, %v113
  %v115 = vrot.slane %v25, %v114
  %v117 = vmul.f32 %v38, %v115
  %v118 = vmul.f32 %v39, %v115
  %v119 = vmul.f32 %v40, %v115
  %v120 = vmul.f32 %v41, %v115
  %v121 = vadd.f32 %v107, %v117
  %v122 = vadd.f32 %v108, %v118
  %v123 = vadd.f32 %v109, %v119
  %v124 = vadd.f32 %v110, %v120
  %v126 = vlaneseq
  %v127 = vshrl.u32 %v126, 7
  %v128 = vsub.s32 0, %v127
  %v129 = vrot.slane %v26, %v128
  %v131 = vmul.f32 %v44, %v129
  %v132 = vmul.f32 %v45, %v129
  %v133 = vmul.f32 %v46, %v129
  %v134 = vmul.f32 %v47, %v129
  %v135 = vadd.f32 %v121, %v131
  %v136 = vadd.f32 %v122, %v132
  %v137 = vadd.f32 %v123, %v133
  %v138 = vadd.f32 %v124, %v134
  %s139 = scalar_lea.vmem %s3, 24
  %v140 = vld [vmem:[%s139] sm:$0x1]
  %v142 = vlaneseq
  %v143 = vshrl.u32 %v142, 7
  %v144 = vsub.s32 0, %v143
  %v145 = vrot.slane %v140, %v144
  %v147 = vadd.f32 %v135, %v145
  %v148 = vadd.f32 %v136, %v145
  %v149 = vadd.f32 %v137, %v145
  %v150 = vadd.f32 %v138, %v145
  %s151 = scalar_lea.vmem %s4, 96
  %152 = vst [vmem:[%s151] sm:$0x1] %v147
  %153 = vst [vmem:[%s151 + $0x18] sm:$0x1] %v148
  %154 = vst [vmem:[%s151 + $0x30] sm:$0x1] %v149
  %155 = vst [vmem:[%s151 + $0x48] sm:$0x1] %v150
  %v157 = vlaneseq
  %v158 = vshrl.u32 %v157, 7
  %v159 = vsub.s32 0, %v158
  %v160 = vrot.slane %v27, %v159
  %v162 = vmul.f32 %v32, %v160
  %v163 = vmul.f32 %v33, %v160
  %v164 = vmul.f32 %v34, %v160
  %v165 = vmul.f32 %v35, %v160
  %v167 = vlaneseq
  %v168 = vshrl.u32 %v167, 7
  %v169 = vsub.s32 0, %v168
  %v170 = vrot.slane %v28, %v169
  %v172 = vmul.f32 %v38, %v170
  %v173 = vmul.f32 %v39, %v170
  %v174 = vmul.f32 %v40, %v170
  %v175 = vmul.f32 %v41, %v170
  %v176 = vadd.f32 %v162, %v172
  %v177 = vadd.f32 %v163, %v173
  %v178 = vadd.f32 %v164, %v174
  %v179 = vadd.f32 %v165, %v175
  %v181 = vlaneseq
  %v182 = vshrl.u32 %v181, 7
  %v183 = vsub.s32 0, %v182
  %v184 = vrot.slane %v29, %v183
  %v186 = vmul.f32 %v44, %v184
  %v187 = vmul.f32 %v45, %v184
  %v188 = vmul.f32 %v46, %v184
  %v189 = vmul.f32 %v47, %v184
  %v190 = vadd.f32 %v176, %v186
  %v191 = vadd.f32 %v177, %v187
  %v192 = vadd.f32 %v178, %v188
  %v193 = vadd.f32 %v179, %v189
  %s194 = scalar_lea.vmem %s3, 48
  %v195 = vld [vmem:[%s194] sm:$0x1]
  %v197 = vlaneseq
  %v198 = vshrl.u32 %v197, 7
  %v199 = vsub.s32 0, %v198
  %v200 = vrot.slane %v195, %v199
  %v202 = vadd.f32 %v190, %v200
  %v203 = vadd.f32 %v191, %v200
  %v204 = vadd.f32 %v192, %v200
  %v205 = vadd.f32 %v193, %v200
  %s206 = scalar_lea.vmem %s4, 192
  %207 = vst [vmem:[%s206] sm:$0x1] %v202
  %208 = vst [vmem:[%s206 + $0x18] sm:$0x1] %v203
  %209 = vst [vmem:[%s206 + $0x30] sm:$0x1] %v204
  %210 = vst [vmem:[%s206 + $0x48] sm:$0x1] %v205
  %s211 = sadd.s32 %s30, 288
  %s212 = scalar_lea.vmem %s1, %s211
  %v213 = vld [vmem:[%s212] sm:$0x1]
  %v214 = vld [vmem:[%s212 + $0x18] sm:$0x1]
  %v215 = vld [vmem:[%s212 + $0x30] sm:$0x1]
  %v216 = vld [vmem:[%s212 + $0x48] sm:$0x1]
  %s217 = scalar_lea.vmem %s4, 288
  %218 = vst [vmem:[%s217] sm:$0x1] %v213
  %219 = vst [vmem:[%s217 + $0x18] sm:$0x1] %v214
  %220 = vst [vmem:[%s217 + $0x30] sm:$0x1] %v215
  %221 = vst [vmem:[%s217 + $0x48] sm:$0x1] %v216
  %s222 = sadd.s32 %s30, 384
  %s223 = scalar_lea.vmem %s1, %s222
  %v224 = vld [vmem:[%s223] sm:$0x1]
  %v225 = vld [vmem:[%s223 + $0x18] sm:$0x1]
  %v226 = vld [vmem:[%s223 + $0x30] sm:$0x1]
  %v227 = vld [vmem:[%s223 + $0x48] sm:$0x1]
  %s228 = scalar_lea.vmem %s4, 384
  %229 = vst [vmem:[%s228] sm:$0x1] %v224
  %230 = vst [vmem:[%s228 + $0x18] sm:$0x1] %v225
  %231 = vst [vmem:[%s228 + $0x30] sm:$0x1] %v226
  %232 = vst [vmem:[%s228 + $0x48] sm:$0x1] %v227
  %s233 = sadd.s32 %s30, 480
  %s234 = scalar_lea.vmem %s1, %s233
  %v235 = vld [vmem:[%s234] sm:$0x1]
  %v236 = vld [vmem:[%s234 + $0x18] sm:$0x1]
  %v237 = vld [vmem:[%s234 + $0x30] sm:$0x1]
  %v238 = vld [vmem:[%s234 + $0x48] sm:$0x1]
  %s239 = scalar_lea.vmem %s4, 480
  %240 = vst [vmem:[%s239] sm:$0x1] %v235
  %241 = vst [vmem:[%s239 + $0x18] sm:$0x1] %v236
  %242 = vst [vmem:[%s239 + $0x30] sm:$0x1] %v237
  %243 = vst [vmem:[%s239 + $0x48] sm:$0x1] %v238
  %s244 = sld [smem:[#allocation3 + $0x1]]
  %s245 = scalar_lea.vmem %s1, %s244
  %v246 = vld [vmem:[%s245] sm:$0x1]
  %v247 = vld [vmem:[%s245 + $0x18] sm:$0x1]
  %v248 = vld [vmem:[%s245 + $0x30] sm:$0x1]
  %v249 = vld [vmem:[%s245 + $0x48] sm:$0x1]
  %s250 = sadd.s32 %s244, 96
  %s251 = scalar_lea.vmem %s1, %s250
  %v252 = vld [vmem:[%s251] sm:$0x1]
  %v253 = vld [vmem:[%s251 + $0x18] sm:$0x1]
  %v254 = vld [vmem:[%s251 + $0x30] sm:$0x1]
  %v255 = vld [vmem:[%s251 + $0x48] sm:$0x1]
  %s256 = sadd.s32 %s244, 192
  %s257 = scalar_lea.vmem %s1, %s256
  %v258 = vld [vmem:[%s257] sm:$0x1]
  %v259 = vld [vmem:[%s257 + $0x18] sm:$0x1]
  %v260 = vld [vmem:[%s257 + $0x30] sm:$0x1]
  %v261 = vld [vmem:[%s257 + $0x48] sm:$0x1]
  %v262 = vmul.f32 %v246, %v52
  %v263 = vmul.f32 %v247, %v52
  %v264 = vmul.f32 %v248, %v52
  %v265 = vmul.f32 %v249, %v52
  %v266 = vmul.f32 %v252, %v62
  %v267 = vmul.f32 %v253, %v62
  %v268 = vmul.f32 %v254, %v62
  %v269 = vmul.f32 %v255, %v62
  %v270 = vadd.f32 %v262, %v266
  %v271 = vadd.f32 %v263, %v267
  %v272 = vadd.f32 %v264, %v268
  %v273 = vadd.f32 %v265, %v269
  %v274 = vmul.f32 %v258, %v76
  %v275 = vmul.f32 %v259, %v76
  %v276 = vmul.f32 %v260, %v76
  %v277 = vmul.f32 %v261, %v76
  %v278 = vadd.f32 %v270, %v274
  %v279 = vadd.f32 %v271, %v275
  %v280 = vadd.f32 %v272, %v276
  %v281 = vadd.f32 %v273, %v277
  %s282 = scalar_lea.vmem %s3, 1
  %v283 = vld [vmem:[%s282] sm:$0x1]
  %v285 = vlaneseq
  %v286 = vshrl.u32 %v285, 7
  %v287 = vsub.s32 0, %v286
  %v288 = vrot.slane %v283, %v287
  %v290 = vadd.f32 %v278, %v288
  %v291 = vadd.f32 %v279, %v288
  %v292 = vadd.f32 %v280, %v288
  %v293 = vadd.f32 %v281, %v288
  %294 = vst [vmem:[%s4 + $0x1] sm:$0x1] %v290
  %295 = vst [vmem:[%s4 + $0x19] sm:$0x1] %v291
  %296 = vst [vmem:[%s4 + $0x31] sm:$0x1] %v292
  %297 = vst [vmem:[%s4 + $0x49] sm:$0x1] %v293
  %v298 = vmul.f32 %v246, %v105
  %v299 = vmul.f32 %v247, %v105
  %v300 = vmul.f32 %v248, %v105
  %v301 = vmul.f32 %v249, %v105
  %v302 = vmul.f32 %v252, %v115
  %v303 = vmul.f32 %v253, %v115
  %v304 = vmul.f32 %v254, %v115
  %v305 = vmul.f32 %v255, %v115
  %v306 = vadd.f32 %v298, %v302
  %v307 = vadd.f32 %v299, %v303
  %v308 = vadd.f32 %v300, %v304
  %v309 = vadd.f32 %v301, %v305
  %v310 = vmul.f32 %v258, %v129
  %v311 = vmul.f32 %v259, %v129
  %v312 = vmul.f32 %v260, %v129
  %v313 = vmul.f32 %v261, %v129
  %v314 = vadd.f32 %v306, %v310
  %v315 = vadd.f32 %v307, %v311
  %v316 = vadd.f32 %v308, %v312
  %v317 = vadd.f32 %v309, %v313
  %s318 = scalar_lea.vmem %s3, 25
  %v319 = vld [vmem:[%s318] sm:$0x1]
  %v321 = vlaneseq
  %v322 = vshrl.u32 %v321, 7
  %v323 = vsub.s32 0, %v322
  %v324 = vrot.slane %v319, %v323
  %v326 = vadd.f32 %v314, %v324
  %v327 = vadd.f32 %v315, %v324
  %v328 = vadd.f32 %v316, %v324
  %v329 = vadd.f32 %v317, %v324
  %330 = vst [vmem:[%s151 + $0x1] sm:$0x1] %v326
  %331 = vst [vmem:[%s151 + $0x19] sm:$0x1] %v327
  %332 = vst [vmem:[%s151 + $0x31] sm:$0x1] %v328
  %333 = vst [vmem:[%s151 + $0x49] sm:$0x1] %v329
  %v334 = vmul.f32 %v246, %v160
  %v335 = vmul.f32 %v247, %v160
  %v336 = vmul.f32 %v248, %v160
  %v337 = vmul.f32 %v249, %v160
  %v338 = vmul.f32 %v252, %v170
  %v339 = vmul.f32 %v253, %v170
  %v340 = vmul.f32 %v254, %v170
  %v341 = vmul.f32 %v255, %v170
  %v342 = vadd.f32 %v334, %v338
  %v343 = vadd.f32 %v335, %v339
  %v344 = vadd.f32 %v336, %v340
  %v345 = vadd.f32 %v337, %v341
  %v346 = vmul.f32 %v258, %v184
  %v347 = vmul.f32 %v259, %v184
  %v348 = vmul.f32 %v260, %v184
  %v349 = vmul.f32 %v261, %v184
  %v350 = vadd.f32 %v342, %v346
  %v351 = vadd.f32 %v343, %v347
  %v352 = vadd.f32 %v344, %v348
  %v353 = vadd.f32 %v345, %v349
  %s354 = scalar_lea.vmem %s3, 49
  %v355 = vld [vmem:[%s354] sm:$0x1]
  %v357 = vlaneseq
  %v358 = vshrl.u32 %v357, 7
  %v359 = vsub.s32 0, %v358
  %v360 = vrot.slane %v355, %v359
  %v362 = vadd.f32 %v350, %v360
  %v363 = vadd.f32 %v351, %v360
  %v364 = vadd.f32 %v352, %v360
  %v365 = vadd.f32 %v353, %v360
  %366 = vst [vmem:[%s206 + $0x1] sm:$0x1] %v362
  %367 = vst [vmem:[%s206 + $0x19] sm:$0x1] %v363
  %368 = vst [vmem:[%s206 + $0x31] sm:$0x1] %v364
  %369 = vst [vmem:[%s206 + $0x49] sm:$0x1] %v365
  %s370 = sadd.s32 %s244, 288
  %s371 = scalar_lea.vmem %s1, %s370
  %v372 = vld [vmem:[%s371] sm:$0x1]
  %v373 = vld [vmem:[%s371 + $0x18] sm:$0x1]
  %v374 = vld [vmem:[%s371 + $0x30] sm:$0x1]
  %v375 = vld [vmem:[%s371 + $0x48] sm:$0x1]
  %376 = vst [vmem:[%s217 + $0x1] sm:$0x1] %v372
  %377 = vst [vmem:[%s217 + $0x19] sm:$0x1] %v373
  %378 = vst [vmem:[%s217 + $0x31] sm:$0x1] %v374
  %379 = vst [vmem:[%s217 + $0x49] sm:$0x1] %v375
  %s380 = sadd.s32 %s244, 384
  %s381 = scalar_lea.vmem %s1, %s380
  %v382 = vld [vmem:[%s381] sm:$0x1]
  %v383 = vld [vmem:[%s381 + $0x18] sm:$0x1]
  %v384 = vld [vmem:[%s381 + $0x30] sm:$0x1]
  %v385 = vld [vmem:[%s381 + $0x48] sm:$0x1]
  %386 = vst [vmem:[%s228 + $0x1] sm:$0x1] %v382
  %387 = vst [vmem:[%s228 + $0x19] sm:$0x1] %v383
  %388 = vst [vmem:[%s228 + $0x31] sm:$0x1] %v384
  %389 = vst [vmem:[%s228 + $0x49] sm:$0x1] %v385
  %s390 = sadd.s32 %s244, 480
  %s391 = scalar_lea.vmem %s1, %s390
  %v392 = vld [vmem:[%s391] sm:$0x1]
  %v393 = vld [vmem:[%s391 + $0x18] sm:$0x1]
  %v394 = vld [vmem:[%s391 + $0x30] sm:$0x1]
  %v395 = vld [vmem:[%s391 + $0x48] sm:$0x1]
  %396 = vst [vmem:[%s239 + $0x1] sm:$0x1] %v392
  %397 = vst [vmem:[%s239 + $0x19] sm:$0x1] %v393
  %398 = vst [vmem:[%s239 + $0x31] sm:$0x1] %v394
  %399 = vst [vmem:[%s239 + $0x49] sm:$0x1] %v395
  %s400 = sld [smem:[#allocation3 + $0x2]]
  %s401 = scalar_lea.vmem %s1, %s400
  %v402 = vld [vmem:[%s401] sm:$0x1]
  %v403 = vld [vmem:[%s401 + $0x18] sm:$0x1]
  %v404 = vld [vmem:[%s401 + $0x30] sm:$0x1]
  %v405 = vld [vmem:[%s401 + $0x48] sm:$0x1]
  %s406 = sadd.s32 %s400, 96
  %s407 = scalar_lea.vmem %s1, %s406
  %v408 = vld [vmem:[%s407] sm:$0x1]
  %v409 = vld [vmem:[%s407 + $0x18] sm:$0x1]
  %v410 = vld [vmem:[%s407 + $0x30] sm:$0x1]
  %v411 = vld [vmem:[%s407 + $0x48] sm:$0x1]
  %s412 = sadd.s32 %s400, 192
  %s413 = scalar_lea.vmem %s1, %s412
  %v414 = vld [vmem:[%s413] sm:$0x1]
  %v415 = vld [vmem:[%s413 + $0x18] sm:$0x1]
  %v416 = vld [vmem:[%s413 + $0x30] sm:$0x1]
  %v417 = vld [vmem:[%s413 + $0x48] sm:$0x1]
  %v418 = vmul.f32 %v402, %v52
  %v419 = vmul.f32 %v403, %v52
  %v420 = vmul.f32 %v404, %v52
  %v421 = vmul.f32 %v405, %v52
  %v422 = vmul.f32 %v408, %v62
  %v423 = vmul.f32 %v409, %v62
  %v424 = vmul.f32 %v410, %v62
  %v425 = vmul.f32 %v411, %v62
  %v426 = vadd.f32 %v418, %v422
  %v427 = vadd.f32 %v419, %v423
  %v428 = vadd.f32 %v420, %v424
  %v429 = vadd.f32 %v421, %v425
  %v430 = vmul.f32 %v414, %v76
  %v431 = vmul.f32 %v415, %v76
  %v432 = vmul.f32 %v416, %v76
  %v433 = vmul.f32 %v417, %v76
  %v434 = vadd.f32 %v426, %v430
  %v435 = vadd.f32 %v427, %v431
  %v436 = vadd.f32 %v428, %v432
  %v437 = vadd.f32 %v429, %v433
  %s438 = scalar_lea.vmem %s3, 2
  %v439 = vld [vmem:[%s438] sm:$0x1]
  %v441 = vlaneseq
  %v442 = vshrl.u32 %v441, 7
  %v443 = vsub.s32 0, %v442
  %v444 = vrot.slane %v439, %v443
  %v446 = vadd.f32 %v434, %v444
  %v447 = vadd.f32 %v435, %v444
  %v448 = vadd.f32 %v436, %v444
  %v449 = vadd.f32 %v437, %v444
  %450 = vst [vmem:[%s4 + $0x2] sm:$0x1] %v446
  %451 = vst [vmem:[%s4 + $0x1a] sm:$0x1] %v447
  %452 = vst [vmem:[%s4 + $0x32] sm:$0x1] %v448
  %453 = vst [vmem:[%s4 + $0x4a] sm:$0x1] %v449
  %v454 = vmul.f32 %v402, %v105
  %v455 = vmul.f32 %v403, %v105
  %v456 = vmul.f32 %v404, %v105
  %v457 = vmul.f32 %v405, %v105
  %v458 = vmul.f32 %v408, %v115
  %v459 = vmul.f32 %v409, %v115
  %v460 = vmul.f32 %v410, %v115
  %v461 = vmul.f32 %v411, %v115
  %v462 = vadd.f32 %v454, %v458
  %v463 = vadd.f32 %v455, %v459
  %v464 = vadd.f32 %v456, %v460
  %v465 = vadd.f32 %v457, %v461
  %v466 = vmul.f32 %v414, %v129
  %v467 = vmul.f32 %v415, %v129
  %v468 = vmul.f32 %v416, %v129
  %v469 = vmul.f32 %v417, %v129
  %v470 = vadd.f32 %v462, %v466
  %v471 = vadd.f32 %v463, %v467
  %v472 = vadd.f32 %v464, %v468
  %v473 = vadd.f32 %v465, %v469
  %s474 = scalar_lea.vmem %s3, 26
  %v475 = vld [vmem:[%s474] sm:$0x1]
  %v477 = vlaneseq
  %v478 = vshrl.u32 %v477, 7
  %v479 = vsub.s32 0, %v478
  %v480 = vrot.slane %v475, %v479
  %v482 = vadd.f32 %v470, %v480
  %v483 = vadd.f32 %v471, %v480
  %v484 = vadd.f32 %v472, %v480
  %v485 = vadd.f32 %v473, %v480
  %486 = vst [vmem:[%s151 + $0x2] sm:$0x1] %v482
  %487 = vst [vmem:[%s151 + $0x1a] sm:$0x1] %v483
  %488 = vst [vmem:[%s151 + $0x32] sm:$0x1] %v484
  %489 = vst [vmem:[%s151 + $0x4a] sm:$0x1] %v485
  %v490 = vmul.f32 %v402, %v160
  %v491 = vmul.f32 %v403, %v160
  %v492 = vmul.f32 %v404, %v160
  %v493 = vmul.f32 %v405, %v160
  %v494 = vmul.f32 %v408, %v170
  %v495 = vmul.f32 %v409, %v170
  %v496 = vmul.f32 %v410, %v170
  %v497 = vmul.f32 %v411, %v170
  %v498 = vadd.f32 %v490, %v494
  %v499 = vadd.f32 %v491, %v495
  %v500 = vadd.f32 %v492, %v496
  %v501 = vadd.f32 %v493, %v497
  %v502 = vmul.f32 %v414, %v184
  %v503 = vmul.f32 %v415, %v184
  %v504 = vmul.f32 %v416, %v184
  %v505 = vmul.f32 %v417, %v184
  %v506 = vadd.f32 %v498, %v502
  %v507 = vadd.f32 %v499, %v503
  %v508 = vadd.f32 %v500, %v504
  %v509 = vadd.f32 %v501, %v505
  %s510 = scalar_lea.vmem %s3, 50
  %v511 = vld [vmem:[%s510] sm:$0x1]
  %v513 = vlaneseq
  %v514 = vshrl.u32 %v513, 7
  %v515 = vsub.s32 0, %v514
  %v516 = vrot.slane %v511, %v515
  %v518 = vadd.f32 %v506, %v516
  %v519 = vadd.f32 %v507, %v516
  %v520 = vadd.f32 %v508, %v516
  %v521 = vadd.f32 %v509, %v516
  %522 = vst [vmem:[%s206 + $0x2] sm:$0x1] %v518
  %523 = vst [vmem:[%s206 + $0x1a] sm:$0x1] %v519
  %524 = vst [vmem:[%s206 + $0x32] sm:$0x1] %v520
  %525 = vst [vmem:[%s206 + $0x4a] sm:$0x1] %v521
  %s526 = sadd.s32 %s400, 288
  %s527 = scalar_lea.vmem %s1, %s526
  %v528 = vld [vmem:[%s527] sm:$0x1]
  %v529 = vld [vmem:[%s527 + $0x18] sm:$0x1]
  %v530 = vld [vmem:[%s527 + $0x30] sm:$0x1]
  %v531 = vld [vmem:[%s527 + $0x48] sm:$0x1]
  %532 = vst [vmem:[%s217 + $0x2] sm:$0x1] %v528
  %533 = vst [vmem:[%s217 + $0x1a] sm:$0x1] %v529
  %534 = vst [vmem:[%s217 + $0x32] sm:$0x1] %v530
  %535 = vst [vmem:[%s217 + $0x4a] sm:$0x1] %v531
  %s536 = sadd.s32 %s400, 384
  %s537 = scalar_lea.vmem %s1, %s536
  %v538 = vld [vmem:[%s537] sm:$0x1]
  %v539 = vld [vmem:[%s537 + $0x18] sm:$0x1]
  %v540 = vld [vmem:[%s537 + $0x30] sm:$0x1]
  %v541 = vld [vmem:[%s537 + $0x48] sm:$0x1]
  %542 = vst [vmem:[%s228 + $0x2] sm:$0x1] %v538
  %543 = vst [vmem:[%s228 + $0x1a] sm:$0x1] %v539
  %544 = vst [vmem:[%s228 + $0x32] sm:$0x1] %v540
  %545 = vst [vmem:[%s228 + $0x4a] sm:$0x1] %v541
  %s546 = sadd.s32 %s400, 480
  %s547 = scalar_lea.vmem %s1, %s546
  %v548 = vld [vmem:[%s547] sm:$0x1]
  %v549 = vld [vmem:[%s547 + $0x18] sm:$0x1]
  %v550 = vld [vmem:[%s547 + $0x30] sm:$0x1]
  %v551 = vld [vmem:[%s547 + $0x48] sm:$0x1]
  %552 = vst [vmem:[%s239 + $0x2] sm:$0x1] %v548
  %553 = vst [vmem:[%s239 + $0x1a] sm:$0x1] %v549
  %554 = vst [vmem:[%s239 + $0x32] sm:$0x1] %v550
  %555 = vst [vmem:[%s239 + $0x4a] sm:$0x1] %v551
  %s556 = sld [smem:[#allocation3 + $0x3]]
  %s557 = scalar_lea.vmem %s1, %s556
  %v558 = vld [vmem:[%s557] sm:$0x1]
  %v559 = vld [vmem:[%s557 + $0x18] sm:$0x1]
  %v560 = vld [vmem:[%s557 + $0x30] sm:$0x1]
  %v561 = vld [vmem:[%s557 + $0x48] sm:$0x1]
  %s562 = sadd.s32 %s556, 96
  %s563 = scalar_lea.vmem %s1, %s562
  %v564 = vld [vmem:[%s563] sm:$0x1]
  %v565 = vld [vmem:[%s563 + $0x18] sm:$0x1]
  %v566 = vld [vmem:[%s563 + $0x30] sm:$0x1]
  %v567 = vld [vmem:[%s563 + $0x48] sm:$0x1]
  %s568 = sadd.s32 %s556, 192
  %s569 = scalar_lea.vmem %s1, %s568
  %v570 = vld [vmem:[%s569] sm:$0x1]
  %v571 = vld [vmem:[%s569 + $0x18] sm:$0x1]
  %v572 = vld [vmem:[%s569 + $0x30] sm:$0x1]
  %v573 = vld [vmem:[%s569 + $0x48] sm:$0x1]
  %v574 = vmul.f32 %v558, %v52
  %v575 = vmul.f32 %v559, %v52
  %v576 = vmul.f32 %v560, %v52
  %v577 = vmul.f32 %v561, %v52
  %v578 = vmul.f32 %v564, %v62
  %v579 = vmul.f32 %v565, %v62
  %v580 = vmul.f32 %v566, %v62
  %v581 = vmul.f32 %v567, %v62
  %v582 = vadd.f32 %v574, %v578
  %v583 = vadd.f32 %v575, %v579
  %v584 = vadd.f32 %v576, %v580
  %v585 = vadd.f32 %v577, %v581
  %v586 = vmul.f32 %v570, %v76
  %v587 = vmul.f32 %v571, %v76
  %v588 = vmul.f32 %v572, %v76
  %v589 = vmul.f32 %v573, %v76
  %v590 = vadd.f32 %v582, %v586
  %v591 = vadd.f32 %v583, %v587
  %v592 = vadd.f32 %v584, %v588
  %v593 = vadd.f32 %v585, %v589
  %s594 = scalar_lea.vmem %s3, 3
  %v595 = vld [vmem:[%s594] sm:$0x1]
  %v597 = vlaneseq
  %v598 = vshrl.u32 %v597, 7
  %v599 = vsub.s32 0, %v598
  %v600 = vrot.slane %v595, %v599
  %v602 = vadd.f32 %v590, %v600
  %v603 = vadd.f32 %v591, %v600
  %v604 = vadd.f32 %v592, %v600
  %v605 = vadd.f32 %v593, %v600
  %606 = vst [vmem:[%s4 + $0x3] sm:$0x1] %v602
  %607 = vst [vmem:[%s4 + $0x1b] sm:$0x1] %v603
  %608 = vst [vmem:[%s4 + $0x33] sm:$0x1] %v604
  %609 = vst [vmem:[%s4 + $0x4b] sm:$0x1] %v605
  %v610 = vmul.f32 %v558, %v105
  %v611 = vmul.f32 %v559, %v105
  %v612 = vmul.f32 %v560, %v105
  %v613 = vmul.f32 %v561, %v105
  %v614 = vmul.f32 %v564, %v115
  %v615 = vmul.f32 %v565, %v115
  %v616 = vmul.f32 %v566, %v115
  %v617 = vmul.f32 %v567, %v115
  %v618 = vadd.f32 %v610, %v614
  %v619 = vadd.f32 %v611, %v615
  %v620 = vadd.f32 %v612, %v616
  %v621 = vadd.f32 %v613, %v617
  %v622 = vmul.f32 %v570, %v129
  %v623 = vmul.f32 %v571, %v129
  %v624 = vmul.f32 %v572, %v129
  %v625 = vmul.f32 %v573, %v129
  %v626 = vadd.f32 %v618, %v622
  %v627 = vadd.f32 %v619, %v623
  %v628 = vadd.f32 %v620, %v624
  %v629 = vadd.f32 %v621, %v625
  %s630 = scalar_lea.vmem %s3, 27
  %v631 = vld [vmem:[%s630] sm:$0x1]
  %v633 = vlaneseq
  %v634 = vshrl.u32 %v633, 7
  %v635 = vsub.s32 0, %v634
  %v636 = vrot.slane %v631, %v635
  %v638 = vadd.f32 %v626, %v636
  %v639 = vadd.f32 %v627, %v636
  %v640 = vadd.f32 %v628, %v636
  %v641 = vadd.f32 %v629, %v636
  %642 = vst [vmem:[%s151 + $0x3] sm:$0x1] %v638
  %643 = vst [vmem:[%s151 + $0x1b] sm:$0x1] %v639
  %644 = vst [vmem:[%s151 + $0x33] sm:$0x1] %v640
  %645 = vst [vmem:[%s151 + $0x4b] sm:$0x1] %v641
  %v646 = vmul.f32 %v558, %v160
  %v647 = vmul.f32 %v559, %v160
  %v648 = vmul.f32 %v560, %v160
  %v649 = vmul.f32 %v561, %v160
  %v650 = vmul.f32 %v564, %v170
  %v651 = vmul.f32 %v565, %v170
  %v652 = vmul.f32 %v566, %v170
  %v653 = vmul.f32 %v567, %v170
  %v654 = vadd.f32 %v646, %v650
  %v655 = vadd.f32 %v647, %v651
  %v656 = vadd.f32 %v648, %v652
  %v657 = vadd.f32 %v649, %v653
  %v658 = vmul.f32 %v570, %v184
  %v659 = vmul.f32 %v571, %v184
  %v660 = vmul.f32 %v572, %v184
  %v661 = vmul.f32 %v573, %v184
  %v662 = vadd.f32 %v654, %v658
  %v663 = vadd.f32 %v655, %v659
  %v664 = vadd.f32 %v656, %v660
  %v665 = vadd.f32 %v657, %v661
  %s666 = scalar_lea.vmem %s3, 51
  %v667 = vld [vmem:[%s666] sm:$0x1]
  %v669 = vlaneseq
  %v670 = vshrl.u32 %v669, 7
  %v671 = vsub.s32 0, %v670
  %v672 = vrot.slane %v667, %v671
  %v674 = vadd.f32 %v662, %v672
  %v675 = vadd.f32 %v663, %v672
  %v676 = vadd.f32 %v664, %v672
  %v677 = vadd.f32 %v665, %v672
  %678 = vst [vmem:[%s206 + $0x3] sm:$0x1] %v674
  %679 = vst [vmem:[%s206 + $0x1b] sm:$0x1] %v675
  %680 = vst [vmem:[%s206 + $0x33] sm:$0x1] %v676
  %681 = vst [vmem:[%s206 + $0x4b] sm:$0x1] %v677
  %s682 = sadd.s32 %s556, 288
  %s683 = scalar_lea.vmem %s1, %s682
  %v684 = vld [vmem:[%s683] sm:$0x1]
  %v685 = vld [vmem:[%s683 + $0x18] sm:$0x1]
  %v686 = vld [vmem:[%s683 + $0x30] sm:$0x1]
  %v687 = vld [vmem:[%s683 + $0x48] sm:$0x1]
  %688 = vst [vmem:[%s217 + $0x3] sm:$0x1] %v684
  %689 = vst [vmem:[%s217 + $0x1b] sm:$0x1] %v685
  %690 = vst [vmem:[%s217 + $0x33] sm:$0x1] %v686
  %691 = vst [vmem:[%s217 + $0x4b] sm:$0x1] %v687
  %s692 = sadd.s32 %s556, 384
  %s693 = scalar_lea.vmem %s1, %s692
  %v694 = vld [vmem:[%s693] sm:$0x1]
  %v695 = vld [vmem:[%s693 + $0x18] sm:$0x1]
  %v696 = vld [vmem:[%s693 + $0x30] sm:$0x1]
  %v697 = vld [vmem:[%s693 + $0x48] sm:$0x1]
  %698 = vst [vmem:[%s228 + $0x3] sm:$0x1] %v694
  %699 = vst [vmem:[%s228 + $0x1b] sm:$0x1] %v695
  %700 = vst [vmem:[%s228 + $0x33] sm:$0x1] %v696
  %701 = vst [vmem:[%s228 + $0x4b] sm:$0x1] %v697
  %s702 = sadd.s32 %s556, 480
  %s703 = scalar_lea.vmem %s1, %s702
  %v704 = vld [vmem:[%s703] sm:$0x1]
  %v705 = vld [vmem:[%s703 + $0x18] sm:$0x1]
  %v706 = vld [vmem:[%s703 + $0x30] sm:$0x1]
  %v707 = vld [vmem:[%s703 + $0x48] sm:$0x1]
  %708 = vst [vmem:[%s239 + $0x3] sm:$0x1] %v704
  %709 = vst [vmem:[%s239 + $0x1b] sm:$0x1] %v705
  %710 = vst [vmem:[%s239 + $0x33] sm:$0x1] %v706
  %711 = vst [vmem:[%s239 + $0x4b] sm:$0x1] %v707
  %s712 = sld [smem:[#allocation3 + $0x4]]
  %s713 = scalar_lea.vmem %s1, %s712
  %v714 = vld [vmem:[%s713] sm:$0x1]
  %v715 = vld [vmem:[%s713 + $0x18] sm:$0x1]
  %v716 = vld [vmem:[%s713 + $0x30] sm:$0x1]
  %v717 = vld [vmem:[%s713 + $0x48] sm:$0x1]
  %s718 = sadd.s32 %s712, 96
  %s719 = scalar_lea.vmem %s1, %s718
  %v720 = vld [vmem:[%s719] sm:$0x1]
  %v721 = vld [vmem:[%s719 + $0x18] sm:$0x1]
  %v722 = vld [vmem:[%s719 + $0x30] sm:$0x1]
  %v723 = vld [vmem:[%s719 + $0x48] sm:$0x1]
  %s724 = sadd.s32 %s712, 192
  %s725 = scalar_lea.vmem %s1, %s724
  %v726 = vld [vmem:[%s725] sm:$0x1]
  %v727 = vld [vmem:[%s725 + $0x18] sm:$0x1]
  %v728 = vld [vmem:[%s725 + $0x30] sm:$0x1]
  %v729 = vld [vmem:[%s725 + $0x48] sm:$0x1]
  %v730 = vmul.f32 %v714, %v52
  %v731 = vmul.f32 %v715, %v52
  %v732 = vmul.f32 %v716, %v52
  %v733 = vmul.f32 %v717, %v52
  %v734 = vmul.f32 %v720, %v62
  %v735 = vmul.f32 %v721, %v62
  %v736 = vmul.f32 %v722, %v62
  %v737 = vmul.f32 %v723, %v62
  %v738 = vadd.f32 %v730, %v734
  %v739 = vadd.f32 %v731, %v735
  %v740 = vadd.f32 %v732, %v736
  %v741 = vadd.f32 %v733, %v737
  %v742 = vmul.f32 %v726, %v76
  %v743 = vmul.f32 %v727, %v76
  %v744 = vmul.f32 %v728, %v76
  %v745 = vmul.f32 %v729, %v76
  %v746 = vadd.f32 %v738, %v742
  %v747 = vadd.f32 %v739, %v743
  %v748 = vadd.f32 %v740, %v744
  %v749 = vadd.f32 %v741, %v745
  %s750 = scalar_lea.vmem %s3, 4
  %v751 = vld [vmem:[%s750] sm:$0x1]
  %v753 = vlaneseq
  %v754 = vshrl.u32 %v753, 7
  %v755 = vsub.s32 0, %v754
  %v756 = vrot.slane %v751, %v755
  %v758 = vadd.f32 %v746, %v756
  %v759 = vadd.f32 %v747, %v756
  %v760 = vadd.f32 %v748, %v756
  %v761 = vadd.f32 %v749, %v756
  %762 = vst [vmem:[%s4 + $0x4] sm:$0x1] %v758
  %763 = vst [vmem:[%s4 + $0x1c] sm:$0x1] %v759
  %764 = vst [vmem:[%s4 + $0x34] sm:$0x1] %v760
  %765 = vst [vmem:[%s4 + $0x4c] sm:$0x1] %v761
  %v766 = vmul.f32 %v714, %v105
  %v767 = vmul.f32 %v715, %v105
  %v768 = vmul.f32 %v716, %v105
  %v769 = vmul.f32 %v717, %v105
  %v770 = vmul.f32 %v720, %v115
  %v771 = vmul.f32 %v721, %v115
  %v772 = vmul.f32 %v722, %v115
  %v773 = vmul.f32 %v723, %v115
  %v774 = vadd.f32 %v766, %v770
  %v775 = vadd.f32 %v767, %v771
  %v776 = vadd.f32 %v768, %v772
  %v777 = vadd.f32 %v769, %v773
  %v778 = vmul.f32 %v726, %v129
  %v779 = vmul.f32 %v727, %v129
  %v780 = vmul.f32 %v728, %v129
  %v781 = vmul.f32 %v729, %v129
  %v782 = vadd.f32 %v774, %v778
  %v783 = vadd.f32 %v775, %v779
  %v784 = vadd.f32 %v776, %v780
  %v785 = vadd.f32 %v777, %v781
  %s786 = scalar_lea.vmem %s3, 28
  %v787 = vld [vmem:[%s786] sm:$0x1]
  %v789 = vlaneseq
  %v790 = vshrl.u32 %v789, 7
  %v791 = vsub.s32 0, %v790
  %v792 = vrot.slane %v787, %v791
  %v794 = vadd.f32 %v782, %v792
  %v795 = vadd.f32 %v783, %v792
  %v796 = vadd.f32 %v784, %v792
  %v797 = vadd.f32 %v785, %v792
  %798 = vst [vmem:[%s151 + $0x4] sm:$0x1] %v794
  %799 = vst [vmem:[%s151 + $0x1c] sm:$0x1] %v795
  %800 = vst [vmem:[%s151 + $0x34] sm:$0x1] %v796
  %801 = vst [vmem:[%s151 + $0x4c] sm:$0x1] %v797
  %v802 = vmul.f32 %v714, %v160
  %v803 = vmul.f32 %v715, %v160
  %v804 = vmul.f32 %v716, %v160
  %v805 = vmul.f32 %v717, %v160
  %v806 = vmul.f32 %v720, %v170
  %v807 = vmul.f32 %v721, %v170
  %v808 = vmul.f32 %v722, %v170
  %v809 = vmul.f32 %v723, %v170
  %v810 = vadd.f32 %v802, %v806
  %v811 = vadd.f32 %v803, %v807
  %v812 = vadd.f32 %v804, %v808
  %v813 = vadd.f32 %v805, %v809
  %v814 = vmul.f32 %v726, %v184
  %v815 = vmul.f32 %v727, %v184
  %v816 = vmul.f32 %v728, %v184
  %v817 = vmul.f32 %v729, %v184
  %v818 = vadd.f32 %v810, %v814
  %v819 = vadd.f32 %v811, %v815
  %v820 = vadd.f32 %v812, %v816
  %v821 = vadd.f32 %v813, %v817
  %s822 = scalar_lea.vmem %s3, 52
  %v823 = vld [vmem:[%s822] sm:$0x1]
  %v825 = vlaneseq
  %v826 = vshrl.u32 %v825, 7
  %v827 = vsub.s32 0, %v826
  %v828 = vrot.slane %v823, %v827
  %v830 = vadd.f32 %v818, %v828
  %v831 = vadd.f32 %v819, %v828
  %v832 = vadd.f32 %v820, %v828
  %v833 = vadd.f32 %v821, %v828
  %834 = vst [vmem:[%s206 + $0x4] sm:$0x1] %v830
  %835 = vst [vmem:[%s206 + $0x1c] sm:$0x1] %v831
  %836 = vst [vmem:[%s206 + $0x34] sm:$0x1] %v832
  %837 = vst [vmem:[%s206 + $0x4c] sm:$0x1] %v833
  %s838 = sadd.s32 %s712, 288
  %s839 = scalar_lea.vmem %s1, %s838
  %v840 = vld [vmem:[%s839] sm:$0x1]
  %v841 = vld [vmem:[%s839 + $0x18] sm:$0x1]
  %v842 = vld [vmem:[%s839 + $0x30] sm:$0x1]
  %v843 = vld [vmem:[%s839 + $0x48] sm:$0x1]
  %844 = vst [vmem:[%s217 + $0x4] sm:$0x1] %v840
  %845 = vst [vmem:[%s217 + $0x1c] sm:$0x1] %v841
  %846 = vst [vmem:[%s217 + $0x34] sm:$0x1] %v842
  %847 = vst [vmem:[%s217 + $0x4c] sm:$0x1] %v843
  %s848 = sadd.s32 %s712, 384
  %s849 = scalar_lea.vmem %s1, %s848
  %v850 = vld [vmem:[%s849] sm:$0x1]
  %v851 = vld [vmem:[%s849 + $0x18] sm:$0x1]
  %v852 = vld [vmem:[%s849 + $0x30] sm:$0x1]
  %v853 = vld [vmem:[%s849 + $0x48] sm:$0x1]
  %854 = vst [vmem:[%s228 + $0x4] sm:$0x1] %v850
  %855 = vst [vmem:[%s228 + $0x1c] sm:$0x1] %v851
  %856 = vst [vmem:[%s228 + $0x34] sm:$0x1] %v852
  %857 = vst [vmem:[%s228 + $0x4c] sm:$0x1] %v853
  %s858 = sadd.s32 %s712, 480
  %s859 = scalar_lea.vmem %s1, %s858
  %v860 = vld [vmem:[%s859] sm:$0x1]
  %v861 = vld [vmem:[%s859 + $0x18] sm:$0x1]
  %v862 = vld [vmem:[%s859 + $0x30] sm:$0x1]
  %v863 = vld [vmem:[%s859 + $0x48] sm:$0x1]
  %864 = vst [vmem:[%s239 + $0x4] sm:$0x1] %v860
  %865 = vst [vmem:[%s239 + $0x1c] sm:$0x1] %v861
  %866 = vst [vmem:[%s239 + $0x34] sm:$0x1] %v862
  %867 = vst [vmem:[%s239 + $0x4c] sm:$0x1] %v863
  %s868 = sld [smem:[#allocation3 + $0x5]]
  %s869 = scalar_lea.vmem %s1, %s868
  %v870 = vld [vmem:[%s869] sm:$0x1]
  %v871 = vld [vmem:[%s869 + $0x18] sm:$0x1]
  %v872 = vld [vmem:[%s869 + $0x30] sm:$0x1]
  %v873 = vld [vmem:[%s869 + $0x48] sm:$0x1]
  %s874 = sadd.s32 %s868, 96
  %s875 = scalar_lea.vmem %s1, %s874
  %v876 = vld [vmem:[%s875] sm:$0x1]
  %v877 = vld [vmem:[%s875 + $0x18] sm:$0x1]
  %v878 = vld [vmem:[%s875 + $0x30] sm:$0x1]
  %v879 = vld [vmem:[%s875 + $0x48] sm:$0x1]
  %s880 = sadd.s32 %s868, 192
  %s881 = scalar_lea.vmem %s1, %s880
  %v882 = vld [vmem:[%s881] sm:$0x1]
  %v883 = vld [vmem:[%s881 + $0x18] sm:$0x1]
  %v884 = vld [vmem:[%s881 + $0x30] sm:$0x1]
  %v885 = vld [vmem:[%s881 + $0x48] sm:$0x1]
  %v886 = vmul.f32 %v870, %v52
  %v887 = vmul.f32 %v871, %v52
  %v888 = vmul.f32 %v872, %v52
  %v889 = vmul.f32 %v873, %v52
  %v890 = vmul.f32 %v876, %v62
  %v891 = vmul.f32 %v877, %v62
  %v892 = vmul.f32 %v878, %v62
  %v893 = vmul.f32 %v879, %v62
  %v894 = vadd.f32 %v886, %v890
  %v895 = vadd.f32 %v887, %v891
  %v896 = vadd.f32 %v888, %v892
  %v897 = vadd.f32 %v889, %v893
  %v898 = vmul.f32 %v882, %v76
  %v899 = vmul.f32 %v883, %v76
  %v900 = vmul.f32 %v884, %v76
  %v901 = vmul.f32 %v885, %v76
  %v902 = vadd.f32 %v894, %v898
  %v903 = vadd.f32 %v895, %v899
  %v904 = vadd.f32 %v896, %v900
  %v905 = vadd.f32 %v897, %v901
  %s906 = scalar_lea.vmem %s3, 5
  %v907 = vld [vmem:[%s906] sm:$0x1]
  %v909 = vlaneseq
  %v910 = vshrl.u32 %v909, 7
  %v911 = vsub.s32 0, %v910
  %v912 = vrot.slane %v907, %v911
  %v914 = vadd.f32 %v902, %v912
  %v915 = vadd.f32 %v903, %v912
  %v916 = vadd.f32 %v904, %v912
  %v917 = vadd.f32 %v905, %v912
  %918 = vst [vmem:[%s4 + $0x5] sm:$0x1] %v914
  %919 = vst [vmem:[%s4 + $0x1d] sm:$0x1] %v915
  %920 = vst [vmem:[%s4 + $0x35] sm:$0x1] %v916
  %921 = vst [vmem:[%s4 + $0x4d] sm:$0x1] %v917
  %v922 = vmul.f32 %v870, %v105
  %v923 = vmul.f32 %v871, %v105
  %v924 = vmul.f32 %v872, %v105
  %v925 = vmul.f32 %v873, %v105
  %v926 = vmul.f32 %v876, %v115
  %v927 = vmul.f32 %v877, %v115
  %v928 = vmul.f32 %v878, %v115
  %v929 = vmul.f32 %v879, %v115
  %v930 = vadd.f32 %v922, %v926
  %v931 = vadd.f32 %v923, %v927
  %v932 = vadd.f32 %v924, %v928
  %v933 = vadd.f32 %v925, %v929
  %v934 = vmul.f32 %v882, %v129
  %v935 = vmul.f32 %v883, %v129
  %v936 = vmul.f32 %v884, %v129
  %v937 = vmul.f32 %v885, %v129
  %v938 = vadd.f32 %v930, %v934
  %v939 = vadd.f32 %v931, %v935
  %v940 = vadd.f32 %v932, %v936
  %v941 = vadd.f32 %v933, %v937
  %s942 = scalar_lea.vmem %s3, 29
  %v943 = vld [vmem:[%s942] sm:$0x1]
  %v945 = vlaneseq
  %v946 = vshrl.u32 %v945, 7
  %v947 = vsub.s32 0, %v946
  %v948 = vrot.slane %v943, %v947
  %v950 = vadd.f32 %v938, %v948
  %v951 = vadd.f32 %v939, %v948
  %v952 = vadd.f32 %v940, %v948
  %v953 = vadd.f32 %v941, %v948
  %954 = vst [vmem:[%s151 + $0x5] sm:$0x1] %v950
  %955 = vst [vmem:[%s151 + $0x1d] sm:$0x1] %v951
  %956 = vst [vmem:[%s151 + $0x35] sm:$0x1] %v952
  %957 = vst [vmem:[%s151 + $0x4d] sm:$0x1] %v953
  %v958 = vmul.f32 %v870, %v160
  %v959 = vmul.f32 %v871, %v160
  %v960 = vmul.f32 %v872, %v160
  %v961 = vmul.f32 %v873, %v160
  %v962 = vmul.f32 %v876, %v170
  %v963 = vmul.f32 %v877, %v170
  %v964 = vmul.f32 %v878, %v170
  %v965 = vmul.f32 %v879, %v170
  %v966 = vadd.f32 %v958, %v962
  %v967 = vadd.f32 %v959, %v963
  %v968 = vadd.f32 %v960, %v964
  %v969 = vadd.f32 %v961, %v965
  %v970 = vmul.f32 %v882, %v184
  %v971 = vmul.f32 %v883, %v184
  %v972 = vmul.f32 %v884, %v184
  %v973 = vmul.f32 %v885, %v184
  %v974 = vadd.f32 %v966, %v970
  %v975 = vadd.f32 %v967, %v971
  %v976 = vadd.f32 %v968, %v972
  %v977 = vadd.f32 %v969, %v973
  %s978 = scalar_lea.vmem %s3, 53
  %v979 = vld [vmem:[%s978] sm:$0x1]
  %v981 = vlaneseq
  %v982 = vshrl.u32 %v981, 7
  %v983 = vsub.s32 0, %v982
  %v984 = vrot.slane %v979, %v983
  %v986 = vadd.f32 %v974, %v984
  %v987 = vadd.f32 %v975, %v984
  %v988 = vadd.f32 %v976, %v984
  %v989 = vadd.f32 %v977, %v984
  %990 = vst [vmem:[%s206 + $0x5] sm:$0x1] %v986
  %991 = vst [vmem:[%s206 + $0x1d] sm:$0x1] %v987
  %992 = vst [vmem:[%s206 + $0x35] sm:$0x1] %v988
  %993 = vst [vmem:[%s206 + $0x4d] sm:$0x1] %v989
  %s994 = sadd.s32 %s868, 288
  %s995 = scalar_lea.vmem %s1, %s994
  %v996 = vld [vmem:[%s995] sm:$0x1]
  %v997 = vld [vmem:[%s995 + $0x18] sm:$0x1]
  %v998 = vld [vmem:[%s995 + $0x30] sm:$0x1]
  %v999 = vld [vmem:[%s995 + $0x48] sm:$0x1]
  %1000 = vst [vmem:[%s217 + $0x5] sm:$0x1] %v996
  %1001 = vst [vmem:[%s217 + $0x1d] sm:$0x1] %v997
  %1002 = vst [vmem:[%s217 + $0x35] sm:$0x1] %v998
  %1003 = vst [vmem:[%s217 + $0x4d] sm:$0x1] %v999
  %s1004 = sadd.s32 %s868, 384
  %s1005 = scalar_lea.vmem %s1, %s1004
  %v1006 = vld [vmem:[%s1005] sm:$0x1]
  %v1007 = vld [vmem:[%s1005 + $0x18] sm:$0x1]
  %v1008 = vld [vmem:[%s1005 + $0x30] sm:$0x1]
  %v1009 = vld [vmem:[%s1005 + $0x48] sm:$0x1]
  %1010 = vst [vmem:[%s228 + $0x5] sm:$0x1] %v1006
  %1011 = vst [vmem:[%s228 + $0x1d] sm:$0x1] %v1007
  %1012 = vst [vmem:[%s228 + $0x35] sm:$0x1] %v1008
  %1013 = vst [vmem:[%s228 + $0x4d] sm:$0x1] %v1009
  %s1014 = sadd.s32 %s868, 480
  %s1015 = scalar_lea.vmem %s1, %s1014
  %v1016 = vld [vmem:[%s1015] sm:$0x1]
  %v1017 = vld [vmem:[%s1015 + $0x18] sm:$0x1]
  %v1018 = vld [vmem:[%s1015 + $0x30] sm:$0x1]
  %v1019 = vld [vmem:[%s1015 + $0x48] sm:$0x1]
  %1020 = vst [vmem:[%s239 + $0x5] sm:$0x1] %v1016
  %1021 = vst [vmem:[%s239 + $0x1d] sm:$0x1] %v1017
  %1022 = vst [vmem:[%s239 + $0x35] sm:$0x1] %v1018
  %1023 = vst [vmem:[%s239 + $0x4d] sm:$0x1] %v1019
  %s1024 = sld [smem:[#allocation3 + $0x6]]
  %s1025 = scalar_lea.vmem %s1, %s1024
  %v1026 = vld [vmem:[%s1025] sm:$0x1]
  %v1027 = vld [vmem:[%s1025 + $0x18] sm:$0x1]
  %v1028 = vld [vmem:[%s1025 + $0x30] sm:$0x1]
  %v1029 = vld [vmem:[%s1025 + $0x48] sm:$0x1]
  %s1030 = sadd.s32 %s1024, 96
  %s1031 = scalar_lea.vmem %s1, %s1030
  %v1032 = vld [vmem:[%s1031] sm:$0x1]
  %v1033 = vld [vmem:[%s1031 + $0x18] sm:$0x1]
  %v1034 = vld [vmem:[%s1031 + $0x30] sm:$0x1]
  %v1035 = vld [vmem:[%s1031 + $0x48] sm:$0x1]
  %s1036 = sadd.s32 %s1024, 192
  %s1037 = scalar_lea.vmem %s1, %s1036
  %v1038 = vld [vmem:[%s1037] sm:$0x1]
  %v1039 = vld [vmem:[%s1037 + $0x18] sm:$0x1]
  %v1040 = vld [vmem:[%s1037 + $0x30] sm:$0x1]
  %v1041 = vld [vmem:[%s1037 + $0x48] sm:$0x1]
  %v1042 = vmul.f32 %v1026, %v52
  %v1043 = vmul.f32 %v1027, %v52
  %v1044 = vmul.f32 %v1028, %v52
  %v1045 = vmul.f32 %v1029, %v52
  %v1046 = vmul.f32 %v1032, %v62
  %v1047 = vmul.f32 %v1033, %v62
  %v1048 = vmul.f32 %v1034, %v62
  %v1049 = vmul.f32 %v1035, %v62
  %v1050 = vadd.f32 %v1042, %v1046
  %v1051 = vadd.f32 %v1043, %v1047
  %v1052 = vadd.f32 %v1044, %v1048
  %v1053 = vadd.f32 %v1045, %v1049
  %v1054 = vmul.f32 %v1038, %v76
  %v1055 = vmul.f32 %v1039, %v76
  %v1056 = vmul.f32 %v1040, %v76
  %v1057 = vmul.f32 %v1041, %v76
  %v1058 = vadd.f32 %v1050, %v1054
  %v1059 = vadd.f32 %v1051, %v1055
  %v1060 = vadd.f32 %v1052, %v1056
  %v1061 = vadd.f32 %v1053, %v1057
  %s1062 = scalar_lea.vmem %s3, 6
  %v1063 = vld [vmem:[%s1062] sm:$0x1]
  %v1065 = vlaneseq
  %v1066 = vshrl.u32 %v1065, 7
  %v1067 = vsub.s32 0, %v1066
  %v1068 = vrot.slane %v1063, %v1067
  %v1070 = vadd.f32 %v1058, %v1068
  %v1071 = vadd.f32 %v1059, %v1068
  %v1072 = vadd.f32 %v1060, %v1068
  %v1073 = vadd.f32 %v1061, %v1068
  %1074 = vst [vmem:[%s4 + $0x6] sm:$0x1] %v1070
  %1075 = vst [vmem:[%s4 + $0x1e] sm:$0x1] %v1071
  %1076 = vst [vmem:[%s4 + $0x36] sm:$0x1] %v1072
  %1077 = vst [vmem:[%s4 + $0x4e] sm:$0x1] %v1073
  %v1078 = vmul.f32 %v1026, %v105
  %v1079 = vmul.f32 %v1027, %v105
  %v1080 = vmul.f32 %v1028, %v105
  %v1081 = vmul.f32 %v1029, %v105
  %v1082 = vmul.f32 %v1032, %v115
  %v1083 = vmul.f32 %v1033, %v115
  %v1084 = vmul.f32 %v1034, %v115
  %v1085 = vmul.f32 %v1035, %v115
  %v1086 = vadd.f32 %v1078, %v1082
  %v1087 = vadd.f32 %v1079, %v1083
  %v1088 = vadd.f32 %v1080, %v1084
  %v1089 = vadd.f32 %v1081, %v1085
  %v1090 = vmul.f32 %v1038, %v129
  %v1091 = vmul.f32 %v1039, %v129
  %v1092 = vmul.f32 %v1040, %v129
  %v1093 = vmul.f32 %v1041, %v129
  %v1094 = vadd.f32 %v1086, %v1090
  %v1095 = vadd.f32 %v1087, %v1091
  %v1096 = vadd.f32 %v1088, %v1092
  %v1097 = vadd.f32 %v1089, %v1093
  %s1098 = scalar_lea.vmem %s3, 30
  %v1099 = vld [vmem:[%s1098] sm:$0x1]
  %v1101 = vlaneseq
  %v1102 = vshrl.u32 %v1101, 7
  %v1103 = vsub.s32 0, %v1102
  %v1104 = vrot.slane %v1099, %v1103
  %v1106 = vadd.f32 %v1094, %v1104
  %v1107 = vadd.f32 %v1095, %v1104
  %v1108 = vadd.f32 %v1096, %v1104
  %v1109 = vadd.f32 %v1097, %v1104
  %1110 = vst [vmem:[%s151 + $0x6] sm:$0x1] %v1106
  %1111 = vst [vmem:[%s151 + $0x1e] sm:$0x1] %v1107
  %1112 = vst [vmem:[%s151 + $0x36] sm:$0x1] %v1108
  %1113 = vst [vmem:[%s151 + $0x4e] sm:$0x1] %v1109
  %v1114 = vmul.f32 %v1026, %v160
  %v1115 = vmul.f32 %v1027, %v160
  %v1116 = vmul.f32 %v1028, %v160
  %v1117 = vmul.f32 %v1029, %v160
  %v1118 = vmul.f32 %v1032, %v170
  %v1119 = vmul.f32 %v1033, %v170
  %v1120 = vmul.f32 %v1034, %v170
  %v1121 = vmul.f32 %v1035, %v170
  %v1122 = vadd.f32 %v1114, %v1118
  %v1123 = vadd.f32 %v1115, %v1119
  %v1124 = vadd.f32 %v1116, %v1120
  %v1125 = vadd.f32 %v1117, %v1121
  %v1126 = vmul.f32 %v1038, %v184
  %v1127 = vmul.f32 %v1039, %v184
  %v1128 = vmul.f32 %v1040, %v184
  %v1129 = vmul.f32 %v1041, %v184
  %v1130 = vadd.f32 %v1122, %v1126
  %v1131 = vadd.f32 %v1123, %v1127
  %v1132 = vadd.f32 %v1124, %v1128
  %v1133 = vadd.f32 %v1125, %v1129
  %s1134 = scalar_lea.vmem %s3, 54
  %v1135 = vld [vmem:[%s1134] sm:$0x1]
  %v1137 = vlaneseq
  %v1138 = vshrl.u32 %v1137, 7
  %v1139 = vsub.s32 0, %v1138
  %v1140 = vrot.slane %v1135, %v1139
  %v1142 = vadd.f32 %v1130, %v1140
  %v1143 = vadd.f32 %v1131, %v1140
  %v1144 = vadd.f32 %v1132, %v1140
  %v1145 = vadd.f32 %v1133, %v1140
  %1146 = vst [vmem:[%s206 + $0x6] sm:$0x1] %v1142
  %1147 = vst [vmem:[%s206 + $0x1e] sm:$0x1] %v1143
  %1148 = vst [vmem:[%s206 + $0x36] sm:$0x1] %v1144
  %1149 = vst [vmem:[%s206 + $0x4e] sm:$0x1] %v1145
  %s1150 = sadd.s32 %s1024, 288
  %s1151 = scalar_lea.vmem %s1, %s1150
  %v1152 = vld [vmem:[%s1151] sm:$0x1]
  %v1153 = vld [vmem:[%s1151 + $0x18] sm:$0x1]
  %v1154 = vld [vmem:[%s1151 + $0x30] sm:$0x1]
  %v1155 = vld [vmem:[%s1151 + $0x48] sm:$0x1]
  %1156 = vst [vmem:[%s217 + $0x6] sm:$0x1] %v1152
  %1157 = vst [vmem:[%s217 + $0x1e] sm:$0x1] %v1153
  %1158 = vst [vmem:[%s217 + $0x36] sm:$0x1] %v1154
  %1159 = vst [vmem:[%s217 + $0x4e] sm:$0x1] %v1155
  %s1160 = sadd.s32 %s1024, 384
  %s1161 = scalar_lea.vmem %s1, %s1160
  %v1162 = vld [vmem:[%s1161] sm:$0x1]
  %v1163 = vld [vmem:[%s1161 + $0x18] sm:$0x1]
  %v1164 = vld [vmem:[%s1161 + $0x30] sm:$0x1]
  %v1165 = vld [vmem:[%s1161 + $0x48] sm:$0x1]
  %1166 = vst [vmem:[%s228 + $0x6] sm:$0x1] %v1162
  %1167 = vst [vmem:[%s228 + $0x1e] sm:$0x1] %v1163
  %1168 = vst [vmem:[%s228 + $0x36] sm:$0x1] %v1164
  %1169 = vst [vmem:[%s228 + $0x4e] sm:$0x1] %v1165
  %s1170 = sadd.s32 %s1024, 480
  %s1171 = scalar_lea.vmem %s1, %s1170
  %v1172 = vld [vmem:[%s1171] sm:$0x1]
  %v1173 = vld [vmem:[%s1171 + $0x18] sm:$0x1]
  %v1174 = vld [vmem:[%s1171 + $0x30] sm:$0x1]
  %v1175 = vld [vmem:[%s1171 + $0x48] sm:$0x1]
  %1176 = vst [vmem:[%s239 + $0x6] sm:$0x1] %v1172
  %1177 = vst [vmem:[%s239 + $0x1e] sm:$0x1] %v1173
  %1178 = vst [vmem:[%s239 + $0x36] sm:$0x1] %v1174
  %1179 = vst [vmem:[%s239 + $0x4e] sm:$0x1] %v1175
  %s1180 = sld [smem:[#allocation3 + $0x7]]
  %s1181 = scalar_lea.vmem %s1, %s1180
  %v1182 = vld [vmem:[%s1181] sm:$0x1]
  %v1183 = vld [vmem:[%s1181 + $0x18] sm:$0x1]
  %v1184 = vld [vmem:[%s1181 + $0x30] sm:$0x1]
  %v1185 = vld [vmem:[%s1181 + $0x48] sm:$0x1]
  %s1186 = sadd.s32 %s1180, 96
  %s1187 = scalar_lea.vmem %s1, %s1186
  %v1188 = vld [vmem:[%s1187] sm:$0x1]
  %v1189 = vld [vmem:[%s1187 + $0x18] sm:$0x1]
  %v1190 = vld [vmem:[%s1187 + $0x30] sm:$0x1]
  %v1191 = vld [vmem:[%s1187 + $0x48] sm:$0x1]
  %s1192 = sadd.s32 %s1180, 192
  %s1193 = scalar_lea.vmem %s1, %s1192
  %v1194 = vld [vmem:[%s1193] sm:$0x1]
  %v1195 = vld [vmem:[%s1193 + $0x18] sm:$0x1]
  %v1196 = vld [vmem:[%s1193 + $0x30] sm:$0x1]
  %v1197 = vld [vmem:[%s1193 + $0x48] sm:$0x1]
  %v1198 = vmul.f32 %v1182, %v52
  %v1199 = vmul.f32 %v1183, %v52
  %v1200 = vmul.f32 %v1184, %v52
  %v1201 = vmul.f32 %v1185, %v52
  %v1202 = vmul.f32 %v1188, %v62
  %v1203 = vmul.f32 %v1189, %v62
  %v1204 = vmul.f32 %v1190, %v62
  %v1205 = vmul.f32 %v1191, %v62
  %v1206 = vadd.f32 %v1198, %v1202
  %v1207 = vadd.f32 %v1199, %v1203
  %v1208 = vadd.f32 %v1200, %v1204
  %v1209 = vadd.f32 %v1201, %v1205
  %v1210 = vmul.f32 %v1194, %v76
  %v1211 = vmul.f32 %v1195, %v76
  %v1212 = vmul.f32 %v1196, %v76
  %v1213 = vmul.f32 %v1197, %v76
  %v1214 = vadd.f32 %v1206, %v1210
  %v1215 = vadd.f32 %v1207, %v1211
  %v1216 = vadd.f32 %v1208, %v1212
  %v1217 = vadd.f32 %v1209, %v1213
  %s1218 = scalar_lea.vmem %s3, 7
  %v1219 = vld [vmem:[%s1218] sm:$0x1]
  %v1221 = vlaneseq
  %v1222 = vshrl.u32 %v1221, 7
  %v1223 = vsub.s32 0, %v1222
  %v1224 = vrot.slane %v1219, %v1223
  %v1226 = vadd.f32 %v1214, %v1224
  %v1227 = vadd.f32 %v1215, %v1224
  %v1228 = vadd.f32 %v1216, %v1224
  %v1229 = vadd.f32 %v1217, %v1224
  %1230 = vst [vmem:[%s4 + $0x7] sm:$0x1] %v1226
  %1231 = vst [vmem:[%s4 + $0x1f] sm:$0x1] %v1227
  %1232 = vst [vmem:[%s4 + $0x37] sm:$0x1] %v1228
  %1233 = vst [vmem:[%s4 + $0x4f] sm:$0x1] %v1229
  %v1234 = vmul.f32 %v1182, %v105
  %v1235 = vmul.f32 %v1183, %v105
  %v1236 = vmul.f32 %v1184, %v105
  %v1237 = vmul.f32 %v1185, %v105
  %v1238 = vmul.f32 %v1188, %v115
  %v1239 = vmul.f32 %v1189, %v115
  %v1240 = vmul.f32 %v1190, %v115
  %v1241 = vmul.f32 %v1191, %v115
  %v1242 = vadd.f32 %v1234, %v1238
  %v1243 = vadd.f32 %v1235, %v1239
  %v1244 = vadd.f32 %v1236, %v1240
  %v1245 = vadd.f32 %v1237, %v1241
  %v1246 = vmul.f32 %v1194, %v129
  %v1247 = vmul.f32 %v1195, %v129
  %v1248 = vmul.f32 %v1196, %v129
  %v1249 = vmul.f32 %v1197, %v129
  %v1250 = vadd.f32 %v1242, %v1246
  %v1251 = vadd.f32 %v1243, %v1247
  %v1252 = vadd.f32 %v1244, %v1248
  %v1253 = vadd.f32 %v1245, %v1249
  %s1254 = scalar_lea.vmem %s3, 31
  %v1255 = vld [vmem:[%s1254] sm:$0x1]
  %v1257 = vlaneseq
  %v1258 = vshrl.u32 %v1257, 7
  %v1259 = vsub.s32 0, %v1258
  %v1260 = vrot.slane %v1255, %v1259
  %v1262 = vadd.f32 %v1250, %v1260
  %v1263 = vadd.f32 %v1251, %v1260
  %v1264 = vadd.f32 %v1252, %v1260
  %v1265 = vadd.f32 %v1253, %v1260
  %1266 = vst [vmem:[%s151 + $0x7] sm:$0x1] %v1262
  %1267 = vst [vmem:[%s151 + $0x1f] sm:$0x1] %v1263
  %1268 = vst [vmem:[%s151 + $0x37] sm:$0x1] %v1264
  %1269 = vst [vmem:[%s151 + $0x4f] sm:$0x1] %v1265
  %v1270 = vmul.f32 %v1182, %v160
  %v1271 = vmul.f32 %v1183, %v160
  %v1272 = vmul.f32 %v1184, %v160
  %v1273 = vmul.f32 %v1185, %v160
  %v1274 = vmul.f32 %v1188, %v170
  %v1275 = vmul.f32 %v1189, %v170
  %v1276 = vmul.f32 %v1190, %v170
  %v1277 = vmul.f32 %v1191, %v170
  %v1278 = vadd.f32 %v1270, %v1274
  %v1279 = vadd.f32 %v1271, %v1275
  %v1280 = vadd.f32 %v1272, %v1276
  %v1281 = vadd.f32 %v1273, %v1277
  %v1282 = vmul.f32 %v1194, %v184
  %v1283 = vmul.f32 %v1195, %v184
  %v1284 = vmul.f32 %v1196, %v184
  %v1285 = vmul.f32 %v1197, %v184
  %v1286 = vadd.f32 %v1278, %v1282
  %v1287 = vadd.f32 %v1279, %v1283
  %v1288 = vadd.f32 %v1280, %v1284
  %v1289 = vadd.f32 %v1281, %v1285
  %s1290 = scalar_lea.vmem %s3, 55
  %v1291 = vld [vmem:[%s1290] sm:$0x1]
  %v1293 = vlaneseq
  %v1294 = vshrl.u32 %v1293, 7
  %v1295 = vsub.s32 0, %v1294
  %v1296 = vrot.slane %v1291, %v1295
  %v1298 = vadd.f32 %v1286, %v1296
  %v1299 = vadd.f32 %v1287, %v1296
  %v1300 = vadd.f32 %v1288, %v1296
  %v1301 = vadd.f32 %v1289, %v1296
  %1302 = vst [vmem:[%s206 + $0x7] sm:$0x1] %v1298
  %1303 = vst [vmem:[%s206 + $0x1f] sm:$0x1] %v1299
  %1304 = vst [vmem:[%s206 + $0x37] sm:$0x1] %v1300
  %1305 = vst [vmem:[%s206 + $0x4f] sm:$0x1] %v1301
  %s1306 = sadd.s32 %s1180, 288
  %s1307 = scalar_lea.vmem %s1, %s1306
  %v1308 = vld [vmem:[%s1307] sm:$0x1]
  %v1309 = vld [vmem:[%s1307 + $0x18] sm:$0x1]
  %v1310 = vld [vmem:[%s1307 + $0x30] sm:$0x1]
  %v1311 = vld [vmem:[%s1307 + $0x48] sm:$0x1]
  %1312 = vst [vmem:[%s217 + $0x7] sm:$0x1] %v1308
  %1313 = vst [vmem:[%s217 + $0x1f] sm:$0x1] %v1309
  %1314 = vst [vmem:[%s217 + $0x37] sm:$0x1] %v1310
  %1315 = vst [vmem:[%s217 + $0x4f] sm:$0x1] %v1311
  %s1316 = sadd.s32 %s1180, 384
  %s1317 = scalar_lea.vmem %s1, %s1316
  %v1318 = vld [vmem:[%s1317] sm:$0x1]
  %v1319 = vld [vmem:[%s1317 + $0x18] sm:$0x1]
  %v1320 = vld [vmem:[%s1317 + $0x30] sm:$0x1]
  %v1321 = vld [vmem:[%s1317 + $0x48] sm:$0x1]
  %1322 = vst [vmem:[%s228 + $0x7] sm:$0x1] %v1318
  %1323 = vst [vmem:[%s228 + $0x1f] sm:$0x1] %v1319
  %1324 = vst [vmem:[%s228 + $0x37] sm:$0x1] %v1320
  %1325 = vst [vmem:[%s228 + $0x4f] sm:$0x1] %v1321
  %s1326 = sadd.s32 %s1180, 480
  %s1327 = scalar_lea.vmem %s1, %s1326
  %v1328 = vld [vmem:[%s1327] sm:$0x1]
  %v1329 = vld [vmem:[%s1327 + $0x18] sm:$0x1]
  %v1330 = vld [vmem:[%s1327 + $0x30] sm:$0x1]
  %v1331 = vld [vmem:[%s1327 + $0x48] sm:$0x1]
  %1332 = vst [vmem:[%s239 + $0x7] sm:$0x1] %v1328
  %1333 = vst [vmem:[%s239 + $0x1f] sm:$0x1] %v1329
  %1334 = vst [vmem:[%s239 + $0x37] sm:$0x1] %v1330
  %1335 = vst [vmem:[%s239 + $0x4f] sm:$0x1] %v1331
  %s1336 = sld [smem:[#allocation3 + $0x8]]
  %s1337 = scalar_lea.vmem %s1, %s1336
  %v1338 = vld [vmem:[%s1337] sm:$0x1]
  %v1339 = vld [vmem:[%s1337 + $0x18] sm:$0x1]
  %v1340 = vld [vmem:[%s1337 + $0x30] sm:$0x1]
  %v1341 = vld [vmem:[%s1337 + $0x48] sm:$0x1]
  %s1342 = sadd.s32 %s1336, 96
  %s1343 = scalar_lea.vmem %s1, %s1342
  %v1344 = vld [vmem:[%s1343] sm:$0x1]
  %v1345 = vld [vmem:[%s1343 + $0x18] sm:$0x1]
  %v1346 = vld [vmem:[%s1343 + $0x30] sm:$0x1]
  %v1347 = vld [vmem:[%s1343 + $0x48] sm:$0x1]
  %s1348 = sadd.s32 %s1336, 192
  %s1349 = scalar_lea.vmem %s1, %s1348
  %v1350 = vld [vmem:[%s1349] sm:$0x1]
  %v1351 = vld [vmem:[%s1349 + $0x18] sm:$0x1]
  %v1352 = vld [vmem:[%s1349 + $0x30] sm:$0x1]
  %v1353 = vld [vmem:[%s1349 + $0x48] sm:$0x1]
  %v1354 = vmul.f32 %v1338, %v52
  %v1355 = vmul.f32 %v1339, %v52
  %v1356 = vmul.f32 %v1340, %v52
  %v1357 = vmul.f32 %v1341, %v52
  %v1358 = vmul.f32 %v1344, %v62
  %v1359 = vmul.f32 %v1345, %v62
  %v1360 = vmul.f32 %v1346, %v62
  %v1361 = vmul.f32 %v1347, %v62
  %v1362 = vadd.f32 %v1354, %v1358
  %v1363 = vadd.f32 %v1355, %v1359
  %v1364 = vadd.f32 %v1356, %v1360
  %v1365 = vadd.f32 %v1357, %v1361
  %v1366 = vmul.f32 %v1350, %v76
  %v1367 = vmul.f32 %v1351, %v76
  %v1368 = vmul.f32 %v1352, %v76
  %v1369 = vmul.f32 %v1353, %v76
  %v1370 = vadd.f32 %v1362, %v1366
  %v1371 = vadd.f32 %v1363, %v1367
  %v1372 = vadd.f32 %v1364, %v1368
  %v1373 = vadd.f32 %v1365, %v1369
  %s1374 = scalar_lea.vmem %s3, 8
  %v1375 = vld [vmem:[%s1374] sm:$0x1]
  %v1377 = vlaneseq
  %v1378 = vshrl.u32 %v1377, 7
  %v1379 = vsub.s32 0, %v1378
  %v1380 = vrot.slane %v1375, %v1379
  %v1382 = vadd.f32 %v1370, %v1380
  %v1383 = vadd.f32 %v1371, %v1380
  %v1384 = vadd.f32 %v1372, %v1380
  %v1385 = vadd.f32 %v1373, %v1380
  %1386 = vst [vmem:[%s4 + $0x8] sm:$0x1] %v1382
  %1387 = vst [vmem:[%s4 + $0x20] sm:$0x1] %v1383
  %1388 = vst [vmem:[%s4 + $0x38] sm:$0x1] %v1384
  %1389 = vst [vmem:[%s4 + $0x50] sm:$0x1] %v1385
  %v1390 = vmul.f32 %v1338, %v105
  %v1391 = vmul.f32 %v1339, %v105
  %v1392 = vmul.f32 %v1340, %v105
  %v1393 = vmul.f32 %v1341, %v105
  %v1394 = vmul.f32 %v1344, %v115
  %v1395 = vmul.f32 %v1345, %v115
  %v1396 = vmul.f32 %v1346, %v115
  %v1397 = vmul.f32 %v1347, %v115
  %v1398 = vadd.f32 %v1390, %v1394
  %v1399 = vadd.f32 %v1391, %v1395
  %v1400 = vadd.f32 %v1392, %v1396
  %v1401 = vadd.f32 %v1393, %v1397
  %v1402 = vmul.f32 %v1350, %v129
  %v1403 = vmul.f32 %v1351, %v129
  %v1404 = vmul.f32 %v1352, %v129
  %v1405 = vmul.f32 %v1353, %v129
  %v1406 = vadd.f32 %v1398, %v1402
  %v1407 = vadd.f32 %v1399, %v1403
  %v1408 = vadd.f32 %v1400, %v1404
  %v1409 = vadd.f32 %v1401, %v1405
  %s1410 = scalar_lea.vmem %s3, 32
  %v1411 = vld [vmem:[%s1410] sm:$0x1]
  %v1413 = vlaneseq
  %v1414 = vshrl.u32 %v1413, 7
  %v1415 = vsub.s32 0, %v1414
  %v1416 = vrot.slane %v1411, %v1415
  %v1418 = vadd.f32 %v1406, %v1416
  %v1419 = vadd.f32 %v1407, %v1416
  %v1420 = vadd.f32 %v1408, %v1416
  %v1421 = vadd.f32 %v1409, %v1416
  %1422 = vst [vmem:[%s151 + $0x8] sm:$0x1] %v1418
  %1423 = vst [vmem:[%s151 + $0x20] sm:$0x1] %v1419
  %1424 = vst [vmem:[%s151 + $0x38] sm:$0x1] %v1420
  %1425 = vst [vmem:[%s151 + $0x50] sm:$0x1] %v1421
  %v1426 = vmul.f32 %v1338, %v160
  %v1427 = vmul.f32 %v1339, %v160
  %v1428 = vmul.f32 %v1340, %v160
  %v1429 = vmul.f32 %v1341, %v160
  %v1430 = vmul.f32 %v1344, %v170
  %v1431 = vmul.f32 %v1345, %v170
  %v1432 = vmul.f32 %v1346, %v170
  %v1433 = vmul.f32 %v1347, %v170
  %v1434 = vadd.f32 %v1426, %v1430
  %v1435 = vadd.f32 %v1427, %v1431
  %v1436 = vadd.f32 %v1428, %v1432
  %v1437 = vadd.f32 %v1429, %v1433
  %v1438 = vmul.f32 %v1350, %v184
  %v1439 = vmul.f32 %v1351, %v184
  %v1440 = vmul.f32 %v1352, %v184
  %v1441 = vmul.f32 %v1353, %v184
  %v1442 = vadd.f32 %v1434, %v1438
  %v1443 = vadd.f32 %v1435, %v1439
  %v1444 = vadd.f32 %v1436, %v1440
  %v1445 = vadd.f32 %v1437, %v1441
  %s1446 = scalar_lea.vmem %s3, 56
  %v1447 = vld [vmem:[%s1446] sm:$0x1]
  %v1449 = vlaneseq
  %v1450 = vshrl.u32 %v1449, 7
  %v1451 = vsub.s32 0, %v1450
  %v1452 = vrot.slane %v1447, %v1451
  %v1454 = vadd.f32 %v1442, %v1452
  %v1455 = vadd.f32 %v1443, %v1452
  %v1456 = vadd.f32 %v1444, %v1452
  %v1457 = vadd.f32 %v1445, %v1452
  %1458 = vst [vmem:[%s206 + $0x8] sm:$0x1] %v1454
  %1459 = vst [vmem:[%s206 + $0x20] sm:$0x1] %v1455
  %1460 = vst [vmem:[%s206 + $0x38] sm:$0x1] %v1456
  %1461 = vst [vmem:[%s206 + $0x50] sm:$0x1] %v1457
  %s1462 = sadd.s32 %s1336, 288
  %s1463 = scalar_lea.vmem %s1, %s1462
  %v1464 = vld [vmem:[%s1463] sm:$0x1]
  %v1465 = vld [vmem:[%s1463 + $0x18] sm:$0x1]
  %v1466 = vld [vmem:[%s1463 + $0x30] sm:$0x1]
  %v1467 = vld [vmem:[%s1463 + $0x48] sm:$0x1]
  %1468 = vst [vmem:[%s217 + $0x8] sm:$0x1] %v1464
  %1469 = vst [vmem:[%s217 + $0x20] sm:$0x1] %v1465
  %1470 = vst [vmem:[%s217 + $0x38] sm:$0x1] %v1466
  %1471 = vst [vmem:[%s217 + $0x50] sm:$0x1] %v1467
  %s1472 = sadd.s32 %s1336, 384
  %s1473 = scalar_lea.vmem %s1, %s1472
  %v1474 = vld [vmem:[%s1473] sm:$0x1]
  %v1475 = vld [vmem:[%s1473 + $0x18] sm:$0x1]
  %v1476 = vld [vmem:[%s1473 + $0x30] sm:$0x1]
  %v1477 = vld [vmem:[%s1473 + $0x48] sm:$0x1]
  %1478 = vst [vmem:[%s228 + $0x8] sm:$0x1] %v1474
  %1479 = vst [vmem:[%s228 + $0x20] sm:$0x1] %v1475
  %1480 = vst [vmem:[%s228 + $0x38] sm:$0x1] %v1476
  %1481 = vst [vmem:[%s228 + $0x50] sm:$0x1] %v1477
  %s1482 = sadd.s32 %s1336, 480
  %s1483 = scalar_lea.vmem %s1, %s1482
  %v1484 = vld [vmem:[%s1483] sm:$0x1]
  %v1485 = vld [vmem:[%s1483 + $0x18] sm:$0x1]
  %v1486 = vld [vmem:[%s1483 + $0x30] sm:$0x1]
  %v1487 = vld [vmem:[%s1483 + $0x48] sm:$0x1]
  %1488 = vst [vmem:[%s239 + $0x8] sm:$0x1] %v1484
  %1489 = vst [vmem:[%s239 + $0x20] sm:$0x1] %v1485
  %1490 = vst [vmem:[%s239 + $0x38] sm:$0x1] %v1486
  %1491 = vst [vmem:[%s239 + $0x50] sm:$0x1] %v1487
  %s1492 = sld [smem:[#allocation3 + $0x9]]
  %s1493 = scalar_lea.vmem %s1, %s1492
  %v1494 = vld [vmem:[%s1493] sm:$0x1]
  %v1495 = vld [vmem:[%s1493 + $0x18] sm:$0x1]
  %v1496 = vld [vmem:[%s1493 + $0x30] sm:$0x1]
  %v1497 = vld [vmem:[%s1493 + $0x48] sm:$0x1]
  %s1498 = sadd.s32 %s1492, 96
  %s1499 = scalar_lea.vmem %s1, %s1498
  %v1500 = vld [vmem:[%s1499] sm:$0x1]
  %v1501 = vld [vmem:[%s1499 + $0x18] sm:$0x1]
  %v1502 = vld [vmem:[%s1499 + $0x30] sm:$0x1]
  %v1503 = vld [vmem:[%s1499 + $0x48] sm:$0x1]
  %s1504 = sadd.s32 %s1492, 192
  %s1505 = scalar_lea.vmem %s1, %s1504
  %v1506 = vld [vmem:[%s1505] sm:$0x1]
  %v1507 = vld [vmem:[%s1505 + $0x18] sm:$0x1]
  %v1508 = vld [vmem:[%s1505 + $0x30] sm:$0x1]
  %v1509 = vld [vmem:[%s1505 + $0x48] sm:$0x1]
  %v1510 = vmul.f32 %v1494, %v52
  %v1511 = vmul.f32 %v1495, %v52
  %v1512 = vmul.f32 %v1496, %v52
  %v1513 = vmul.f32 %v1497, %v52
  %v1514 = vmul.f32 %v1500, %v62
  %v1515 = vmul.f32 %v1501, %v62
  %v1516 = vmul.f32 %v1502, %v62
  %v1517 = vmul.f32 %v1503, %v62
  %v1518 = vadd.f32 %v1510, %v1514
  %v1519 = vadd.f32 %v1511, %v1515
  %v1520 = vadd.f32 %v1512, %v1516
  %v1521 = vadd.f32 %v1513, %v1517
  %v1522 = vmul.f32 %v1506, %v76
  %v1523 = vmul.f32 %v1507, %v76
  %v1524 = vmul.f32 %v1508, %v76
  %v1525 = vmul.f32 %v1509, %v76
  %v1526 = vadd.f32 %v1518, %v1522
  %v1527 = vadd.f32 %v1519, %v1523
  %v1528 = vadd.f32 %v1520, %v1524
  %v1529 = vadd.f32 %v1521, %v1525
  %s1530 = scalar_lea.vmem %s3, 9
  %v1531 = vld [vmem:[%s1530] sm:$0x1]
  %v1533 = vlaneseq
  %v1534 = vshrl.u32 %v1533, 7
  %v1535 = vsub.s32 0, %v1534
  %v1536 = vrot.slane %v1531, %v1535
  %v1538 = vadd.f32 %v1526, %v1536
  %v1539 = vadd.f32 %v1527, %v1536
  %v1540 = vadd.f32 %v1528, %v1536
  %v1541 = vadd.f32 %v1529, %v1536
  %1542 = vst [vmem:[%s4 + $0x9] sm:$0x1] %v1538
  %1543 = vst [vmem:[%s4 + $0x21] sm:$0x1] %v1539
  %1544 = vst [vmem:[%s4 + $0x39] sm:$0x1] %v1540
  %1545 = vst [vmem:[%s4 + $0x51] sm:$0x1] %v1541
  %v1546 = vmul.f32 %v1494, %v105
  %v1547 = vmul.f32 %v1495, %v105
  %v1548 = vmul.f32 %v1496, %v105
  %v1549 = vmul.f32 %v1497, %v105
  %v1550 = vmul.f32 %v1500, %v115
  %v1551 = vmul.f32 %v1501, %v115
  %v1552 = vmul.f32 %v1502, %v115
  %v1553 = vmul.f32 %v1503, %v115
  %v1554 = vadd.f32 %v1546, %v1550
  %v1555 = vadd.f32 %v1547, %v1551
  %v1556 = vadd.f32 %v1548, %v1552
  %v1557 = vadd.f32 %v1549, %v1553
  %v1558 = vmul.f32 %v1506, %v129
  %v1559 = vmul.f32 %v1507, %v129
  %v1560 = vmul.f32 %v1508, %v129
  %v1561 = vmul.f32 %v1509, %v129
  %v1562 = vadd.f32 %v1554, %v1558
  %v1563 = vadd.f32 %v1555, %v1559
  %v1564 = vadd.f32 %v1556, %v1560
  %v1565 = vadd.f32 %v1557, %v1561
  %s1566 = scalar_lea.vmem %s3, 33
  %v1567 = vld [vmem:[%s1566] sm:$0x1]
  %v1569 = vlaneseq
  %v1570 = vshrl.u32 %v1569, 7
  %v1571 = vsub.s32 0, %v1570
  %v1572 = vrot.slane %v1567, %v1571
  %v1574 = vadd.f32 %v1562, %v1572
  %v1575 = vadd.f32 %v1563, %v1572
  %v1576 = vadd.f32 %v1564, %v1572
  %v1577 = vadd.f32 %v1565, %v1572
  %1578 = vst [vmem:[%s151 + $0x9] sm:$0x1] %v1574
  %1579 = vst [vmem:[%s151 + $0x21] sm:$0x1] %v1575
  %1580 = vst [vmem:[%s151 + $0x39] sm:$0x1] %v1576
  %1581 = vst [vmem:[%s151 + $0x51] sm:$0x1] %v1577
  %v1582 = vmul.f32 %v1494, %v160
  %v1583 = vmul.f32 %v1495, %v160
  %v1584 = vmul.f32 %v1496, %v160
  %v1585 = vmul.f32 %v1497, %v160
  %v1586 = vmul.f32 %v1500, %v170
  %v1587 = vmul.f32 %v1501, %v170
  %v1588 = vmul.f32 %v1502, %v170
  %v1589 = vmul.f32 %v1503, %v170
  %v1590 = vadd.f32 %v1582, %v1586
  %v1591 = vadd.f32 %v1583, %v1587
  %v1592 = vadd.f32 %v1584, %v1588
  %v1593 = vadd.f32 %v1585, %v1589
  %v1594 = vmul.f32 %v1506, %v184
  %v1595 = vmul.f32 %v1507, %v184
  %v1596 = vmul.f32 %v1508, %v184
  %v1597 = vmul.f32 %v1509, %v184
  %v1598 = vadd.f32 %v1590, %v1594
  %v1599 = vadd.f32 %v1591, %v1595
  %v1600 = vadd.f32 %v1592, %v1596
  %v1601 = vadd.f32 %v1593, %v1597
  %s1602 = scalar_lea.vmem %s3, 57
  %v1603 = vld [vmem:[%s1602] sm:$0x1]
  %v1605 = vlaneseq
  %v1606 = vshrl.u32 %v1605, 7
  %v1607 = vsub.s32 0, %v1606
  %v1608 = vrot.slane %v1603, %v1607
  %v1610 = vadd.f32 %v1598, %v1608
  %v1611 = vadd.f32 %v1599, %v1608
  %v1612 = vadd.f32 %v1600, %v1608
  %v1613 = vadd.f32 %v1601, %v1608
  %1614 = vst [vmem:[%s206 + $0x9] sm:$0x1] %v1610
  %1615 = vst [vmem:[%s206 + $0x21] sm:$0x1] %v1611
  %1616 = vst [vmem:[%s206 + $0x39] sm:$0x1] %v1612
  %1617 = vst [vmem:[%s206 + $0x51] sm:$0x1] %v1613
  %s1618 = sadd.s32 %s1492, 288
  %s1619 = scalar_lea.vmem %s1, %s1618
  %v1620 = vld [vmem:[%s1619] sm:$0x1]
  %v1621 = vld [vmem:[%s1619 + $0x18] sm:$0x1]
  %v1622 = vld [vmem:[%s1619 + $0x30] sm:$0x1]
  %v1623 = vld [vmem:[%s1619 + $0x48] sm:$0x1]
  %1624 = vst [vmem:[%s217 + $0x9] sm:$0x1] %v1620
  %1625 = vst [vmem:[%s217 + $0x21] sm:$0x1] %v1621
  %1626 = vst [vmem:[%s217 + $0x39] sm:$0x1] %v1622
  %1627 = vst [vmem:[%s217 + $0x51] sm:$0x1] %v1623
  %s1628 = sadd.s32 %s1492, 384
  %s1629 = scalar_lea.vmem %s1, %s1628
  %v1630 = vld [vmem:[%s1629] sm:$0x1]
  %v1631 = vld [vmem:[%s1629 + $0x18] sm:$0x1]
  %v1632 = vld [vmem:[%s1629 + $0x30] sm:$0x1]
  %v1633 = vld [vmem:[%s1629 + $0x48] sm:$0x1]
  %1634 = vst [vmem:[%s228 + $0x9] sm:$0x1] %v1630
  %1635 = vst [vmem:[%s228 + $0x21] sm:$0x1] %v1631
  %1636 = vst [vmem:[%s228 + $0x39] sm:$0x1] %v1632
  %1637 = vst [vmem:[%s228 + $0x51] sm:$0x1] %v1633
  %s1638 = sadd.s32 %s1492, 480
  %s1639 = scalar_lea.vmem %s1, %s1638
  %v1640 = vld [vmem:[%s1639] sm:$0x1]
  %v1641 = vld [vmem:[%s1639 + $0x18] sm:$0x1]
  %v1642 = vld [vmem:[%s1639 + $0x30] sm:$0x1]
  %v1643 = vld [vmem:[%s1639 + $0x48] sm:$0x1]
  %1644 = vst [vmem:[%s239 + $0x9] sm:$0x1] %v1640
  %1645 = vst [vmem:[%s239 + $0x21] sm:$0x1] %v1641
  %1646 = vst [vmem:[%s239 + $0x39] sm:$0x1] %v1642
  %1647 = vst [vmem:[%s239 + $0x51] sm:$0x1] %v1643
  %s1648 = sld [smem:[#allocation3 + $0xa]]
  %s1649 = scalar_lea.vmem %s1, %s1648
  %v1650 = vld [vmem:[%s1649] sm:$0x1]
  %v1651 = vld [vmem:[%s1649 + $0x18] sm:$0x1]
  %v1652 = vld [vmem:[%s1649 + $0x30] sm:$0x1]
  %v1653 = vld [vmem:[%s1649 + $0x48] sm:$0x1]
  %s1654 = sadd.s32 %s1648, 96
  %s1655 = scalar_lea.vmem %s1, %s1654
  %v1656 = vld [vmem:[%s1655] sm:$0x1]
  %v1657 = vld [vmem:[%s1655 + $0x18] sm:$0x1]
  %v1658 = vld [vmem:[%s1655 + $0x30] sm:$0x1]
  %v1659 = vld [vmem:[%s1655 + $0x48] sm:$0x1]
  %s1660 = sadd.s32 %s1648, 192
  %s1661 = scalar_lea.vmem %s1, %s1660
  %v1662 = vld [vmem:[%s1661] sm:$0x1]
  %v1663 = vld [vmem:[%s1661 + $0x18] sm:$0x1]
  %v1664 = vld [vmem:[%s1661 + $0x30] sm:$0x1]
  %v1665 = vld [vmem:[%s1661 + $0x48] sm:$0x1]
  %v1666 = vmul.f32 %v1650, %v52
  %v1667 = vmul.f32 %v1651, %v52
  %v1668 = vmul.f32 %v1652, %v52
  %v1669 = vmul.f32 %v1653, %v52
  %v1670 = vmul.f32 %v1656, %v62
  %v1671 = vmul.f32 %v1657, %v62
  %v1672 = vmul.f32 %v1658, %v62
  %v1673 = vmul.f32 %v1659, %v62
  %v1674 = vadd.f32 %v1666, %v1670
  %v1675 = vadd.f32 %v1667, %v1671
  %v1676 = vadd.f32 %v1668, %v1672
  %v1677 = vadd.f32 %v1669, %v1673
  %v1678 = vmul.f32 %v1662, %v76
  %v1679 = vmul.f32 %v1663, %v76
  %v1680 = vmul.f32 %v1664, %v76
  %v1681 = vmul.f32 %v1665, %v76
  %v1682 = vadd.f32 %v1674, %v1678
  %v1683 = vadd.f32 %v1675, %v1679
  %v1684 = vadd.f32 %v1676, %v1680
  %v1685 = vadd.f32 %v1677, %v1681
  %s1686 = scalar_lea.vmem %s3, 10
  %v1687 = vld [vmem:[%s1686] sm:$0x1]
  %v1689 = vlaneseq
  %v1690 = vshrl.u32 %v1689, 7
  %v1691 = vsub.s32 0, %v1690
  %v1692 = vrot.slane %v1687, %v1691
  %v1694 = vadd.f32 %v1682, %v1692
  %v1695 = vadd.f32 %v1683, %v1692
  %v1696 = vadd.f32 %v1684, %v1692
  %v1697 = vadd.f32 %v1685, %v1692
  %1698 = vst [vmem:[%s4 + $0xa] sm:$0x1] %v1694
  %1699 = vst [vmem:[%s4 + $0x22] sm:$0x1] %v1695
  %1700 = vst [vmem:[%s4 + $0x3a] sm:$0x1] %v1696
  %1701 = vst [vmem:[%s4 + $0x52] sm:$0x1] %v1697
  %v1702 = vmul.f32 %v1650, %v105
  %v1703 = vmul.f32 %v1651, %v105
  %v1704 = vmul.f32 %v1652, %v105
  %v1705 = vmul.f32 %v1653, %v105
  %v1706 = vmul.f32 %v1656, %v115
  %v1707 = vmul.f32 %v1657, %v115
  %v1708 = vmul.f32 %v1658, %v115
  %v1709 = vmul.f32 %v1659, %v115
  %v1710 = vadd.f32 %v1702, %v1706
  %v1711 = vadd.f32 %v1703, %v1707
  %v1712 = vadd.f32 %v1704, %v1708
  %v1713 = vadd.f32 %v1705, %v1709
  %v1714 = vmul.f32 %v1662, %v129
  %v1715 = vmul.f32 %v1663, %v129
  %v1716 = vmul.f32 %v1664, %v129
  %v1717 = vmul.f32 %v1665, %v129
  %v1718 = vadd.f32 %v1710, %v1714
  %v1719 = vadd.f32 %v1711, %v1715
  %v1720 = vadd.f32 %v1712, %v1716
  %v1721 = vadd.f32 %v1713, %v1717
  %s1722 = scalar_lea.vmem %s3, 34
  %v1723 = vld [vmem:[%s1722] sm:$0x1]
  %v1725 = vlaneseq
  %v1726 = vshrl.u32 %v1725, 7
  %v1727 = vsub.s32 0, %v1726
  %v1728 = vrot.slane %v1723, %v1727
  %v1730 = vadd.f32 %v1718, %v1728
  %v1731 = vadd.f32 %v1719, %v1728
  %v1732 = vadd.f32 %v1720, %v1728
  %v1733 = vadd.f32 %v1721, %v1728
  %1734 = vst [vmem:[%s151 + $0xa] sm:$0x1] %v1730
  %1735 = vst [vmem:[%s151 + $0x22] sm:$0x1] %v1731
  %1736 = vst [vmem:[%s151 + $0x3a] sm:$0x1] %v1732
  %1737 = vst [vmem:[%s151 + $0x52] sm:$0x1] %v1733
  %v1738 = vmul.f32 %v1650, %v160
  %v1739 = vmul.f32 %v1651, %v160
  %v1740 = vmul.f32 %v1652, %v160
  %v1741 = vmul.f32 %v1653, %v160
  %v1742 = vmul.f32 %v1656, %v170
  %v1743 = vmul.f32 %v1657, %v170
  %v1744 = vmul.f32 %v1658, %v170
  %v1745 = vmul.f32 %v1659, %v170
  %v1746 = vadd.f32 %v1738, %v1742
  %v1747 = vadd.f32 %v1739, %v1743
  %v1748 = vadd.f32 %v1740, %v1744
  %v1749 = vadd.f32 %v1741, %v1745
  %v1750 = vmul.f32 %v1662, %v184
  %v1751 = vmul.f32 %v1663, %v184
  %v1752 = vmul.f32 %v1664, %v184
  %v1753 = vmul.f32 %v1665, %v184
  %v1754 = vadd.f32 %v1746, %v1750
  %v1755 = vadd.f32 %v1747, %v1751
  %v1756 = vadd.f32 %v1748, %v1752
  %v1757 = vadd.f32 %v1749, %v1753
  %s1758 = scalar_lea.vmem %s3, 58
  %v1759 = vld [vmem:[%s1758] sm:$0x1]
  %v1761 = vlaneseq
  %v1762 = vshrl.u32 %v1761, 7
  %v1763 = vsub.s32 0, %v1762
  %v1764 = vrot.slane %v1759, %v1763
  %v1766 = vadd.f32 %v1754, %v1764
  %v1767 = vadd.f32 %v1755, %v1764
  %v1768 = vadd.f32 %v1756, %v1764
  %v1769 = vadd.f32 %v1757, %v1764
  %1770 = vst [vmem:[%s206 + $0xa] sm:$0x1] %v1766
  %1771 = vst [vmem:[%s206 + $0x22] sm:$0x1] %v1767
  %1772 = vst [vmem:[%s206 + $0x3a] sm:$0x1] %v1768
  %1773 = vst [vmem:[%s206 + $0x52] sm:$0x1] %v1769
  %s1774 = sadd.s32 %s1648, 288
  %s1775 = scalar_lea.vmem %s1, %s1774
  %v1776 = vld [vmem:[%s1775] sm:$0x1]
  %v1777 = vld [vmem:[%s1775 + $0x18] sm:$0x1]
  %v1778 = vld [vmem:[%s1775 + $0x30] sm:$0x1]
  %v1779 = vld [vmem:[%s1775 + $0x48] sm:$0x1]
  %1780 = vst [vmem:[%s217 + $0xa] sm:$0x1] %v1776
  %1781 = vst [vmem:[%s217 + $0x22] sm:$0x1] %v1777
  %1782 = vst [vmem:[%s217 + $0x3a] sm:$0x1] %v1778
  %1783 = vst [vmem:[%s217 + $0x52] sm:$0x1] %v1779
  %s1784 = sadd.s32 %s1648, 384
  %s1785 = scalar_lea.vmem %s1, %s1784
  %v1786 = vld [vmem:[%s1785] sm:$0x1]
  %v1787 = vld [vmem:[%s1785 + $0x18] sm:$0x1]
  %v1788 = vld [vmem:[%s1785 + $0x30] sm:$0x1]
  %v1789 = vld [vmem:[%s1785 + $0x48] sm:$0x1]
  %1790 = vst [vmem:[%s228 + $0xa] sm:$0x1] %v1786
  %1791 = vst [vmem:[%s228 + $0x22] sm:$0x1] %v1787
  %1792 = vst [vmem:[%s228 + $0x3a] sm:$0x1] %v1788
  %1793 = vst [vmem:[%s228 + $0x52] sm:$0x1] %v1789
  %s1794 = sadd.s32 %s1648, 480
  %s1795 = scalar_lea.vmem %s1, %s1794
  %v1796 = vld [vmem:[%s1795] sm:$0x1]
  %v1797 = vld [vmem:[%s1795 + $0x18] sm:$0x1]
  %v1798 = vld [vmem:[%s1795 + $0x30] sm:$0x1]
  %v1799 = vld [vmem:[%s1795 + $0x48] sm:$0x1]
  %1800 = vst [vmem:[%s239 + $0xa] sm:$0x1] %v1796
  %1801 = vst [vmem:[%s239 + $0x22] sm:$0x1] %v1797
  %1802 = vst [vmem:[%s239 + $0x3a] sm:$0x1] %v1798
  %1803 = vst [vmem:[%s239 + $0x52] sm:$0x1] %v1799
  %s1804 = sld [smem:[#allocation3 + $0xb]]
  %s1805 = scalar_lea.vmem %s1, %s1804
  %v1806 = vld [vmem:[%s1805] sm:$0x1]
  %v1807 = vld [vmem:[%s1805 + $0x18] sm:$0x1]
  %v1808 = vld [vmem:[%s1805 + $0x30] sm:$0x1]
  %v1809 = vld [vmem:[%s1805 + $0x48] sm:$0x1]
  %s1810 = sadd.s32 %s1804, 96
  %s1811 = scalar_lea.vmem %s1, %s1810
  %v1812 = vld [vmem:[%s1811] sm:$0x1]
  %v1813 = vld [vmem:[%s1811 + $0x18] sm:$0x1]
  %v1814 = vld [vmem:[%s1811 + $0x30] sm:$0x1]
  %v1815 = vld [vmem:[%s1811 + $0x48] sm:$0x1]
  %s1816 = sadd.s32 %s1804, 192
  %s1817 = scalar_lea.vmem %s1, %s1816
  %v1818 = vld [vmem:[%s1817] sm:$0x1]
  %v1819 = vld [vmem:[%s1817 + $0x18] sm:$0x1]
  %v1820 = vld [vmem:[%s1817 + $0x30] sm:$0x1]
  %v1821 = vld [vmem:[%s1817 + $0x48] sm:$0x1]
  %v1822 = vmul.f32 %v1806, %v52
  %v1823 = vmul.f32 %v1807, %v52
  %v1824 = vmul.f32 %v1808, %v52
  %v1825 = vmul.f32 %v1809, %v52
  %v1826 = vmul.f32 %v1812, %v62
  %v1827 = vmul.f32 %v1813, %v62
  %v1828 = vmul.f32 %v1814, %v62
  %v1829 = vmul.f32 %v1815, %v62
  %v1830 = vadd.f32 %v1822, %v1826
  %v1831 = vadd.f32 %v1823, %v1827
  %v1832 = vadd.f32 %v1824, %v1828
  %v1833 = vadd.f32 %v1825, %v1829
  %v1834 = vmul.f32 %v1818, %v76
  %v1835 = vmul.f32 %v1819, %v76
  %v1836 = vmul.f32 %v1820, %v76
  %v1837 = vmul.f32 %v1821, %v76
  %v1838 = vadd.f32 %v1830, %v1834
  %v1839 = vadd.f32 %v1831, %v1835
  %v1840 = vadd.f32 %v1832, %v1836
  %v1841 = vadd.f32 %v1833, %v1837
  %s1842 = scalar_lea.vmem %s3, 11
  %v1843 = vld [vmem:[%s1842] sm:$0x1]
  %v1845 = vlaneseq
  %v1846 = vshrl.u32 %v1845, 7
  %v1847 = vsub.s32 0, %v1846
  %v1848 = vrot.slane %v1843, %v1847
  %v1850 = vadd.f32 %v1838, %v1848
  %v1851 = vadd.f32 %v1839, %v1848
  %v1852 = vadd.f32 %v1840, %v1848
  %v1853 = vadd.f32 %v1841, %v1848
  %1854 = vst [vmem:[%s4 + $0xb] sm:$0x1] %v1850
  %1855 = vst [vmem:[%s4 + $0x23] sm:$0x1] %v1851
  %1856 = vst [vmem:[%s4 + $0x3b] sm:$0x1] %v1852
  %1857 = vst [vmem:[%s4 + $0x53] sm:$0x1] %v1853
  %v1858 = vmul.f32 %v1806, %v105
  %v1859 = vmul.f32 %v1807, %v105
  %v1860 = vmul.f32 %v1808, %v105
  %v1861 = vmul.f32 %v1809, %v105
  %v1862 = vmul.f32 %v1812, %v115
  %v1863 = vmul.f32 %v1813, %v115
  %v1864 = vmul.f32 %v1814, %v115
  %v1865 = vmul.f32 %v1815, %v115
  %v1866 = vadd.f32 %v1858, %v1862
  %v1867 = vadd.f32 %v1859, %v1863
  %v1868 = vadd.f32 %v1860, %v1864
  %v1869 = vadd.f32 %v1861, %v1865
  %v1870 = vmul.f32 %v1818, %v129
  %v1871 = vmul.f32 %v1819, %v129
  %v1872 = vmul.f32 %v1820, %v129
  %v1873 = vmul.f32 %v1821, %v129
  %v1874 = vadd.f32 %v1866, %v1870
  %v1875 = vadd.f32 %v1867, %v1871
  %v1876 = vadd.f32 %v1868, %v1872
  %v1877 = vadd.f32 %v1869, %v1873
  %s1878 = scalar_lea.vmem %s3, 35
  %v1879 = vld [vmem:[%s1878] sm:$0x1]
  %v1881 = vlaneseq
  %v1882 = vshrl.u32 %v1881, 7
  %v1883 = vsub.s32 0, %v1882
  %v1884 = vrot.slane %v1879, %v1883
  %v1886 = vadd.f32 %v1874, %v1884
  %v1887 = vadd.f32 %v1875, %v1884
  %v1888 = vadd.f32 %v1876, %v1884
  %v1889 = vadd.f32 %v1877, %v1884
  %1890 = vst [vmem:[%s151 + $0xb] sm:$0x1] %v1886
  %1891 = vst [vmem:[%s151 + $0x23] sm:$0x1] %v1887
  %1892 = vst [vmem:[%s151 + $0x3b] sm:$0x1] %v1888
  %1893 = vst [vmem:[%s151 + $0x53] sm:$0x1] %v1889
  %v1894 = vmul.f32 %v1806, %v160
  %v1895 = vmul.f32 %v1807, %v160
  %v1896 = vmul.f32 %v1808, %v160
  %v1897 = vmul.f32 %v1809, %v160
  %v1898 = vmul.f32 %v1812, %v170
  %v1899 = vmul.f32 %v1813, %v170
  %v1900 = vmul.f32 %v1814, %v170
  %v1901 = vmul.f32 %v1815, %v170
  %v1902 = vadd.f32 %v1894, %v1898
  %v1903 = vadd.f32 %v1895, %v1899
  %v1904 = vadd.f32 %v1896, %v1900
  %v1905 = vadd.f32 %v1897, %v1901
  %v1906 = vmul.f32 %v1818, %v184
  %v1907 = vmul.f32 %v1819, %v184
  %v1908 = vmul.f32 %v1820, %v184
  %v1909 = vmul.f32 %v1821, %v184
  %v1910 = vadd.f32 %v1902, %v1906
  %v1911 = vadd.f32 %v1903, %v1907
  %v1912 = vadd.f32 %v1904, %v1908
  %v1913 = vadd.f32 %v1905, %v1909
  %s1914 = scalar_lea.vmem %s3, 59
  %v1915 = vld [vmem:[%s1914] sm:$0x1]
  %v1917 = vlaneseq
  %v1918 = vshrl.u32 %v1917, 7
  %v1919 = vsub.s32 0, %v1918
  %v1920 = vrot.slane %v1915, %v1919
  %v1922 = vadd.f32 %v1910, %v1920
  %v1923 = vadd.f32 %v1911, %v1920
  %v1924 = vadd.f32 %v1912, %v1920
  %v1925 = vadd.f32 %v1913, %v1920
  %1926 = vst [vmem:[%s206 + $0xb] sm:$0x1] %v1922
  %1927 = vst [vmem:[%s206 + $0x23] sm:$0x1] %v1923
  %1928 = vst [vmem:[%s206 + $0x3b] sm:$0x1] %v1924
  %1929 = vst [vmem:[%s206 + $0x53] sm:$0x1] %v1925
  %s1930 = sadd.s32 %s1804, 288
  %s1931 = scalar_lea.vmem %s1, %s1930
  %v1932 = vld [vmem:[%s1931] sm:$0x1]
  %v1933 = vld [vmem:[%s1931 + $0x18] sm:$0x1]
  %v1934 = vld [vmem:[%s1931 + $0x30] sm:$0x1]
  %v1935 = vld [vmem:[%s1931 + $0x48] sm:$0x1]
  %1936 = vst [vmem:[%s217 + $0xb] sm:$0x1] %v1932
  %1937 = vst [vmem:[%s217 + $0x23] sm:$0x1] %v1933
  %1938 = vst [vmem:[%s217 + $0x3b] sm:$0x1] %v1934
  %1939 = vst [vmem:[%s217 + $0x53] sm:$0x1] %v1935
  %s1940 = sadd.s32 %s1804, 384
  %s1941 = scalar_lea.vmem %s1, %s1940
  %v1942 = vld [vmem:[%s1941] sm:$0x1]
  %v1943 = vld [vmem:[%s1941 + $0x18] sm:$0x1]
  %v1944 = vld [vmem:[%s1941 + $0x30] sm:$0x1]
  %v1945 = vld [vmem:[%s1941 + $0x48] sm:$0x1]
  %1946 = vst [vmem:[%s228 + $0xb] sm:$0x1] %v1942
  %1947 = vst [vmem:[%s228 + $0x23] sm:$0x1] %v1943
  %1948 = vst [vmem:[%s228 + $0x3b] sm:$0x1] %v1944
  %1949 = vst [vmem:[%s228 + $0x53] sm:$0x1] %v1945
  %s1950 = sadd.s32 %s1804, 480
  %s1951 = scalar_lea.vmem %s1, %s1950
  %v1952 = vld [vmem:[%s1951] sm:$0x1]
  %v1953 = vld [vmem:[%s1951 + $0x18] sm:$0x1]
  %v1954 = vld [vmem:[%s1951 + $0x30] sm:$0x1]
  %v1955 = vld [vmem:[%s1951 + $0x48] sm:$0x1]
  %1956 = vst [vmem:[%s239 + $0xb] sm:$0x1] %v1952
  %1957 = vst [vmem:[%s239 + $0x23] sm:$0x1] %v1953
  %1958 = vst [vmem:[%s239 + $0x3b] sm:$0x1] %v1954
  %1959 = vst [vmem:[%s239 + $0x53] sm:$0x1] %v1955
  %s1960 = sld [smem:[#allocation3 + $0xc]]
  %s1961 = scalar_lea.vmem %s1, %s1960
  %v1962 = vld [vmem:[%s1961] sm:$0x1]
  %v1963 = vld [vmem:[%s1961 + $0x18] sm:$0x1]
  %v1964 = vld [vmem:[%s1961 + $0x30] sm:$0x1]
  %v1965 = vld [vmem:[%s1961 + $0x48] sm:$0x1]
  %s1966 = sadd.s32 %s1960, 96
  %s1967 = scalar_lea.vmem %s1, %s1966
  %v1968 = vld [vmem:[%s1967] sm:$0x1]
  %v1969 = vld [vmem:[%s1967 + $0x18] sm:$0x1]
  %v1970 = vld [vmem:[%s1967 + $0x30] sm:$0x1]
  %v1971 = vld [vmem:[%s1967 + $0x48] sm:$0x1]
  %s1972 = sadd.s32 %s1960, 192
  %s1973 = scalar_lea.vmem %s1, %s1972
  %v1974 = vld [vmem:[%s1973] sm:$0x1]
  %v1975 = vld [vmem:[%s1973 + $0x18] sm:$0x1]
  %v1976 = vld [vmem:[%s1973 + $0x30] sm:$0x1]
  %v1977 = vld [vmem:[%s1973 + $0x48] sm:$0x1]
  %v1978 = vmul.f32 %v1962, %v52
  %v1979 = vmul.f32 %v1963, %v52
  %v1980 = vmul.f32 %v1964, %v52
  %v1981 = vmul.f32 %v1965, %v52
  %v1982 = vmul.f32 %v1968, %v62
  %v1983 = vmul.f32 %v1969, %v62
  %v1984 = vmul.f32 %v1970, %v62
  %v1985 = vmul.f32 %v1971, %v62
  %v1986 = vadd.f32 %v1978, %v1982
  %v1987 = vadd.f32 %v1979, %v1983
  %v1988 = vadd.f32 %v1980, %v1984
  %v1989 = vadd.f32 %v1981, %v1985
  %v1990 = vmul.f32 %v1974, %v76
  %v1991 = vmul.f32 %v1975, %v76
  %v1992 = vmul.f32 %v1976, %v76
  %v1993 = vmul.f32 %v1977, %v76
  %v1994 = vadd.f32 %v1986, %v1990
  %v1995 = vadd.f32 %v1987, %v1991
  %v1996 = vadd.f32 %v1988, %v1992
  %v1997 = vadd.f32 %v1989, %v1993
  %s1998 = scalar_lea.vmem %s3, 12
  %v1999 = vld [vmem:[%s1998] sm:$0x1]
  %v2001 = vlaneseq
  %v2002 = vshrl.u32 %v2001, 7
  %v2003 = vsub.s32 0, %v2002
  %v2004 = vrot.slane %v1999, %v2003
  %v2006 = vadd.f32 %v1994, %v2004
  %v2007 = vadd.f32 %v1995, %v2004
  %v2008 = vadd.f32 %v1996, %v2004
  %v2009 = vadd.f32 %v1997, %v2004
  %2010 = vst [vmem:[%s4 + $0xc] sm:$0x1] %v2006
  %2011 = vst [vmem:[%s4 + $0x24] sm:$0x1] %v2007
  %2012 = vst [vmem:[%s4 + $0x3c] sm:$0x1] %v2008
  %2013 = vst [vmem:[%s4 + $0x54] sm:$0x1] %v2009
  %v2014 = vmul.f32 %v1962, %v105
  %v2015 = vmul.f32 %v1963, %v105
  %v2016 = vmul.f32 %v1964, %v105
  %v2017 = vmul.f32 %v1965, %v105
  %v2018 = vmul.f32 %v1968, %v115
  %v2019 = vmul.f32 %v1969, %v115
  %v2020 = vmul.f32 %v1970, %v115
  %v2021 = vmul.f32 %v1971, %v115
  %v2022 = vadd.f32 %v2014, %v2018
  %v2023 = vadd.f32 %v2015, %v2019
  %v2024 = vadd.f32 %v2016, %v2020
  %v2025 = vadd.f32 %v2017, %v2021
  %v2026 = vmul.f32 %v1974, %v129
  %v2027 = vmul.f32 %v1975, %v129
  %v2028 = vmul.f32 %v1976, %v129
  %v2029 = vmul.f32 %v1977, %v129
  %v2030 = vadd.f32 %v2022, %v2026
  %v2031 = vadd.f32 %v2023, %v2027
  %v2032 = vadd.f32 %v2024, %v2028
  %v2033 = vadd.f32 %v2025, %v2029
  %s2034 = scalar_lea.vmem %s3, 36
  %v2035 = vld [vmem:[%s2034] sm:$0x1]
  %v2037 = vlaneseq
  %v2038 = vshrl.u32 %v2037, 7
  %v2039 = vsub.s32 0, %v2038
  %v2040 = vrot.slane %v2035, %v2039
  %v2042 = vadd.f32 %v2030, %v2040
  %v2043 = vadd.f32 %v2031, %v2040
  %v2044 = vadd.f32 %v2032, %v2040
  %v2045 = vadd.f32 %v2033, %v2040
  %2046 = vst [vmem:[%s151 + $0xc] sm:$0x1] %v2042
  %2047 = vst [vmem:[%s151 + $0x24] sm:$0x1] %v2043
  %2048 = vst [vmem:[%s151 + $0x3c] sm:$0x1] %v2044
  %2049 = vst [vmem:[%s151 + $0x54] sm:$0x1] %v2045
  %v2050 = vmul.f32 %v1962, %v160
  %v2051 = vmul.f32 %v1963, %v160
  %v2052 = vmul.f32 %v1964, %v160
  %v2053 = vmul.f32 %v1965, %v160
  %v2054 = vmul.f32 %v1968, %v170
  %v2055 = vmul.f32 %v1969, %v170
  %v2056 = vmul.f32 %v1970, %v170
  %v2057 = vmul.f32 %v1971, %v170
  %v2058 = vadd.f32 %v2050, %v2054
  %v2059 = vadd.f32 %v2051, %v2055
  %v2060 = vadd.f32 %v2052, %v2056
  %v2061 = vadd.f32 %v2053, %v2057
  %v2062 = vmul.f32 %v1974, %v184
  %v2063 = vmul.f32 %v1975, %v184
  %v2064 = vmul.f32 %v1976, %v184
  %v2065 = vmul.f32 %v1977, %v184
  %v2066 = vadd.f32 %v2058, %v2062
  %v2067 = vadd.f32 %v2059, %v2063
  %v2068 = vadd.f32 %v2060, %v2064
  %v2069 = vadd.f32 %v2061, %v2065
  %s2070 = scalar_lea.vmem %s3, 60
  %v2071 = vld [vmem:[%s2070] sm:$0x1]
  %v2073 = vlaneseq
  %v2074 = vshrl.u32 %v2073, 7
  %v2075 = vsub.s32 0, %v2074
  %v2076 = vrot.slane %v2071, %v2075
  %v2078 = vadd.f32 %v2066, %v2076
  %v2079 = vadd.f32 %v2067, %v2076
  %v2080 = vadd.f32 %v2068, %v2076
  %v2081 = vadd.f32 %v2069, %v2076
  %2082 = vst [vmem:[%s206 + $0xc] sm:$0x1] %v2078
  %2083 = vst [vmem:[%s206 + $0x24] sm:$0x1] %v2079
  %2084 = vst [vmem:[%s206 + $0x3c] sm:$0x1] %v2080
  %2085 = vst [vmem:[%s206 + $0x54] sm:$0x1] %v2081
  %s2086 = sadd.s32 %s1960, 288
  %s2087 = scalar_lea.vmem %s1, %s2086
  %v2088 = vld [vmem:[%s2087] sm:$0x1]
  %v2089 = vld [vmem:[%s2087 + $0x18] sm:$0x1]
  %v2090 = vld [vmem:[%s2087 + $0x30] sm:$0x1]
  %v2091 = vld [vmem:[%s2087 + $0x48] sm:$0x1]
  %2092 = vst [vmem:[%s217 + $0xc] sm:$0x1] %v2088
  %2093 = vst [vmem:[%s217 + $0x24] sm:$0x1] %v2089
  %2094 = vst [vmem:[%s217 + $0x3c] sm:$0x1] %v2090
  %2095 = vst [vmem:[%s217 + $0x54] sm:$0x1] %v2091
  %s2096 = sadd.s32 %s1960, 384
  %s2097 = scalar_lea.vmem %s1, %s2096
  %v2098 = vld [vmem:[%s2097] sm:$0x1]
  %v2099 = vld [vmem:[%s2097 + $0x18] sm:$0x1]
  %v2100 = vld [vmem:[%s2097 + $0x30] sm:$0x1]
  %v2101 = vld [vmem:[%s2097 + $0x48] sm:$0x1]
  %2102 = vst [vmem:[%s228 + $0xc] sm:$0x1] %v2098
  %2103 = vst [vmem:[%s228 + $0x24] sm:$0x1] %v2099
  %2104 = vst [vmem:[%s228 + $0x3c] sm:$0x1] %v2100
  %2105 = vst [vmem:[%s228 + $0x54] sm:$0x1] %v2101
  %s2106 = sadd.s32 %s1960, 480
  %s2107 = scalar_lea.vmem %s1, %s2106
  %v2108 = vld [vmem:[%s2107] sm:$0x1]
  %v2109 = vld [vmem:[%s2107 + $0x18] sm:$0x1]
  %v2110 = vld [vmem:[%s2107 + $0x30] sm:$0x1]
  %v2111 = vld [vmem:[%s2107 + $0x48] sm:$0x1]
  %2112 = vst [vmem:[%s239 + $0xc] sm:$0x1] %v2108
  %2113 = vst [vmem:[%s239 + $0x24] sm:$0x1] %v2109
  %2114 = vst [vmem:[%s239 + $0x3c] sm:$0x1] %v2110
  %2115 = vst [vmem:[%s239 + $0x54] sm:$0x1] %v2111
  %s2116 = sld [smem:[#allocation3 + $0xd]]
  %s2117 = scalar_lea.vmem %s1, %s2116
  %v2118 = vld [vmem:[%s2117] sm:$0x1]
  %v2119 = vld [vmem:[%s2117 + $0x18] sm:$0x1]
  %v2120 = vld [vmem:[%s2117 + $0x30] sm:$0x1]
  %v2121 = vld [vmem:[%s2117 + $0x48] sm:$0x1]
  %s2122 = sadd.s32 %s2116, 96
  %s2123 = scalar_lea.vmem %s1, %s2122
  %v2124 = vld [vmem:[%s2123] sm:$0x1]
  %v2125 = vld [vmem:[%s2123 + $0x18] sm:$0x1]
  %v2126 = vld [vmem:[%s2123 + $0x30] sm:$0x1]
  %v2127 = vld [vmem:[%s2123 + $0x48] sm:$0x1]
  %s2128 = sadd.s32 %s2116, 192
  %s2129 = scalar_lea.vmem %s1, %s2128
  %v2130 = vld [vmem:[%s2129] sm:$0x1]
  %v2131 = vld [vmem:[%s2129 + $0x18] sm:$0x1]
  %v2132 = vld [vmem:[%s2129 + $0x30] sm:$0x1]
  %v2133 = vld [vmem:[%s2129 + $0x48] sm:$0x1]
  %v2134 = vmul.f32 %v2118, %v52
  %v2135 = vmul.f32 %v2119, %v52
  %v2136 = vmul.f32 %v2120, %v52
  %v2137 = vmul.f32 %v2121, %v52
  %v2138 = vmul.f32 %v2124, %v62
  %v2139 = vmul.f32 %v2125, %v62
  %v2140 = vmul.f32 %v2126, %v62
  %v2141 = vmul.f32 %v2127, %v62
  %v2142 = vadd.f32 %v2134, %v2138
  %v2143 = vadd.f32 %v2135, %v2139
  %v2144 = vadd.f32 %v2136, %v2140
  %v2145 = vadd.f32 %v2137, %v2141
  %v2146 = vmul.f32 %v2130, %v76
  %v2147 = vmul.f32 %v2131, %v76
  %v2148 = vmul.f32 %v2132, %v76
  %v2149 = vmul.f32 %v2133, %v76
  %v2150 = vadd.f32 %v2142, %v2146
  %v2151 = vadd.f32 %v2143, %v2147
  %v2152 = vadd.f32 %v2144, %v2148
  %v2153 = vadd.f32 %v2145, %v2149
  %s2154 = scalar_lea.vmem %s3, 13
  %v2155 = vld [vmem:[%s2154] sm:$0x1]
  %v2157 = vlaneseq
  %v2158 = vshrl.u32 %v2157, 7
  %v2159 = vsub.s32 0, %v2158
  %v2160 = vrot.slane %v2155, %v2159
  %v2162 = vadd.f32 %v2150, %v2160
  %v2163 = vadd.f32 %v2151, %v2160
  %v2164 = vadd.f32 %v2152, %v2160
  %v2165 = vadd.f32 %v2153, %v2160
  %2166 = vst [vmem:[%s4 + $0xd] sm:$0x1] %v2162
  %2167 = vst [vmem:[%s4 + $0x25] sm:$0x1] %v2163
  %2168 = vst [vmem:[%s4 + $0x3d] sm:$0x1] %v2164
  %2169 = vst [vmem:[%s4 + $0x55] sm:$0x1] %v2165
  %v2170 = vmul.f32 %v2118, %v105
  %v2171 = vmul.f32 %v2119, %v105
  %v2172 = vmul.f32 %v2120, %v105
  %v2173 = vmul.f32 %v2121, %v105
  %v2174 = vmul.f32 %v2124, %v115
  %v2175 = vmul.f32 %v2125, %v115
  %v2176 = vmul.f32 %v2126, %v115
  %v2177 = vmul.f32 %v2127, %v115
  %v2178 = vadd.f32 %v2170, %v2174
  %v2179 = vadd.f32 %v2171, %v2175
  %v2180 = vadd.f32 %v2172, %v2176
  %v2181 = vadd.f32 %v2173, %v2177
  %v2182 = vmul.f32 %v2130, %v129
  %v2183 = vmul.f32 %v2131, %v129
  %v2184 = vmul.f32 %v2132, %v129
  %v2185 = vmul.f32 %v2133, %v129
  %v2186 = vadd.f32 %v2178, %v2182
  %v2187 = vadd.f32 %v2179, %v2183
  %v2188 = vadd.f32 %v2180, %v2184
  %v2189 = vadd.f32 %v2181, %v2185
  %s2190 = scalar_lea.vmem %s3, 37
  %v2191 = vld [vmem:[%s2190] sm:$0x1]
  %v2193 = vlaneseq
  %v2194 = vshrl.u32 %v2193, 7
  %v2195 = vsub.s32 0, %v2194
  %v2196 = vrot.slane %v2191, %v2195
  %v2198 = vadd.f32 %v2186, %v2196
  %v2199 = vadd.f32 %v2187, %v2196
  %v2200 = vadd.f32 %v2188, %v2196
  %v2201 = vadd.f32 %v2189, %v2196
  %2202 = vst [vmem:[%s151 + $0xd] sm:$0x1] %v2198
  %2203 = vst [vmem:[%s151 + $0x25] sm:$0x1] %v2199
  %2204 = vst [vmem:[%s151 + $0x3d] sm:$0x1] %v2200
  %2205 = vst [vmem:[%s151 + $0x55] sm:$0x1] %v2201
  %v2206 = vmul.f32 %v2118, %v160
  %v2207 = vmul.f32 %v2119, %v160
  %v2208 = vmul.f32 %v2120, %v160
  %v2209 = vmul.f32 %v2121, %v160
  %v2210 = vmul.f32 %v2124, %v170
  %v2211 = vmul.f32 %v2125, %v170
  %v2212 = vmul.f32 %v2126, %v170
  %v2213 = vmul.f32 %v2127, %v170
  %v2214 = vadd.f32 %v2206, %v2210
  %v2215 = vadd.f32 %v2207, %v2211
  %v2216 = vadd.f32 %v2208, %v2212
  %v2217 = vadd.f32 %v2209, %v2213
  %v2218 = vmul.f32 %v2130, %v184
  %v2219 = vmul.f32 %v2131, %v184
  %v2220 = vmul.f32 %v2132, %v184
  %v2221 = vmul.f32 %v2133, %v184
  %v2222 = vadd.f32 %v2214, %v2218
  %v2223 = vadd.f32 %v2215, %v2219
  %v2224 = vadd.f32 %v2216, %v2220
  %v2225 = vadd.f32 %v2217, %v2221
  %s2226 = scalar_lea.vmem %s3, 61
  %v2227 = vld [vmem:[%s2226] sm:$0x1]
  %v2229 = vlaneseq
  %v2230 = vshrl.u32 %v2229, 7
  %v2231 = vsub.s32 0, %v2230
  %v2232 = vrot.slane %v2227, %v2231
  %v2234 = vadd.f32 %v2222, %v2232
  %v2235 = vadd.f32 %v2223, %v2232
  %v2236 = vadd.f32 %v2224, %v2232
  %v2237 = vadd.f32 %v2225, %v2232
  %2238 = vst [vmem:[%s206 + $0xd] sm:$0x1] %v2234
  %2239 = vst [vmem:[%s206 + $0x25] sm:$0x1] %v2235
  %2240 = vst [vmem:[%s206 + $0x3d] sm:$0x1] %v2236
  %2241 = vst [vmem:[%s206 + $0x55] sm:$0x1] %v2237
  %s2242 = sadd.s32 %s2116, 288
  %s2243 = scalar_lea.vmem %s1, %s2242
  %v2244 = vld [vmem:[%s2243] sm:$0x1]
  %v2245 = vld [vmem:[%s2243 + $0x18] sm:$0x1]
  %v2246 = vld [vmem:[%s2243 + $0x30] sm:$0x1]
  %v2247 = vld [vmem:[%s2243 + $0x48] sm:$0x1]
  %2248 = vst [vmem:[%s217 + $0xd] sm:$0x1] %v2244
  %2249 = vst [vmem:[%s217 + $0x25] sm:$0x1] %v2245
  %2250 = vst [vmem:[%s217 + $0x3d] sm:$0x1] %v2246
  %2251 = vst [vmem:[%s217 + $0x55] sm:$0x1] %v2247
  %s2252 = sadd.s32 %s2116, 384
  %s2253 = scalar_lea.vmem %s1, %s2252
  %v2254 = vld [vmem:[%s2253] sm:$0x1]
  %v2255 = vld [vmem:[%s2253 + $0x18] sm:$0x1]
  %v2256 = vld [vmem:[%s2253 + $0x30] sm:$0x1]
  %v2257 = vld [vmem:[%s2253 + $0x48] sm:$0x1]
  %2258 = vst [vmem:[%s228 + $0xd] sm:$0x1] %v2254
  %2259 = vst [vmem:[%s228 + $0x25] sm:$0x1] %v2255
  %2260 = vst [vmem:[%s228 + $0x3d] sm:$0x1] %v2256
  %2261 = vst [vmem:[%s228 + $0x55] sm:$0x1] %v2257
  %s2262 = sadd.s32 %s2116, 480
  %s2263 = scalar_lea.vmem %s1, %s2262
  %v2264 = vld [vmem:[%s2263] sm:$0x1]
  %v2265 = vld [vmem:[%s2263 + $0x18] sm:$0x1]
  %v2266 = vld [vmem:[%s2263 + $0x30] sm:$0x1]
  %v2267 = vld [vmem:[%s2263 + $0x48] sm:$0x1]
  %2268 = vst [vmem:[%s239 + $0xd] sm:$0x1] %v2264
  %2269 = vst [vmem:[%s239 + $0x25] sm:$0x1] %v2265
  %2270 = vst [vmem:[%s239 + $0x3d] sm:$0x1] %v2266
  %2271 = vst [vmem:[%s239 + $0x55] sm:$0x1] %v2267
  %s2272 = sld [smem:[#allocation3 + $0xe]]
  %s2273 = scalar_lea.vmem %s1, %s2272
  %v2274 = vld [vmem:[%s2273] sm:$0x1]
  %v2275 = vld [vmem:[%s2273 + $0x18] sm:$0x1]
  %v2276 = vld [vmem:[%s2273 + $0x30] sm:$0x1]
  %v2277 = vld [vmem:[%s2273 + $0x48] sm:$0x1]
  %s2278 = sadd.s32 %s2272, 96
  %s2279 = scalar_lea.vmem %s1, %s2278
  %v2280 = vld [vmem:[%s2279] sm:$0x1]
  %v2281 = vld [vmem:[%s2279 + $0x18] sm:$0x1]
  %v2282 = vld [vmem:[%s2279 + $0x30] sm:$0x1]
  %v2283 = vld [vmem:[%s2279 + $0x48] sm:$0x1]
  %s2284 = sadd.s32 %s2272, 192
  %s2285 = scalar_lea.vmem %s1, %s2284
  %v2286 = vld [vmem:[%s2285] sm:$0x1]
  %v2287 = vld [vmem:[%s2285 + $0x18] sm:$0x1]
  %v2288 = vld [vmem:[%s2285 + $0x30] sm:$0x1]
  %v2289 = vld [vmem:[%s2285 + $0x48] sm:$0x1]
  %v2290 = vmul.f32 %v2274, %v52
  %v2291 = vmul.f32 %v2275, %v52
  %v2292 = vmul.f32 %v2276, %v52
  %v2293 = vmul.f32 %v2277, %v52
  %v2294 = vmul.f32 %v2280, %v62
  %v2295 = vmul.f32 %v2281, %v62
  %v2296 = vmul.f32 %v2282, %v62
  %v2297 = vmul.f32 %v2283, %v62
  %v2298 = vadd.f32 %v2290, %v2294
  %v2299 = vadd.f32 %v2291, %v2295
  %v2300 = vadd.f32 %v2292, %v2296
  %v2301 = vadd.f32 %v2293, %v2297
  %v2302 = vmul.f32 %v2286, %v76
  %v2303 = vmul.f32 %v2287, %v76
  %v2304 = vmul.f32 %v2288, %v76
  %v2305 = vmul.f32 %v2289, %v76
  %v2306 = vadd.f32 %v2298, %v2302
  %v2307 = vadd.f32 %v2299, %v2303
  %v2308 = vadd.f32 %v2300, %v2304
  %v2309 = vadd.f32 %v2301, %v2305
  %s2310 = scalar_lea.vmem %s3, 14
  %v2311 = vld [vmem:[%s2310] sm:$0x1]
  %v2313 = vlaneseq
  %v2314 = vshrl.u32 %v2313, 7
  %v2315 = vsub.s32 0, %v2314
  %v2316 = vrot.slane %v2311, %v2315
  %v2318 = vadd.f32 %v2306, %v2316
  %v2319 = vadd.f32 %v2307, %v2316
  %v2320 = vadd.f32 %v2308, %v2316
  %v2321 = vadd.f32 %v2309, %v2316
  %2322 = vst [vmem:[%s4 + $0xe] sm:$0x1] %v2318
  %2323 = vst [vmem:[%s4 + $0x26] sm:$0x1] %v2319
  %2324 = vst [vmem:[%s4 + $0x3e] sm:$0x1] %v2320
  %2325 = vst [vmem:[%s4 + $0x56] sm:$0x1] %v2321
  %v2326 = vmul.f32 %v2274, %v105
  %v2327 = vmul.f32 %v2275, %v105
  %v2328 = vmul.f32 %v2276, %v105
  %v2329 = vmul.f32 %v2277, %v105
  %v2330 = vmul.f32 %v2280, %v115
  %v2331 = vmul.f32 %v2281, %v115
  %v2332 = vmul.f32 %v2282, %v115
  %v2333 = vmul.f32 %v2283, %v115
  %v2334 = vadd.f32 %v2326, %v2330
  %v2335 = vadd.f32 %v2327, %v2331
  %v2336 = vadd.f32 %v2328, %v2332
  %v2337 = vadd.f32 %v2329, %v2333
  %v2338 = vmul.f32 %v2286, %v129
  %v2339 = vmul.f32 %v2287, %v129
  %v2340 = vmul.f32 %v2288, %v129
  %v2341 = vmul.f32 %v2289, %v129
  %v2342 = vadd.f32 %v2334, %v2338
  %v2343 = vadd.f32 %v2335, %v2339
  %v2344 = vadd.f32 %v2336, %v2340
  %v2345 = vadd.f32 %v2337, %v2341
  %s2346 = scalar_lea.vmem %s3, 38
  %v2347 = vld [vmem:[%s2346] sm:$0x1]
  %v2349 = vlaneseq
  %v2350 = vshrl.u32 %v2349, 7
  %v2351 = vsub.s32 0, %v2350
  %v2352 = vrot.slane %v2347, %v2351
  %v2354 = vadd.f32 %v2342, %v2352
  %v2355 = vadd.f32 %v2343, %v2352
  %v2356 = vadd.f32 %v2344, %v2352
  %v2357 = vadd.f32 %v2345, %v2352
  %2358 = vst [vmem:[%s151 + $0xe] sm:$0x1] %v2354
  %2359 = vst [vmem:[%s151 + $0x26] sm:$0x1] %v2355
  %2360 = vst [vmem:[%s151 + $0x3e] sm:$0x1] %v2356
  %2361 = vst [vmem:[%s151 + $0x56] sm:$0x1] %v2357
  %v2362 = vmul.f32 %v2274, %v160
  %v2363 = vmul.f32 %v2275, %v160
  %v2364 = vmul.f32 %v2276, %v160
  %v2365 = vmul.f32 %v2277, %v160
  %v2366 = vmul.f32 %v2280, %v170
  %v2367 = vmul.f32 %v2281, %v170
  %v2368 = vmul.f32 %v2282, %v170
  %v2369 = vmul.f32 %v2283, %v170
  %v2370 = vadd.f32 %v2362, %v2366
  %v2371 = vadd.f32 %v2363, %v2367
  %v2372 = vadd.f32 %v2364, %v2368
  %v2373 = vadd.f32 %v2365, %v2369
  %v2374 = vmul.f32 %v2286, %v184
  %v2375 = vmul.f32 %v2287, %v184
  %v2376 = vmul.f32 %v2288, %v184
  %v2377 = vmul.f32 %v2289, %v184
  %v2378 = vadd.f32 %v2370, %v2374
  %v2379 = vadd.f32 %v2371, %v2375
  %v2380 = vadd.f32 %v2372, %v2376
  %v2381 = vadd.f32 %v2373, %v2377
  %s2382 = scalar_lea.vmem %s3, 62
  %v2383 = vld [vmem:[%s2382] sm:$0x1]
  %v2385 = vlaneseq
  %v2386 = vshrl.u32 %v2385, 7
  %v2387 = vsub.s32 0, %v2386
  %v2388 = vrot.slane %v2383, %v2387
  %v2390 = vadd.f32 %v2378, %v2388
  %v2391 = vadd.f32 %v2379, %v2388
  %v2392 = vadd.f32 %v2380, %v2388
  %v2393 = vadd.f32 %v2381, %v2388
  %2394 = vst [vmem:[%s206 + $0xe] sm:$0x1] %v2390
  %2395 = vst [vmem:[%s206 + $0x26] sm:$0x1] %v2391
  %2396 = vst [vmem:[%s206 + $0x3e] sm:$0x1] %v2392
  %2397 = vst [vmem:[%s206 + $0x56] sm:$0x1] %v2393
  %s2398 = sadd.s32 %s2272, 288
  %s2399 = scalar_lea.vmem %s1, %s2398
  %v2400 = vld [vmem:[%s2399] sm:$0x1]
  %v2401 = vld [vmem:[%s2399 + $0x18] sm:$0x1]
  %v2402 = vld [vmem:[%s2399 + $0x30] sm:$0x1]
  %v2403 = vld [vmem:[%s2399 + $0x48] sm:$0x1]
  %2404 = vst [vmem:[%s217 + $0xe] sm:$0x1] %v2400
  %2405 = vst [vmem:[%s217 + $0x26] sm:$0x1] %v2401
  %2406 = vst [vmem:[%s217 + $0x3e] sm:$0x1] %v2402
  %2407 = vst [vmem:[%s217 + $0x56] sm:$0x1] %v2403
  %s2408 = sadd.s32 %s2272, 384
  %s2409 = scalar_lea.vmem %s1, %s2408
  %v2410 = vld [vmem:[%s2409] sm:$0x1]
  %v2411 = vld [vmem:[%s2409 + $0x18] sm:$0x1]
  %v2412 = vld [vmem:[%s2409 + $0x30] sm:$0x1]
  %v2413 = vld [vmem:[%s2409 + $0x48] sm:$0x1]
  %2414 = vst [vmem:[%s228 + $0xe] sm:$0x1] %v2410
  %2415 = vst [vmem:[%s228 + $0x26] sm:$0x1] %v2411
  %2416 = vst [vmem:[%s228 + $0x3e] sm:$0x1] %v2412
  %2417 = vst [vmem:[%s228 + $0x56] sm:$0x1] %v2413
  %s2418 = sadd.s32 %s2272, 480
  %s2419 = scalar_lea.vmem %s1, %s2418
  %v2420 = vld [vmem:[%s2419] sm:$0x1]
  %v2421 = vld [vmem:[%s2419 + $0x18] sm:$0x1]
  %v2422 = vld [vmem:[%s2419 + $0x30] sm:$0x1]
  %v2423 = vld [vmem:[%s2419 + $0x48] sm:$0x1]
  %2424 = vst [vmem:[%s239 + $0xe] sm:$0x1] %v2420
  %2425 = vst [vmem:[%s239 + $0x26] sm:$0x1] %v2421
  %2426 = vst [vmem:[%s239 + $0x3e] sm:$0x1] %v2422
  %2427 = vst [vmem:[%s239 + $0x56] sm:$0x1] %v2423
  %s2428 = sld [smem:[#allocation3 + $0xf]]
  %s2429 = scalar_lea.vmem %s1, %s2428
  %v2430 = vld [vmem:[%s2429] sm:$0x1]
  %v2431 = vld [vmem:[%s2429 + $0x18] sm:$0x1]
  %v2432 = vld [vmem:[%s2429 + $0x30] sm:$0x1]
  %v2433 = vld [vmem:[%s2429 + $0x48] sm:$0x1]
  %s2434 = sadd.s32 %s2428, 96
  %s2435 = scalar_lea.vmem %s1, %s2434
  %v2436 = vld [vmem:[%s2435] sm:$0x1]
  %v2437 = vld [vmem:[%s2435 + $0x18] sm:$0x1]
  %v2438 = vld [vmem:[%s2435 + $0x30] sm:$0x1]
  %v2439 = vld [vmem:[%s2435 + $0x48] sm:$0x1]
  %s2440 = sadd.s32 %s2428, 192
  %s2441 = scalar_lea.vmem %s1, %s2440
  %v2442 = vld [vmem:[%s2441] sm:$0x1]
  %v2443 = vld [vmem:[%s2441 + $0x18] sm:$0x1]
  %v2444 = vld [vmem:[%s2441 + $0x30] sm:$0x1]
  %v2445 = vld [vmem:[%s2441 + $0x48] sm:$0x1]
  %v2446 = vmul.f32 %v2430, %v52
  %v2447 = vmul.f32 %v2431, %v52
  %v2448 = vmul.f32 %v2432, %v52
  %v2449 = vmul.f32 %v2433, %v52
  %v2450 = vmul.f32 %v2436, %v62
  %v2451 = vmul.f32 %v2437, %v62
  %v2452 = vmul.f32 %v2438, %v62
  %v2453 = vmul.f32 %v2439, %v62
  %v2454 = vadd.f32 %v2446, %v2450
  %v2455 = vadd.f32 %v2447, %v2451
  %v2456 = vadd.f32 %v2448, %v2452
  %v2457 = vadd.f32 %v2449, %v2453
  %v2458 = vmul.f32 %v2442, %v76
  %v2459 = vmul.f32 %v2443, %v76
  %v2460 = vmul.f32 %v2444, %v76
  %v2461 = vmul.f32 %v2445, %v76
  %v2462 = vadd.f32 %v2454, %v2458
  %v2463 = vadd.f32 %v2455, %v2459
  %v2464 = vadd.f32 %v2456, %v2460
  %v2465 = vadd.f32 %v2457, %v2461
  %s2466 = scalar_lea.vmem %s3, 15
  %v2467 = vld [vmem:[%s2466] sm:$0x1]
  %v2469 = vlaneseq
  %v2470 = vshrl.u32 %v2469, 7
  %v2471 = vsub.s32 0, %v2470
  %v2472 = vrot.slane %v2467, %v2471
  %v2474 = vadd.f32 %v2462, %v2472
  %v2475 = vadd.f32 %v2463, %v2472
  %v2476 = vadd.f32 %v2464, %v2472
  %v2477 = vadd.f32 %v2465, %v2472
  %2478 = vst [vmem:[%s4 + $0xf] sm:$0x1] %v2474
  %2479 = vst [vmem:[%s4 + $0x27] sm:$0x1] %v2475
  %2480 = vst [vmem:[%s4 + $0x3f] sm:$0x1] %v2476
  %2481 = vst [vmem:[%s4 + $0x57] sm:$0x1] %v2477
  %v2482 = vmul.f32 %v2430, %v105
  %v2483 = vmul.f32 %v2431, %v105
  %v2484 = vmul.f32 %v2432, %v105
  %v2485 = vmul.f32 %v2433, %v105
  %v2486 = vmul.f32 %v2436, %v115
  %v2487 = vmul.f32 %v2437, %v115
  %v2488 = vmul.f32 %v2438, %v115
  %v2489 = vmul.f32 %v2439, %v115
  %v2490 = vadd.f32 %v2482, %v2486
  %v2491 = vadd.f32 %v2483, %v2487
  %v2492 = vadd.f32 %v2484, %v2488
  %v2493 = vadd.f32 %v2485, %v2489
  %v2494 = vmul.f32 %v2442, %v129
  %v2495 = vmul.f32 %v2443, %v129
  %v2496 = vmul.f32 %v2444, %v129
  %v2497 = vmul.f32 %v2445, %v129
  %v2498 = vadd.f32 %v2490, %v2494
  %v2499 = vadd.f32 %v2491, %v2495
  %v2500 = vadd.f32 %v2492, %v2496
  %v2501 = vadd.f32 %v2493, %v2497
  %s2502 = scalar_lea.vmem %s3, 39
  %v2503 = vld [vmem:[%s2502] sm:$0x1]
  %v2505 = vlaneseq
  %v2506 = vshrl.u32 %v2505, 7
  %v2507 = vsub.s32 0, %v2506
  %v2508 = vrot.slane %v2503, %v2507
  %v2510 = vadd.f32 %v2498, %v2508
  %v2511 = vadd.f32 %v2499, %v2508
  %v2512 = vadd.f32 %v2500, %v2508
  %v2513 = vadd.f32 %v2501, %v2508
  %2514 = vst [vmem:[%s151 + $0xf] sm:$0x1] %v2510
  %2515 = vst [vmem:[%s151 + $0x27] sm:$0x1] %v2511
  %2516 = vst [vmem:[%s151 + $0x3f] sm:$0x1] %v2512
  %2517 = vst [vmem:[%s151 + $0x57] sm:$0x1] %v2513
  %v2518 = vmul.f32 %v2430, %v160
  %v2519 = vmul.f32 %v2431, %v160
  %v2520 = vmul.f32 %v2432, %v160
  %v2521 = vmul.f32 %v2433, %v160
  %v2522 = vmul.f32 %v2436, %v170
  %v2523 = vmul.f32 %v2437, %v170
  %v2524 = vmul.f32 %v2438, %v170
  %v2525 = vmul.f32 %v2439, %v170
  %v2526 = vadd.f32 %v2518, %v2522
  %v2527 = vadd.f32 %v2519, %v2523
  %v2528 = vadd.f32 %v2520, %v2524
  %v2529 = vadd.f32 %v2521, %v2525
  %v2530 = vmul.f32 %v2442, %v184
  %v2531 = vmul.f32 %v2443, %v184
  %v2532 = vmul.f32 %v2444, %v184
  %v2533 = vmul.f32 %v2445, %v184
  %v2534 = vadd.f32 %v2526, %v2530
  %v2535 = vadd.f32 %v2527, %v2531
  %v2536 = vadd.f32 %v2528, %v2532
  %v2537 = vadd.f32 %v2529, %v2533
  %s2538 = scalar_lea.vmem %s3, 63
  %v2539 = vld [vmem:[%s2538] sm:$0x1]
  %v2541 = vlaneseq
  %v2542 = vshrl.u32 %v2541, 7
  %v2543 = vsub.s32 0, %v2542
  %v2544 = vrot.slane %v2539, %v2543
  %v2546 = vadd.f32 %v2534, %v2544
  %v2547 = vadd.f32 %v2535, %v2544
  %v2548 = vadd.f32 %v2536, %v2544
  %v2549 = vadd.f32 %v2537, %v2544
  %2550 = vst [vmem:[%s206 + $0xf] sm:$0x1] %v2546
  %2551 = vst [vmem:[%s206 + $0x27] sm:$0x1] %v2547
  %2552 = vst [vmem:[%s206 + $0x3f] sm:$0x1] %v2548
  %2553 = vst [vmem:[%s206 + $0x57] sm:$0x1] %v2549
  %s2554 = sadd.s32 %s2428, 288
  %s2555 = scalar_lea.vmem %s1, %s2554
  %v2556 = vld [vmem:[%s2555] sm:$0x1]
  %v2557 = vld [vmem:[%s2555 + $0x18] sm:$0x1]
  %v2558 = vld [vmem:[%s2555 + $0x30] sm:$0x1]
  %v2559 = vld [vmem:[%s2555 + $0x48] sm:$0x1]
  %2560 = vst [vmem:[%s217 + $0xf] sm:$0x1] %v2556
  %2561 = vst [vmem:[%s217 + $0x27] sm:$0x1] %v2557
  %2562 = vst [vmem:[%s217 + $0x3f] sm:$0x1] %v2558
  %2563 = vst [vmem:[%s217 + $0x57] sm:$0x1] %v2559
  %s2564 = sadd.s32 %s2428, 384
  %s2565 = scalar_lea.vmem %s1, %s2564
  %v2566 = vld [vmem:[%s2565] sm:$0x1]
  %v2567 = vld [vmem:[%s2565 + $0x18] sm:$0x1]
  %v2568 = vld [vmem:[%s2565 + $0x30] sm:$0x1]
  %v2569 = vld [vmem:[%s2565 + $0x48] sm:$0x1]
  %2570 = vst [vmem:[%s228 + $0xf] sm:$0x1] %v2566
  %2571 = vst [vmem:[%s228 + $0x27] sm:$0x1] %v2567
  %2572 = vst [vmem:[%s228 + $0x3f] sm:$0x1] %v2568
  %2573 = vst [vmem:[%s228 + $0x57] sm:$0x1] %v2569
  %s2574 = sadd.s32 %s2428, 480
  %s2575 = scalar_lea.vmem %s1, %s2574
  %v2576 = vld [vmem:[%s2575] sm:$0x1]
  %v2577 = vld [vmem:[%s2575 + $0x18] sm:$0x1]
  %v2578 = vld [vmem:[%s2575 + $0x30] sm:$0x1]
  %v2579 = vld [vmem:[%s2575 + $0x48] sm:$0x1]
  %2580 = vst [vmem:[%s239 + $0xf] sm:$0x1] %v2576
  %2581 = vst [vmem:[%s239 + $0x27] sm:$0x1] %v2577
  %2582 = vst [vmem:[%s239 + $0x3f] sm:$0x1] %v2578
  %2583 = vst [vmem:[%s239 + $0x57] sm:$0x1] %v2579
  %s2584 = sld [smem:[#allocation3 + $0x10]]
  %s2585 = scalar_lea.vmem %s1, %s2584
  %v2586 = vld [vmem:[%s2585] sm:$0x1]
  %v2587 = vld [vmem:[%s2585 + $0x18] sm:$0x1]
  %v2588 = vld [vmem:[%s2585 + $0x30] sm:$0x1]
  %v2589 = vld [vmem:[%s2585 + $0x48] sm:$0x1]
  %s2590 = sadd.s32 %s2584, 96
  %s2591 = scalar_lea.vmem %s1, %s2590
  %v2592 = vld [vmem:[%s2591] sm:$0x1]
  %v2593 = vld [vmem:[%s2591 + $0x18] sm:$0x1]
  %v2594 = vld [vmem:[%s2591 + $0x30] sm:$0x1]
  %v2595 = vld [vmem:[%s2591 + $0x48] sm:$0x1]
  %s2596 = sadd.s32 %s2584, 192
  %s2597 = scalar_lea.vmem %s1, %s2596
  %v2598 = vld [vmem:[%s2597] sm:$0x1]
  %v2599 = vld [vmem:[%s2597 + $0x18] sm:$0x1]
  %v2600 = vld [vmem:[%s2597 + $0x30] sm:$0x1]
  %v2601 = vld [vmem:[%s2597 + $0x48] sm:$0x1]
  %v2602 = vmul.f32 %v2586, %v52
  %v2603 = vmul.f32 %v2587, %v52
  %v2604 = vmul.f32 %v2588, %v52
  %v2605 = vmul.f32 %v2589, %v52
  %v2606 = vmul.f32 %v2592, %v62
  %v2607 = vmul.f32 %v2593, %v62
  %v2608 = vmul.f32 %v2594, %v62
  %v2609 = vmul.f32 %v2595, %v62
  %v2610 = vadd.f32 %v2602, %v2606
  %v2611 = vadd.f32 %v2603, %v2607
  %v2612 = vadd.f32 %v2604, %v2608
  %v2613 = vadd.f32 %v2605, %v2609
  %v2614 = vmul.f32 %v2598, %v76
  %v2615 = vmul.f32 %v2599, %v76
  %v2616 = vmul.f32 %v2600, %v76
  %v2617 = vmul.f32 %v2601, %v76
  %v2618 = vadd.f32 %v2610, %v2614
  %v2619 = vadd.f32 %v2611, %v2615
  %v2620 = vadd.f32 %v2612, %v2616
  %v2621 = vadd.f32 %v2613, %v2617
  %s2622 = scalar_lea.vmem %s3, 16
  %v2623 = vld [vmem:[%s2622] sm:$0x1]
  %v2625 = vlaneseq
  %v2626 = vshrl.u32 %v2625, 7
  %v2627 = vsub.s32 0, %v2626
  %v2628 = vrot.slane %v2623, %v2627
  %v2630 = vadd.f32 %v2618, %v2628
  %v2631 = vadd.f32 %v2619, %v2628
  %v2632 = vadd.f32 %v2620, %v2628
  %v2633 = vadd.f32 %v2621, %v2628
  %2634 = vst [vmem:[%s4 + $0x10] sm:$0x1] %v2630
  %2635 = vst [vmem:[%s4 + $0x28] sm:$0x1] %v2631
  %2636 = vst [vmem:[%s4 + $0x40] sm:$0x1] %v2632
  %2637 = vst [vmem:[%s4 + $0x58] sm:$0x1] %v2633
  %v2638 = vmul.f32 %v2586, %v105
  %v2639 = vmul.f32 %v2587, %v105
  %v2640 = vmul.f32 %v2588, %v105
  %v2641 = vmul.f32 %v2589, %v105
  %v2642 = vmul.f32 %v2592, %v115
  %v2643 = vmul.f32 %v2593, %v115
  %v2644 = vmul.f32 %v2594, %v115
  %v2645 = vmul.f32 %v2595, %v115
  %v2646 = vadd.f32 %v2638, %v2642
  %v2647 = vadd.f32 %v2639, %v2643
  %v2648 = vadd.f32 %v2640, %v2644
  %v2649 = vadd.f32 %v2641, %v2645
  %v2650 = vmul.f32 %v2598, %v129
  %v2651 = vmul.f32 %v2599, %v129
  %v2652 = vmul.f32 %v2600, %v129
  %v2653 = vmul.f32 %v2601, %v129
  %v2654 = vadd.f32 %v2646, %v2650
  %v2655 = vadd.f32 %v2647, %v2651
  %v2656 = vadd.f32 %v2648, %v2652
  %v2657 = vadd.f32 %v2649, %v2653
  %s2658 = scalar_lea.vmem %s3, 40
  %v2659 = vld [vmem:[%s2658] sm:$0x1]
  %v2661 = vlaneseq
  %v2662 = vshrl.u32 %v2661, 7
  %v2663 = vsub.s32 0, %v2662
  %v2664 = vrot.slane %v2659, %v2663
  %v2666 = vadd.f32 %v2654, %v2664
  %v2667 = vadd.f32 %v2655, %v2664
  %v2668 = vadd.f32 %v2656, %v2664
  %v2669 = vadd.f32 %v2657, %v2664
  %2670 = vst [vmem:[%s151 + $0x10] sm:$0x1] %v2666
  %2671 = vst [vmem:[%s151 + $0x28] sm:$0x1] %v2667
  %2672 = vst [vmem:[%s151 + $0x40] sm:$0x1] %v2668
  %2673 = vst [vmem:[%s151 + $0x58] sm:$0x1] %v2669
  %v2674 = vmul.f32 %v2586, %v160
  %v2675 = vmul.f32 %v2587, %v160
  %v2676 = vmul.f32 %v2588, %v160
  %v2677 = vmul.f32 %v2589, %v160
  %v2678 = vmul.f32 %v2592, %v170
  %v2679 = vmul.f32 %v2593, %v170
  %v2680 = vmul.f32 %v2594, %v170
  %v2681 = vmul.f32 %v2595, %v170
  %v2682 = vadd.f32 %v2674, %v2678
  %v2683 = vadd.f32 %v2675, %v2679
  %v2684 = vadd.f32 %v2676, %v2680
  %v2685 = vadd.f32 %v2677, %v2681
  %v2686 = vmul.f32 %v2598, %v184
  %v2687 = vmul.f32 %v2599, %v184
  %v2688 = vmul.f32 %v2600, %v184
  %v2689 = vmul.f32 %v2601, %v184
  %v2690 = vadd.f32 %v2682, %v2686
  %v2691 = vadd.f32 %v2683, %v2687
  %v2692 = vadd.f32 %v2684, %v2688
  %v2693 = vadd.f32 %v2685, %v2689
  %s2694 = scalar_lea.vmem %s3, 64
  %v2695 = vld [vmem:[%s2694] sm:$0x1]
  %v2697 = vlaneseq
  %v2698 = vshrl.u32 %v2697, 7
  %v2699 = vsub.s32 0, %v2698
  %v2700 = vrot.slane %v2695, %v2699
  %v2702 = vadd.f32 %v2690, %v2700
  %v2703 = vadd.f32 %v2691, %v2700
  %v2704 = vadd.f32 %v2692, %v2700
  %v2705 = vadd.f32 %v2693, %v2700
  %2706 = vst [vmem:[%s206 + $0x10] sm:$0x1] %v2702
  %2707 = vst [vmem:[%s206 + $0x28] sm:$0x1] %v2703
  %2708 = vst [vmem:[%s206 + $0x40] sm:$0x1] %v2704
  %2709 = vst [vmem:[%s206 + $0x58] sm:$0x1] %v2705
  %s2710 = sadd.s32 %s2584, 288
  %s2711 = scalar_lea.vmem %s1, %s2710
  %v2712 = vld [vmem:[%s2711] sm:$0x1]
  %v2713 = vld [vmem:[%s2711 + $0x18] sm:$0x1]
  %v2714 = vld [vmem:[%s2711 + $0x30] sm:$0x1]
  %v2715 = vld [vmem:[%s2711 + $0x48] sm:$0x1]
  %2716 = vst [vmem:[%s217 + $0x10] sm:$0x1] %v2712
  %2717 = vst [vmem:[%s217 + $0x28] sm:$0x1] %v2713
  %2718 = vst [vmem:[%s217 + $0x40] sm:$0x1] %v2714
  %2719 = vst [vmem:[%s217 + $0x58] sm:$0x1] %v2715
  %s2720 = sadd.s32 %s2584, 384
  %s2721 = scalar_lea.vmem %s1, %s2720
  %v2722 = vld [vmem:[%s2721] sm:$0x1]
  %v2723 = vld [vmem:[%s2721 + $0x18] sm:$0x1]
  %v2724 = vld [vmem:[%s2721 + $0x30] sm:$0x1]
  %v2725 = vld [vmem:[%s2721 + $0x48] sm:$0x1]
  %2726 = vst [vmem:[%s228 + $0x10] sm:$0x1] %v2722
  %2727 = vst [vmem:[%s228 + $0x28] sm:$0x1] %v2723
  %2728 = vst [vmem:[%s228 + $0x40] sm:$0x1] %v2724
  %2729 = vst [vmem:[%s228 + $0x58] sm:$0x1] %v2725
  %s2730 = sadd.s32 %s2584, 480
  %s2731 = scalar_lea.vmem %s1, %s2730
  %v2732 = vld [vmem:[%s2731] sm:$0x1]
  %v2733 = vld [vmem:[%s2731 + $0x18] sm:$0x1]
  %v2734 = vld [vmem:[%s2731 + $0x30] sm:$0x1]
  %v2735 = vld [vmem:[%s2731 + $0x48] sm:$0x1]
  %2736 = vst [vmem:[%s239 + $0x10] sm:$0x1] %v2732
  %2737 = vst [vmem:[%s239 + $0x28] sm:$0x1] %v2733
  %2738 = vst [vmem:[%s239 + $0x40] sm:$0x1] %v2734
  %2739 = vst [vmem:[%s239 + $0x58] sm:$0x1] %v2735
  %s2740 = sld [smem:[#allocation3 + $0x11]]
  %s2741 = scalar_lea.vmem %s1, %s2740
  %v2742 = vld [vmem:[%s2741] sm:$0x1]
  %v2743 = vld [vmem:[%s2741 + $0x18] sm:$0x1]
  %v2744 = vld [vmem:[%s2741 + $0x30] sm:$0x1]
  %v2745 = vld [vmem:[%s2741 + $0x48] sm:$0x1]
  %s2746 = sadd.s32 %s2740, 96
  %s2747 = scalar_lea.vmem %s1, %s2746
  %v2748 = vld [vmem:[%s2747] sm:$0x1]
  %v2749 = vld [vmem:[%s2747 + $0x18] sm:$0x1]
  %v2750 = vld [vmem:[%s2747 + $0x30] sm:$0x1]
  %v2751 = vld [vmem:[%s2747 + $0x48] sm:$0x1]
  %s2752 = sadd.s32 %s2740, 192
  %s2753 = scalar_lea.vmem %s1, %s2752
  %v2754 = vld [vmem:[%s2753] sm:$0x1]
  %v2755 = vld [vmem:[%s2753 + $0x18] sm:$0x1]
  %v2756 = vld [vmem:[%s2753 + $0x30] sm:$0x1]
  %v2757 = vld [vmem:[%s2753 + $0x48] sm:$0x1]
  %v2758 = vmul.f32 %v2742, %v52
  %v2759 = vmul.f32 %v2743, %v52
  %v2760 = vmul.f32 %v2744, %v52
  %v2761 = vmul.f32 %v2745, %v52
  %v2762 = vmul.f32 %v2748, %v62
  %v2763 = vmul.f32 %v2749, %v62
  %v2764 = vmul.f32 %v2750, %v62
  %v2765 = vmul.f32 %v2751, %v62
  %v2766 = vadd.f32 %v2758, %v2762
  %v2767 = vadd.f32 %v2759, %v2763
  %v2768 = vadd.f32 %v2760, %v2764
  %v2769 = vadd.f32 %v2761, %v2765
  %v2770 = vmul.f32 %v2754, %v76
  %v2771 = vmul.f32 %v2755, %v76
  %v2772 = vmul.f32 %v2756, %v76
  %v2773 = vmul.f32 %v2757, %v76
  %v2774 = vadd.f32 %v2766, %v2770
  %v2775 = vadd.f32 %v2767, %v2771
  %v2776 = vadd.f32 %v2768, %v2772
  %v2777 = vadd.f32 %v2769, %v2773
  %s2778 = scalar_lea.vmem %s3, 17
  %v2779 = vld [vmem:[%s2778] sm:$0x1]
  %v2781 = vlaneseq
  %v2782 = vshrl.u32 %v2781, 7
  %v2783 = vsub.s32 0, %v2782
  %v2784 = vrot.slane %v2779, %v2783
  %v2786 = vadd.f32 %v2774, %v2784
  %v2787 = vadd.f32 %v2775, %v2784
  %v2788 = vadd.f32 %v2776, %v2784
  %v2789 = vadd.f32 %v2777, %v2784
  %2790 = vst [vmem:[%s4 + $0x11] sm:$0x1] %v2786
  %2791 = vst [vmem:[%s4 + $0x29] sm:$0x1] %v2787
  %2792 = vst [vmem:[%s4 + $0x41] sm:$0x1] %v2788
  %2793 = vst [vmem:[%s4 + $0x59] sm:$0x1] %v2789
  %v2794 = vmul.f32 %v2742, %v105
  %v2795 = vmul.f32 %v2743, %v105
  %v2796 = vmul.f32 %v2744, %v105
  %v2797 = vmul.f32 %v2745, %v105
  %v2798 = vmul.f32 %v2748, %v115
  %v2799 = vmul.f32 %v2749, %v115
  %v2800 = vmul.f32 %v2750, %v115
  %v2801 = vmul.f32 %v2751, %v115
  %v2802 = vadd.f32 %v2794, %v2798
  %v2803 = vadd.f32 %v2795, %v2799
  %v2804 = vadd.f32 %v2796, %v2800
  %v2805 = vadd.f32 %v2797, %v2801
  %v2806 = vmul.f32 %v2754, %v129
  %v2807 = vmul.f32 %v2755, %v129
  %v2808 = vmul.f32 %v2756, %v129
  %v2809 = vmul.f32 %v2757, %v129
  %v2810 = vadd.f32 %v2802, %v2806
  %v2811 = vadd.f32 %v2803, %v2807
  %v2812 = vadd.f32 %v2804, %v2808
  %v2813 = vadd.f32 %v2805, %v2809
  %s2814 = scalar_lea.vmem %s3, 41
  %v2815 = vld [vmem:[%s2814] sm:$0x1]
  %v2817 = vlaneseq
  %v2818 = vshrl.u32 %v2817, 7
  %v2819 = vsub.s32 0, %v2818
  %v2820 = vrot.slane %v2815, %v2819
  %v2822 = vadd.f32 %v2810, %v2820
  %v2823 = vadd.f32 %v2811, %v2820
  %v2824 = vadd.f32 %v2812, %v2820
  %v2825 = vadd.f32 %v2813, %v2820
  %2826 = vst [vmem:[%s151 + $0x11] sm:$0x1] %v2822
  %2827 = vst [vmem:[%s151 + $0x29] sm:$0x1] %v2823
  %2828 = vst [vmem:[%s151 + $0x41] sm:$0x1] %v2824
  %2829 = vst [vmem:[%s151 + $0x59] sm:$0x1] %v2825
  %v2830 = vmul.f32 %v2742, %v160
  %v2831 = vmul.f32 %v2743, %v160
  %v2832 = vmul.f32 %v2744, %v160
  %v2833 = vmul.f32 %v2745, %v160
  %v2834 = vmul.f32 %v2748, %v170
  %v2835 = vmul.f32 %v2749, %v170
  %v2836 = vmul.f32 %v2750, %v170
  %v2837 = vmul.f32 %v2751, %v170
  %v2838 = vadd.f32 %v2830, %v2834
  %v2839 = vadd.f32 %v2831, %v2835
  %v2840 = vadd.f32 %v2832, %v2836
  %v2841 = vadd.f32 %v2833, %v2837
  %v2842 = vmul.f32 %v2754, %v184
  %v2843 = vmul.f32 %v2755, %v184
  %v2844 = vmul.f32 %v2756, %v184
  %v2845 = vmul.f32 %v2757, %v184
  %v2846 = vadd.f32 %v2838, %v2842
  %v2847 = vadd.f32 %v2839, %v2843
  %v2848 = vadd.f32 %v2840, %v2844
  %v2849 = vadd.f32 %v2841, %v2845
  %s2850 = scalar_lea.vmem %s3, 65
  %v2851 = vld [vmem:[%s2850] sm:$0x1]
  %v2853 = vlaneseq
  %v2854 = vshrl.u32 %v2853, 7
  %v2855 = vsub.s32 0, %v2854
  %v2856 = vrot.slane %v2851, %v2855
  %v2858 = vadd.f32 %v2846, %v2856
  %v2859 = vadd.f32 %v2847, %v2856
  %v2860 = vadd.f32 %v2848, %v2856
  %v2861 = vadd.f32 %v2849, %v2856
  %2862 = vst [vmem:[%s206 + $0x11] sm:$0x1] %v2858
  %2863 = vst [vmem:[%s206 + $0x29] sm:$0x1] %v2859
  %2864 = vst [vmem:[%s206 + $0x41] sm:$0x1] %v2860
  %2865 = vst [vmem:[%s206 + $0x59] sm:$0x1] %v2861
  %s2866 = sadd.s32 %s2740, 288
  %s2867 = scalar_lea.vmem %s1, %s2866
  %v2868 = vld [vmem:[%s2867] sm:$0x1]
  %v2869 = vld [vmem:[%s2867 + $0x18] sm:$0x1]
  %v2870 = vld [vmem:[%s2867 + $0x30] sm:$0x1]
  %v2871 = vld [vmem:[%s2867 + $0x48] sm:$0x1]
  %2872 = vst [vmem:[%s217 + $0x11] sm:$0x1] %v2868
  %2873 = vst [vmem:[%s217 + $0x29] sm:$0x1] %v2869
  %2874 = vst [vmem:[%s217 + $0x41] sm:$0x1] %v2870
  %2875 = vst [vmem:[%s217 + $0x59] sm:$0x1] %v2871
  %s2876 = sadd.s32 %s2740, 384
  %s2877 = scalar_lea.vmem %s1, %s2876
  %v2878 = vld [vmem:[%s2877] sm:$0x1]
  %v2879 = vld [vmem:[%s2877 + $0x18] sm:$0x1]
  %v2880 = vld [vmem:[%s2877 + $0x30] sm:$0x1]
  %v2881 = vld [vmem:[%s2877 + $0x48] sm:$0x1]
  %2882 = vst [vmem:[%s228 + $0x11] sm:$0x1] %v2878
  %2883 = vst [vmem:[%s228 + $0x29] sm:$0x1] %v2879
  %2884 = vst [vmem:[%s228 + $0x41] sm:$0x1] %v2880
  %2885 = vst [vmem:[%s228 + $0x59] sm:$0x1] %v2881
  %s2886 = sadd.s32 %s2740, 480
  %s2887 = scalar_lea.vmem %s1, %s2886
  %v2888 = vld [vmem:[%s2887] sm:$0x1]
  %v2889 = vld [vmem:[%s2887 + $0x18] sm:$0x1]
  %v2890 = vld [vmem:[%s2887 + $0x30] sm:$0x1]
  %v2891 = vld [vmem:[%s2887 + $0x48] sm:$0x1]
  %2892 = vst [vmem:[%s239 + $0x11] sm:$0x1] %v2888
  %2893 = vst [vmem:[%s239 + $0x29] sm:$0x1] %v2889
  %2894 = vst [vmem:[%s239 + $0x41] sm:$0x1] %v2890
  %2895 = vst [vmem:[%s239 + $0x59] sm:$0x1] %v2891
  %s2896 = sld [smem:[#allocation3 + $0x12]]
  %s2897 = scalar_lea.vmem %s1, %s2896
  %v2898 = vld [vmem:[%s2897] sm:$0x1]
  %v2899 = vld [vmem:[%s2897 + $0x18] sm:$0x1]
  %v2900 = vld [vmem:[%s2897 + $0x30] sm:$0x1]
  %v2901 = vld [vmem:[%s2897 + $0x48] sm:$0x1]
  %s2902 = sadd.s32 %s2896, 96
  %s2903 = scalar_lea.vmem %s1, %s2902
  %v2904 = vld [vmem:[%s2903] sm:$0x1]
  %v2905 = vld [vmem:[%s2903 + $0x18] sm:$0x1]
  %v2906 = vld [vmem:[%s2903 + $0x30] sm:$0x1]
  %v2907 = vld [vmem:[%s2903 + $0x48] sm:$0x1]
  %s2908 = sadd.s32 %s2896, 192
  %s2909 = scalar_lea.vmem %s1, %s2908
  %v2910 = vld [vmem:[%s2909] sm:$0x1]
  %v2911 = vld [vmem:[%s2909 + $0x18] sm:$0x1]
  %v2912 = vld [vmem:[%s2909 + $0x30] sm:$0x1]
  %v2913 = vld [vmem:[%s2909 + $0x48] sm:$0x1]
  %v2914 = vmul.f32 %v2898, %v52
  %v2915 = vmul.f32 %v2899, %v52
  %v2916 = vmul.f32 %v2900, %v52
  %v2917 = vmul.f32 %v2901, %v52
  %v2918 = vmul.f32 %v2904, %v62
  %v2919 = vmul.f32 %v2905, %v62
  %v2920 = vmul.f32 %v2906, %v62
  %v2921 = vmul.f32 %v2907, %v62
  %v2922 = vadd.f32 %v2914, %v2918
  %v2923 = vadd.f32 %v2915, %v2919
  %v2924 = vadd.f32 %v2916, %v2920
  %v2925 = vadd.f32 %v2917, %v2921
  %v2926 = vmul.f32 %v2910, %v76
  %v2927 = vmul.f32 %v2911, %v76
  %v2928 = vmul.f32 %v2912, %v76
  %v2929 = vmul.f32 %v2913, %v76
  %v2930 = vadd.f32 %v2922, %v2926
  %v2931 = vadd.f32 %v2923, %v2927
  %v2932 = vadd.f32 %v2924, %v2928
  %v2933 = vadd.f32 %v2925, %v2929
  %s2934 = scalar_lea.vmem %s3, 18
  %v2935 = vld [vmem:[%s2934] sm:$0x1]
  %v2937 = vlaneseq
  %v2938 = vshrl.u32 %v2937, 7
  %v2939 = vsub.s32 0, %v2938
  %v2940 = vrot.slane %v2935, %v2939
  %v2942 = vadd.f32 %v2930, %v2940
  %v2943 = vadd.f32 %v2931, %v2940
  %v2944 = vadd.f32 %v2932, %v2940
  %v2945 = vadd.f32 %v2933, %v2940
  %2946 = vst [vmem:[%s4 + $0x12] sm:$0x1] %v2942
  %2947 = vst [vmem:[%s4 + $0x2a] sm:$0x1] %v2943
  %2948 = vst [vmem:[%s4 + $0x42] sm:$0x1] %v2944
  %2949 = vst [vmem:[%s4 + $0x5a] sm:$0x1] %v2945
  %v2950 = vmul.f32 %v2898, %v105
  %v2951 = vmul.f32 %v2899, %v105
  %v2952 = vmul.f32 %v2900, %v105
  %v2953 = vmul.f32 %v2901, %v105
  %v2954 = vmul.f32 %v2904, %v115
  %v2955 = vmul.f32 %v2905, %v115
  %v2956 = vmul.f32 %v2906, %v115
  %v2957 = vmul.f32 %v2907, %v115
  %v2958 = vadd.f32 %v2950, %v2954
  %v2959 = vadd.f32 %v2951, %v2955
  %v2960 = vadd.f32 %v2952, %v2956
  %v2961 = vadd.f32 %v2953, %v2957
  %v2962 = vmul.f32 %v2910, %v129
  %v2963 = vmul.f32 %v2911, %v129
  %v2964 = vmul.f32 %v2912, %v129
  %v2965 = vmul.f32 %v2913, %v129
  %v2966 = vadd.f32 %v2958, %v2962
  %v2967 = vadd.f32 %v2959, %v2963
  %v2968 = vadd.f32 %v2960, %v2964
  %v2969 = vadd.f32 %v2961, %v2965
  %s2970 = scalar_lea.vmem %s3, 42
  %v2971 = vld [vmem:[%s2970] sm:$0x1]
  %v2973 = vlaneseq
  %v2974 = vshrl.u32 %v2973, 7
  %v2975 = vsub.s32 0, %v2974
  %v2976 = vrot.slane %v2971, %v2975
  %v2978 = vadd.f32 %v2966, %v2976
  %v2979 = vadd.f32 %v2967, %v2976
  %v2980 = vadd.f32 %v2968, %v2976
  %v2981 = vadd.f32 %v2969, %v2976
  %2982 = vst [vmem:[%s151 + $0x12] sm:$0x1] %v2978
  %2983 = vst [vmem:[%s151 + $0x2a] sm:$0x1] %v2979
  %2984 = vst [vmem:[%s151 + $0x42] sm:$0x1] %v2980
  %2985 = vst [vmem:[%s151 + $0x5a] sm:$0x1] %v2981
  %v2986 = vmul.f32 %v2898, %v160
  %v2987 = vmul.f32 %v2899, %v160
  %v2988 = vmul.f32 %v2900, %v160
  %v2989 = vmul.f32 %v2901, %v160
  %v2990 = vmul.f32 %v2904, %v170
  %v2991 = vmul.f32 %v2905, %v170
  %v2992 = vmul.f32 %v2906, %v170
  %v2993 = vmul.f32 %v2907, %v170
  %v2994 = vadd.f32 %v2986, %v2990
  %v2995 = vadd.f32 %v2987, %v2991
  %v2996 = vadd.f32 %v2988, %v2992
  %v2997 = vadd.f32 %v2989, %v2993
  %v2998 = vmul.f32 %v2910, %v184
  %v2999 = vmul.f32 %v2911, %v184
  %v3000 = vmul.f32 %v2912, %v184
  %v3001 = vmul.f32 %v2913, %v184
  %v3002 = vadd.f32 %v2994, %v2998
  %v3003 = vadd.f32 %v2995, %v2999
  %v3004 = vadd.f32 %v2996, %v3000
  %v3005 = vadd.f32 %v2997, %v3001
  %s3006 = scalar_lea.vmem %s3, 66
  %v3007 = vld [vmem:[%s3006] sm:$0x1]
  %v3009 = vlaneseq
  %v3010 = vshrl.u32 %v3009, 7
  %v3011 = vsub.s32 0, %v3010
  %v3012 = vrot.slane %v3007, %v3011
  %v3014 = vadd.f32 %v3002, %v3012
  %v3015 = vadd.f32 %v3003, %v3012
  %v3016 = vadd.f32 %v3004, %v3012
  %v3017 = vadd.f32 %v3005, %v3012
  %3018 = vst [vmem:[%s206 + $0x12] sm:$0x1] %v3014
  %3019 = vst [vmem:[%s206 + $0x2a] sm:$0x1] %v3015
  %3020 = vst [vmem:[%s206 + $0x42] sm:$0x1] %v3016
  %3021 = vst [vmem:[%s206 + $0x5a] sm:$0x1] %v3017
  %s3022 = sadd.s32 %s2896, 288
  %s3023 = scalar_lea.vmem %s1, %s3022
  %v3024 = vld [vmem:[%s3023] sm:$0x1]
  %v3025 = vld [vmem:[%s3023 + $0x18] sm:$0x1]
  %v3026 = vld [vmem:[%s3023 + $0x30] sm:$0x1]
  %v3027 = vld [vmem:[%s3023 + $0x48] sm:$0x1]
  %3028 = vst [vmem:[%s217 + $0x12] sm:$0x1] %v3024
  %3029 = vst [vmem:[%s217 + $0x2a] sm:$0x1] %v3025
  %3030 = vst [vmem:[%s217 + $0x42] sm:$0x1] %v3026
  %3031 = vst [vmem:[%s217 + $0x5a] sm:$0x1] %v3027
  %s3032 = sadd.s32 %s2896, 384
  %s3033 = scalar_lea.vmem %s1, %s3032
  %v3034 = vld [vmem:[%s3033] sm:$0x1]
  %v3035 = vld [vmem:[%s3033 + $0x18] sm:$0x1]
  %v3036 = vld [vmem:[%s3033 + $0x30] sm:$0x1]
  %v3037 = vld [vmem:[%s3033 + $0x48] sm:$0x1]
  %3038 = vst [vmem:[%s228 + $0x12] sm:$0x1] %v3034
  %3039 = vst [vmem:[%s228 + $0x2a] sm:$0x1] %v3035
  %3040 = vst [vmem:[%s228 + $0x42] sm:$0x1] %v3036
  %3041 = vst [vmem:[%s228 + $0x5a] sm:$0x1] %v3037
  %s3042 = sadd.s32 %s2896, 480
  %s3043 = scalar_lea.vmem %s1, %s3042
  %v3044 = vld [vmem:[%s3043] sm:$0x1]
  %v3045 = vld [vmem:[%s3043 + $0x18] sm:$0x1]
  %v3046 = vld [vmem:[%s3043 + $0x30] sm:$0x1]
  %v3047 = vld [vmem:[%s3043 + $0x48] sm:$0x1]
  %3048 = vst [vmem:[%s239 + $0x12] sm:$0x1] %v3044
  %3049 = vst [vmem:[%s239 + $0x2a] sm:$0x1] %v3045
  %3050 = vst [vmem:[%s239 + $0x42] sm:$0x1] %v3046
  %3051 = vst [vmem:[%s239 + $0x5a] sm:$0x1] %v3047
  %s3052 = sld [smem:[#allocation3 + $0x13]]
  %s3053 = scalar_lea.vmem %s1, %s3052
  %v3054 = vld [vmem:[%s3053] sm:$0x1]
  %v3055 = vld [vmem:[%s3053 + $0x18] sm:$0x1]
  %v3056 = vld [vmem:[%s3053 + $0x30] sm:$0x1]
  %v3057 = vld [vmem:[%s3053 + $0x48] sm:$0x1]
  %s3058 = sadd.s32 %s3052, 96
  %s3059 = scalar_lea.vmem %s1, %s3058
  %v3060 = vld [vmem:[%s3059] sm:$0x1]
  %v3061 = vld [vmem:[%s3059 + $0x18] sm:$0x1]
  %v3062 = vld [vmem:[%s3059 + $0x30] sm:$0x1]
  %v3063 = vld [vmem:[%s3059 + $0x48] sm:$0x1]
  %s3064 = sadd.s32 %s3052, 192
  %s3065 = scalar_lea.vmem %s1, %s3064
  %v3066 = vld [vmem:[%s3065] sm:$0x1]
  %v3067 = vld [vmem:[%s3065 + $0x18] sm:$0x1]
  %v3068 = vld [vmem:[%s3065 + $0x30] sm:$0x1]
  %v3069 = vld [vmem:[%s3065 + $0x48] sm:$0x1]
  %v3070 = vmul.f32 %v3054, %v52
  %v3071 = vmul.f32 %v3055, %v52
  %v3072 = vmul.f32 %v3056, %v52
  %v3073 = vmul.f32 %v3057, %v52
  %v3074 = vmul.f32 %v3060, %v62
  %v3075 = vmul.f32 %v3061, %v62
  %v3076 = vmul.f32 %v3062, %v62
  %v3077 = vmul.f32 %v3063, %v62
  %v3078 = vadd.f32 %v3070, %v3074
  %v3079 = vadd.f32 %v3071, %v3075
  %v3080 = vadd.f32 %v3072, %v3076
  %v3081 = vadd.f32 %v3073, %v3077
  %v3082 = vmul.f32 %v3066, %v76
  %v3083 = vmul.f32 %v3067, %v76
  %v3084 = vmul.f32 %v3068, %v76
  %v3085 = vmul.f32 %v3069, %v76
  %v3086 = vadd.f32 %v3078, %v3082
  %v3087 = vadd.f32 %v3079, %v3083
  %v3088 = vadd.f32 %v3080, %v3084
  %v3089 = vadd.f32 %v3081, %v3085
  %s3090 = scalar_lea.vmem %s3, 19
  %v3091 = vld [vmem:[%s3090] sm:$0x1]
  %v3093 = vlaneseq
  %v3094 = vshrl.u32 %v3093, 7
  %v3095 = vsub.s32 0, %v3094
  %v3096 = vrot.slane %v3091, %v3095
  %v3098 = vadd.f32 %v3086, %v3096
  %v3099 = vadd.f32 %v3087, %v3096
  %v3100 = vadd.f32 %v3088, %v3096
  %v3101 = vadd.f32 %v3089, %v3096
  %3102 = vst [vmem:[%s4 + $0x13] sm:$0x1] %v3098
  %3103 = vst [vmem:[%s4 + $0x2b] sm:$0x1] %v3099
  %3104 = vst [vmem:[%s4 + $0x43] sm:$0x1] %v3100
  %3105 = vst [vmem:[%s4 + $0x5b] sm:$0x1] %v3101
  %v3106 = vmul.f32 %v3054, %v105
  %v3107 = vmul.f32 %v3055, %v105
  %v3108 = vmul.f32 %v3056, %v105
  %v3109 = vmul.f32 %v3057, %v105
  %v3110 = vmul.f32 %v3060, %v115
  %v3111 = vmul.f32 %v3061, %v115
  %v3112 = vmul.f32 %v3062, %v115
  %v3113 = vmul.f32 %v3063, %v115
  %v3114 = vadd.f32 %v3106, %v3110
  %v3115 = vadd.f32 %v3107, %v3111
  %v3116 = vadd.f32 %v3108, %v3112
  %v3117 = vadd.f32 %v3109, %v3113
  %v3118 = vmul.f32 %v3066, %v129
  %v3119 = vmul.f32 %v3067, %v129
  %v3120 = vmul.f32 %v3068, %v129
  %v3121 = vmul.f32 %v3069, %v129
  %v3122 = vadd.f32 %v3114, %v3118
  %v3123 = vadd.f32 %v3115, %v3119
  %v3124 = vadd.f32 %v3116, %v3120
  %v3125 = vadd.f32 %v3117, %v3121
  %s3126 = scalar_lea.vmem %s3, 43
  %v3127 = vld [vmem:[%s3126] sm:$0x1]
  %v3129 = vlaneseq
  %v3130 = vshrl.u32 %v3129, 7
  %v3131 = vsub.s32 0, %v3130
  %v3132 = vrot.slane %v3127, %v3131
  %v3134 = vadd.f32 %v3122, %v3132
  %v3135 = vadd.f32 %v3123, %v3132
  %v3136 = vadd.f32 %v3124, %v3132
  %v3137 = vadd.f32 %v3125, %v3132
  %3138 = vst [vmem:[%s151 + $0x13] sm:$0x1] %v3134
  %3139 = vst [vmem:[%s151 + $0x2b] sm:$0x1] %v3135
  %3140 = vst [vmem:[%s151 + $0x43] sm:$0x1] %v3136
  %3141 = vst [vmem:[%s151 + $0x5b] sm:$0x1] %v3137
  %v3142 = vmul.f32 %v3054, %v160
  %v3143 = vmul.f32 %v3055, %v160
  %v3144 = vmul.f32 %v3056, %v160
  %v3145 = vmul.f32 %v3057, %v160
  %v3146 = vmul.f32 %v3060, %v170
  %v3147 = vmul.f32 %v3061, %v170
  %v3148 = vmul.f32 %v3062, %v170
  %v3149 = vmul.f32 %v3063, %v170
  %v3150 = vadd.f32 %v3142, %v3146
  %v3151 = vadd.f32 %v3143, %v3147
  %v3152 = vadd.f32 %v3144, %v3148
  %v3153 = vadd.f32 %v3145, %v3149
  %v3154 = vmul.f32 %v3066, %v184
  %v3155 = vmul.f32 %v3067, %v184
  %v3156 = vmul.f32 %v3068, %v184
  %v3157 = vmul.f32 %v3069, %v184
  %v3158 = vadd.f32 %v3150, %v3154
  %v3159 = vadd.f32 %v3151, %v3155
  %v3160 = vadd.f32 %v3152, %v3156
  %v3161 = vadd.f32 %v3153, %v3157
  %s3162 = scalar_lea.vmem %s3, 67
  %v3163 = vld [vmem:[%s3162] sm:$0x1]
  %v3165 = vlaneseq
  %v3166 = vshrl.u32 %v3165, 7
  %v3167 = vsub.s32 0, %v3166
  %v3168 = vrot.slane %v3163, %v3167
  %v3170 = vadd.f32 %v3158, %v3168
  %v3171 = vadd.f32 %v3159, %v3168
  %v3172 = vadd.f32 %v3160, %v3168
  %v3173 = vadd.f32 %v3161, %v3168
  %3174 = vst [vmem:[%s206 + $0x13] sm:$0x1] %v3170
  %3175 = vst [vmem:[%s206 + $0x2b] sm:$0x1] %v3171
  %3176 = vst [vmem:[%s206 + $0x43] sm:$0x1] %v3172
  %3177 = vst [vmem:[%s206 + $0x5b] sm:$0x1] %v3173
  %s3178 = sadd.s32 %s3052, 288
  %s3179 = scalar_lea.vmem %s1, %s3178
  %v3180 = vld [vmem:[%s3179] sm:$0x1]
  %v3181 = vld [vmem:[%s3179 + $0x18] sm:$0x1]
  %v3182 = vld [vmem:[%s3179 + $0x30] sm:$0x1]
  %v3183 = vld [vmem:[%s3179 + $0x48] sm:$0x1]
  %3184 = vst [vmem:[%s217 + $0x13] sm:$0x1] %v3180
  %3185 = vst [vmem:[%s217 + $0x2b] sm:$0x1] %v3181
  %3186 = vst [vmem:[%s217 + $0x43] sm:$0x1] %v3182
  %3187 = vst [vmem:[%s217 + $0x5b] sm:$0x1] %v3183
  %s3188 = sadd.s32 %s3052, 384
  %s3189 = scalar_lea.vmem %s1, %s3188
  %v3190 = vld [vmem:[%s3189] sm:$0x1]
  %v3191 = vld [vmem:[%s3189 + $0x18] sm:$0x1]
  %v3192 = vld [vmem:[%s3189 + $0x30] sm:$0x1]
  %v3193 = vld [vmem:[%s3189 + $0x48] sm:$0x1]
  %3194 = vst [vmem:[%s228 + $0x13] sm:$0x1] %v3190
  %3195 = vst [vmem:[%s228 + $0x2b] sm:$0x1] %v3191
  %3196 = vst [vmem:[%s228 + $0x43] sm:$0x1] %v3192
  %3197 = vst [vmem:[%s228 + $0x5b] sm:$0x1] %v3193
  %s3198 = sadd.s32 %s3052, 480
  %s3199 = scalar_lea.vmem %s1, %s3198
  %v3200 = vld [vmem:[%s3199] sm:$0x1]
  %v3201 = vld [vmem:[%s3199 + $0x18] sm:$0x1]
  %v3202 = vld [vmem:[%s3199 + $0x30] sm:$0x1]
  %v3203 = vld [vmem:[%s3199 + $0x48] sm:$0x1]
  %3204 = vst [vmem:[%s239 + $0x13] sm:$0x1] %v3200
  %3205 = vst [vmem:[%s239 + $0x2b] sm:$0x1] %v3201
  %3206 = vst [vmem:[%s239 + $0x43] sm:$0x1] %v3202
  %3207 = vst [vmem:[%s239 + $0x5b] sm:$0x1] %v3203
  %s3208 = sld [smem:[#allocation3 + $0x14]]
  %s3209 = scalar_lea.vmem %s1, %s3208
  %v3210 = vld [vmem:[%s3209] sm:$0x1]
  %v3211 = vld [vmem:[%s3209 + $0x18] sm:$0x1]
  %v3212 = vld [vmem:[%s3209 + $0x30] sm:$0x1]
  %v3213 = vld [vmem:[%s3209 + $0x48] sm:$0x1]
  %s3214 = sadd.s32 %s3208, 96
  %s3215 = scalar_lea.vmem %s1, %s3214
  %v3216 = vld [vmem:[%s3215] sm:$0x1]
  %v3217 = vld [vmem:[%s3215 + $0x18] sm:$0x1]
  %v3218 = vld [vmem:[%s3215 + $0x30] sm:$0x1]
  %v3219 = vld [vmem:[%s3215 + $0x48] sm:$0x1]
  %s3220 = sadd.s32 %s3208, 192
  %s3221 = scalar_lea.vmem %s1, %s3220
  %v3222 = vld [vmem:[%s3221] sm:$0x1]
  %v3223 = vld [vmem:[%s3221 + $0x18] sm:$0x1]
  %v3224 = vld [vmem:[%s3221 + $0x30] sm:$0x1]
  %v3225 = vld [vmem:[%s3221 + $0x48] sm:$0x1]
  %v3226 = vmul.f32 %v3210, %v52
  %v3227 = vmul.f32 %v3211, %v52
  %v3228 = vmul.f32 %v3212, %v52
  %v3229 = vmul.f32 %v3213, %v52
  %v3230 = vmul.f32 %v3216, %v62
  %v3231 = vmul.f32 %v3217, %v62
  %v3232 = vmul.f32 %v3218, %v62
  %v3233 = vmul.f32 %v3219, %v62
  %v3234 = vadd.f32 %v3226, %v3230
  %v3235 = vadd.f32 %v3227, %v3231
  %v3236 = vadd.f32 %v3228, %v3232
  %v3237 = vadd.f32 %v3229, %v3233
  %v3238 = vmul.f32 %v3222, %v76
  %v3239 = vmul.f32 %v3223, %v76
  %v3240 = vmul.f32 %v3224, %v76
  %v3241 = vmul.f32 %v3225, %v76
  %v3242 = vadd.f32 %v3234, %v3238
  %v3243 = vadd.f32 %v3235, %v3239
  %v3244 = vadd.f32 %v3236, %v3240
  %v3245 = vadd.f32 %v3237, %v3241
  %s3246 = scalar_lea.vmem %s3, 20
  %v3247 = vld [vmem:[%s3246] sm:$0x1]
  %v3249 = vlaneseq
  %v3250 = vshrl.u32 %v3249, 7
  %v3251 = vsub.s32 0, %v3250
  %v3252 = vrot.slane %v3247, %v3251
  %v3254 = vadd.f32 %v3242, %v3252
  %v3255 = vadd.f32 %v3243, %v3252
  %v3256 = vadd.f32 %v3244, %v3252
  %v3257 = vadd.f32 %v3245, %v3252
  %3258 = vst [vmem:[%s4 + $0x14] sm:$0x1] %v3254
  %3259 = vst [vmem:[%s4 + $0x2c] sm:$0x1] %v3255
  %3260 = vst [vmem:[%s4 + $0x44] sm:$0x1] %v3256
  %3261 = vst [vmem:[%s4 + $0x5c] sm:$0x1] %v3257
  %v3262 = vmul.f32 %v3210, %v105
  %v3263 = vmul.f32 %v3211, %v105
  %v3264 = vmul.f32 %v3212, %v105
  %v3265 = vmul.f32 %v3213, %v105
  %v3266 = vmul.f32 %v3216, %v115
  %v3267 = vmul.f32 %v3217, %v115
  %v3268 = vmul.f32 %v3218, %v115
  %v3269 = vmul.f32 %v3219, %v115
  %v3270 = vadd.f32 %v3262, %v3266
  %v3271 = vadd.f32 %v3263, %v3267
  %v3272 = vadd.f32 %v3264, %v3268
  %v3273 = vadd.f32 %v3265, %v3269
  %v3274 = vmul.f32 %v3222, %v129
  %v3275 = vmul.f32 %v3223, %v129
  %v3276 = vmul.f32 %v3224, %v129
  %v3277 = vmul.f32 %v3225, %v129
  %v3278 = vadd.f32 %v3270, %v3274
  %v3279 = vadd.f32 %v3271, %v3275
  %v3280 = vadd.f32 %v3272, %v3276
  %v3281 = vadd.f32 %v3273, %v3277
  %s3282 = scalar_lea.vmem %s3, 44
  %v3283 = vld [vmem:[%s3282] sm:$0x1]
  %v3285 = vlaneseq
  %v3286 = vshrl.u32 %v3285, 7
  %v3287 = vsub.s32 0, %v3286
  %v3288 = vrot.slane %v3283, %v3287
  %v3290 = vadd.f32 %v3278, %v3288
  %v3291 = vadd.f32 %v3279, %v3288
  %v3292 = vadd.f32 %v3280, %v3288
  %v3293 = vadd.f32 %v3281, %v3288
  %3294 = vst [vmem:[%s151 + $0x14] sm:$0x1] %v3290
  %3295 = vst [vmem:[%s151 + $0x2c] sm:$0x1] %v3291
  %3296 = vst [vmem:[%s151 + $0x44] sm:$0x1] %v3292
  %3297 = vst [vmem:[%s151 + $0x5c] sm:$0x1] %v3293
  %v3298 = vmul.f32 %v3210, %v160
  %v3299 = vmul.f32 %v3211, %v160
  %v3300 = vmul.f32 %v3212, %v160
  %v3301 = vmul.f32 %v3213, %v160
  %v3302 = vmul.f32 %v3216, %v170
  %v3303 = vmul.f32 %v3217, %v170
  %v3304 = vmul.f32 %v3218, %v170
  %v3305 = vmul.f32 %v3219, %v170
  %v3306 = vadd.f32 %v3298, %v3302
  %v3307 = vadd.f32 %v3299, %v3303
  %v3308 = vadd.f32 %v3300, %v3304
  %v3309 = vadd.f32 %v3301, %v3305
  %v3310 = vmul.f32 %v3222, %v184
  %v3311 = vmul.f32 %v3223, %v184
  %v3312 = vmul.f32 %v3224, %v184
  %v3313 = vmul.f32 %v3225, %v184
  %v3314 = vadd.f32 %v3306, %v3310
  %v3315 = vadd.f32 %v3307, %v3311
  %v3316 = vadd.f32 %v3308, %v3312
  %v3317 = vadd.f32 %v3309, %v3313
  %s3318 = scalar_lea.vmem %s3, 68
  %v3319 = vld [vmem:[%s3318] sm:$0x1]
  %v3321 = vlaneseq
  %v3322 = vshrl.u32 %v3321, 7
  %v3323 = vsub.s32 0, %v3322
  %v3324 = vrot.slane %v3319, %v3323
  %v3326 = vadd.f32 %v3314, %v3324
  %v3327 = vadd.f32 %v3315, %v3324
  %v3328 = vadd.f32 %v3316, %v3324
  %v3329 = vadd.f32 %v3317, %v3324
  %3330 = vst [vmem:[%s206 + $0x14] sm:$0x1] %v3326
  %3331 = vst [vmem:[%s206 + $0x2c] sm:$0x1] %v3327
  %3332 = vst [vmem:[%s206 + $0x44] sm:$0x1] %v3328
  %3333 = vst [vmem:[%s206 + $0x5c] sm:$0x1] %v3329
  %s3334 = sadd.s32 %s3208, 288
  %s3335 = scalar_lea.vmem %s1, %s3334
  %v3336 = vld [vmem:[%s3335] sm:$0x1]
  %v3337 = vld [vmem:[%s3335 + $0x18] sm:$0x1]
  %v3338 = vld [vmem:[%s3335 + $0x30] sm:$0x1]
  %v3339 = vld [vmem:[%s3335 + $0x48] sm:$0x1]
  %3340 = vst [vmem:[%s217 + $0x14] sm:$0x1] %v3336
  %3341 = vst [vmem:[%s217 + $0x2c] sm:$0x1] %v3337
  %3342 = vst [vmem:[%s217 + $0x44] sm:$0x1] %v3338
  %3343 = vst [vmem:[%s217 + $0x5c] sm:$0x1] %v3339
  %s3344 = sadd.s32 %s3208, 384
  %s3345 = scalar_lea.vmem %s1, %s3344
  %v3346 = vld [vmem:[%s3345] sm:$0x1]
  %v3347 = vld [vmem:[%s3345 + $0x18] sm:$0x1]
  %v3348 = vld [vmem:[%s3345 + $0x30] sm:$0x1]
  %v3349 = vld [vmem:[%s3345 + $0x48] sm:$0x1]
  %3350 = vst [vmem:[%s228 + $0x14] sm:$0x1] %v3346
  %3351 = vst [vmem:[%s228 + $0x2c] sm:$0x1] %v3347
  %3352 = vst [vmem:[%s228 + $0x44] sm:$0x1] %v3348
  %3353 = vst [vmem:[%s228 + $0x5c] sm:$0x1] %v3349
  %s3354 = sadd.s32 %s3208, 480
  %s3355 = scalar_lea.vmem %s1, %s3354
  %v3356 = vld [vmem:[%s3355] sm:$0x1]
  %v3357 = vld [vmem:[%s3355 + $0x18] sm:$0x1]
  %v3358 = vld [vmem:[%s3355 + $0x30] sm:$0x1]
  %v3359 = vld [vmem:[%s3355 + $0x48] sm:$0x1]
  %3360 = vst [vmem:[%s239 + $0x14] sm:$0x1] %v3356
  %3361 = vst [vmem:[%s239 + $0x2c] sm:$0x1] %v3357
  %3362 = vst [vmem:[%s239 + $0x44] sm:$0x1] %v3358
  %3363 = vst [vmem:[%s239 + $0x5c] sm:$0x1] %v3359
  %s3364 = sld [smem:[#allocation3 + $0x15]]
  %s3365 = scalar_lea.vmem %s1, %s3364
  %v3366 = vld [vmem:[%s3365] sm:$0x1]
  %v3367 = vld [vmem:[%s3365 + $0x18] sm:$0x1]
  %v3368 = vld [vmem:[%s3365 + $0x30] sm:$0x1]
  %v3369 = vld [vmem:[%s3365 + $0x48] sm:$0x1]
  %s3370 = sadd.s32 %s3364, 96
  %s3371 = scalar_lea.vmem %s1, %s3370
  %v3372 = vld [vmem:[%s3371] sm:$0x1]
  %v3373 = vld [vmem:[%s3371 + $0x18] sm:$0x1]
  %v3374 = vld [vmem:[%s3371 + $0x30] sm:$0x1]
  %v3375 = vld [vmem:[%s3371 + $0x48] sm:$0x1]
  %s3376 = sadd.s32 %s3364, 192
  %s3377 = scalar_lea.vmem %s1, %s3376
  %v3378 = vld [vmem:[%s3377] sm:$0x1]
  %v3379 = vld [vmem:[%s3377 + $0x18] sm:$0x1]
  %v3380 = vld [vmem:[%s3377 + $0x30] sm:$0x1]
  %v3381 = vld [vmem:[%s3377 + $0x48] sm:$0x1]
  %v3382 = vmul.f32 %v3366, %v52
  %v3383 = vmul.f32 %v3367, %v52
  %v3384 = vmul.f32 %v3368, %v52
  %v3385 = vmul.f32 %v3369, %v52
  %v3386 = vmul.f32 %v3372, %v62
  %v3387 = vmul.f32 %v3373, %v62
  %v3388 = vmul.f32 %v3374, %v62
  %v3389 = vmul.f32 %v3375, %v62
  %v3390 = vadd.f32 %v3382, %v3386
  %v3391 = vadd.f32 %v3383, %v3387
  %v3392 = vadd.f32 %v3384, %v3388
  %v3393 = vadd.f32 %v3385, %v3389
  %v3394 = vmul.f32 %v3378, %v76
  %v3395 = vmul.f32 %v3379, %v76
  %v3396 = vmul.f32 %v3380, %v76
  %v3397 = vmul.f32 %v3381, %v76
  %v3398 = vadd.f32 %v3390, %v3394
  %v3399 = vadd.f32 %v3391, %v3395
  %v3400 = vadd.f32 %v3392, %v3396
  %v3401 = vadd.f32 %v3393, %v3397
  %s3402 = scalar_lea.vmem %s3, 21
  %v3403 = vld [vmem:[%s3402] sm:$0x1]
  %v3405 = vlaneseq
  %v3406 = vshrl.u32 %v3405, 7
  %v3407 = vsub.s32 0, %v3406
  %v3408 = vrot.slane %v3403, %v3407
  %v3410 = vadd.f32 %v3398, %v3408
  %v3411 = vadd.f32 %v3399, %v3408
  %v3412 = vadd.f32 %v3400, %v3408
  %v3413 = vadd.f32 %v3401, %v3408
  %3414 = vst [vmem:[%s4 + $0x15] sm:$0x1] %v3410
  %3415 = vst [vmem:[%s4 + $0x2d] sm:$0x1] %v3411
  %3416 = vst [vmem:[%s4 + $0x45] sm:$0x1] %v3412
  %3417 = vst [vmem:[%s4 + $0x5d] sm:$0x1] %v3413
  %v3418 = vmul.f32 %v3366, %v105
  %v3419 = vmul.f32 %v3367, %v105
  %v3420 = vmul.f32 %v3368, %v105
  %v3421 = vmul.f32 %v3369, %v105
  %v3422 = vmul.f32 %v3372, %v115
  %v3423 = vmul.f32 %v3373, %v115
  %v3424 = vmul.f32 %v3374, %v115
  %v3425 = vmul.f32 %v3375, %v115
  %v3426 = vadd.f32 %v3418, %v3422
  %v3427 = vadd.f32 %v3419, %v3423
  %v3428 = vadd.f32 %v3420, %v3424
  %v3429 = vadd.f32 %v3421, %v3425
  %v3430 = vmul.f32 %v3378, %v129
  %v3431 = vmul.f32 %v3379, %v129
  %v3432 = vmul.f32 %v3380, %v129
  %v3433 = vmul.f32 %v3381, %v129
  %v3434 = vadd.f32 %v3426, %v3430
  %v3435 = vadd.f32 %v3427, %v3431
  %v3436 = vadd.f32 %v3428, %v3432
  %v3437 = vadd.f32 %v3429, %v3433
  %s3438 = scalar_lea.vmem %s3, 45
  %v3439 = vld [vmem:[%s3438] sm:$0x1]
  %v3441 = vlaneseq
  %v3442 = vshrl.u32 %v3441, 7
  %v3443 = vsub.s32 0, %v3442
  %v3444 = vrot.slane %v3439, %v3443
  %v3446 = vadd.f32 %v3434, %v3444
  %v3447 = vadd.f32 %v3435, %v3444
  %v3448 = vadd.f32 %v3436, %v3444
  %v3449 = vadd.f32 %v3437, %v3444
  %3450 = vst [vmem:[%s151 + $0x15] sm:$0x1] %v3446
  %3451 = vst [vmem:[%s151 + $0x2d] sm:$0x1] %v3447
  %3452 = vst [vmem:[%s151 + $0x45] sm:$0x1] %v3448
  %3453 = vst [vmem:[%s151 + $0x5d] sm:$0x1] %v3449
  %v3454 = vmul.f32 %v3366, %v160
  %v3455 = vmul.f32 %v3367, %v160
  %v3456 = vmul.f32 %v3368, %v160
  %v3457 = vmul.f32 %v3369, %v160
  %v3458 = vmul.f32 %v3372, %v170
  %v3459 = vmul.f32 %v3373, %v170
  %v3460 = vmul.f32 %v3374, %v170
  %v3461 = vmul.f32 %v3375, %v170
  %v3462 = vadd.f32 %v3454, %v3458
  %v3463 = vadd.f32 %v3455, %v3459
  %v3464 = vadd.f32 %v3456, %v3460
  %v3465 = vadd.f32 %v3457, %v3461
  %v3466 = vmul.f32 %v3378, %v184
  %v3467 = vmul.f32 %v3379, %v184
  %v3468 = vmul.f32 %v3380, %v184
  %v3469 = vmul.f32 %v3381, %v184
  %v3470 = vadd.f32 %v3462, %v3466
  %v3471 = vadd.f32 %v3463, %v3467
  %v3472 = vadd.f32 %v3464, %v3468
  %v3473 = vadd.f32 %v3465, %v3469
  %s3474 = scalar_lea.vmem %s3, 69
  %v3475 = vld [vmem:[%s3474] sm:$0x1]
  %v3477 = vlaneseq
  %v3478 = vshrl.u32 %v3477, 7
  %v3479 = vsub.s32 0, %v3478
  %v3480 = vrot.slane %v3475, %v3479
  %v3482 = vadd.f32 %v3470, %v3480
  %v3483 = vadd.f32 %v3471, %v3480
  %v3484 = vadd.f32 %v3472, %v3480
  %v3485 = vadd.f32 %v3473, %v3480
  %3486 = vst [vmem:[%s206 + $0x15] sm:$0x1] %v3482
  %3487 = vst [vmem:[%s206 + $0x2d] sm:$0x1] %v3483
  %3488 = vst [vmem:[%s206 + $0x45] sm:$0x1] %v3484
  %3489 = vst [vmem:[%s206 + $0x5d] sm:$0x1] %v3485
  %s3490 = sadd.s32 %s3364, 288
  %s3491 = scalar_lea.vmem %s1, %s3490
  %v3492 = vld [vmem:[%s3491] sm:$0x1]
  %v3493 = vld [vmem:[%s3491 + $0x18] sm:$0x1]
  %v3494 = vld [vmem:[%s3491 + $0x30] sm:$0x1]
  %v3495 = vld [vmem:[%s3491 + $0x48] sm:$0x1]
  %3496 = vst [vmem:[%s217 + $0x15] sm:$0x1] %v3492
  %3497 = vst [vmem:[%s217 + $0x2d] sm:$0x1] %v3493
  %3498 = vst [vmem:[%s217 + $0x45] sm:$0x1] %v3494
  %3499 = vst [vmem:[%s217 + $0x5d] sm:$0x1] %v3495
  %s3500 = sadd.s32 %s3364, 384
  %s3501 = scalar_lea.vmem %s1, %s3500
  %v3502 = vld [vmem:[%s3501] sm:$0x1]
  %v3503 = vld [vmem:[%s3501 + $0x18] sm:$0x1]
  %v3504 = vld [vmem:[%s3501 + $0x30] sm:$0x1]
  %v3505 = vld [vmem:[%s3501 + $0x48] sm:$0x1]
  %3506 = vst [vmem:[%s228 + $0x15] sm:$0x1] %v3502
  %3507 = vst [vmem:[%s228 + $0x2d] sm:$0x1] %v3503
  %3508 = vst [vmem:[%s228 + $0x45] sm:$0x1] %v3504
  %3509 = vst [vmem:[%s228 + $0x5d] sm:$0x1] %v3505
  %s3510 = sadd.s32 %s3364, 480
  %s3511 = scalar_lea.vmem %s1, %s3510
  %v3512 = vld [vmem:[%s3511] sm:$0x1]
  %v3513 = vld [vmem:[%s3511 + $0x18] sm:$0x1]
  %v3514 = vld [vmem:[%s3511 + $0x30] sm:$0x1]
  %v3515 = vld [vmem:[%s3511 + $0x48] sm:$0x1]
  %3516 = vst [vmem:[%s239 + $0x15] sm:$0x1] %v3512
  %3517 = vst [vmem:[%s239 + $0x2d] sm:$0x1] %v3513
  %3518 = vst [vmem:[%s239 + $0x45] sm:$0x1] %v3514
  %3519 = vst [vmem:[%s239 + $0x5d] sm:$0x1] %v3515
  %s3520 = sld [smem:[#allocation3 + $0x16]]
  %s3521 = scalar_lea.vmem %s1, %s3520
  %v3522 = vld [vmem:[%s3521] sm:$0x1]
  %v3523 = vld [vmem:[%s3521 + $0x18] sm:$0x1]
  %v3524 = vld [vmem:[%s3521 + $0x30] sm:$0x1]
  %v3525 = vld [vmem:[%s3521 + $0x48] sm:$0x1]
  %s3526 = sadd.s32 %s3520, 96
  %s3527 = scalar_lea.vmem %s1, %s3526
  %v3528 = vld [vmem:[%s3527] sm:$0x1]
  %v3529 = vld [vmem:[%s3527 + $0x18] sm:$0x1]
  %v3530 = vld [vmem:[%s3527 + $0x30] sm:$0x1]
  %v3531 = vld [vmem:[%s3527 + $0x48] sm:$0x1]
  %s3532 = sadd.s32 %s3520, 192
  %s3533 = scalar_lea.vmem %s1, %s3532
  %v3534 = vld [vmem:[%s3533] sm:$0x1]
  %v3535 = vld [vmem:[%s3533 + $0x18] sm:$0x1]
  %v3536 = vld [vmem:[%s3533 + $0x30] sm:$0x1]
  %v3537 = vld [vmem:[%s3533 + $0x48] sm:$0x1]
  %v3538 = vmul.f32 %v3522, %v52
  %v3539 = vmul.f32 %v3523, %v52
  %v3540 = vmul.f32 %v3524, %v52
  %v3541 = vmul.f32 %v3525, %v52
  %v3542 = vmul.f32 %v3528, %v62
  %v3543 = vmul.f32 %v3529, %v62
  %v3544 = vmul.f32 %v3530, %v62
  %v3545 = vmul.f32 %v3531, %v62
  %v3546 = vadd.f32 %v3538, %v3542
  %v3547 = vadd.f32 %v3539, %v3543
  %v3548 = vadd.f32 %v3540, %v3544
  %v3549 = vadd.f32 %v3541, %v3545
  %v3550 = vmul.f32 %v3534, %v76
  %v3551 = vmul.f32 %v3535, %v76
  %v3552 = vmul.f32 %v3536, %v76
  %v3553 = vmul.f32 %v3537, %v76
  %v3554 = vadd.f32 %v3546, %v3550
  %v3555 = vadd.f32 %v3547, %v3551
  %v3556 = vadd.f32 %v3548, %v3552
  %v3557 = vadd.f32 %v3549, %v3553
  %s3558 = scalar_lea.vmem %s3, 22
  %v3559 = vld [vmem:[%s3558] sm:$0x1]
  %v3561 = vlaneseq
  %v3562 = vshrl.u32 %v3561, 7
  %v3563 = vsub.s32 0, %v3562
  %v3564 = vrot.slane %v3559, %v3563
  %v3566 = vadd.f32 %v3554, %v3564
  %v3567 = vadd.f32 %v3555, %v3564
  %v3568 = vadd.f32 %v3556, %v3564
  %v3569 = vadd.f32 %v3557, %v3564
  %3570 = vst [vmem:[%s4 + $0x16] sm:$0x1] %v3566
  %3571 = vst [vmem:[%s4 + $0x2e] sm:$0x1] %v3567
  %3572 = vst [vmem:[%s4 + $0x46] sm:$0x1] %v3568
  %3573 = vst [vmem:[%s4 + $0x5e] sm:$0x1] %v3569
  %v3574 = vmul.f32 %v3522, %v105
  %v3575 = vmul.f32 %v3523, %v105
  %v3576 = vmul.f32 %v3524, %v105
  %v3577 = vmul.f32 %v3525, %v105
  %v3578 = vmul.f32 %v3528, %v115
  %v3579 = vmul.f32 %v3529, %v115
  %v3580 = vmul.f32 %v3530, %v115
  %v3581 = vmul.f32 %v3531, %v115
  %v3582 = vadd.f32 %v3574, %v3578
  %v3583 = vadd.f32 %v3575, %v3579
  %v3584 = vadd.f32 %v3576, %v3580
  %v3585 = vadd.f32 %v3577, %v3581
  %v3586 = vmul.f32 %v3534, %v129
  %v3587 = vmul.f32 %v3535, %v129
  %v3588 = vmul.f32 %v3536, %v129
  %v3589 = vmul.f32 %v3537, %v129
  %v3590 = vadd.f32 %v3582, %v3586
  %v3591 = vadd.f32 %v3583, %v3587
  %v3592 = vadd.f32 %v3584, %v3588
  %v3593 = vadd.f32 %v3585, %v3589
  %s3594 = scalar_lea.vmem %s3, 46
  %v3595 = vld [vmem:[%s3594] sm:$0x1]
  %v3597 = vlaneseq
  %v3598 = vshrl.u32 %v3597, 7
  %v3599 = vsub.s32 0, %v3598
  %v3600 = vrot.slane %v3595, %v3599
  %v3602 = vadd.f32 %v3590, %v3600
  %v3603 = vadd.f32 %v3591, %v3600
  %v3604 = vadd.f32 %v3592, %v3600
  %v3605 = vadd.f32 %v3593, %v3600
  %3606 = vst [vmem:[%s151 + $0x16] sm:$0x1] %v3602
  %3607 = vst [vmem:[%s151 + $0x2e] sm:$0x1] %v3603
  %3608 = vst [vmem:[%s151 + $0x46] sm:$0x1] %v3604
  %3609 = vst [vmem:[%s151 + $0x5e] sm:$0x1] %v3605
  %v3610 = vmul.f32 %v3522, %v160
  %v3611 = vmul.f32 %v3523, %v160
  %v3612 = vmul.f32 %v3524, %v160
  %v3613 = vmul.f32 %v3525, %v160
  %v3614 = vmul.f32 %v3528, %v170
  %v3615 = vmul.f32 %v3529, %v170
  %v3616 = vmul.f32 %v3530, %v170
  %v3617 = vmul.f32 %v3531, %v170
  %v3618 = vadd.f32 %v3610, %v3614
  %v3619 = vadd.f32 %v3611, %v3615
  %v3620 = vadd.f32 %v3612, %v3616
  %v3621 = vadd.f32 %v3613, %v3617
  %v3622 = vmul.f32 %v3534, %v184
  %v3623 = vmul.f32 %v3535, %v184
  %v3624 = vmul.f32 %v3536, %v184
  %v3625 = vmul.f32 %v3537, %v184
  %v3626 = vadd.f32 %v3618, %v3622
  %v3627 = vadd.f32 %v3619, %v3623
  %v3628 = vadd.f32 %v3620, %v3624
  %v3629 = vadd.f32 %v3621, %v3625
  %s3630 = scalar_lea.vmem %s3, 70
  %v3631 = vld [vmem:[%s3630] sm:$0x1]
  %v3633 = vlaneseq
  %v3634 = vshrl.u32 %v3633, 7
  %v3635 = vsub.s32 0, %v3634
  %v3636 = vrot.slane %v3631, %v3635
  %v3638 = vadd.f32 %v3626, %v3636
  %v3639 = vadd.f32 %v3627, %v3636
  %v3640 = vadd.f32 %v3628, %v3636
  %v3641 = vadd.f32 %v3629, %v3636
  %3642 = vst [vmem:[%s206 + $0x16] sm:$0x1] %v3638
  %3643 = vst [vmem:[%s206 + $0x2e] sm:$0x1] %v3639
  %3644 = vst [vmem:[%s206 + $0x46] sm:$0x1] %v3640
  %3645 = vst [vmem:[%s206 + $0x5e] sm:$0x1] %v3641
  %s3646 = sadd.s32 %s3520, 288
  %s3647 = scalar_lea.vmem %s1, %s3646
  %v3648 = vld [vmem:[%s3647] sm:$0x1]
  %v3649 = vld [vmem:[%s3647 + $0x18] sm:$0x1]
  %v3650 = vld [vmem:[%s3647 + $0x30] sm:$0x1]
  %v3651 = vld [vmem:[%s3647 + $0x48] sm:$0x1]
  %3652 = vst [vmem:[%s217 + $0x16] sm:$0x1] %v3648
  %3653 = vst [vmem:[%s217 + $0x2e] sm:$0x1] %v3649
  %3654 = vst [vmem:[%s217 + $0x46] sm:$0x1] %v3650
  %3655 = vst [vmem:[%s217 + $0x5e] sm:$0x1] %v3651
  %s3656 = sadd.s32 %s3520, 384
  %s3657 = scalar_lea.vmem %s1, %s3656
  %v3658 = vld [vmem:[%s3657] sm:$0x1]
  %v3659 = vld [vmem:[%s3657 + $0x18] sm:$0x1]
  %v3660 = vld [vmem:[%s3657 + $0x30] sm:$0x1]
  %v3661 = vld [vmem:[%s3657 + $0x48] sm:$0x1]
  %3662 = vst [vmem:[%s228 + $0x16] sm:$0x1] %v3658
  %3663 = vst [vmem:[%s228 + $0x2e] sm:$0x1] %v3659
  %3664 = vst [vmem:[%s228 + $0x46] sm:$0x1] %v3660
  %3665 = vst [vmem:[%s228 + $0x5e] sm:$0x1] %v3661
  %s3666 = sadd.s32 %s3520, 480
  %s3667 = scalar_lea.vmem %s1, %s3666
  %v3668 = vld [vmem:[%s3667] sm:$0x1]
  %v3669 = vld [vmem:[%s3667 + $0x18] sm:$0x1]
  %v3670 = vld [vmem:[%s3667 + $0x30] sm:$0x1]
  %v3671 = vld [vmem:[%s3667 + $0x48] sm:$0x1]
  %3672 = vst [vmem:[%s239 + $0x16] sm:$0x1] %v3668
  %3673 = vst [vmem:[%s239 + $0x2e] sm:$0x1] %v3669
  %3674 = vst [vmem:[%s239 + $0x46] sm:$0x1] %v3670
  %3675 = vst [vmem:[%s239 + $0x5e] sm:$0x1] %v3671
  %s3676 = sld [smem:[#allocation3 + $0x17]]
  %s3677 = scalar_lea.vmem %s1, %s3676
  %v3678 = vld [vmem:[%s3677] sm:$0x1]
  %v3679 = vld [vmem:[%s3677 + $0x18] sm:$0x1]
  %v3680 = vld [vmem:[%s3677 + $0x30] sm:$0x1]
  %v3681 = vld [vmem:[%s3677 + $0x48] sm:$0x1]
  %s3682 = sadd.s32 %s3676, 96
  %s3683 = scalar_lea.vmem %s1, %s3682
  %v3684 = vld [vmem:[%s3683] sm:$0x1]
  %v3685 = vld [vmem:[%s3683 + $0x18] sm:$0x1]
  %v3686 = vld [vmem:[%s3683 + $0x30] sm:$0x1]
  %v3687 = vld [vmem:[%s3683 + $0x48] sm:$0x1]
  %s3688 = sadd.s32 %s3676, 192
  %s3689 = scalar_lea.vmem %s1, %s3688
  %v3690 = vld [vmem:[%s3689] sm:$0x1]
  %v3691 = vld [vmem:[%s3689 + $0x18] sm:$0x1]
  %v3692 = vld [vmem:[%s3689 + $0x30] sm:$0x1]
  %v3693 = vld [vmem:[%s3689 + $0x48] sm:$0x1]
  %v3694 = vmul.f32 %v3678, %v52
  %v3695 = vmul.f32 %v3679, %v52
  %v3696 = vmul.f32 %v3680, %v52
  %v3697 = vmul.f32 %v3681, %v52
  %v3698 = vmul.f32 %v3684, %v62
  %v3699 = vmul.f32 %v3685, %v62
  %v3700 = vmul.f32 %v3686, %v62
  %v3701 = vmul.f32 %v3687, %v62
  %v3702 = vadd.f32 %v3694, %v3698
  %v3703 = vadd.f32 %v3695, %v3699
  %v3704 = vadd.f32 %v3696, %v3700
  %v3705 = vadd.f32 %v3697, %v3701
  %v3706 = vmul.f32 %v3690, %v76
  %v3707 = vmul.f32 %v3691, %v76
  %v3708 = vmul.f32 %v3692, %v76
  %v3709 = vmul.f32 %v3693, %v76
  %v3710 = vadd.f32 %v3702, %v3706
  %v3711 = vadd.f32 %v3703, %v3707
  %v3712 = vadd.f32 %v3704, %v3708
  %v3713 = vadd.f32 %v3705, %v3709
  %s3714 = scalar_lea.vmem %s3, 23
  %v3715 = vld [vmem:[%s3714] sm:$0x1]
  %v3717 = vlaneseq
  %v3718 = vshrl.u32 %v3717, 7
  %v3719 = vsub.s32 0, %v3718
  %v3720 = vrot.slane %v3715, %v3719
  %v3722 = vadd.f32 %v3710, %v3720
  %v3723 = vadd.f32 %v3711, %v3720
  %v3724 = vadd.f32 %v3712, %v3720
  %v3725 = vadd.f32 %v3713, %v3720
  %3726 = vst [vmem:[%s4 + $0x17] sm:$0x1] %v3722
  %3727 = vst [vmem:[%s4 + $0x2f] sm:$0x1] %v3723
  %3728 = vst [vmem:[%s4 + $0x47] sm:$0x1] %v3724
  %3729 = vst [vmem:[%s4 + $0x5f] sm:$0x1] %v3725
  %v3730 = vmul.f32 %v3678, %v105
  %v3731 = vmul.f32 %v3679, %v105
  %v3732 = vmul.f32 %v3680, %v105
  %v3733 = vmul.f32 %v3681, %v105
  %v3734 = vmul.f32 %v3684, %v115
  %v3735 = vmul.f32 %v3685, %v115
  %v3736 = vmul.f32 %v3686, %v115
  %v3737 = vmul.f32 %v3687, %v115
  %v3738 = vadd.f32 %v3730, %v3734
  %v3739 = vadd.f32 %v3731, %v3735
  %v3740 = vadd.f32 %v3732, %v3736
  %v3741 = vadd.f32 %v3733, %v3737
  %v3742 = vmul.f32 %v3690, %v129
  %v3743 = vmul.f32 %v3691, %v129
  %v3744 = vmul.f32 %v3692, %v129
  %v3745 = vmul.f32 %v3693, %v129
  %v3746 = vadd.f32 %v3738, %v3742
  %v3747 = vadd.f32 %v3739, %v3743
  %v3748 = vadd.f32 %v3740, %v3744
  %v3749 = vadd.f32 %v3741, %v3745
  %s3750 = scalar_lea.vmem %s3, 47
  %v3751 = vld [vmem:[%s3750] sm:$0x1]
  %v3753 = vlaneseq
  %v3754 = vshrl.u32 %v3753, 7
  %v3755 = vsub.s32 0, %v3754
  %v3756 = vrot.slane %v3751, %v3755
  %v3758 = vadd.f32 %v3746, %v3756
  %v3759 = vadd.f32 %v3747, %v3756
  %v3760 = vadd.f32 %v3748, %v3756
  %v3761 = vadd.f32 %v3749, %v3756
  %3762 = vst [vmem:[%s151 + $0x17] sm:$0x1] %v3758
  %3763 = vst [vmem:[%s151 + $0x2f] sm:$0x1] %v3759
  %3764 = vst [vmem:[%s151 + $0x47] sm:$0x1] %v3760
  %3765 = vst [vmem:[%s151 + $0x5f] sm:$0x1] %v3761
  %v3766 = vmul.f32 %v3678, %v160
  %v3767 = vmul.f32 %v3679, %v160
  %v3768 = vmul.f32 %v3680, %v160
  %v3769 = vmul.f32 %v3681, %v160
  %v3770 = vmul.f32 %v3684, %v170
  %v3771 = vmul.f32 %v3685, %v170
  %v3772 = vmul.f32 %v3686, %v170
  %v3773 = vmul.f32 %v3687, %v170
  %v3774 = vadd.f32 %v3766, %v3770
  %v3775 = vadd.f32 %v3767, %v3771
  %v3776 = vadd.f32 %v3768, %v3772
  %v3777 = vadd.f32 %v3769, %v3773
  %v3778 = vmul.f32 %v3690, %v184
  %v3779 = vmul.f32 %v3691, %v184
  %v3780 = vmul.f32 %v3692, %v184
  %v3781 = vmul.f32 %v3693, %v184
  %v3782 = vadd.f32 %v3774, %v3778
  %v3783 = vadd.f32 %v3775, %v3779
  %v3784 = vadd.f32 %v3776, %v3780
  %v3785 = vadd.f32 %v3777, %v3781
  %s3786 = scalar_lea.vmem %s3, 71
  %v3787 = vld [vmem:[%s3786] sm:$0x1]
  %v3789 = vlaneseq
  %v3790 = vshrl.u32 %v3789, 7
  %v3791 = vsub.s32 0, %v3790
  %v3792 = vrot.slane %v3787, %v3791
  %v3794 = vadd.f32 %v3782, %v3792
  %v3795 = vadd.f32 %v3783, %v3792
  %v3796 = vadd.f32 %v3784, %v3792
  %v3797 = vadd.f32 %v3785, %v3792
  %3798 = vst [vmem:[%s206 + $0x17] sm:$0x1] %v3794
  %3799 = vst [vmem:[%s206 + $0x2f] sm:$0x1] %v3795
  %3800 = vst [vmem:[%s206 + $0x47] sm:$0x1] %v3796
  %3801 = vst [vmem:[%s206 + $0x5f] sm:$0x1] %v3797
  %s3802 = sadd.s32 %s3676, 288
  %s3803 = scalar_lea.vmem %s1, %s3802
  %v3804 = vld [vmem:[%s3803] sm:$0x1]
  %v3805 = vld [vmem:[%s3803 + $0x18] sm:$0x1]
  %v3806 = vld [vmem:[%s3803 + $0x30] sm:$0x1]
  %v3807 = vld [vmem:[%s3803 + $0x48] sm:$0x1]
  %3808 = vst [vmem:[%s217 + $0x17] sm:$0x1] %v3804
  %3809 = vst [vmem:[%s217 + $0x2f] sm:$0x1] %v3805
  %3810 = vst [vmem:[%s217 + $0x47] sm:$0x1] %v3806
  %3811 = vst [vmem:[%s217 + $0x5f] sm:$0x1] %v3807
  %s3812 = sadd.s32 %s3676, 384
  %s3813 = scalar_lea.vmem %s1, %s3812
  %v3814 = vld [vmem:[%s3813] sm:$0x1]
  %v3815 = vld [vmem:[%s3813 + $0x18] sm:$0x1]
  %v3816 = vld [vmem:[%s3813 + $0x30] sm:$0x1]
  %v3817 = vld [vmem:[%s3813 + $0x48] sm:$0x1]
  %3818 = vst [vmem:[%s228 + $0x17] sm:$0x1] %v3814
  %3819 = vst [vmem:[%s228 + $0x2f] sm:$0x1] %v3815
  %3820 = vst [vmem:[%s228 + $0x47] sm:$0x1] %v3816
  %3821 = vst [vmem:[%s228 + $0x5f] sm:$0x1] %v3817
  %s3822 = sadd.s32 %s3676, 480
  %s3823 = scalar_lea.vmem %s1, %s3822
  %v3824 = vld [vmem:[%s3823] sm:$0x1]
  %v3825 = vld [vmem:[%s3823 + $0x18] sm:$0x1]
  %v3826 = vld [vmem:[%s3823 + $0x30] sm:$0x1]
  %v3827 = vld [vmem:[%s3823 + $0x48] sm:$0x1]
  %3828 = vst [vmem:[%s239 + $0x17] sm:$0x1] %v3824
  %3829 = vst [vmem:[%s239 + $0x2f] sm:$0x1] %v3825
  %3830 = vst [vmem:[%s239 + $0x47] sm:$0x1] %v3826
  %3831 = vst [vmem:[%s239 + $0x5f] sm:$0x1] %v3827
  // Predicated region
  $region14: #{_augment_forward.1} parent=0 // pred_check
    _
  $region15: #{_augment_forward.1} parent=0 // pred_check_branch
    %3833 = sbr.rel (0) target = $region17
  $region16: #{_augment_forward.1} parent=0 // pred_region
    _
  $region17: #{_augment_forward.1} parent=0 // pred_fallthru
    _
  // Predicated region
  $region18: #{_augment_forward.1} parent=0 // pred_check
    _
  $region19: #{_augment_forward.1} parent=0 // pred_check_branch
    %3835 = sbr.rel (0) target = $region21
  $region20: #{_augment_forward.1} parent=0 // pred_region
    _
  $region21: #{_augment_forward.1} parent=0 // pred_fallthru
    _

</llo_original>
